<compile_context>
chip_gen: v7x
topology: tpu7x:2x2x1
jax: 0.10.0
libtpu: 0.0.40
codegen_flags: <defaults>
</compile_context>

<pallas_src>
import functools

import jax
import jax.numpy as jnp
from jax.experimental import pallas as pl
from jax.experimental.pallas import tpu as pltpu

EXPANSION = 4
BN_EPS = 1e-5
VMEM_LIMIT = 32 * 1024 * 1024  # explicit scoped-VMEM limit (safe on v5e/v6e/v7x)


# --------------------------- Pallas kernels ---------------------------------

def _pw_conv_kernel(x_ref, w_ref, scale_ref, shift_ref, o_ref, st_ref, *,
                    apply_prologue):
    """1x1 conv tile: optional (BN+ReLU) prologue, MXU matmul, BN-stats epilogue."""
    if apply_prologue:
        x = x_ref[...].astype(jnp.float32)
        x = jnp.maximum(x * scale_ref[...] + shift_ref[...], 0.0)
        x = x.astype(w_ref.dtype)
    else:
        x = x_ref[...]
    acc = jnp.dot(x, w_ref[...], preferred_element_type=jnp.float32)
    o_ref[...] = acc.astype(o_ref.dtype)
    # per-tile partial BN statistics (reduced across tiles in the wrapper)
    st_ref[0, 0:1, :] = jnp.sum(acc, axis=0, keepdims=True)
    st_ref[0, 1:2, :] = jnp.sum(acc * acc, axis=0, keepdims=True)


def _conv3x3_kernel(xph_ref, w_ref, scale_ref, shift_ref, o_ref, st_ref,
                    acc_ref, *, stride):
    """3x3 conv (pad=1, stride s) over polyphase input, with BN+ReLU prologue.

    xph_ref: (s*s, 1, Hph, Wph, Cin) polyphase padded input for one image
    w_ref:   (3, 3, Cin, Cout) HWIO weights
    o_ref:   (1, th, Wout, Cout) strided conv output row tile
    st_ref:  (1, 1, 2, Cout) per-tile partial BN stats
    acc_ref: (th*Wout, Cout) f32 VMEM accumulator
    """
    r = pl.program_id(1)
    _, th, w_out, c_out = o_ref.shape
    c_in = xph_ref.shape[-1]
    row0 = r * th

    acc_ref[...] = jnp.zeros_like(acc_ref)
    for kh in range(3):
        for kw in range(3):
            p = (kh % stride) * stride + (kw % stride)   # polyphase index
            ro = kh // stride                            # row offset in phase
            co = kw // stride                            # col offset in phase
            patch = xph_ref[p, 0, pl.ds(row0 + ro, th), pl.ds(co, w_out), :]
            patch = patch.astype(jnp.float32).reshape(th * w_out, c_in)
            # bn1 + relu prologue (pad positions map to exactly 0)
            patch = jnp.maximum(patch * scale_ref[...] + shift_ref[...], 0.0)
            acc_ref[...] += jnp.dot(patch.astype(w_ref.dtype), w_ref[kh, kw],
                                    preferred_element_type=jnp.float32)

    acc = acc_ref[...]
    o_ref[...] = acc.reshape(1, th, w_out, c_out).astype(o_ref.dtype)
    st_ref[0, 0, 0:1, :] = jnp.sum(acc, axis=0, keepdims=True)
    st_ref[0, 0, 1:2, :] = jnp.sum(acc * acc, axis=0, keepdims=True)


def _bn_add_relu_kernel(h_ref, sc_ref, s3_ref, b3_ref, ssc_ref, bsc_ref, o_ref):
    """Fused bn3(h) + bn_sc(shortcut) + add + ReLU."""
    h = h_ref[...].astype(jnp.float32)
    sc = sc_ref[...].astype(jnp.float32)
    y = (h * s3_ref[...] + b3_ref[...]) + (sc * ssc_ref[...] + bsc_ref[...])
    o_ref[...] = jnp.maximum(y, 0.0)


# --------------------------- tiling helpers ----------------------------------

def _pick_m_tile(m):
    # Prefer large (>=256 row) tiles; tiny fallbacks only matter for toy shapes.
    for t in (512, 256, 128, 64, 32, 16, 8):
        if m % t == 0:
            return t
    return m


def _pick_row_tile(h_out, w_out, c_out):
    budget = 2 * 1024 * 1024  # cap the f32 accumulator per grid step
    best = 1
    for t in range(1, h_out + 1):
        if h_out % t == 0 and t * w_out * c_out * 4 <= budget:
            best = t
    return best


# --------------------------- kernel wrappers ----------------------------------

def pointwise_conv(x2d, w, scale=None, shift=None):
    """1x1 conv as tiled matmul; returns (raw_out, bn_stats(2, Cout) f32)."""
    m, k = x2d.shape
    c_out = w.shape[1]
    tm = _pick_m_tile(m)
    n_tiles = m // tm
    apply_prologue = scale is not None
    if scale is None:
        scale = jnp.ones((1, k), jnp.float32)
        shift = jnp.zeros((1, k), jnp.float32)
    out, st = pl.pallas_call(
        functools.partial(_pw_conv_kernel, apply_prologue=apply_prologue),
        out_shape=(jax.ShapeDtypeStruct((m, c_out), x2d.dtype),
                   jax.ShapeDtypeStruct((n_tiles, 2, c_out), jnp.float32)),
        grid=(n_tiles,),
        in_specs=[pl.BlockSpec((tm, k), lambda i: (i, 0)),
                  pl.BlockSpec((k, c_out), lambda i: (0, 0)),
                  pl.BlockSpec((1, k), lambda i: (0, 0)),
                  pl.BlockSpec((1, k), lambda i: (0, 0))],
        out_specs=[pl.BlockSpec((tm, c_out), lambda i: (i, 0)),
                   pl.BlockSpec((1, 2, c_out), lambda i: (i, 0, 0))],
        compiler_params=pltpu.CompilerParams(
            dimension_semantics=("parallel",),
            vmem_limit_bytes=VMEM_LIMIT),
    )(x2d, w, scale, shift)
    return out, jnp.sum(st, axis=0)


def conv3x3_bn_prologue(phases, w_hwio, scale, shift, stride, h_out, w_out):
    """3x3 conv (stride s) over polyphase input with bn+relu prologue."""
    p_cnt, n, hph, wph, c_in = phases.shape
    c_out = w_hwio.shape[-1]
    th = _pick_row_tile(h_out, w_out, c_out)
    r_tiles = h_out // th
    out, st = pl.pallas_call(
        functools.partial(_conv3x3_kernel, stride=stride),
        out_shape=(jax.ShapeDtypeStruct((n, h_out, w_out, c_out), phases.dtype),
                   jax.ShapeDtypeStruct((n, r_tiles, 2, c_out), jnp.float32)),
        grid=(n, r_tiles),
        in_specs=[pl.BlockSpec((p_cnt, 1, hph, wph, c_in),
                               lambda i, r: (0, i, 0, 0, 0)),
                  pl.BlockSpec((3, 3, c_in, c_out), lambda i, r: (0, 0, 0, 0)),
                  pl.BlockSpec((1, c_in), lambda i, r: (0, 0)),
                  pl.BlockSpec((1, c_in), lambda i, r: (0, 0))],
        out_specs=[pl.BlockSpec((1, th, w_out, c_out), lambda i, r: (i, r, 0, 0)),
                   pl.BlockSpec((1, 1, 2, c_out), lambda i, r: (i, r, 0, 0))],
        scratch_shapes=[pltpu.VMEM((th * w_out, c_out), jnp.float32)],
        compiler_params=pltpu.CompilerParams(
            dimension_semantics=("parallel", "parallel"),
            vmem_limit_bytes=VMEM_LIMIT),
    )(phases, w_hwio, scale, shift)
    return out, jnp.sum(st, axis=(0, 1))


def bn_add_relu(h3, sc, s3, b3, ssc, bsc):
    m, c = h3.shape
    tm = _pick_m_tile(m)
    return pl.pallas_call(
        _bn_add_relu_kernel,
        out_shape=jax.ShapeDtypeStruct((m, c), jnp.float32),
        grid=(m // tm,),
        in_specs=[pl.BlockSpec((tm, c), lambda i: (i, 0)),
                  pl.BlockSpec((tm, c), lambda i: (i, 0)),
                  pl.BlockSpec((1, c), lambda i: (0, 0)),
                  pl.BlockSpec((1, c), lambda i: (0, 0)),
                  pl.BlockSpec((1, c), lambda i: (0, 0)),
                  pl.BlockSpec((1, c), lambda i: (0, 0))],
        out_specs=pl.BlockSpec((tm, c), lambda i: (i, 0)),
        compiler_params=pltpu.CompilerParams(
            dimension_semantics=("parallel",),
            vmem_limit_bytes=VMEM_LIMIT),
    )(h3, sc, s3, b3, ssc, bsc)


# --------------------------- glue (tiny, O(C) or O(border)) ------------------

def _bn_affine(stats, count, gamma, beta):
    """Turn (sum, sumsq) into the per-channel affine of training-mode BN."""
    mean = stats[0] / count
    var = jnp.maximum(stats[1] / count - mean * mean, 0.0)   # biased, as torch
    scale = gamma * jax.lax.rsqrt(var + BN_EPS)
    shift = beta - mean * scale
    return (scale.reshape(1, -1).astype(jnp.float32),
            shift.reshape(1, -1).astype(jnp.float32))


def _pad_value(scale, shift):
    """Per-channel value v with relu(v*scale + shift) == 0 (maps to -1)."""
    ok = jnp.abs(scale) > 1e-12
    safe = jnp.where(ok, scale, 1.0)
    return jnp.where(ok, (-1.0 - shift) / safe, 0.0)


def _make_phases(x_img, pad_val, stride):
    """Pad by 1 ring (per-channel pad value) and split into s*s polyphases."""
    n, h, w, c = x_img.shape
    pv = pad_val.reshape(1, 1, 1, c).astype(x_img.dtype)
    eh = (-(h + 2)) % stride
    ew = (-(w + 2)) % stride
    top = jnp.broadcast_to(pv, (n, 1, w, c))
    bot = jnp.broadcast_to(pv, (n, 1 + eh, w, c))
    xp = jnp.concatenate([top, x_img, bot], axis=1)
    hp = xp.shape[1]
    left = jnp.broadcast_to(pv, (n, hp, 1, c))
    right = jnp.broadcast_to(pv, (n, hp, 1 + ew, c))
    xp = jnp.concatenate([left, xp, right], axis=2)
    if stride == 1:
        return xp[None]
    return jnp.stack([xp[:, a::stride, b::stride, :]
                      for a in range(stride) for b in range(stride)], axis=0)


# --------------------------- Bottleneck module -------------------------------

def init_bottleneck_params(key, in_planes, planes, stride):
    out_planes = planes * EXPANSION
    ks = jax.random.split(key, 8)
    s = 0.1
    p = {
        "w1": s * jax.random.normal(ks[0], (in_planes, planes), jnp.float32),
        "g1": 1.0 + 0.1 * jax.random.normal(ks[3], (planes,), jnp.float32),
        "b1": 0.1 * jax.random.normal(ks[4], (planes,), jnp.float32),
        "w2": s * jax.random.normal(ks[1], (3, 3, planes, planes), jnp.float32),
        "g2": 1.0 + 0.1 * jax.random.normal(ks[5], (planes,), jnp.float32),
        "b2": 0.1 * jax.random.normal(ks[6], (planes,), jnp.float32),
        "w3": s * jax.random.normal(ks[2], (planes, out_planes), jnp.float32),
        "g3": jnp.ones((out_planes,), jnp.float32),
        "b3": jnp.zeros((out_planes,), jnp.float32),
    }
    if stride != 1 or in_planes != out_planes:
        p["wsc"] = s * jax.random.normal(ks[7], (in_planes, out_planes), jnp.float32)
        p["gsc"] = jnp.ones((out_planes,), jnp.float32)
        p["bsc"] = jnp.zeros((out_planes,), jnp.float32)
    return p


def bottleneck_forward(x_nchw, params, stride=1, compute_dtype=jnp.bfloat16):
    n, c_in, h, w = x_nchw.shape
    planes = params["w1"].shape[1]
    out_planes = planes * EXPANSION
    cdt = compute_dtype

    x = jnp.transpose(x_nchw, (0, 2, 3, 1)).astype(jnp.float32)  # NHWC
    x_c = x.astype(cdt)

    # conv1 (1x1), bn1 stats fused into the matmul epilogue
    h1_raw, st1 = pointwise_conv(x_c.reshape(n * h * w, c_in),
                                 params["w1"].astype(cdt))
    s1, b1 = _bn_affine(st1, n * h * w, params["g1"], params["b1"])

    # conv2 (3x3, stride, pad=1) with bn1+relu applied in the kernel prologue
    h_out = (h - 1) // stride + 1
    w_out = (w - 1) // stride + 1
    pad_val = _pad_value(s1, b1)
    phases = _make_phases(h1_raw.reshape(n, h, w, planes),
                          pad_val.astype(cdt), stride)
    h2_raw, st2 = conv3x3_bn_prologue(phases, params["w2"].astype(cdt),
                                      s1, b1, stride, h_out, w_out)
    m2 = n * h_out * w_out
    s2, b2 = _bn_affine(st2, m2, params["g2"], params["b2"])

    # conv3 (1x1) with bn2+relu prologue; bn3 stats in epilogue
    h3_raw, st3 = pointwise_conv(h2_raw.reshape(m2, planes),
                                 params["w3"].astype(cdt), s2, b2)
    s3, b3 = _bn_affine(st3, m2, params["g3"], params["b3"])

    # shortcut
    if stride != 1 or c_in != out_planes:
        # TODO(synk): fold the strided slice into the shortcut matmul index_map.
        xs = x_c[:, ::stride, ::stride, :].reshape(m2, c_in)
        sc_raw, st_sc = pointwise_conv(xs, params["wsc"].astype(cdt))
        ssc, bsc = _bn_affine(st_sc, m2, params["gsc"], params["bsc"])
    else:
        sc_raw = x_c.reshape(m2, c_in)
        ssc = jnp.ones((1, out_planes), jnp.float32)
        bsc = jnp.zeros((1, out_planes), jnp.float32)

    # bn3 + shortcut-bn + residual add + final ReLU, fused
    out2d = bn_add_relu(h3_raw, sc_raw, s3, b3, ssc, bsc)
    out = out2d.reshape(n, h_out, w_out, out_planes)
    return jnp.transpose(out, (0, 3, 1, 2))  # back to NCHW


# --------------------------- pure-JAX reference -------------------------------

def ref_bottleneck(x_nchw, params, stride=1):
    def bn(t, g, b):
        mean = jnp.mean(t, axis=(0, 1, 2), keepdims=True)
        var = jnp.mean((t - mean) ** 2, axis=(0, 1, 2), keepdims=True)
        return (t - mean) * jax.lax.rsqrt(var + BN_EPS) * g + b

    dn = ("NHWC", "HWIO", "NHWC")
    x = jnp.transpose(x_nchw, (0, 2, 3, 1)).astype(jnp.float32)
    out = jax.lax.conv_general_dilated(x, params["w1"][None, None], (1, 1),
                                       "VALID", dimension_numbers=dn)
    out = jax.nn.relu(bn(out, params["g1"], params["b1"]))
    out = jax.lax.conv_general_dilated(out, params["w2"], (stride, stride),
                                       ((1, 1), (1, 1)), dimension_numbers=dn)
    out = jax.nn.relu(bn(out, params["g2"], params["b2"]))
    out = jax.lax.conv_general_dilated(out, params["w3"][None, None], (1, 1),
                                       "VALID", dimension_numbers=dn)
    out = bn(out, params["g3"], params["b3"])
    c_in = x.shape[-1]
    out_planes = params["w3"].shape[1]
    if stride != 1 or c_in != out_planes:
        sc = jax.lax.conv_general_dilated(x, params["wsc"][None, None],
                                          (stride, stride), "VALID",
                                          dimension_numbers=dn)
        sc = bn(sc, params["gsc"], params["bsc"])
    else:
        sc = x
    out = jax.nn.relu(out + sc)
    return jnp.transpose(out, (0, 3, 1, 2))


# --------------------------------- main ---------------------------------------

if __name__ == "__main__":
    key = jax.random.PRNGKey(0)
    fwd = jax.jit(bottleneck_forward, static_argnames=("stride", "compute_dtype"))

    # (in_planes, planes, stride, compute dtype, max-err tol, mean-err tol)
    configs = [
        (4, 4, 1, jnp.float32, 5e-3, 1e-3),     # conv shortcut, stride 1
        (8, 4, 2, jnp.float32, 5e-3, 1e-3),     # strided conv + conv shortcut
        (16, 4, 1, jnp.bfloat16, 1.5e-1, 3e-2),  # identity shortcut, bf16 MXU path
    ]

    for cin, planes, stride, cdt, tol_max, tol_mean in configs:
        kx, kp, key = jax.random.split(key, 3)
        x = jax.random.normal(kx, (2, cin, 16, 16), jnp.float32)  # NCHW input
        params = init_bottleneck_params(kp, cin, planes, stride)

        out = fwd(x, params, stride=stride, compute_dtype=cdt)
        out = jax.block_until_ready(out)

        h_out = (16 - 1) // stride + 1
        assert out.shape == (2, planes * EXPANSION, h_out, h_out), out.shape

        ref = ref_bottleneck(x, params, stride)
        err = jnp.abs(out.astype(jnp.float32) - ref)
        max_err = float(jnp.max(err))
        mean_err = float(jnp.mean(err))
        assert max_err < tol_max, (cin, planes, stride, str(cdt), max_err)
        assert mean_err < tol_mean, (cin, planes, stride, str(cdt), mean_err)

    print("KERNEL_OK")
</pallas_src>

<mosaic_0001>
module attributes {stable_mosaic.version = 11 : i64} {
  func.func @_pw_conv_kernel(%arg0: i32, %arg1: memref<512x4xf32, #tpu.memory_space<vmem>>, %arg2: memref<4x16xf32, #tpu.memory_space<vmem>>, %arg3: memref<1x4xf32, #tpu.memory_space<vmem>>, %arg4: memref<1x4xf32, #tpu.memory_space<vmem>>, %arg5: memref<512x16xf32, #tpu.memory_space<vmem>>, %arg6: memref<1x2x16xf32, #tpu.memory_space<vmem>>) attributes {dimension_semantics = [#tpu.dimension_semantics<parallel>], iteration_bounds = array<i64: 1>, scalar_prefetch = 0 : i64, scratch_operands = 0 : i64, tpu.core_type = #tpu.core_type<tc>, window_params = [{transform_indices = @transform_0, window_bounds = array<i64: 512, 4>}, {pipeline_mode = #tpu.pipeline_mode<synchronous>, transform_indices = @transform_1, window_bounds = array<i64: 4, 16>}, {pipeline_mode = #tpu.pipeline_mode<synchronous>, transform_indices = @transform_2, window_bounds = array<i64: 1, 4>}, {pipeline_mode = #tpu.pipeline_mode<synchronous>, transform_indices = @transform_3, window_bounds = array<i64: 1, 4>}, {transform_indices = @transform_4, window_bounds = array<i64: 512, 16>}, {transform_indices = @transform_5, window_bounds = array<i64: 1, 2, 16>}]} {
    %c0 = arith.constant 0 : index
    %c0_0 = arith.constant 0 : index
    %0 = vector.load %arg1[%c0, %c0_0] : memref<512x4xf32, #tpu.memory_space<vmem>>, vector<512x4xf32>
    %c0_1 = arith.constant 0 : index
    %c0_2 = arith.constant 0 : index
    %1 = vector.load %arg2[%c0_1, %c0_2] : memref<4x16xf32, #tpu.memory_space<vmem>>, vector<4x16xf32>
    %cst = arith.constant dense<0.000000e+00> : vector<512x16xf32>
    %2 = tpu.matmul %0, %1, %cst {dimension_numbers = #tpu.dot_dimension_numbers<[1], [0], [0], [1], [0, 0, 1, 1], [], []>} : vector<512x4xf32>, vector<4x16xf32>, vector<512x16xf32> -> vector<512x16xf32>
    %c0_3 = arith.constant 0 : index
    %c0_4 = arith.constant 0 : index
    %3 = vector.load %arg5[%c0_3, %c0_4] : memref<512x16xf32, #tpu.memory_space<vmem>>, vector<512x16xf32>
    tpu.vector_store %arg5[%c0_3, %c0_4], %2 {strides = array<i32>} : memref<512x16xf32, #tpu.memory_space<vmem>>, vector<512x16xf32>,
    %cst_5 = arith.constant dense<0.000000e+00> : vector<16xf32>
    %4 = vector.multi_reduction <add>, %2, %cst_5 [0] : vector<512x16xf32> to vector<16xf32>
    %5 = vector.shape_cast %4 : vector<16xf32> to vector<1x16xf32>
    %c0_6 = arith.constant 0 : index
    %c0_7 = arith.constant 0 : index
    %c0_8 = arith.constant 0 : index
    %6 = vector.load %arg6[%c0_6, %c0_7, %c0_8] : memref<1x2x16xf32, #tpu.memory_space<vmem>>, vector<1x1x16xf32>
    %7 = vector.shape_cast %6 : vector<1x1x16xf32> to vector<1x16xf32>
    %8 = vector.shape_cast %5 : vector<1x16xf32> to vector<1x1x16xf32>
    tpu.vector_store %arg6[%c0_6, %c0_7, %c0_8], %8 {strides = array<i32>} : memref<1x2x16xf32, #tpu.memory_space<vmem>>, vector<1x1x16xf32>,
    %9 = arith.mulf %2, %2 : vector<512x16xf32>
    %cst_9 = arith.constant dense<0.000000e+00> : vector<16xf32>
    %10 = vector.multi_reduction <add>, %9, %cst_9 [0] : vector<512x16xf32> to vector<16xf32>
    %11 = vector.shape_cast %10 : vector<16xf32> to vector<1x16xf32>
    %c0_10 = arith.constant 0 : index
    %c1 = arith.constant 1 : index
    %c0_11 = arith.constant 0 : index
    %12 = vector.load %arg6[%c0_10, %c1, %c0_11] : memref<1x2x16xf32, #tpu.memory_space<vmem>>, vector<1x1x16xf32>
    %13 = vector.shape_cast %12 : vector<1x1x16xf32> to vector<1x16xf32>
    %14 = vector.shape_cast %11 : vector<1x16xf32> to vector<1x1x16xf32>
    tpu.vector_store %arg6[%c0_10, %c1, %c0_11], %14 {strides = array<i32>} : memref<1x2x16xf32, #tpu.memory_space<vmem>>, vector<1x1x16xf32>,
    return
  }
  func.func @transform_0(%arg0: i32) -> (i32, i32) {
    %c0_i32 = arith.constant 0 : i32
    %c0_i32_0 = arith.constant 0 : i32
    return %arg0, %c0_i32 : i32, i32
  }
  func.func @transform_1(%arg0: i32) -> (i32, i32) {
    %c0_i32 = arith.constant 0 : i32
    %c0_i32_0 = arith.constant 0 : i32
    %c0_i32_1 = arith.constant 0 : i32
    return %c0_i32, %c0_i32_0 : i32, i32
  }
  func.func @transform_2(%arg0: i32) -> (i32, i32) {
    %c0_i32 = arith.constant 0 : i32
    %c0_i32_0 = arith.constant 0 : i32
    %c0_i32_1 = arith.constant 0 : i32
    return %c0_i32, %c0_i32_0 : i32, i32
  }
  func.func @transform_3(%arg0: i32) -> (i32, i32) {
    %c0_i32 = arith.constant 0 : i32
    %c0_i32_0 = arith.constant 0 : i32
    %c0_i32_1 = arith.constant 0 : i32
    return %c0_i32, %c0_i32_0 : i32, i32
  }
  func.func @transform_4(%arg0: i32) -> (i32, i32) {
    %c0_i32 = arith.constant 0 : i32
    %c0_i32_0 = arith.constant 0 : i32
    return %arg0, %c0_i32 : i32, i32
  }
  func.func @transform_5(%arg0: i32) -> (i32, i32, i32) {
    %c0_i32 = arith.constant 0 : i32
    %c0_i32_0 = arith.constant 0 : i32
    %c0_i32_1 = arith.constant 0 : i32
    return %arg0, %c0_i32, %c0_i32_0 : i32, i32, i32
  }
}

module attributes {stable_mosaic.version = 11 : i64} {
  func.func @_pw_conv_kernel(%arg0: i32, %arg1: memref<512x4xf32, #tpu.memory_space<vmem>>, %arg2: memref<4x4xf32, #tpu.memory_space<vmem>>, %arg3: memref<1x4xf32, #tpu.memory_space<vmem>>, %arg4: memref<1x4xf32, #tpu.memory_space<vmem>>, %arg5: memref<512x4xf32, #tpu.memory_space<vmem>>, %arg6: memref<1x2x4xf32, #tpu.memory_space<vmem>>) attributes {dimension_semantics = [#tpu.dimension_semantics<parallel>], iteration_bounds = array<i64: 1>, scalar_prefetch = 0 : i64, scratch_operands = 0 : i64, tpu.core_type = #tpu.core_type<tc>, window_params = [{transform_indices = @transform_0, window_bounds = array<i64: 512, 4>}, {pipeline_mode = #tpu.pipeline_mode<synchronous>, transform_indices = @transform_1, window_bounds = array<i64: 4, 4>}, {pipeline_mode = #tpu.pipeline_mode<synchronous>, transform_indices = @transform_2, window_bounds = array<i64: 1, 4>}, {pipeline_mode = #tpu.pipeline_mode<synchronous>, transform_indices = @transform_3, window_bounds = array<i64: 1, 4>}, {transform_indices = @transform_4, window_bounds = array<i64: 512, 4>}, {transform_indices = @transform_5, window_bounds = array<i64: 1, 2, 4>}]} {
    %c0 = arith.constant 0 : index
    %c0_0 = arith.constant 0 : index
    %0 = vector.load %arg1[%c0, %c0_0] : memref<512x4xf32, #tpu.memory_space<vmem>>, vector<512x4xf32>
    %c0_1 = arith.constant 0 : index
    %c0_2 = arith.constant 0 : index
    %1 = vector.load %arg2[%c0_1, %c0_2] : memref<4x4xf32, #tpu.memory_space<vmem>>, vector<4x4xf32>
    %cst = arith.constant dense<0.000000e+00> : vector<512x4xf32>
    %2 = tpu.matmul %0, %1, %cst {dimension_numbers = #tpu.dot_dimension_numbers<[1], [0], [0], [1], [0, 0, 1, 1], [], []>} : vector<512x4xf32>, vector<4x4xf32>, vector<512x4xf32> -> vector<512x4xf32>
    %c0_3 = arith.constant 0 : index
    %c0_4 = arith.constant 0 : index
    %3 = vector.load %arg5[%c0_3, %c0_4] : memref<512x4xf32, #tpu.memory_space<vmem>>, vector<512x4xf32>
    tpu.vector_store %arg5[%c0_3, %c0_4], %2 {strides = array<i32>} : memref<512x4xf32, #tpu.memory_space<vmem>>, vector<512x4xf32>,
    %cst_5 = arith.constant dense<0.000000e+00> : vector<4xf32>
    %4 = vector.multi_reduction <add>, %2, %cst_5 [0] : vector<512x4xf32> to vector<4xf32>
    %5 = vector.shape_cast %4 : vector<4xf32> to vector<1x4xf32>
    %c0_6 = arith.constant 0 : index
    %c0_7 = arith.constant 0 : index
    %c0_8 = arith.constant 0 : index
    %6 = vector.load %arg6[%c0_6, %c0_7, %c0_8] : memref<1x2x4xf32, #tpu.memory_space<vmem>>, vector<1x1x4xf32>
    %7 = vector.shape_cast %6 : vector<1x1x4xf32> to vector<1x4xf32>
    %8 = vector.shape_cast %5 : vector<1x4xf32> to vector<1x1x4xf32>
    tpu.vector_store %arg6[%c0_6, %c0_7, %c0_8], %8 {strides = array<i32>} : memref<1x2x4xf32, #tpu.memory_space<vmem>>, vector<1x1x4xf32>,
    %9 = arith.mulf %2, %2 : vector<512x4xf32>
    %cst_9 = arith.constant dense<0.000000e+00> : vector<4xf32>
    %10 = vector.multi_reduction <add>, %9, %cst_9 [0] : vector<512x4xf32> to vector<4xf32>
    %11 = vector.shape_cast %10 : vector<4xf32> to vector<1x4xf32>
    %c0_10 = arith.constant 0 : index
    %c1 = arith.constant 1 : index
    %c0_11 = arith.constant 0 : index
    %12 = vector.load %arg6[%c0_10, %c1, %c0_11] : memref<1x2x4xf32, #tpu.memory_space<vmem>>, vector<1x1x4xf32>
    %13 = vector.shape_cast %12 : vector<1x1x4xf32> to vector<1x4xf32>
    %14 = vector.shape_cast %11 : vector<1x4xf32> to vector<1x1x4xf32>
    tpu.vector_store %arg6[%c0_10, %c1, %c0_11], %14 {strides = array<i32>} : memref<1x2x4xf32, #tpu.memory_space<vmem>>, vector<1x1x4xf32>,
    return
  }
  func.func @transform_0(%arg0: i32) -> (i32, i32) {
    %c0_i32 = arith.constant 0 : i32
    %c0_i32_0 = arith.constant 0 : i32
    return %arg0, %c0_i32 : i32, i32
  }
  func.func @transform_1(%arg0: i32) -> (i32, i32) {
    %c0_i32 = arith.constant 0 : i32
    %c0_i32_0 = arith.constant 0 : i32
    %c0_i32_1 = arith.constant 0 : i32
    return %c0_i32, %c0_i32_0 : i32, i32
  }
  func.func @transform_2(%arg0: i32) -> (i32, i32) {
    %c0_i32 = arith.constant 0 : i32
    %c0_i32_0 = arith.constant 0 : i32
    %c0_i32_1 = arith.constant 0 : i32
    return %c0_i32, %c0_i32_0 : i32, i32
  }
  func.func @transform_3(%arg0: i32) -> (i32, i32) {
    %c0_i32 = arith.constant 0 : i32
    %c0_i32_0 = arith.constant 0 : i32
    %c0_i32_1 = arith.constant 0 : i32
    return %c0_i32, %c0_i32_0 : i32, i32
  }
  func.func @transform_4(%arg0: i32) -> (i32, i32) {
    %c0_i32 = arith.constant 0 : i32
    %c0_i32_0 = arith.constant 0 : i32
    return %arg0, %c0_i32 : i32, i32
  }
  func.func @transform_5(%arg0: i32) -> (i32, i32, i32) {
    %c0_i32 = arith.constant 0 : i32
    %c0_i32_0 = arith.constant 0 : i32
    %c0_i32_1 = arith.constant 0 : i32
    return %arg0, %c0_i32, %c0_i32_0 : i32, i32, i32
  }
}

module attributes {stable_mosaic.version = 11 : i64} {
  func.func @_conv3x3_kernel(%arg0: i32, %arg1: i32, %arg2: memref<1x1x18x18x4xf32, #tpu.memory_space<vmem>>, %arg3: memref<3x3x4x4xf32, #tpu.memory_space<vmem>>, %arg4: memref<1x4xf32, #tpu.memory_space<vmem>>, %arg5: memref<1x4xf32, #tpu.memory_space<vmem>>, %arg6: memref<1x16x16x4xf32, #tpu.memory_space<vmem>>, %arg7: memref<1x1x2x4xf32, #tpu.memory_space<vmem>>, %arg8: memref<256x4xf32, #tpu.memory_space<vmem>>) attributes {dimension_semantics = [#tpu.dimension_semantics<parallel>, #tpu.dimension_semantics<parallel>], iteration_bounds = array<i64: 2, 1>, scalar_prefetch = 0 : i64, scratch_operands = 1 : i64, tpu.core_type = #tpu.core_type<tc>, window_params = [{transform_indices = @transform_0, window_bounds = array<i64: 1, 1, 18, 18, 4>}, {pipeline_mode = #tpu.pipeline_mode<synchronous>, transform_indices = @transform_1, window_bounds = array<i64: 3, 3, 4, 4>}, {pipeline_mode = #tpu.pipeline_mode<synchronous>, transform_indices = @transform_2, window_bounds = array<i64: 1, 4>}, {pipeline_mode = #tpu.pipeline_mode<synchronous>, transform_indices = @transform_3, window_bounds = array<i64: 1, 4>}, {transform_indices = @transform_4, window_bounds = array<i64: 1, 16, 16, 4>}, {transform_indices = @transform_5, window_bounds = array<i64: 1, 1, 2, 4>}]} {
    %c16_i32 = arith.constant 16 : i32
    %0 = arith.muli %arg1, %c16_i32 : i32
    %cst = arith.constant 0.000000e+00 : f32
    %1 = vector.broadcast %cst : f32 to vector<256x4xf32>
    %c0 = arith.constant 0 : index
    %c0_0 = arith.constant 0 : index
    %2 = vector.load %arg8[%c0, %c0_0] : memref<256x4xf32, #tpu.memory_space<vmem>>, vector<256x4xf32>
    tpu.vector_store %arg8[%c0, %c0_0], %1 {strides = array<i32>} : memref<256x4xf32, #tpu.memory_space<vmem>>, vector<256x4xf32>,
    %c0_i32 = arith.constant 0 : i32
    %3 = arith.addi %0, %c0_i32 : i32
    %c0_1 = arith.constant 0 : index
    %c0_2 = arith.constant 0 : index
    %4 = arith.index_cast %3 : i32 to index
    %c0_3 = arith.constant 0 : index
    %c0_4 = arith.constant 0 : index
    %5 = vector.load %arg2[%c0_1, %c0_2, %4, %c0_3, %c0_4] : memref<1x1x18x18x4xf32, #tpu.memory_space<vmem>>, vector<1x1x16x16x4xf32>
    %6 = vector.shape_cast %5 : vector<1x1x16x16x4xf32> to vector<16x16x4xf32>
    %7 = vector.shape_cast %6 : vector<16x16x4xf32> to vector<256x4xf32>
    %c0_5 = arith.constant 0 : index
    %c0_6 = arith.constant 0 : index
    %8 = vector.load %arg4[%c0_5, %c0_6] : memref<1x4xf32, #tpu.memory_space<vmem>>, vector<1x4xf32>
    %9 = vector.broadcast %8 : vector<1x4xf32> to vector<256x4xf32>
    %10 = arith.mulf %7, %9 : vector<256x4xf32>
    %c0_7 = arith.constant 0 : index
    %c0_8 = arith.constant 0 : index
    %11 = vector.load %arg5[%c0_7, %c0_8] : memref<1x4xf32, #tpu.memory_space<vmem>>, vector<1x4xf32>
    %12 = vector.broadcast %11 : vector<1x4xf32> to vector<256x4xf32>
    %13 = arith.addf %10, %12 : vector<256x4xf32>
    %cst_9 = arith.constant 0.000000e+00 : f32
    %14 = vector.broadcast %cst_9 : f32 to vector<256x4xf32>
    %15 = arith.maximumf %13, %14 : vector<256x4xf32>
    %c0_10 = arith.constant 0 : index
    %c0_11 = arith.constant 0 : index
    %16 = vector.load %arg8[%c0_10, %c0_11] : memref<256x4xf32, #tpu.memory_space<vmem>>, vector<256x4xf32>
    %c0_12 = arith.constant 0 : index
    %c0_13 = arith.constant 0 : index
    %c0_14 = arith.constant 0 : index
    %c0_15 = arith.constant 0 : index
    %17 = vector.load %arg3[%c0_12, %c0_13, %c0_14, %c0_15] : memref<3x3x4x4xf32, #tpu.memory_space<vmem>>, vector<1x1x4x4xf32>
    %18 = vector.shape_cast %17 : vector<1x1x4x4xf32> to vector<4x4xf32>
    %cst_16 = arith.constant dense<0.000000e+00> : vector<256x4xf32>
    %19 = tpu.matmul %15, %18, %cst_16 {dimension_numbers = #tpu.dot_dimension_numbers<[1], [0], [0], [1], [0, 0, 1, 1], [], []>} : vector<256x4xf32>, vector<4x4xf32>, vector<256x4xf32> -> vector<256x4xf32>
    %20 = arith.addf %16, %19 : vector<256x4xf32>
    %c0_17 = arith.constant 0 : index
    %c0_18 = arith.constant 0 : index
    %21 = vector.load %arg8[%c0_17, %c0_18] : memref<256x4xf32, #tpu.memory_space<vmem>>, vector<256x4xf32>
    tpu.vector_store %arg8[%c0_17, %c0_18], %20 {strides = array<i32>} : memref<256x4xf32, #tpu.memory_space<vmem>>, vector<256x4xf32>,
    %c0_i32_19 = arith.constant 0 : i32
    %22 = arith.addi %0, %c0_i32_19 : i32
    %c0_20 = arith.constant 0 : index
    %c0_21 = arith.constant 0 : index
    %23 = arith.index_cast %22 : i32 to index
    %c1 = arith.constant 1 : index
    %c0_22 = arith.constant 0 : index
    %24 = vector.load %arg2[%c0_20, %c0_21, %23, %c1, %c0_22] : memref<1x1x18x18x4xf32, #tpu.memory_space<vmem>>, vector<1x1x16x16x4xf32>
    %25 = vector.shape_cast %24 : vector<1x1x16x16x4xf32> to vector<16x16x4xf32>
    %26 = vector.shape_cast %25 : vector<16x16x4xf32> to vector<256x4xf32>
    %c0_23 = arith.constant 0 : index
    %c0_24 = arith.constant 0 : index
    %27 = vector.load %arg4[%c0_23, %c0_24] : memref<1x4xf32, #tpu.memory_space<vmem>>, vector<1x4xf32>
    %28 = vector.broadcast %27 : vector<1x4xf32> to vector<256x4xf32>
    %29 = arith.mulf %26, %28 : vector<256x4xf32>
    %c0_25 = arith.constant 0 : index
    %c0_26 = arith.constant 0 : index
    %30 = vector.load %arg5[%c0_25, %c0_26] : memref<1x4xf32, #tpu.memory_space<vmem>>, vector<1x4xf32>
    %31 = vector.broadcast %30 : vector<1x4xf32> to vector<256x4xf32>
    %32 = arith.addf %29, %31 : vector<256x4xf32>
    %cst_27 = arith.constant 0.000000e+00 : f32
    %33 = vector.broadcast %cst_27 : f32 to vector<256x4xf32>
    %34 = arith.maximumf %32, %33 : vector<256x4xf32>
    %c0_28 = arith.constant 0 : index
    %c0_29 = arith.constant 0 : index
    %35 = vector.load %arg8[%c0_28, %c0_29] : memref<256x4xf32, #tpu.memory_space<vmem>>, vector<256x4xf32>
    %c0_30 = arith.constant 0 : index
    %c1_31 = arith.constant 1 : index
    %c0_32 = arith.constant 0 : index
    %c0_33 = arith.constant 0 : index
    %36 = vector.load %arg3[%c0_30, %c1_31, %c0_32, %c0_33] : memref<3x3x4x4xf32, #tpu.memory_space<vmem>>, vector<1x1x4x4xf32>
    %37 = vector.shape_cast %36 : vector<1x1x4x4xf32> to vector<4x4xf32>
    %cst_34 = arith.constant dense<0.000000e+00> : vector<256x4xf32>
    %38 = tpu.matmul %34, %37, %cst_34 {dimension_numbers = #tpu.dot_dimension_numbers<[1], [0], [0], [1], [0, 0, 1, 1], [], []>} : vector<256x4xf32>, vector<4x4xf32>, vector<256x4xf32> -> vector<256x4xf32>
    %39 = arith.addf %35, %38 : vector<256x4xf32>
    %c0_35 = arith.constant 0 : index
    %c0_36 = arith.constant 0 : index
    %40 = vector.load %arg8[%c0_35, %c0_36] : memref<256x4xf32, #tpu.memory_space<vmem>>, vector<256x4xf32>
    tpu.vector_store %arg8[%c0_35, %c0_36], %39 {strides = array<i32>} : memref<256x4xf32, #tpu.memory_space<vmem>>, vector<256x4xf32>,
    %c0_i32_37 = arith.constant 0 : i32
    %41 = arith.addi %0, %c0_i32_37 : i32
    %c0_38 = arith.constant 0 : index
    %c0_39 = arith.constant 0 : index
    %42 = arith.index_cast %41 : i32 to index
    %c2 = arith.constant 2 : index
    %c0_40 = arith.constant 0 : index
    %43 = vector.load %arg2[%c0_38, %c0_39, %42, %c2, %c0_40] : memref<1x1x18x18x4xf32, #tpu.memory_space<vmem>>, vector<1x1x16x16x4xf32>
    %44 = vector.shape_cast %43 : vector<1x1x16x16x4xf32> to vector<16x16x4xf32>
    %45 = vector.shape_cast %44 : vector<16x16x4xf32> to vector<256x4xf32>
    %c0_41 = arith.constant 0 : index
    %c0_42 = arith.constant 0 : index
    %46 = vector.load %arg4[%c0_41, %c0_42] : memref<1x4xf32, #tpu.memory_space<vmem>>, vector<1x4xf32>
    %47 = vector.broadcast %46 : vector<1x4xf32> to vector<256x4xf32>
    %48 = arith.mulf %45, %47 : vector<256x4xf32>
    %c0_43 = arith.constant 0 : index
    %c0_44 = arith.constant 0 : index
    %49 = vector.load %arg5[%c0_43, %c0_44] : memref<1x4xf32, #tpu.memory_space<vmem>>, vector<1x4xf32>
    %50 = vector.broadcast %49 : vector<1x4xf32> to vector<256x4xf32>
    %51 = arith.addf %48, %50 : vector<256x4xf32>
    %cst_45 = arith.constant 0.000000e+00 : f32
    %52 = vector.broadcast %cst_45 : f32 to vector<256x4xf32>
    %53 = arith.maximumf %51, %52 : vector<256x4xf32>
    %c0_46 = arith.constant 0 : index
    %c0_47 = arith.constant 0 : index
    %54 = vector.load %arg8[%c0_46, %c0_47] : memref<256x4xf32, #tpu.memory_space<vmem>>, vector<256x4xf32>
    %c0_48 = arith.constant 0 : index
    %c2_49 = arith.constant 2 : index
    %c0_50 = arith.constant 0 : index
    %c0_51 = arith.constant 0 : index
    %55 = vector.load %arg3[%c0_48, %c2_49, %c0_50, %c0_51] : memref<3x3x4x4xf32, #tpu.memory_space<vmem>>, vector<1x1x4x4xf32>
    %56 = vector.shape_cast %55 : vector<1x1x4x4xf32> to vector<4x4xf32>
    %cst_52 = arith.constant dense<0.000000e+00> : vector<256x4xf32>
    %57 = tpu.matmul %53, %56, %cst_52 {dimension_numbers = #tpu.dot_dimension_numbers<[1], [0], [0], [1], [0, 0, 1, 1], [], []>} : vector<256x4xf32>, vector<4x4xf32>, vector<256x4xf32> -> vector<256x4xf32>
    %58 = arith.addf %54, %57 : vector<256x4xf32>
    %c0_53 = arith.constant 0 : index
    %c0_54 = arith.constant 0 : index
    %59 = vector.load %arg8[%c0_53, %c0_54] : memref<256x4xf32, #tpu.memory_space<vmem>>, vector<256x4xf32>
    tpu.vector_store %arg8[%c0_53, %c0_54], %58 {strides = array<i32>} : memref<256x4xf32, #tpu.memory_space<vmem>>, vector<256x4xf32>,
    %c1_i32 = arith.constant 1 : i32
    %60 = arith.addi %0, %c1_i32 : i32
    %c0_55 = arith.constant 0 : index
    %c0_56 = arith.constant 0 : index
    %61 = arith.index_cast %60 : i32 to index
    %c0_57 = arith.constant 0 : index
    %c0_58 = arith.constant 0 : index
    %62 = vector.load %arg2[%c0_55, %c0_56, %61, %c0_57, %c0_58] : memref<1x1x18x18x4xf32, #tpu.memory_space<vmem>>, vector<1x1x16x16x4xf32>
    %63 = vector.shape_cast %62 : vector<1x1x16x16x4xf32> to vector<16x16x4xf32>
    %64 = vector.shape_cast %63 : vector<16x16x4xf32> to vector<256x4xf32>
    %c0_59 = arith.constant 0 : index
    %c0_60 = arith.constant 0 : index
    %65 = vector.load %arg4[%c0_59, %c0_60] : memref<1x4xf32, #tpu.memory_space<vmem>>, vector<1x4xf32>
    %66 = vector.broadcast %65 : vector<1x4xf32> to vector<256x4xf32>
    %67 = arith.mulf %64, %66 : vector<256x4xf32>
    %c0_61 = arith.constant 0 : index
    %c0_62 = arith.constant 0 : index
    %68 = vector.load %arg5[%c0_61, %c0_62] : memref<1x4xf32, #tpu.memory_space<vmem>>, vector<1x4xf32>
    %69 = vector.broadcast %68 : vector<1x4xf32> to vector<256x4xf32>
    %70 = arith.addf %67, %69 : vector<256x4xf32>
    %cst_63 = arith.constant 0.000000e+00 : f32
    %71 = vector.broadcast %cst_63 : f32 to vector<256x4xf32>
    %72 = arith.maximumf %70, %71 : vector<256x4xf32>
    %c0_64 = arith.constant 0 : index
    %c0_65 = arith.constant 0 : index
    %73 = vector.load %arg8[%c0_64, %c0_65] : memref<256x4xf32, #tpu.memory_space<vmem>>, vector<256x4xf32>
    %c1_66 = arith.constant 1 : index
    %c0_67 = arith.constant 0 : index
    %c0_68 = arith.constant 0 : index
    %c0_69 = arith.constant 0 : index
    %74 = vector.load %arg3[%c1_66, %c0_67, %c0_68, %c0_69] : memref<3x3x4x4xf32, #tpu.memory_space<vmem>>, vector<1x1x4x4xf32>
    %75 = vector.shape_cast %74 : vector<1x1x4x4xf32> to vector<4x4xf32>
    %cst_70 = arith.constant dense<0.000000e+00> : vector<256x4xf32>
    %76 = tpu.matmul %72, %75, %cst_70 {dimension_numbers = #tpu.dot_dimension_numbers<[1], [0], [0], [1], [0, 0, 1, 1], [], []>} : vector<256x4xf32>, vector<4x4xf32>, vector<256x4xf32> -> vector<256x4xf32>
    %77 = arith.addf %73, %76 : vector<256x4xf32>
    %c0_71 = arith.constant 0 : index
    %c0_72 = arith.constant 0 : index
    %78 = vector.load %arg8[%c0_71, %c0_72] : memref<256x4xf32, #tpu.memory_space<vmem>>, vector<256x4xf32>
    tpu.vector_store %arg8[%c0_71, %c0_72], %77 {strides = array<i32>} : memref<256x4xf32, #tpu.memory_space<vmem>>, vector<256x4xf32>,
    %c1_i32_73 = arith.constant 1 : i32
    %79 = arith.addi %0, %c1_i32_73 : i32
    %c0_74 = arith.constant 0 : index
    %c0_75 = arith.constant 0 : index
    %80 = arith.index_cast %79 : i32 to index
    %c1_76 = arith.constant 1 : index
    %c0_77 = arith.constant 0 : index
    %81 = vector.load %arg2[%c0_74, %c0_75, %80, %c1_76, %c0_77] : memref<1x1x18x18x4xf32, #tpu.memory_space<vmem>>, vector<1x1x16x16x4xf32>
    %82 = vector.shape_cast %81 : vector<1x1x16x16x4xf32> to vector<16x16x4xf32>
    %83 = vector.shape_cast %82 : vector<16x16x4xf32> to vector<256x4xf32>
    %c0_78 = arith.constant 0 : index
    %c0_79 = arith.constant 0 : index
    %84 = vector.load %arg4[%c0_78, %c0_79] : memref<1x4xf32, #tpu.memory_space<vmem>>, vector<1x4xf32>
    %85 = vector.broadcast %84 : vector<1x4xf32> to vector<256x4xf32>
    %86 = arith.mulf %83, %85 : vector<256x4xf32>
    %c0_80 = arith.constant 0 : index
    %c0_81 = arith.constant 0 : index
    %87 = vector.load %arg5[%c0_80, %c0_81] : memref<1x4xf32, #tpu.memory_space<vmem>>, vector<1x4xf32>
    %88 = vector.broadcast %87 : vector<1x4xf32> to vector<256x4xf32>
    %89 = arith.addf %86, %88 : vector<256x4xf32>
    %cst_82 = arith.constant 0.000000e+00 : f32
    %90 = vector.broadcast %cst_82 : f32 to vector<256x4xf32>
    %91 = arith.maximumf %89, %90 : vector<256x4xf32>
    %c0_83 = arith.constant 0 : index
    %c0_84 = arith.constant 0 : index
    %92 = vector.load %arg8[%c0_83, %c0_84] : memref<256x4xf32, #tpu.memory_space<vmem>>, vector<256x4xf32>
    %c1_85 = arith.constant 1 : index
    %c1_86 = arith.constant 1 : index
    %c0_87 = arith.constant 0 : index
    %c0_88 = arith.constant 0 : index
    %93 = vector.load %arg3[%c1_85, %c1_86, %c0_87, %c0_88] : memref<3x3x4x4xf32, #tpu.memory_space<vmem>>, vector<1x1x4x4xf32>
    %94 = vector.shape_cast %93 : vector<1x1x4x4xf32> to vector<4x4xf32>
    %cst_89 = arith.constant dense<0.000000e+00> : vector<256x4xf32>
    %95 = tpu.matmul %91, %94, %cst_89 {dimension_numbers = #tpu.dot_dimension_numbers<[1], [0], [0], [1], [0, 0, 1, 1], [], []>} : vector<256x4xf32>, vector<4x4xf32>, vector<256x4xf32> -> vector<256x4xf32>
    %96 = arith.addf %92, %95 : vector<256x4xf32>
    %c0_90 = arith.constant 0 : index
    %c0_91 = arith.constant 0 : index
    %97 = vector.load %arg8[%c0_90, %c0_91] : memref<256x4xf32, #tpu.memory_space<vmem>>, vector<256x4xf32>
    tpu.vector_store %arg8[%c0_90, %c0_91], %96 {strides = array<i32>} : memref<256x4xf32, #tpu.memory_space<vmem>>, vector<256x4xf32>,
    %c1_i32_92 = arith.constant 1 : i32
    %98 = arith.addi %0, %c1_i32_92 : i32
    %c0_93 = arith.constant 0 : index
    %c0_94 = arith.constant 0 : index
    %99 = arith.index_cast %98 : i32 to index
    %c2_95 = arith.constant 2 : index
    %c0_96 = arith.constant 0 : index
    %100 = vector.load %arg2[%c0_93, %c0_94, %99, %c2_95, %c0_96] : memref<1x1x18x18x4xf32, #tpu.memory_space<vmem>>, vector<1x1x16x16x4xf32>
    %101 = vector.shape_cast %100 : vector<1x1x16x16x4xf32> to vector<16x16x4xf32>
    %102 = vector.shape_cast %101 : vector<16x16x4xf32> to vector<256x4xf32>
    %c0_97 = arith.constant 0 : index
    %c0_98 = arith.constant 0 : index
    %103 = vector.load %arg4[%c0_97, %c0_98] : memref<1x4xf32, #tpu.memory_space<vmem>>, vector<1x4xf32>
    %104 = vector.broadcast %103 : vector<1x4xf32> to vector<256x4xf32>
    %105 = arith.mulf %102, %104 : vector<256x4xf32>
    %c0_99 = arith.constant 0 : index
    %c0_100 = arith.constant 0 : index
    %106 = vector.load %arg5[%c0_99, %c0_100] : memref<1x4xf32, #tpu.memory_space<vmem>>, vector<1x4xf32>
    %107 = vector.broadcast %106 : vector<1x4xf32> to vector<256x4xf32>
    %108 = arith.addf %105, %107 : vector<256x4xf32>
    %cst_101 = arith.constant 0.000000e+00 : f32
    %109 = vector.broadcast %cst_101 : f32 to vector<256x4xf32>
    %110 = arith.maximumf %108, %109 : vector<256x4xf32>
    %c0_102 = arith.constant 0 : index
    %c0_103 = arith.constant 0 : index
    %111 = vector.load %arg8[%c0_102, %c0_103] : memref<256x4xf32, #tpu.memory_space<vmem>>, vector<256x4xf32>
    %c1_104 = arith.constant 1 : index
    %c2_105 = arith.constant 2 : index
    %c0_106 = arith.constant 0 : index
    %c0_107 = arith.constant 0 : index
    %112 = vector.load %arg3[%c1_104, %c2_105, %c0_106, %c0_107] : memref<3x3x4x4xf32, #tpu.memory_space<vmem>>, vector<1x1x4x4xf32>
    %113 = vector.shape_cast %112 : vector<1x1x4x4xf32> to vector<4x4xf32>
    %cst_108 = arith.constant dense<0.000000e+00> : vector<256x4xf32>
    %114 = tpu.matmul %110, %113, %cst_108 {dimension_numbers = #tpu.dot_dimension_numbers<[1], [0], [0], [1], [0, 0, 1, 1], [], []>} : vector<256x4xf32>, vector<4x4xf32>, vector<256x4xf32> -> vector<256x4xf32>
    %115 = arith.addf %111, %114 : vector<256x4xf32>
    %c0_109 = arith.constant 0 : index
    %c0_110 = arith.constant 0 : index
    %116 = vector.load %arg8[%c0_109, %c0_110] : memref<256x4xf32, #tpu.memory_space<vmem>>, vector<256x4xf32>
    tpu.vector_store %arg8[%c0_109, %c0_110], %115 {strides = array<i32>} : memref<256x4xf32, #tpu.memory_space<vmem>>, vector<256x4xf32>,
    %c2_i32 = arith.constant 2 : i32
    %117 = arith.addi %0, %c2_i32 : i32
    %c0_111 = arith.constant 0 : index
    %c0_112 = arith.constant 0 : index
    %118 = arith.index_cast %117 : i32 to index
    %c0_113 = arith.constant 0 : index
    %c0_114 = arith.constant 0 : index
    %119 = vector.load %arg2[%c0_111, %c0_112, %118, %c0_113, %c0_114] : memref<1x1x18x18x4xf32, #tpu.memory_space<vmem>>, vector<1x1x16x16x4xf32>
    %120 = vector.shape_cast %119 : vector<1x1x16x16x4xf32> to vector<16x16x4xf32>
    %121 = vector.shape_cast %120 : vector<16x16x4xf32> to vector<256x4xf32>
    %c0_115 = arith.constant 0 : index
    %c0_116 = arith.constant 0 : index
    %122 = vector.load %arg4[%c0_115, %c0_116] : memref<1x4xf32, #tpu.memory_space<vmem>>, vector<1x4xf32>
    %123 = vector.broadcast %122 : vector<1x4xf32> to vector<256x4xf32>
    %124 = arith.mulf %121, %123 : vector<256x4xf32>
    %c0_117 = arith.constant 0 : index
    %c0_118 = arith.constant 0 : index
    %125 = vector.load %arg5[%c0_117, %c0_118] : memref<1x4xf32, #tpu.memory_space<vmem>>, vector<1x4xf32>
    %126 = vector.broadcast %125 : vector<1x4xf32> to vector<256x4xf32>
    %127 = arith.addf %124, %126 : vector<256x4xf32>
    %cst_119 = arith.constant 0.000000e+00 : f32
    %128 = vector.broadcast %cst_119 : f32 to vector<256x4xf32>
    %129 = arith.maximumf %127, %128 : vector<256x4xf32>
    %c0_120 = arith.constant 0 : index
    %c0_121 = arith.constant 0 : index
    %130 = vector.load %arg8[%c0_120, %c0_121] : memref<256x4xf32, #tpu.memory_space<vmem>>, vector<256x4xf32>
    %c2_122 = arith.constant 2 : index
    %c0_123 = arith.constant 0 : index
    %c0_124 = arith.constant 0 : index
    %c0_125 = arith.constant 0 : index
    %131 = vector.load %arg3[%c2_122, %c0_123, %c0_124, %c0_125] : memref<3x3x4x4xf32, #tpu.memory_space<vmem>>, vector<1x1x4x4xf32>
    %132 = vector.shape_cast %131 : vector<1x1x4x4xf32> to vector<4x4xf32>
    %cst_126 = arith.constant dense<0.000000e+00> : vector<256x4xf32>
    %133 = tpu.matmul %129, %132, %cst_126 {dimension_numbers = #tpu.dot_dimension_numbers<[1], [0], [0], [1], [0, 0, 1, 1], [], []>} : vector<256x4xf32>, vector<4x4xf32>, vector<256x4xf32> -> vector<256x4xf32>
    %134 = arith.addf %130, %133 : vector<256x4xf32>
    %c0_127 = arith.constant 0 : index
    %c0_128 = arith.constant 0 : index
    %135 = vector.load %arg8[%c0_127, %c0_128] : memref<256x4xf32, #tpu.memory_space<vmem>>, vector<256x4xf32>
    tpu.vector_store %arg8[%c0_127, %c0_128], %134 {strides = array<i32>} : memref<256x4xf32, #tpu.memory_space<vmem>>, vector<256x4xf32>,
    %c2_i32_129 = arith.constant 2 : i32
    %136 = arith.addi %0, %c2_i32_129 : i32
    %c0_130 = arith.constant 0 : index
    %c0_131 = arith.constant 0 : index
    %137 = arith.index_cast %136 : i32 to index
    %c1_132 = arith.constant 1 : index
    %c0_133 = arith.constant 0 : index
    %138 = vector.load %arg2[%c0_130, %c0_131, %137, %c1_132, %c0_133] : memref<1x1x18x18x4xf32, #tpu.memory_space<vmem>>, vector<1x1x16x16x4xf32>
    %139 = vector.shape_cast %138 : vector<1x1x16x16x4xf32> to vector<16x16x4xf32>
    %140 = vector.shape_cast %139 : vector<16x16x4xf32> to vector<256x4xf32>
    %c0_134 = arith.constant 0 : index
    %c0_135 = arith.constant 0 : index
    %141 = vector.load %arg4[%c0_134, %c0_135] : memref<1x4xf32, #tpu.memory_space<vmem>>, vector<1x4xf32>
    %142 = vector.broadcast %141 : vector<1x4xf32> to vector<256x4xf32>
    %143 = arith.mulf %140, %142 : vector<256x4xf32>
    %c0_136 = arith.constant 0 : index
    %c0_137 = arith.constant 0 : index
    %144 = vector.load %arg5[%c0_136, %c0_137] : memref<1x4xf32, #tpu.memory_space<vmem>>, vector<1x4xf32>
    %145 = vector.broadcast %144 : vector<1x4xf32> to vector<256x4xf32>
    %146 = arith.addf %143, %145 : vector<256x4xf32>
    %cst_138 = arith.constant 0.000000e+00 : f32
    %147 = vector.broadcast %cst_138 : f32 to vector<256x4xf32>
    %148 = arith.maximumf %146, %147 : vector<256x4xf32>
    %c0_139 = arith.constant 0 : index
    %c0_140 = arith.constant 0 : index
    %149 = vector.load %arg8[%c0_139, %c0_140] : memref<256x4xf32, #tpu.memory_space<vmem>>, vector<256x4xf32>
    %c2_141 = arith.constant 2 : index
    %c1_142 = arith.constant 1 : index
    %c0_143 = arith.constant 0 : index
    %c0_144 = arith.constant 0 : index
    %150 = vector.load %arg3[%c2_141, %c1_142, %c0_143, %c0_144] : memref<3x3x4x4xf32, #tpu.memory_space<vmem>>, vector<1x1x4x4xf32>
    %151 = vector.shape_cast %150 : vector<1x1x4x4xf32> to vector<4x4xf32>
    %cst_145 = arith.constant dense<0.000000e+00> : vector<256x4xf32>
    %152 = tpu.matmul %148, %151, %cst_145 {dimension_numbers = #tpu.dot_dimension_numbers<[1], [0], [0], [1], [0, 0, 1, 1], [], []>} : vector<256x4xf32>, vector<4x4xf32>, vector<256x4xf32> -> vector<256x4xf32>
    %153 = arith.addf %149, %152 : vector<256x4xf32>
    %c0_146 = arith.constant 0 : index
    %c0_147 = arith.constant 0 : index
    %154 = vector.load %arg8[%c0_146, %c0_147] : memref<256x4xf32, #tpu.memory_space<vmem>>, vector<256x4xf32>
    tpu.vector_store %arg8[%c0_146, %c0_147], %153 {strides = array<i32>} : memref<256x4xf32, #tpu.memory_space<vmem>>, vector<256x4xf32>,
    %c2_i32_148 = arith.constant 2 : i32
    %155 = arith.addi %0, %c2_i32_148 : i32
    %c0_149 = arith.constant 0 : index
    %c0_150 = arith.constant 0 : index
    %156 = arith.index_cast %155 : i32 to index
    %c2_151 = arith.constant 2 : index
    %c0_152 = arith.constant 0 : index
    %157 = vector.load %arg2[%c0_149, %c0_150, %156, %c2_151, %c0_152] : memref<1x1x18x18x4xf32, #tpu.memory_space<vmem>>, vector<1x1x16x16x4xf32>
    %158 = vector.shape_cast %157 : vector<1x1x16x16x4xf32> to vector<16x16x4xf32>
    %159 = vector.shape_cast %158 : vector<16x16x4xf32> to vector<256x4xf32>
    %c0_153 = arith.constant 0 : index
    %c0_154 = arith.constant 0 : index
    %160 = vector.load %arg4[%c0_153, %c0_154] : memref<1x4xf32, #tpu.memory_space<vmem>>, vector<1x4xf32>
    %161 = vector.broadcast %160 : vector<1x4xf32> to vector<256x4xf32>
    %162 = arith.mulf %159, %161 : vector<256x4xf32>
    %c0_155 = arith.constant 0 : index
    %c0_156 = arith.constant 0 : index
    %163 = vector.load %arg5[%c0_155, %c0_156] : memref<1x4xf32, #tpu.memory_space<vmem>>, vector<1x4xf32>
    %164 = vector.broadcast %163 : vector<1x4xf32> to vector<256x4xf32>
    %165 = arith.addf %162, %164 : vector<256x4xf32>
    %cst_157 = arith.constant 0.000000e+00 : f32
    %166 = vector.broadcast %cst_157 : f32 to vector<256x4xf32>
    %167 = arith.maximumf %165, %166 : vector<256x4xf32>
    %c0_158 = arith.constant 0 : index
    %c0_159 = arith.constant 0 : index
    %168 = vector.load %arg8[%c0_158, %c0_159] : memref<256x4xf32, #tpu.memory_space<vmem>>, vector<256x4xf32>
    %c2_160 = arith.constant 2 : index
    %c2_161 = arith.constant 2 : index
    %c0_162 = arith.constant 0 : index
    %c0_163 = arith.constant 0 : index
    %169 = vector.load %arg3[%c2_160, %c2_161, %c0_162, %c0_163] : memref<3x3x4x4xf32, #tpu.memory_space<vmem>>, vector<1x1x4x4xf32>
    %170 = vector.shape_cast %169 : vector<1x1x4x4xf32> to vector<4x4xf32>
    %cst_164 = arith.constant dense<0.000000e+00> : vector<256x4xf32>
    %171 = tpu.matmul %167, %170, %cst_164 {dimension_numbers = #tpu.dot_dimension_numbers<[1], [0], [0], [1], [0, 0, 1, 1], [], []>} : vector<256x4xf32>, vector<4x4xf32>, vector<256x4xf32> -> vector<256x4xf32>
    %172 = arith.addf %168, %171 : vector<256x4xf32>
    %c0_165 = arith.constant 0 : index
    %c0_166 = arith.constant 0 : index
    %173 = vector.load %arg8[%c0_165, %c0_166] : memref<256x4xf32, #tpu.memory_space<vmem>>, vector<256x4xf32>
    tpu.vector_store %arg8[%c0_165, %c0_166], %172 {strides = array<i32>} : memref<256x4xf32, #tpu.memory_space<vmem>>, vector<256x4xf32>,
    %c0_167 = arith.constant 0 : index
    %c0_168 = arith.constant 0 : index
    %174 = vector.load %arg8[%c0_167, %c0_168] : memref<256x4xf32, #tpu.memory_space<vmem>>, vector<256x4xf32>
    %175 = vector.shape_cast %174 : vector<256x4xf32> to vector<1x16x16x4xf32>
    %c0_169 = arith.constant 0 : index
    %c0_170 = arith.constant 0 : index
    %c0_171 = arith.constant 0 : index
    %c0_172 = arith.constant 0 : index
    %176 = vector.load %arg6[%c0_169, %c0_170, %c0_171, %c0_172] : memref<1x16x16x4xf32, #tpu.memory_space<vmem>>, vector<1x16x16x4xf32>
    tpu.vector_store %arg6[%c0_169, %c0_170, %c0_171, %c0_172], %175 {strides = array<i32>} : memref<1x16x16x4xf32, #tpu.memory_space<vmem>>, vector<1x16x16x4xf32>,
    %cst_173 = arith.constant dense<0.000000e+00> : vector<4xf32>
    %177 = vector.multi_reduction <add>, %174, %cst_173 [0] : vector<256x4xf32> to vector<4xf32>
    %178 = vector.shape_cast %177 : vector<4xf32> to vector<1x4xf32>
    %c0_174 = arith.constant 0 : index
    %c0_175 = arith.constant 0 : index
    %c0_176 = arith.constant 0 : index
    %c0_177 = arith.constant 0 : index
    %179 = vector.load %arg7[%c0_174, %c0_175, %c0_176, %c0_177] : memref<1x1x2x4xf32, #tpu.memory_space<vmem>>, vector<1x1x1x4xf32>
    %180 = vector.shape_cast %179 : vector<1x1x1x4xf32> to vector<1x4xf32>
    %181 = vector.shape_cast %178 : vector<1x4xf32> to vector<1x1x1x4xf32>
    tpu.vector_store %arg7[%c0_174, %c0_175, %c0_176, %c0_177], %181 {strides = array<i32>} : memref<1x1x2x4xf32, #tpu.memory_space<vmem>>, vector<1x1x1x4xf32>,
    %182 = arith.mulf %174, %174 : vector<256x4xf32>
    %cst_178 = arith.constant dense<0.000000e+00> : vector<4xf32>
    %183 = vector.multi_reduction <add>, %182, %cst_178 [0] : vector<256x4xf32> to vector<4xf32>
    %184 = vector.shape_cast %183 : vector<4xf32> to vector<1x4xf32>
    %c0_179 = arith.constant 0 : index
    %c0_180 = arith.constant 0 : index
    %c1_181 = arith.constant 1 : index
    %c0_182 = arith.constant 0 : index
    %185 = vector.load %arg7[%c0_179, %c0_180, %c1_181, %c0_182] : memref<1x1x2x4xf32, #tpu.memory_space<vmem>>, vector<1x1x1x4xf32>
    %186 = vector.shape_cast %185 : vector<1x1x1x4xf32> to vector<1x4xf32>
    %187 = vector.shape_cast %184 : vector<1x4xf32> to vector<1x1x1x4xf32>
    tpu.vector_store %arg7[%c0_179, %c0_180, %c1_181, %c0_182], %187 {strides = array<i32>} : memref<1x1x2x4xf32, #tpu.memory_space<vmem>>, vector<1x1x1x4xf32>,
    return
  }
  func.func @transform_0(%arg0: i32, %arg1: i32) -> (i32, i32, i32, i32, i32) {
    %c0_i32 = arith.constant 0 : i32
    %c0_i32_0 = arith.constant 0 : i32
    %c0_i32_1 = arith.constant 0 : i32
    %c0_i32_2 = arith.constant 0 : i32
    %c0_i32_3 = arith.constant 0 : i32
    return %c0_i32, %arg0, %c0_i32_0, %c0_i32_1, %c0_i32_2 : i32, i32, i32, i32, i32
  }
  func.func @transform_1(%arg0: i32, %arg1: i32) -> (i32, i32, i32, i32) {
    %c0_i32 = arith.constant 0 : i32
    %c0_i32_0 = arith.constant 0 : i32
    %c0_i32_1 = arith.constant 0 : i32
    %c0_i32_2 = arith.constant 0 : i32
    %c0_i32_3 = arith.constant 0 : i32
    return %c0_i32, %c0_i32_0, %c0_i32_1, %c0_i32_2 : i32, i32, i32, i32
  }
  func.func @transform_2(%arg0: i32, %arg1: i32) -> (i32, i32) {
    %c0_i32 = arith.constant 0 : i32
    %c0_i32_0 = arith.constant 0 : i32
    %c0_i32_1 = arith.constant 0 : i32
    return %c0_i32, %c0_i32_0 : i32, i32
  }
  func.func @transform_3(%arg0: i32, %arg1: i32) -> (i32, i32) {
    %c0_i32 = arith.constant 0 : i32
    %c0_i32_0 = arith.constant 0 : i32
    %c0_i32_1 = arith.constant 0 : i32
    return %c0_i32, %c0_i32_0 : i32, i32
  }
  func.func @transform_4(%arg0: i32, %arg1: i32) -> (i32, i32, i32, i32) {
    %c0_i32 = arith.constant 0 : i32
    %c0_i32_0 = arith.constant 0 : i32
    %c0_i32_1 = arith.constant 0 : i32
    return %arg0, %arg1, %c0_i32, %c0_i32_0 : i32, i32, i32, i32
  }
  func.func @transform_5(%arg0: i32, %arg1: i32) -> (i32, i32, i32, i32) {
    %c0_i32 = arith.constant 0 : i32
    %c0_i32_0 = arith.constant 0 : i32
    %c0_i32_1 = arith.constant 0 : i32
    return %arg0, %arg1, %c0_i32, %c0_i32_0 : i32, i32, i32, i32
  }
}

module attributes {stable_mosaic.version = 11 : i64} {
  func.func @_pw_conv_kernel(%arg0: i32, %arg1: memref<512x4xf32, #tpu.memory_space<vmem>>, %arg2: memref<4x16xf32, #tpu.memory_space<vmem>>, %arg3: memref<1x4xf32, #tpu.memory_space<vmem>>, %arg4: memref<1x4xf32, #tpu.memory_space<vmem>>, %arg5: memref<512x16xf32, #tpu.memory_space<vmem>>, %arg6: memref<1x2x16xf32, #tpu.memory_space<vmem>>) attributes {dimension_semantics = [#tpu.dimension_semantics<parallel>], iteration_bounds = array<i64: 1>, scalar_prefetch = 0 : i64, scratch_operands = 0 : i64, tpu.core_type = #tpu.core_type<tc>, window_params = [{transform_indices = @transform_0, window_bounds = array<i64: 512, 4>}, {pipeline_mode = #tpu.pipeline_mode<synchronous>, transform_indices = @transform_1, window_bounds = array<i64: 4, 16>}, {pipeline_mode = #tpu.pipeline_mode<synchronous>, transform_indices = @transform_2, window_bounds = array<i64: 1, 4>}, {pipeline_mode = #tpu.pipeline_mode<synchronous>, transform_indices = @transform_3, window_bounds = array<i64: 1, 4>}, {transform_indices = @transform_4, window_bounds = array<i64: 512, 16>}, {transform_indices = @transform_5, window_bounds = array<i64: 1, 2, 16>}]} {
    %c0 = arith.constant 0 : index
    %c0_0 = arith.constant 0 : index
    %0 = vector.load %arg1[%c0, %c0_0] : memref<512x4xf32, #tpu.memory_space<vmem>>, vector<512x4xf32>
    %c0_1 = arith.constant 0 : index
    %c0_2 = arith.constant 0 : index
    %1 = vector.load %arg3[%c0_1, %c0_2] : memref<1x4xf32, #tpu.memory_space<vmem>>, vector<1x4xf32>
    %2 = vector.broadcast %1 : vector<1x4xf32> to vector<512x4xf32>
    %3 = arith.mulf %0, %2 : vector<512x4xf32>
    %c0_3 = arith.constant 0 : index
    %c0_4 = arith.constant 0 : index
    %4 = vector.load %arg4[%c0_3, %c0_4] : memref<1x4xf32, #tpu.memory_space<vmem>>, vector<1x4xf32>
    %5 = vector.broadcast %4 : vector<1x4xf32> to vector<512x4xf32>
    %6 = arith.addf %3, %5 : vector<512x4xf32>
    %cst = arith.constant 0.000000e+00 : f32
    %7 = vector.broadcast %cst : f32 to vector<512x4xf32>
    %8 = arith.maximumf %6, %7 : vector<512x4xf32>
    %c0_5 = arith.constant 0 : index
    %c0_6 = arith.constant 0 : index
    %9 = vector.load %arg2[%c0_5, %c0_6] : memref<4x16xf32, #tpu.memory_space<vmem>>, vector<4x16xf32>
    %cst_7 = arith.constant dense<0.000000e+00> : vector<512x16xf32>
    %10 = tpu.matmul %8, %9, %cst_7 {dimension_numbers = #tpu.dot_dimension_numbers<[1], [0], [0], [1], [0, 0, 1, 1], [], []>} : vector<512x4xf32>, vector<4x16xf32>, vector<512x16xf32> -> vector<512x16xf32>
    %c0_8 = arith.constant 0 : index
    %c0_9 = arith.constant 0 : index
    %11 = vector.load %arg5[%c0_8, %c0_9] : memref<512x16xf32, #tpu.memory_space<vmem>>, vector<512x16xf32>
    tpu.vector_store %arg5[%c0_8, %c0_9], %10 {strides = array<i32>} : memref<512x16xf32, #tpu.memory_space<vmem>>, vector<512x16xf32>,
    %cst_10 = arith.constant dense<0.000000e+00> : vector<16xf32>
    %12 = vector.multi_reduction <add>, %10, %cst_10 [0] : vector<512x16xf32> to vector<16xf32>
    %13 = vector.shape_cast %12 : vector<16xf32> to vector<1x16xf32>
    %c0_11 = arith.constant 0 : index
    %c0_12 = arith.constant 0 : index
    %c0_13 = arith.constant 0 : index
    %14 = vector.load %arg6[%c0_11, %c0_12, %c0_13] : memref<1x2x16xf32, #tpu.memory_space<vmem>>, vector<1x1x16xf32>
    %15 = vector.shape_cast %14 : vector<1x1x16xf32> to vector<1x16xf32>
    %16 = vector.shape_cast %13 : vector<1x16xf32> to vector<1x1x16xf32>
    tpu.vector_store %arg6[%c0_11, %c0_12, %c0_13], %16 {strides = array<i32>} : memref<1x2x16xf32, #tpu.memory_space<vmem>>, vector<1x1x16xf32>,
    %17 = arith.mulf %10, %10 : vector<512x16xf32>
    %cst_14 = arith.constant dense<0.000000e+00> : vector<16xf32>
    %18 = vector.multi_reduction <add>, %17, %cst_14 [0] : vector<512x16xf32> to vector<16xf32>
    %19 = vector.shape_cast %18 : vector<16xf32> to vector<1x16xf32>
    %c0_15 = arith.constant 0 : index
    %c1 = arith.constant 1 : index
    %c0_16 = arith.constant 0 : index
    %20 = vector.load %arg6[%c0_15, %c1, %c0_16] : memref<1x2x16xf32, #tpu.memory_space<vmem>>, vector<1x1x16xf32>
    %21 = vector.shape_cast %20 : vector<1x1x16xf32> to vector<1x16xf32>
    %22 = vector.shape_cast %19 : vector<1x16xf32> to vector<1x1x16xf32>
    tpu.vector_store %arg6[%c0_15, %c1, %c0_16], %22 {strides = array<i32>} : memref<1x2x16xf32, #tpu.memory_space<vmem>>, vector<1x1x16xf32>,
    return
  }
  func.func @transform_0(%arg0: i32) -> (i32, i32) {
    %c0_i32 = arith.constant 0 : i32
    %c0_i32_0 = arith.constant 0 : i32
    return %arg0, %c0_i32 : i32, i32
  }
  func.func @transform_1(%arg0: i32) -> (i32, i32) {
    %c0_i32 = arith.constant 0 : i32
    %c0_i32_0 = arith.constant 0 : i32
    %c0_i32_1 = arith.constant 0 : i32
    return %c0_i32, %c0_i32_0 : i32, i32
  }
  func.func @transform_2(%arg0: i32) -> (i32, i32) {
    %c0_i32 = arith.constant 0 : i32
    %c0_i32_0 = arith.constant 0 : i32
    %c0_i32_1 = arith.constant 0 : i32
    return %c0_i32, %c0_i32_0 : i32, i32
  }
  func.func @transform_3(%arg0: i32) -> (i32, i32) {
    %c0_i32 = arith.constant 0 : i32
    %c0_i32_0 = arith.constant 0 : i32
    %c0_i32_1 = arith.constant 0 : i32
    return %c0_i32, %c0_i32_0 : i32, i32
  }
  func.func @transform_4(%arg0: i32) -> (i32, i32) {
    %c0_i32 = arith.constant 0 : i32
    %c0_i32_0 = arith.constant 0 : i32
    return %arg0, %c0_i32 : i32, i32
  }
  func.func @transform_5(%arg0: i32) -> (i32, i32, i32) {
    %c0_i32 = arith.constant 0 : i32
    %c0_i32_0 = arith.constant 0 : i32
    %c0_i32_1 = arith.constant 0 : i32
    return %arg0, %c0_i32, %c0_i32_0 : i32, i32, i32
  }
}

module attributes {stable_mosaic.version = 11 : i64} {
  func.func @_bn_add_relu_kernel(%arg0: i32, %arg1: memref<512x16xf32, #tpu.memory_space<vmem>>, %arg2: memref<512x16xf32, #tpu.memory_space<vmem>>, %arg3: memref<1x16xf32, #tpu.memory_space<vmem>>, %arg4: memref<1x16xf32, #tpu.memory_space<vmem>>, %arg5: memref<1x16xf32, #tpu.memory_space<vmem>>, %arg6: memref<1x16xf32, #tpu.memory_space<vmem>>, %arg7: memref<512x16xf32, #tpu.memory_space<vmem>>) attributes {dimension_semantics = [#tpu.dimension_semantics<parallel>], iteration_bounds = array<i64: 1>, scalar_prefetch = 0 : i64, scratch_operands = 0 : i64, tpu.core_type = #tpu.core_type<tc>, window_params = [{transform_indices = @transform_0, window_bounds = array<i64: 512, 16>}, {transform_indices = @transform_1, window_bounds = array<i64: 512, 16>}, {pipeline_mode = #tpu.pipeline_mode<synchronous>, transform_indices = @transform_2, window_bounds = array<i64: 1, 16>}, {pipeline_mode = #tpu.pipeline_mode<synchronous>, transform_indices = @transform_3, window_bounds = array<i64: 1, 16>}, {pipeline_mode = #tpu.pipeline_mode<synchronous>, transform_indices = @transform_4, window_bounds = array<i64: 1, 16>}, {pipeline_mode = #tpu.pipeline_mode<synchronous>, transform_indices = @transform_5, window_bounds = array<i64: 1, 16>}, {transform_indices = @transform_6, window_bounds = array<i64: 512, 16>}]} {
    %c0 = arith.constant 0 : index
    %c0_0 = arith.constant 0 : index
    %0 = vector.load %arg1[%c0, %c0_0] : memref<512x16xf32, #tpu.memory_space<vmem>>, vector<512x16xf32>
    %c0_1 = arith.constant 0 : index
    %c0_2 = arith.constant 0 : index
    %1 = vector.load %arg2[%c0_1, %c0_2] : memref<512x16xf32, #tpu.memory_space<vmem>>, vector<512x16xf32>
    %c0_3 = arith.constant 0 : index
    %c0_4 = arith.constant 0 : index
    %2 = vector.load %arg3[%c0_3, %c0_4] : memref<1x16xf32, #tpu.memory_space<vmem>>, vector<1x16xf32>
    %3 = vector.broadcast %2 : vector<1x16xf32> to vector<512x16xf32>
    %4 = arith.mulf %0, %3 : vector<512x16xf32>
    %c0_5 = arith.constant 0 : index
    %c0_6 = arith.constant 0 : index
    %5 = vector.load %arg4[%c0_5, %c0_6] : memref<1x16xf32, #tpu.memory_space<vmem>>, vector<1x16xf32>
    %6 = vector.broadcast %5 : vector<1x16xf32> to vector<512x16xf32>
    %7 = arith.addf %4, %6 : vector<512x16xf32>
    %c0_7 = arith.constant 0 : index
    %c0_8 = arith.constant 0 : index
    %8 = vector.load %arg5[%c0_7, %c0_8] : memref<1x16xf32, #tpu.memory_space<vmem>>, vector<1x16xf32>
    %9 = vector.broadcast %8 : vector<1x16xf32> to vector<512x16xf32>
    %10 = arith.mulf %1, %9 : vector<512x16xf32>
    %c0_9 = arith.constant 0 : index
    %c0_10 = arith.constant 0 : index
    %11 = vector.load %arg6[%c0_9, %c0_10] : memref<1x16xf32, #tpu.memory_space<vmem>>, vector<1x16xf32>
    %12 = vector.broadcast %11 : vector<1x16xf32> to vector<512x16xf32>
    %13 = arith.addf %10, %12 : vector<512x16xf32>
    %14 = arith.addf %7, %13 : vector<512x16xf32>
    %cst = arith.constant 0.000000e+00 : f32
    %15 = vector.broadcast %cst : f32 to vector<512x16xf32>
    %16 = arith.maximumf %14, %15 : vector<512x16xf32>
    %c0_11 = arith.constant 0 : index
    %c0_12 = arith.constant 0 : index
    %17 = vector.load %arg7[%c0_11, %c0_12] : memref<512x16xf32, #tpu.memory_space<vmem>>, vector<512x16xf32>
    tpu.vector_store %arg7[%c0_11, %c0_12], %16 {strides = array<i32>} : memref<512x16xf32, #tpu.memory_space<vmem>>, vector<512x16xf32>,
    return
  }
  func.func @transform_0(%arg0: i32) -> (i32, i32) {
    %c0_i32 = arith.constant 0 : i32
    %c0_i32_0 = arith.constant 0 : i32
    return %arg0, %c0_i32 : i32, i32
  }
  func.func @transform_1(%arg0: i32) -> (i32, i32) {
    %c0_i32 = arith.constant 0 : i32
    %c0_i32_0 = arith.constant 0 : i32
    return %arg0, %c0_i32 : i32, i32
  }
  func.func @transform_2(%arg0: i32) -> (i32, i32) {
    %c0_i32 = arith.constant 0 : i32
    %c0_i32_0 = arith.constant 0 : i32
    %c0_i32_1 = arith.constant 0 : i32
    return %c0_i32, %c0_i32_0 : i32, i32
  }
  func.func @transform_3(%arg0: i32) -> (i32, i32) {
    %c0_i32 = arith.constant 0 : i32
    %c0_i32_0 = arith.constant 0 : i32
    %c0_i32_1 = arith.constant 0 : i32
    return %c0_i32, %c0_i32_0 : i32, i32
  }
  func.func @transform_4(%arg0: i32) -> (i32, i32) {
    %c0_i32 = arith.constant 0 : i32
    %c0_i32_0 = arith.constant 0 : i32
    %c0_i32_1 = arith.constant 0 : i32
    return %c0_i32, %c0_i32_0 : i32, i32
  }
  func.func @transform_5(%arg0: i32) -> (i32, i32) {
    %c0_i32 = arith.constant 0 : i32
    %c0_i32_0 = arith.constant 0 : i32
    %c0_i32_1 = arith.constant 0 : i32
    return %c0_i32, %c0_i32_0 : i32, i32
  }
  func.func @transform_6(%arg0: i32) -> (i32, i32) {
    %c0_i32 = arith.constant 0 : i32
    %c0_i32_0 = arith.constant 0 : i32
    return %arg0, %c0_i32 : i32, i32
  }
}

</mosaic_0001>

<llo_original>
// kernel: bottleneck_forward.8
$region0: #{bottleneck_forward.8}
  #allocation0 [shape = 'u32[]', space=smem, size = 0x4, offset = 0x4, fixed_abs, tag = 'smem constant byte address 0x4 - core index']
  #allocation1 [shape = 'u32[144,128]{1,0:T(1,128)}', space=vmem, size = 0x12000, scoped, tag = 'internal scratch']
  %s0 = inlined_call_operand.vmem [shape: f32[512,4], index: 0, kind: input, shape index: {}]
  %s1 = inlined_call_operand.vmem [shape: f32[4,16], index: 1, kind: input, shape index: {}]
  %s2 = inlined_call_operand.vmem [shape: f32[1,4], index: 2, kind: input, shape index: {}]
  %s3 = inlined_call_operand.vmem [shape: f32[1,4], index: 3, kind: input, shape index: {}]
  %s4 = inlined_call_operand.vmem [shape: f32[512,16], index: 4, kind: output, shape index: {0}]
  %s5 = inlined_call_operand.vmem [shape: f32[1,2,16], index: 5, kind: output, shape index: {1}]
  %6 = xla_tuple %s4, %s5
  %s7 = sld [smem:[#allocation0]]
  $region34: #{bottleneck_forward.8} parent=0
    _
  %s9 = ssub.s32 1, %s7
  %s10 = scalar_select 0, %s9, %s7
  // Predicated region
  $region2: #{bottleneck_forward.8} parent=0 // pred_check
    _
  $region3: #{bottleneck_forward.8} parent=0 // pred_check_branch
    %12 = sbr.rel (0) target = $region5
  $region4: #{bottleneck_forward.8} parent=0 // pred_region
    _
  $region5: #{bottleneck_forward.8} parent=0 // pred_fallthru
    _
  // Predicated region
  $region6: #{bottleneck_forward.8} parent=0 // pred_check
    _
  $region7: #{bottleneck_forward.8} parent=0 // pred_check_branch
    %14 = sbr.rel (0) target = $region9
  $region8: #{bottleneck_forward.8} parent=0 // pred_region
    _
  $region9: #{bottleneck_forward.8} parent=0 // pred_fallthru
    _
  // Predicated region
  $region10: #{bottleneck_forward.8} parent=0 // pred_check
    _
  $region11: #{bottleneck_forward.8} parent=0 // pred_check_branch
    %16 = sbr.rel (0) target = $region13
  $region12: #{bottleneck_forward.8} parent=0 // pred_region
    _
  $region13: #{bottleneck_forward.8} parent=0 // pred_fallthru
    _
  // Predicated region
  $region14: #{bottleneck_forward.8} parent=0 // pred_check
    _
  $region15: #{bottleneck_forward.8} parent=0 // pred_check_branch
    %18 = sbr.rel (0) target = $region17
  $region16: #{bottleneck_forward.8} parent=0 // pred_region
    _
  $region17: #{bottleneck_forward.8} parent=0 // pred_fallthru
    _
  %v19 = vld [vmem:[%s0] sm:$0xff]
  %v20 = vld [vmem:[%s0 + $0x8] sm:$0xff]
  %v21 = vld [vmem:[%s0 + $0x10] sm:$0xff]
  %v22 = vld [vmem:[%s0 + $0x18] sm:$0xff]
  %v23 = vld [vmem:[%s0 + $0x20] sm:$0xff]
  %v24 = vld [vmem:[%s0 + $0x28] sm:$0xff]
  %v25 = vld [vmem:[%s0 + $0x30] sm:$0xff]
  %v26 = vld [vmem:[%s0 + $0x38] sm:$0xff]
  %v27 = vld [vmem:[%s0 + $0x40] sm:$0xff]
  %v28 = vld [vmem:[%s0 + $0x48] sm:$0xff]
  %v29 = vld [vmem:[%s0 + $0x50] sm:$0xff]
  %v30 = vld [vmem:[%s0 + $0x58] sm:$0xff]
  %v31 = vld [vmem:[%s0 + $0x60] sm:$0xff]
  %v32 = vld [vmem:[%s0 + $0x68] sm:$0xff]
  %v33 = vld [vmem:[%s0 + $0x70] sm:$0xff]
  %v34 = vld [vmem:[%s0 + $0x78] sm:$0xff]
  %v35 = vld [vmem:[%s0 + $0x80] sm:$0xff]
  %v36 = vld [vmem:[%s0 + $0x88] sm:$0xff]
  %v37 = vld [vmem:[%s0 + $0x90] sm:$0xff]
  %v38 = vld [vmem:[%s0 + $0x98] sm:$0xff]
  %v39 = vld [vmem:[%s0 + $0xa0] sm:$0xff]
  %v40 = vld [vmem:[%s0 + $0xa8] sm:$0xff]
  %v41 = vld [vmem:[%s0 + $0xb0] sm:$0xff]
  %v42 = vld [vmem:[%s0 + $0xb8] sm:$0xff]
  %v43 = vld [vmem:[%s0 + $0xc0] sm:$0xff]
  %v44 = vld [vmem:[%s0 + $0xc8] sm:$0xff]
  %v45 = vld [vmem:[%s0 + $0xd0] sm:$0xff]
  %v46 = vld [vmem:[%s0 + $0xd8] sm:$0xff]
  %v47 = vld [vmem:[%s0 + $0xe0] sm:$0xff]
  %v48 = vld [vmem:[%s0 + $0xe8] sm:$0xff]
  %v49 = vld [vmem:[%s0 + $0xf0] sm:$0xff]
  %v50 = vld [vmem:[%s0 + $0xf8] sm:$0xff]
  %v51 = vld [vmem:[%s0 + $0x100] sm:$0xff]
  %v52 = vld [vmem:[%s0 + $0x108] sm:$0xff]
  %v53 = vld [vmem:[%s0 + $0x110] sm:$0xff]
  %v54 = vld [vmem:[%s0 + $0x118] sm:$0xff]
  %v55 = vld [vmem:[%s0 + $0x120] sm:$0xff]
  %v56 = vld [vmem:[%s0 + $0x128] sm:$0xff]
  %v57 = vld [vmem:[%s0 + $0x130] sm:$0xff]
  %v58 = vld [vmem:[%s0 + $0x138] sm:$0xff]
  %v59 = vld [vmem:[%s0 + $0x140] sm:$0xff]
  %v60 = vld [vmem:[%s0 + $0x148] sm:$0xff]
  %v61 = vld [vmem:[%s0 + $0x150] sm:$0xff]
  %v62 = vld [vmem:[%s0 + $0x158] sm:$0xff]
  %v63 = vld [vmem:[%s0 + $0x160] sm:$0xff]
  %v64 = vld [vmem:[%s0 + $0x168] sm:$0xff]
  %v65 = vld [vmem:[%s0 + $0x170] sm:$0xff]
  %v66 = vld [vmem:[%s0 + $0x178] sm:$0xff]
  %v67 = vld [vmem:[%s0 + $0x180] sm:$0xff]
  %v68 = vld [vmem:[%s0 + $0x188] sm:$0xff]
  %v69 = vld [vmem:[%s0 + $0x190] sm:$0xff]
  %v70 = vld [vmem:[%s0 + $0x198] sm:$0xff]
  %v71 = vld [vmem:[%s0 + $0x1a0] sm:$0xff]
  %v72 = vld [vmem:[%s0 + $0x1a8] sm:$0xff]
  %v73 = vld [vmem:[%s0 + $0x1b0] sm:$0xff]
  %v74 = vld [vmem:[%s0 + $0x1b8] sm:$0xff]
  %v75 = vld [vmem:[%s0 + $0x1c0] sm:$0xff]
  %v76 = vld [vmem:[%s0 + $0x1c8] sm:$0xff]
  %v77 = vld [vmem:[%s0 + $0x1d0] sm:$0xff]
  %v78 = vld [vmem:[%s0 + $0x1d8] sm:$0xff]
  %v79 = vld [vmem:[%s0 + $0x1e0] sm:$0xff]
  %v80 = vld [vmem:[%s0 + $0x1e8] sm:$0xff]
  %v81 = vld [vmem:[%s0 + $0x1f0] sm:$0xff]
  %v82 = vld [vmem:[%s0 + $0x1f8] sm:$0xff]
  %v83 = vld [vmem:[%s1] sm:$0xf]
  %vm84 = vcmask 31744
  %v86 = vsel %vm84, %v19, 0
  %v89 = vsel %vm84, %v20, 0
  %v92 = vsel %vm84, %v21, 0
  %v95 = vsel %vm84, %v22, 0
  %v98 = vsel %vm84, %v23, 0
  %v101 = vsel %vm84, %v24, 0
  %v104 = vsel %vm84, %v25, 0
  %v107 = vsel %vm84, %v26, 0
  %v110 = vsel %vm84, %v27, 0
  %v113 = vsel %vm84, %v28, 0
  %v116 = vsel %vm84, %v29, 0
  %v119 = vsel %vm84, %v30, 0
  %v122 = vsel %vm84, %v31, 0
  %v125 = vsel %vm84, %v32, 0
  %v128 = vsel %vm84, %v33, 0
  %v131 = vsel %vm84, %v34, 0
  %v134 = vsel %vm84, %v35, 0
  %v137 = vsel %vm84, %v36, 0
  %v140 = vsel %vm84, %v37, 0
  %v143 = vsel %vm84, %v38, 0
  %v146 = vsel %vm84, %v39, 0
  %v149 = vsel %vm84, %v40, 0
  %v152 = vsel %vm84, %v41, 0
  %v155 = vsel %vm84, %v42, 0
  %v158 = vsel %vm84, %v43, 0
  %v161 = vsel %vm84, %v44, 0
  %v164 = vsel %vm84, %v45, 0
  %v167 = vsel %vm84, %v46, 0
  %v170 = vsel %vm84, %v47, 0
  %v173 = vsel %vm84, %v48, 0
  %v176 = vsel %vm84, %v49, 0
  %v179 = vsel %vm84, %v50, 0
  %v182 = vsel %vm84, %v51, 0
  %v185 = vsel %vm84, %v52, 0
  %v188 = vsel %vm84, %v53, 0
  %v191 = vsel %vm84, %v54, 0
  %v194 = vsel %vm84, %v55, 0
  %v197 = vsel %vm84, %v56, 0
  %v200 = vsel %vm84, %v57, 0
  %v203 = vsel %vm84, %v58, 0
  %v206 = vsel %vm84, %v59, 0
  %v209 = vsel %vm84, %v60, 0
  %v212 = vsel %vm84, %v61, 0
  %v215 = vsel %vm84, %v62, 0
  %v218 = vsel %vm84, %v63, 0
  %v221 = vsel %vm84, %v64, 0
  %v224 = vsel %vm84, %v65, 0
  %v227 = vsel %vm84, %v66, 0
  %v230 = vsel %vm84, %v67, 0
  %v233 = vsel %vm84, %v68, 0
  %v236 = vsel %vm84, %v69, 0
  %v239 = vsel %vm84, %v70, 0
  %v242 = vsel %vm84, %v71, 0
  %v245 = vsel %vm84, %v72, 0
  %v248 = vsel %vm84, %v73, 0
  %v251 = vsel %vm84, %v74, 0
  %v254 = vsel %vm84, %v75, 0
  %v257 = vsel %vm84, %v76, 0
  %v260 = vsel %vm84, %v77, 0
  %v263 = vsel %vm84, %v78, 0
  %v266 = vsel %vm84, %v79, 0
  %v269 = vsel %vm84, %v80, 0
  %v272 = vsel %vm84, %v81, 0
  %v275 = vsel %vm84, %v82, 0
  %vm277 = vcmask 1043456
  %v279 = vsel %vm277, %v83, 0
  %281 = vmatprep.subr.mxu0 0.0
  %282 = vmatpush1.msra.mxu0 %v279
  %283 = vmatprep.subr.mxu0 0.0
  %284 = vmatpush1.msra.mxu0 0.0
  %285 = vmatprep.subr.mxu0 0.0
  %286 = vmatpush1.msra.mxu0 0.0
  %287 = vmatprep.subr.mxu0 0.0
  %288 = vmatpush1.msra.mxu0 0.0
  %289 = vmatprep.subr.mxu0 0.0
  %290 = vmatpush1.msra.mxu0 0.0
  %291 = vmatprep.subr.mxu0 0.0
  %292 = vmatpush1.msra.mxu0 0.0
  %293 = vmatprep.subr.mxu0 0.0
  %294 = vmatpush1.msra.mxu0 0.0
  %295 = vmatprep.subr.mxu0 0.0
  %296 = vmatpush1.msra.mxu0 0.0
  %297 = vmatprep.subr.mxu0 0.0
  %298 = vmatpush1.msra.mxu0 0.0
  %299 = vmatprep.subr.mxu0 0.0
  %300 = vmatpush1.msra.mxu0 0.0
  %301 = vmatprep.subr.mxu0 0.0
  %302 = vmatpush1.msra.mxu0 0.0
  %303 = vmatprep.subr.mxu0 0.0
  %304 = vmatpush1.msra.mxu0 0.0
  %305 = vmatprep.subr.mxu0 0.0
  %306 = vmatpush1.msra.mxu0 0.0
  %307 = vmatprep.subr.mxu0 0.0
  %308 = vmatpush1.msra.mxu0 0.0
  %309 = vmatprep.subr.mxu0 0.0
  %310 = vmatpush1.msra.mxu0 0.0
  %311 = vmatprep.subr.mxu0 0.0
  %312 = vmatpush1.msra.mxu0 0.0
  %313 = vmatprep.subr.mxu0 0.0
  %314 = vmatpush1.msra.mxu0 0.0
  %315 = vmatprep.subr.mxu0 0.0
  %316 = vmatpush1.msra.mxu0 0.0
  %317 = vmatprep.subr.mxu0 0.0
  %318 = vmatpush1.msra.mxu0 0.0
  %319 = vmatprep.subr.mxu0 0.0
  %320 = vmatpush1.msra.mxu0 0.0
  %321 = vmatprep.subr.mxu0 0.0
  %322 = vmatpush1.msra.mxu0 0.0
  %323 = vmatprep.subr.mxu0 0.0
  %324 = vmatpush1.msra.mxu0 0.0
  %325 = vmatprep.subr.mxu0 0.0
  %326 = vmatpush1.msra.mxu0 0.0
  %327 = vmatprep.subr.mxu0 0.0
  %328 = vmatpush1.msra.mxu0 0.0
  %329 = vmatprep.subr.mxu0 0.0
  %330 = vmatpush1.msra.mxu0 0.0
  %331 = vmatprep.subr.mxu0 0.0
  %332 = vmatpush1.msra.mxu0 0.0
  %333 = vmatprep.subr.mxu0 0.0
  %334 = vmatpush1.msra.mxu0 0.0
  %335 = vmatprep.subr.mxu0 0.0
  %336 = vmatpush1.msra.mxu0 0.0
  %337 = vmatprep.subr.mxu0 0.0
  %338 = vmatpush1.msra.mxu0 0.0
  %339 = vmatprep.subr.mxu0 0.0
  %340 = vmatpush1.msra.mxu0 0.0
  %341 = vmatprep.subr.mxu0 0.0
  %342 = vmatpush1.msra.mxu0 0.0
  %343 = vmatprep.subr.mxu0 0.0
  %344 = vmatpush1.msra.mxu0 0.0
  %345 = vmatprep.mubr.f32.mxu0 0.0
  %346 = vmatmul.mubr.f32.gmra.mrb[0].mxu0 %v86
  %v347 = vpop.f32.mrb[0].mxu0
  %v348 = vadd.f32 0.0, %v347
  %v349 = vpop.f32.mrb[0].mxu0
  %350 = vmatprep.mubr.f32.mxu0 0.0
  %351 = vmatmul.mubr.f32.gmra.mrb[0].mxu0 %v89
  %v352 = vpop.f32.mrb[0].mxu0
  %v353 = vadd.f32 0.0, %v352
  %v354 = vpop.f32.mrb[0].mxu0
  %355 = vmatprep.mubr.f32.mxu0 0.0
  %356 = vmatmul.mubr.f32.gmra.mrb[0].mxu0 %v92
  %v357 = vpop.f32.mrb[0].mxu0
  %v358 = vadd.f32 0.0, %v357
  %v359 = vpop.f32.mrb[0].mxu0
  %360 = vmatprep.mubr.f32.mxu0 0.0
  %361 = vmatmul.mubr.f32.gmra.mrb[0].mxu0 %v95
  %v362 = vpop.f32.mrb[0].mxu0
  %v363 = vadd.f32 0.0, %v362
  %v364 = vpop.f32.mrb[0].mxu0
  %365 = vmatprep.mubr.f32.mxu0 0.0
  %366 = vmatmul.mubr.f32.gmra.mrb[0].mxu0 %v98
  %v367 = vpop.f32.mrb[0].mxu0
  %v368 = vadd.f32 0.0, %v367
  %v369 = vpop.f32.mrb[0].mxu0
  %370 = vmatprep.mubr.f32.mxu0 0.0
  %371 = vmatmul.mubr.f32.gmra.mrb[0].mxu0 %v101
  %v372 = vpop.f32.mrb[0].mxu0
  %v373 = vadd.f32 0.0, %v372
  %v374 = vpop.f32.mrb[0].mxu0
  %375 = vmatprep.mubr.f32.mxu0 0.0
  %376 = vmatmul.mubr.f32.gmra.mrb[0].mxu0 %v104
  %v377 = vpop.f32.mrb[0].mxu0
  %v378 = vadd.f32 0.0, %v377
  %v379 = vpop.f32.mrb[0].mxu0
  %380 = vmatprep.mubr.f32.mxu0 0.0
  %381 = vmatmul.mubr.f32.gmra.mrb[0].mxu0 %v107
  %v382 = vpop.f32.mrb[0].mxu0
  %v383 = vadd.f32 0.0, %v382
  %v384 = vpop.f32.mrb[0].mxu0
  %385 = vmatprep.mubr.f32.mxu0 0.0
  %386 = vmatmul.mubr.f32.gmra.mrb[0].mxu0 %v110
  %v387 = vpop.f32.mrb[0].mxu0
  %v388 = vadd.f32 0.0, %v387
  %v389 = vpop.f32.mrb[0].mxu0
  %390 = vmatprep.mubr.f32.mxu0 0.0
  %391 = vmatmul.mubr.f32.gmra.mrb[0].mxu0 %v113
  %v392 = vpop.f32.mrb[0].mxu0
  %v393 = vadd.f32 0.0, %v392
  %v394 = vpop.f32.mrb[0].mxu0
  %395 = vmatprep.mubr.f32.mxu0 0.0
  %396 = vmatmul.mubr.f32.gmra.mrb[0].mxu0 %v116
  %v397 = vpop.f32.mrb[0].mxu0
  %v398 = vadd.f32 0.0, %v397
  %v399 = vpop.f32.mrb[0].mxu0
  %400 = vmatprep.mubr.f32.mxu0 0.0
  %401 = vmatmul.mubr.f32.gmra.mrb[0].mxu0 %v119
  %v402 = vpop.f32.mrb[0].mxu0
  %v403 = vadd.f32 0.0, %v402
  %v404 = vpop.f32.mrb[0].mxu0
  %405 = vmatprep.mubr.f32.mxu0 0.0
  %406 = vmatmul.mubr.f32.gmra.mrb[0].mxu0 %v122
  %v407 = vpop.f32.mrb[0].mxu0
  %v408 = vadd.f32 0.0, %v407
  %v409 = vpop.f32.mrb[0].mxu0
  %410 = vmatprep.mubr.f32.mxu0 0.0
  %411 = vmatmul.mubr.f32.gmra.mrb[0].mxu0 %v125
  %v412 = vpop.f32.mrb[0].mxu0
  %v413 = vadd.f32 0.0, %v412
  %v414 = vpop.f32.mrb[0].mxu0
  %415 = vmatprep.mubr.f32.mxu0 0.0
  %416 = vmatmul.mubr.f32.gmra.mrb[0].mxu0 %v128
  %v417 = vpop.f32.mrb[0].mxu0
  %v418 = vadd.f32 0.0, %v417
  %v419 = vpop.f32.mrb[0].mxu0
  %420 = vmatprep.mubr.f32.mxu0 0.0
  %421 = vmatmul.mubr.f32.gmra.mrb[0].mxu0 %v131
  %v422 = vpop.f32.mrb[0].mxu0
  %v423 = vadd.f32 0.0, %v422
  %v424 = vpop.f32.mrb[0].mxu0
  %425 = vmatprep.mubr.f32.mxu0 0.0
  %426 = vmatmul.mubr.f32.gmra.mrb[0].mxu0 %v134
  %v427 = vpop.f32.mrb[0].mxu0
  %v428 = vadd.f32 0.0, %v427
  %v429 = vpop.f32.mrb[0].mxu0
  %430 = vmatprep.mubr.f32.mxu0 0.0
  %431 = vmatmul.mubr.f32.gmra.mrb[0].mxu0 %v137
  %v432 = vpop.f32.mrb[0].mxu0
  %v433 = vadd.f32 0.0, %v432
  %v434 = vpop.f32.mrb[0].mxu0
  %435 = vmatprep.mubr.f32.mxu0 0.0
  %436 = vmatmul.mubr.f32.gmra.mrb[0].mxu0 %v140
  %v437 = vpop.f32.mrb[0].mxu0
  %v438 = vadd.f32 0.0, %v437
  %v439 = vpop.f32.mrb[0].mxu0
  %440 = vmatprep.mubr.f32.mxu0 0.0
  %441 = vmatmul.mubr.f32.gmra.mrb[0].mxu0 %v143
  %v442 = vpop.f32.mrb[0].mxu0
  %v443 = vadd.f32 0.0, %v442
  %v444 = vpop.f32.mrb[0].mxu0
  %445 = vmatprep.mubr.f32.mxu0 0.0
  %446 = vmatmul.mubr.f32.gmra.mrb[0].mxu0 %v146
  %v447 = vpop.f32.mrb[0].mxu0
  %v448 = vadd.f32 0.0, %v447
  %v449 = vpop.f32.mrb[0].mxu0
  %450 = vmatprep.mubr.f32.mxu0 0.0
  %451 = vmatmul.mubr.f32.gmra.mrb[0].mxu0 %v149
  %v452 = vpop.f32.mrb[0].mxu0
  %v453 = vadd.f32 0.0, %v452
  %v454 = vpop.f32.mrb[0].mxu0
  %455 = vmatprep.mubr.f32.mxu0 0.0
  %456 = vmatmul.mubr.f32.gmra.mrb[0].mxu0 %v152
  %v457 = vpop.f32.mrb[0].mxu0
  %v458 = vadd.f32 0.0, %v457
  %v459 = vpop.f32.mrb[0].mxu0
  %460 = vmatprep.mubr.f32.mxu0 0.0
  %461 = vmatmul.mubr.f32.gmra.mrb[0].mxu0 %v155
  %v462 = vpop.f32.mrb[0].mxu0
  %v463 = vadd.f32 0.0, %v462
  %v464 = vpop.f32.mrb[0].mxu0
  %465 = vmatprep.mubr.f32.mxu0 0.0
  %466 = vmatmul.mubr.f32.gmra.mrb[0].mxu0 %v158
  %v467 = vpop.f32.mrb[0].mxu0
  %v468 = vadd.f32 0.0, %v467
  %v469 = vpop.f32.mrb[0].mxu0
  %470 = vmatprep.mubr.f32.mxu0 0.0
  %471 = vmatmul.mubr.f32.gmra.mrb[0].mxu0 %v161
  %v472 = vpop.f32.mrb[0].mxu0
  %v473 = vadd.f32 0.0, %v472
  %v474 = vpop.f32.mrb[0].mxu0
  %475 = vmatprep.mubr.f32.mxu0 0.0
  %476 = vmatmul.mubr.f32.gmra.mrb[0].mxu0 %v164
  %v477 = vpop.f32.mrb[0].mxu0
  %v478 = vadd.f32 0.0, %v477
  %v479 = vpop.f32.mrb[0].mxu0
  %480 = vmatprep.mubr.f32.mxu0 0.0
  %481 = vmatmul.mubr.f32.gmra.mrb[0].mxu0 %v167
  %v482 = vpop.f32.mrb[0].mxu0
  %v483 = vadd.f32 0.0, %v482
  %v484 = vpop.f32.mrb[0].mxu0
  %485 = vmatprep.mubr.f32.mxu0 0.0
  %486 = vmatmul.mubr.f32.gmra.mrb[0].mxu0 %v170
  %v487 = vpop.f32.mrb[0].mxu0
  %v488 = vadd.f32 0.0, %v487
  %v489 = vpop.f32.mrb[0].mxu0
  %490 = vmatprep.mubr.f32.mxu0 0.0
  %491 = vmatmul.mubr.f32.gmra.mrb[0].mxu0 %v173
  %v492 = vpop.f32.mrb[0].mxu0
  %v493 = vadd.f32 0.0, %v492
  %v494 = vpop.f32.mrb[0].mxu0
  %495 = vmatprep.mubr.f32.mxu0 0.0
  %496 = vmatmul.mubr.f32.gmra.mrb[0].mxu0 %v176
  %v497 = vpop.f32.mrb[0].mxu0
  %v498 = vadd.f32 0.0, %v497
  %v499 = vpop.f32.mrb[0].mxu0
  %500 = vmatprep.mubr.f32.mxu0 0.0
  %501 = vmatmul.mubr.f32.gmra.mrb[0].mxu0 %v179
  %v502 = vpop.f32.mrb[0].mxu0
  %v503 = vadd.f32 0.0, %v502
  %v504 = vpop.f32.mrb[0].mxu0
  %505 = vmatprep.mubr.f32.mxu0 0.0
  %506 = vmatmul.mubr.f32.gmra.mrb[0].mxu0 %v182
  %v507 = vpop.f32.mrb[0].mxu0
  %v508 = vadd.f32 0.0, %v507
  %v509 = vpop.f32.mrb[0].mxu0
  %510 = vmatprep.mubr.f32.mxu0 0.0
  %511 = vmatmul.mubr.f32.gmra.mrb[0].mxu0 %v185
  %v512 = vpop.f32.mrb[0].mxu0
  %v513 = vadd.f32 0.0, %v512
  %v514 = vpop.f32.mrb[0].mxu0
  %515 = vmatprep.mubr.f32.mxu0 0.0
  %516 = vmatmul.mubr.f32.gmra.mrb[0].mxu0 %v188
  %v517 = vpop.f32.mrb[0].mxu0
  %v518 = vadd.f32 0.0, %v517
  %v519 = vpop.f32.mrb[0].mxu0
  %520 = vmatprep.mubr.f32.mxu0 0.0
  %521 = vmatmul.mubr.f32.gmra.mrb[0].mxu0 %v191
  %v522 = vpop.f32.mrb[0].mxu0
  %v523 = vadd.f32 0.0, %v522
  %v524 = vpop.f32.mrb[0].mxu0
  %525 = vmatprep.mubr.f32.mxu0 0.0
  %526 = vmatmul.mubr.f32.gmra.mrb[0].mxu0 %v194
  %v527 = vpop.f32.mrb[0].mxu0
  %v528 = vadd.f32 0.0, %v527
  %v529 = vpop.f32.mrb[0].mxu0
  %530 = vmatprep.mubr.f32.mxu0 0.0
  %531 = vmatmul.mubr.f32.gmra.mrb[0].mxu0 %v197
  %v532 = vpop.f32.mrb[0].mxu0
  %v533 = vadd.f32 0.0, %v532
  %v534 = vpop.f32.mrb[0].mxu0
  %535 = vmatprep.mubr.f32.mxu0 0.0
  %536 = vmatmul.mubr.f32.gmra.mrb[0].mxu0 %v200
  %v537 = vpop.f32.mrb[0].mxu0
  %v538 = vadd.f32 0.0, %v537
  %v539 = vpop.f32.mrb[0].mxu0
  %540 = vmatprep.mubr.f32.mxu0 0.0
  %541 = vmatmul.mubr.f32.gmra.mrb[0].mxu0 %v203
  %v542 = vpop.f32.mrb[0].mxu0
  %v543 = vadd.f32 0.0, %v542
  %v544 = vpop.f32.mrb[0].mxu0
  %545 = vmatprep.mubr.f32.mxu0 0.0
  %546 = vmatmul.mubr.f32.gmra.mrb[0].mxu0 %v206
  %v547 = vpop.f32.mrb[0].mxu0
  %v548 = vadd.f32 0.0, %v547
  %v549 = vpop.f32.mrb[0].mxu0
  %550 = vmatprep.mubr.f32.mxu0 0.0
  %551 = vmatmul.mubr.f32.gmra.mrb[0].mxu0 %v209
  %v552 = vpop.f32.mrb[0].mxu0
  %v553 = vadd.f32 0.0, %v552
  %v554 = vpop.f32.mrb[0].mxu0
  %555 = vmatprep.mubr.f32.mxu0 0.0
  %556 = vmatmul.mubr.f32.gmra.mrb[0].mxu0 %v212
  %v557 = vpop.f32.mrb[0].mxu0
  %v558 = vadd.f32 0.0, %v557
  %v559 = vpop.f32.mrb[0].mxu0
  %560 = vmatprep.mubr.f32.mxu0 0.0
  %561 = vmatmul.mubr.f32.gmra.mrb[0].mxu0 %v215
  %v562 = vpop.f32.mrb[0].mxu0
  %v563 = vadd.f32 0.0, %v562
  %v564 = vpop.f32.mrb[0].mxu0
  %565 = vmatprep.mubr.f32.mxu0 0.0
  %566 = vmatmul.mubr.f32.gmra.mrb[0].mxu0 %v218
  %v567 = vpop.f32.mrb[0].mxu0
  %v568 = vadd.f32 0.0, %v567
  %v569 = vpop.f32.mrb[0].mxu0
  %570 = vmatprep.mubr.f32.mxu0 0.0
  %571 = vmatmul.mubr.f32.gmra.mrb[0].mxu0 %v221
  %v572 = vpop.f32.mrb[0].mxu0
  %v573 = vadd.f32 0.0, %v572
  %v574 = vpop.f32.mrb[0].mxu0
  %575 = vmatprep.mubr.f32.mxu0 0.0
  %576 = vmatmul.mubr.f32.gmra.mrb[0].mxu0 %v224
  %v577 = vpop.f32.mrb[0].mxu0
  %v578 = vadd.f32 0.0, %v577
  %v579 = vpop.f32.mrb[0].mxu0
  %580 = vmatprep.mubr.f32.mxu0 0.0
  %581 = vmatmul.mubr.f32.gmra.mrb[0].mxu0 %v227
  %v582 = vpop.f32.mrb[0].mxu0
  %v583 = vadd.f32 0.0, %v582
  %v584 = vpop.f32.mrb[0].mxu0
  %585 = vmatprep.mubr.f32.mxu0 0.0
  %586 = vmatmul.mubr.f32.gmra.mrb[0].mxu0 %v230
  %v587 = vpop.f32.mrb[0].mxu0
  %v588 = vadd.f32 0.0, %v587
  %v589 = vpop.f32.mrb[0].mxu0
  %590 = vmatprep.mubr.f32.mxu0 0.0
  %591 = vmatmul.mubr.f32.gmra.mrb[0].mxu0 %v233
  %v592 = vpop.f32.mrb[0].mxu0
  %v593 = vadd.f32 0.0, %v592
  %v594 = vpop.f32.mrb[0].mxu0
  %595 = vmatprep.mubr.f32.mxu0 0.0
  %596 = vmatmul.mubr.f32.gmra.mrb[0].mxu0 %v236
  %v597 = vpop.f32.mrb[0].mxu0
  %v598 = vadd.f32 0.0, %v597
  %v599 = vpop.f32.mrb[0].mxu0
  %600 = vmatprep.mubr.f32.mxu0 0.0
  %601 = vmatmul.mubr.f32.gmra.mrb[0].mxu0 %v239
  %v602 = vpop.f32.mrb[0].mxu0
  %v603 = vadd.f32 0.0, %v602
  %v604 = vpop.f32.mrb[0].mxu0
  %605 = vmatprep.mubr.f32.mxu0 0.0
  %606 = vmatmul.mubr.f32.gmra.mrb[0].mxu0 %v242
  %v607 = vpop.f32.mrb[0].mxu0
  %v608 = vadd.f32 0.0, %v607
  %v609 = vpop.f32.mrb[0].mxu0
  %610 = vmatprep.mubr.f32.mxu0 0.0
  %611 = vmatmul.mubr.f32.gmra.mrb[0].mxu0 %v245
  %v612 = vpop.f32.mrb[0].mxu0
  %v613 = vadd.f32 0.0, %v612
  %v614 = vpop.f32.mrb[0].mxu0
  %615 = vmatprep.mubr.f32.mxu0 0.0
  %616 = vmatmul.mubr.f32.gmra.mrb[0].mxu0 %v248
  %v617 = vpop.f32.mrb[0].mxu0
  %v618 = vadd.f32 0.0, %v617
  %v619 = vpop.f32.mrb[0].mxu0
  %620 = vmatprep.mubr.f32.mxu0 0.0
  %621 = vmatmul.mubr.f32.gmra.mrb[0].mxu0 %v251
  %v622 = vpop.f32.mrb[0].mxu0
  %v623 = vadd.f32 0.0, %v622
  %v624 = vpop.f32.mrb[0].mxu0
  %625 = vmatprep.mubr.f32.mxu0 0.0
  %626 = vmatmul.mubr.f32.gmra.mrb[0].mxu0 %v254
  %v627 = vpop.f32.mrb[0].mxu0
  %v628 = vadd.f32 0.0, %v627
  %v629 = vpop.f32.mrb[0].mxu0
  %630 = vmatprep.mubr.f32.mxu0 0.0
  %631 = vmatmul.mubr.f32.gmra.mrb[0].mxu0 %v257
  %v632 = vpop.f32.mrb[0].mxu0
  %v633 = vadd.f32 0.0, %v632
  %v634 = vpop.f32.mrb[0].mxu0
  %635 = vmatprep.mubr.f32.mxu0 0.0
  %636 = vmatmul.mubr.f32.gmra.mrb[0].mxu0 %v260
  %v637 = vpop.f32.mrb[0].mxu0
  %v638 = vadd.f32 0.0, %v637
  %v639 = vpop.f32.mrb[0].mxu0
  %640 = vmatprep.mubr.f32.mxu0 0.0
  %641 = vmatmul.mubr.f32.gmra.mrb[0].mxu0 %v263
  %v642 = vpop.f32.mrb[0].mxu0
  %v643 = vadd.f32 0.0, %v642
  %v644 = vpop.f32.mrb[0].mxu0
  %645 = vmatprep.mubr.f32.mxu0 0.0
  %646 = vmatmul.mubr.f32.gmra.mrb[0].mxu0 %v266
  %v647 = vpop.f32.mrb[0].mxu0
  %v648 = vadd.f32 0.0, %v647
  %v649 = vpop.f32.mrb[0].mxu0
  %650 = vmatprep.mubr.f32.mxu0 0.0
  %651 = vmatmul.mubr.f32.gmra.mrb[0].mxu0 %v269
  %v652 = vpop.f32.mrb[0].mxu0
  %v653 = vadd.f32 0.0, %v652
  %v654 = vpop.f32.mrb[0].mxu0
  %655 = vmatprep.mubr.f32.mxu0 0.0
  %656 = vmatmul.mubr.f32.gmra.mrb[0].mxu0 %v272
  %v657 = vpop.f32.mrb[0].mxu0
  %v658 = vadd.f32 0.0, %v657
  %v659 = vpop.f32.mrb[0].mxu0
  %660 = vmatprep.mubr.f32.mxu0 0.0
  %661 = vmatmul.mubr.f32.gmra.mrb[0].mxu0 %v275
  %v662 = vpop.f32.mrb[0].mxu0
  %v663 = vadd.f32 0.0, %v662
  %v664 = vpop.f32.mrb[0].mxu0
  %665 = vdwg.mxu0
  %vm666 = vcmask 130048
  %667 = vst.msk [vmem:[%s4] sm:$0xff] %vm666, %v348
  %668 = vst.msk [vmem:[%s4 + $0x8] sm:$0xff] %vm666, %v353
  %669 = vst.msk [vmem:[%s4 + $0x10] sm:$0xff] %vm666, %v358
  %670 = vst.msk [vmem:[%s4 + $0x18] sm:$0xff] %vm666, %v363
  %671 = vst.msk [vmem:[%s4 + $0x20] sm:$0xff] %vm666, %v368
  %672 = vst.msk [vmem:[%s4 + $0x28] sm:$0xff] %vm666, %v373
  %673 = vst.msk [vmem:[%s4 + $0x30] sm:$0xff] %vm666, %v378
  %674 = vst.msk [vmem:[%s4 + $0x38] sm:$0xff] %vm666, %v383
  %675 = vst.msk [vmem:[%s4 + $0x40] sm:$0xff] %vm666, %v388
  %676 = vst.msk [vmem:[%s4 + $0x48] sm:$0xff] %vm666, %v393
  %677 = vst.msk [vmem:[%s4 + $0x50] sm:$0xff] %vm666, %v398
  %678 = vst.msk [vmem:[%s4 + $0x58] sm:$0xff] %vm666, %v403
  %679 = vst.msk [vmem:[%s4 + $0x60] sm:$0xff] %vm666, %v408
  %680 = vst.msk [vmem:[%s4 + $0x68] sm:$0xff] %vm666, %v413
  %681 = vst.msk [vmem:[%s4 + $0x70] sm:$0xff] %vm666, %v418
  %682 = vst.msk [vmem:[%s4 + $0x78] sm:$0xff] %vm666, %v423
  %683 = vst.msk [vmem:[%s4 + $0x80] sm:$0xff] %vm666, %v428
  %684 = vst.msk [vmem:[%s4 + $0x88] sm:$0xff] %vm666, %v433
  %685 = vst.msk [vmem:[%s4 + $0x90] sm:$0xff] %vm666, %v438
  %686 = vst.msk [vmem:[%s4 + $0x98] sm:$0xff] %vm666, %v443
  %687 = vst.msk [vmem:[%s4 + $0xa0] sm:$0xff] %vm666, %v448
  %688 = vst.msk [vmem:[%s4 + $0xa8] sm:$0xff] %vm666, %v453
  %689 = vst.msk [vmem:[%s4 + $0xb0] sm:$0xff] %vm666, %v458
  %690 = vst.msk [vmem:[%s4 + $0xb8] sm:$0xff] %vm666, %v463
  %691 = vst.msk [vmem:[%s4 + $0xc0] sm:$0xff] %vm666, %v468
  %692 = vst.msk [vmem:[%s4 + $0xc8] sm:$0xff] %vm666, %v473
  %693 = vst.msk [vmem:[%s4 + $0xd0] sm:$0xff] %vm666, %v478
  %694 = vst.msk [vmem:[%s4 + $0xd8] sm:$0xff] %vm666, %v483
  %695 = vst.msk [vmem:[%s4 + $0xe0] sm:$0xff] %vm666, %v488
  %696 = vst.msk [vmem:[%s4 + $0xe8] sm:$0xff] %vm666, %v493
  %697 = vst.msk [vmem:[%s4 + $0xf0] sm:$0xff] %vm666, %v498
  %698 = vst.msk [vmem:[%s4 + $0xf8] sm:$0xff] %vm666, %v503
  %699 = vst.msk [vmem:[%s4 + $0x100] sm:$0xff] %vm666, %v508
  %700 = vst.msk [vmem:[%s4 + $0x108] sm:$0xff] %vm666, %v513
  %701 = vst.msk [vmem:[%s4 + $0x110] sm:$0xff] %vm666, %v518
  %702 = vst.msk [vmem:[%s4 + $0x118] sm:$0xff] %vm666, %v523
  %703 = vst.msk [vmem:[%s4 + $0x120] sm:$0xff] %vm666, %v528
  %704 = vst.msk [vmem:[%s4 + $0x128] sm:$0xff] %vm666, %v533
  %705 = vst.msk [vmem:[%s4 + $0x130] sm:$0xff] %vm666, %v538
  %706 = vst.msk [vmem:[%s4 + $0x138] sm:$0xff] %vm666, %v543
  %707 = vst.msk [vmem:[%s4 + $0x140] sm:$0xff] %vm666, %v548
  %708 = vst.msk [vmem:[%s4 + $0x148] sm:$0xff] %vm666, %v553
  %709 = vst.msk [vmem:[%s4 + $0x150] sm:$0xff] %vm666, %v558
  %710 = vst.msk [vmem:[%s4 + $0x158] sm:$0xff] %vm666, %v563
  %711 = vst.msk [vmem:[%s4 + $0x160] sm:$0xff] %vm666, %v568
  %712 = vst.msk [vmem:[%s4 + $0x168] sm:$0xff] %vm666, %v573
  %713 = vst.msk [vmem:[%s4 + $0x170] sm:$0xff] %vm666, %v578
  %714 = vst.msk [vmem:[%s4 + $0x178] sm:$0xff] %vm666, %v583
  %715 = vst.msk [vmem:[%s4 + $0x180] sm:$0xff] %vm666, %v588
  %716 = vst.msk [vmem:[%s4 + $0x188] sm:$0xff] %vm666, %v593
  %717 = vst.msk [vmem:[%s4 + $0x190] sm:$0xff] %vm666, %v598
  %718 = vst.msk [vmem:[%s4 + $0x198] sm:$0xff] %vm666, %v603
  %719 = vst.msk [vmem:[%s4 + $0x1a0] sm:$0xff] %vm666, %v608
  %720 = vst.msk [vmem:[%s4 + $0x1a8] sm:$0xff] %vm666, %v613
  %721 = vst.msk [vmem:[%s4 + $0x1b0] sm:$0xff] %vm666, %v618
  %722 = vst.msk [vmem:[%s4 + $0x1b8] sm:$0xff] %vm666, %v623
  %723 = vst.msk [vmem:[%s4 + $0x1c0] sm:$0xff] %vm666, %v628
  %724 = vst.msk [vmem:[%s4 + $0x1c8] sm:$0xff] %vm666, %v633
  %725 = vst.msk [vmem:[%s4 + $0x1d0] sm:$0xff] %vm666, %v638
  %726 = vst.msk [vmem:[%s4 + $0x1d8] sm:$0xff] %vm666, %v643
  %727 = vst.msk [vmem:[%s4 + $0x1e0] sm:$0xff] %vm666, %v648
  %728 = vst.msk [vmem:[%s4 + $0x1e8] sm:$0xff] %vm666, %v653
  %729 = vst.msk [vmem:[%s4 + $0x1f0] sm:$0xff] %vm666, %v658
  %730 = vst.msk [vmem:[%s4 + $0x1f8] sm:$0xff] %vm666, %v663
  %v731 = vsel %vm666, %v348, 0.0
  %v732 = vsel %vm666, %v353, 0.0
  %v733 = vadd.f32 %v731, %v732
  %v734 = vsel %vm666, %v358, 0.0
  %v735 = vadd.f32 %v733, %v734
  %v736 = vsel %vm666, %v363, 0.0
  %v737 = vadd.f32 %v735, %v736
  %v738 = vsel %vm666, %v368, 0.0
  %v739 = vadd.f32 %v737, %v738
  %v740 = vsel %vm666, %v373, 0.0
  %v741 = vadd.f32 %v739, %v740
  %v742 = vsel %vm666, %v378, 0.0
  %v743 = vadd.f32 %v741, %v742
  %v744 = vsel %vm666, %v383, 0.0
  %v745 = vadd.f32 %v743, %v744
  %v746 = vsel %vm666, %v388, 0.0
  %v747 = vadd.f32 %v745, %v746
  %v748 = vsel %vm666, %v393, 0.0
  %v749 = vadd.f32 %v747, %v748
  %v750 = vsel %vm666, %v398, 0.0
  %v751 = vadd.f32 %v749, %v750
  %v752 = vsel %vm666, %v403, 0.0
  %v753 = vadd.f32 %v751, %v752
  %v754 = vsel %vm666, %v408, 0.0
  %v755 = vadd.f32 %v753, %v754
  %v756 = vsel %vm666, %v413, 0.0
  %v757 = vadd.f32 %v755, %v756
  %v758 = vsel %vm666, %v418, 0.0
  %v759 = vadd.f32 %v757, %v758
  %v760 = vsel %vm666, %v423, 0.0
  %v761 = vadd.f32 %v759, %v760
  %v762 = vsel %vm666, %v428, 0.0
  %v763 = vadd.f32 %v761, %v762
  %v764 = vsel %vm666, %v433, 0.0
  %v765 = vadd.f32 %v763, %v764
  %v766 = vsel %vm666, %v438, 0.0
  %v767 = vadd.f32 %v765, %v766
  %v768 = vsel %vm666, %v443, 0.0
  %v769 = vadd.f32 %v767, %v768
  %v770 = vsel %vm666, %v448, 0.0
  %v771 = vadd.f32 %v769, %v770
  %v772 = vsel %vm666, %v453, 0.0
  %v773 = vadd.f32 %v771, %v772
  %v774 = vsel %vm666, %v458, 0.0
  %v775 = vadd.f32 %v773, %v774
  %v776 = vsel %vm666, %v463, 0.0
  %v777 = vadd.f32 %v775, %v776
  %v778 = vsel %vm666, %v468, 0.0
  %v779 = vadd.f32 %v777, %v778
  %v780 = vsel %vm666, %v473, 0.0
  %v781 = vadd.f32 %v779, %v780
  %v782 = vsel %vm666, %v478, 0.0
  %v783 = vadd.f32 %v781, %v782
  %v784 = vsel %vm666, %v483, 0.0
  %v785 = vadd.f32 %v783, %v784
  %v786 = vsel %vm666, %v488, 0.0
  %v787 = vadd.f32 %v785, %v786
  %v788 = vsel %vm666, %v493, 0.0
  %v789 = vadd.f32 %v787, %v788
  %v790 = vsel %vm666, %v498, 0.0
  %v791 = vadd.f32 %v789, %v790
  %v792 = vsel %vm666, %v503, 0.0
  %v793 = vadd.f32 %v791, %v792
  %v794 = vsel %vm666, %v508, 0.0
  %v795 = vadd.f32 %v793, %v794
  %v796 = vsel %vm666, %v513, 0.0
  %v797 = vadd.f32 %v795, %v796
  %v798 = vsel %vm666, %v518, 0.0
  %v799 = vadd.f32 %v797, %v798
  %v800 = vsel %vm666, %v523, 0.0
  %v801 = vadd.f32 %v799, %v800
  %v802 = vsel %vm666, %v528, 0.0
  %v803 = vadd.f32 %v801, %v802
  %v804 = vsel %vm666, %v533, 0.0
  %v805 = vadd.f32 %v803, %v804
  %v806 = vsel %vm666, %v538, 0.0
  %v807 = vadd.f32 %v805, %v806
  %v808 = vsel %vm666, %v543, 0.0
  %v809 = vadd.f32 %v807, %v808
  %v810 = vsel %vm666, %v548, 0.0
  %v811 = vadd.f32 %v809, %v810
  %v812 = vsel %vm666, %v553, 0.0
  %v813 = vadd.f32 %v811, %v812
  %v814 = vsel %vm666, %v558, 0.0
  %v815 = vadd.f32 %v813, %v814
  %v816 = vsel %vm666, %v563, 0.0
  %v817 = vadd.f32 %v815, %v816
  %v818 = vsel %vm666, %v568, 0.0
  %v819 = vadd.f32 %v817, %v818
  %v820 = vsel %vm666, %v573, 0.0
  %v821 = vadd.f32 %v819, %v820
  %v822 = vsel %vm666, %v578, 0.0
  %v823 = vadd.f32 %v821, %v822
  %v824 = vsel %vm666, %v583, 0.0
  %v825 = vadd.f32 %v823, %v824
  %v826 = vsel %vm666, %v588, 0.0
  %v827 = vadd.f32 %v825, %v826
  %v828 = vsel %vm666, %v593, 0.0
  %v829 = vadd.f32 %v827, %v828
  %v830 = vsel %vm666, %v598, 0.0
  %v831 = vadd.f32 %v829, %v830
  %v832 = vsel %vm666, %v603, 0.0
  %v833 = vadd.f32 %v831, %v832
  %v834 = vsel %vm666, %v608, 0.0
  %v835 = vadd.f32 %v833, %v834
  %v836 = vsel %vm666, %v613, 0.0
  %v837 = vadd.f32 %v835, %v836
  %v838 = vsel %vm666, %v618, 0.0
  %v839 = vadd.f32 %v837, %v838
  %v840 = vsel %vm666, %v623, 0.0
  %v841 = vadd.f32 %v839, %v840
  %v842 = vsel %vm666, %v628, 0.0
  %v843 = vadd.f32 %v841, %v842
  %v844 = vsel %vm666, %v633, 0.0
  %v845 = vadd.f32 %v843, %v844
  %v846 = vsel %vm666, %v638, 0.0
  %v847 = vadd.f32 %v845, %v846
  %v848 = vsel %vm666, %v643, 0.0
  %v849 = vadd.f32 %v847, %v848
  %v850 = vsel %vm666, %v648, 0.0
  %v851 = vadd.f32 %v849, %v850
  %v852 = vsel %vm666, %v653, 0.0
  %v853 = vadd.f32 %v851, %v852
  %v854 = vsel %vm666, %v658, 0.0
  %v855 = vadd.f32 %v853, %v854
  %v856 = vsel %vm666, %v663, 0.0
  %v857 = vadd.f32 %v855, %v856
  %v858 = vrot.slane %v857, 4
  %v859 = vadd.f32 %v857, %v858
  %v860 = vrot.slane %v859, 2
  %v861 = vadd.f32 %v859, %v860
  %v862 = vrot.slane %v861, 1
  %v863 = vadd.f32 %v861, %v862
  %vm864 = vcmask 122880
  %865 = vst.msk [vmem:[%s5] sm:$0x1] %vm864, %v863
  %v866 = vmul.f32 %v348, %v348
  %v867 = vmul.f32 %v353, %v353
  %v868 = vmul.f32 %v358, %v358
  %v869 = vmul.f32 %v363, %v363
  %v870 = vmul.f32 %v368, %v368
  %v871 = vmul.f32 %v373, %v373
  %v872 = vmul.f32 %v378, %v378
  %v873 = vmul.f32 %v383, %v383
  %v874 = vmul.f32 %v388, %v388
  %v875 = vmul.f32 %v393, %v393
  %v876 = vmul.f32 %v398, %v398
  %v877 = vmul.f32 %v403, %v403
  %v878 = vmul.f32 %v408, %v408
  %v879 = vmul.f32 %v413, %v413
  %v880 = vmul.f32 %v418, %v418
  %v881 = vmul.f32 %v423, %v423
  %v882 = vmul.f32 %v428, %v428
  %v883 = vmul.f32 %v433, %v433
  %v884 = vmul.f32 %v438, %v438
  %v885 = vmul.f32 %v443, %v443
  %v886 = vmul.f32 %v448, %v448
  %v887 = vmul.f32 %v453, %v453
  %v888 = vmul.f32 %v458, %v458
  %v889 = vmul.f32 %v463, %v463
  %v890 = vmul.f32 %v468, %v468
  %v891 = vmul.f32 %v473, %v473
  %v892 = vmul.f32 %v478, %v478
  %v893 = vmul.f32 %v483, %v483
  %v894 = vmul.f32 %v488, %v488
  %v895 = vmul.f32 %v493, %v493
  %v896 = vmul.f32 %v498, %v498
  %v897 = vmul.f32 %v503, %v503
  %v898 = vmul.f32 %v508, %v508
  %v899 = vmul.f32 %v513, %v513
  %v900 = vmul.f32 %v518, %v518
  %v901 = vmul.f32 %v523, %v523
  %v902 = vmul.f32 %v528, %v528
  %v903 = vmul.f32 %v533, %v533
  %v904 = vmul.f32 %v538, %v538
  %v905 = vmul.f32 %v543, %v543
  %v906 = vmul.f32 %v548, %v548
  %v907 = vmul.f32 %v553, %v553
  %v908 = vmul.f32 %v558, %v558
  %v909 = vmul.f32 %v563, %v563
  %v910 = vmul.f32 %v568, %v568
  %v911 = vmul.f32 %v573, %v573
  %v912 = vmul.f32 %v578, %v578
  %v913 = vmul.f32 %v583, %v583
  %v914 = vmul.f32 %v588, %v588
  %v915 = vmul.f32 %v593, %v593
  %v916 = vmul.f32 %v598, %v598
  %v917 = vmul.f32 %v603, %v603
  %v918 = vmul.f32 %v608, %v608
  %v919 = vmul.f32 %v613, %v613
  %v920 = vmul.f32 %v618, %v618
  %v921 = vmul.f32 %v623, %v623
  %v922 = vmul.f32 %v628, %v628
  %v923 = vmul.f32 %v633, %v633
  %v924 = vmul.f32 %v638, %v638
  %v925 = vmul.f32 %v643, %v643
  %v926 = vmul.f32 %v648, %v648
  %v927 = vmul.f32 %v653, %v653
  %v928 = vmul.f32 %v658, %v658
  %v929 = vmul.f32 %v663, %v663
  %v930 = vsel %vm666, %v866, 0.0
  %v931 = vsel %vm666, %v867, 0.0
  %v932 = vadd.f32 %v930, %v931
  %v933 = vsel %vm666, %v868, 0.0
  %v934 = vadd.f32 %v932, %v933
  %v935 = vsel %vm666, %v869, 0.0
  %v936 = vadd.f32 %v934, %v935
  %v937 = vsel %vm666, %v870, 0.0
  %v938 = vadd.f32 %v936, %v937
  %v939 = vsel %vm666, %v871, 0.0
  %v940 = vadd.f32 %v938, %v939
  %v941 = vsel %vm666, %v872, 0.0
  %v942 = vadd.f32 %v940, %v941
  %v943 = vsel %vm666, %v873, 0.0
  %v944 = vadd.f32 %v942, %v943
  %v945 = vsel %vm666, %v874, 0.0
  %v946 = vadd.f32 %v944, %v945
  %v947 = vsel %vm666, %v875, 0.0
  %v948 = vadd.f32 %v946, %v947
  %v949 = vsel %vm666, %v876, 0.0
  %v950 = vadd.f32 %v948, %v949
  %v951 = vsel %vm666, %v877, 0.0
  %v952 = vadd.f32 %v950, %v951
  %v953 = vsel %vm666, %v878, 0.0
  %v954 = vadd.f32 %v952, %v953
  %v955 = vsel %vm666, %v879, 0.0
  %v956 = vadd.f32 %v954, %v955
  %v957 = vsel %vm666, %v880, 0.0
  %v958 = vadd.f32 %v956, %v957
  %v959 = vsel %vm666, %v881, 0.0
  %v960 = vadd.f32 %v958, %v959
  %v961 = vsel %vm666, %v882, 0.0
  %v962 = vadd.f32 %v960, %v961
  %v963 = vsel %vm666, %v883, 0.0
  %v964 = vadd.f32 %v962, %v963
  %v965 = vsel %vm666, %v884, 0.0
  %v966 = vadd.f32 %v964, %v965
  %v967 = vsel %vm666, %v885, 0.0
  %v968 = vadd.f32 %v966, %v967
  %v969 = vsel %vm666, %v886, 0.0
  %v970 = vadd.f32 %v968, %v969
  %v971 = vsel %vm666, %v887, 0.0
  %v972 = vadd.f32 %v970, %v971
  %v973 = vsel %vm666, %v888, 0.0
  %v974 = vadd.f32 %v972, %v973
  %v975 = vsel %vm666, %v889, 0.0
  %v976 = vadd.f32 %v974, %v975
  %v977 = vsel %vm666, %v890, 0.0
  %v978 = vadd.f32 %v976, %v977
  %v979 = vsel %vm666, %v891, 0.0
  %v980 = vadd.f32 %v978, %v979
  %v981 = vsel %vm666, %v892, 0.0
  %v982 = vadd.f32 %v980, %v981
  %v983 = vsel %vm666, %v893, 0.0
  %v984 = vadd.f32 %v982, %v983
  %v985 = vsel %vm666, %v894, 0.0
  %v986 = vadd.f32 %v984, %v985
  %v987 = vsel %vm666, %v895, 0.0
  %v988 = vadd.f32 %v986, %v987
  %v989 = vsel %vm666, %v896, 0.0
  %v990 = vadd.f32 %v988, %v989
  %v991 = vsel %vm666, %v897, 0.0
  %v992 = vadd.f32 %v990, %v991
  %v993 = vsel %vm666, %v898, 0.0
  %v994 = vadd.f32 %v992, %v993
  %v995 = vsel %vm666, %v899, 0.0
  %v996 = vadd.f32 %v994, %v995
  %v997 = vsel %vm666, %v900, 0.0
  %v998 = vadd.f32 %v996, %v997
  %v999 = vsel %vm666, %v901, 0.0
  %v1000 = vadd.f32 %v998, %v999
  %v1001 = vsel %vm666, %v902, 0.0
  %v1002 = vadd.f32 %v1000, %v1001
  %v1003 = vsel %vm666, %v903, 0.0
  %v1004 = vadd.f32 %v1002, %v1003
  %v1005 = vsel %vm666, %v904, 0.0
  %v1006 = vadd.f32 %v1004, %v1005
  %v1007 = vsel %vm666, %v905, 0.0
  %v1008 = vadd.f32 %v1006, %v1007
  %v1009 = vsel %vm666, %v906, 0.0
  %v1010 = vadd.f32 %v1008, %v1009
  %v1011 = vsel %vm666, %v907, 0.0
  %v1012 = vadd.f32 %v1010, %v1011
  %v1013 = vsel %vm666, %v908, 0.0
  %v1014 = vadd.f32 %v1012, %v1013
  %v1015 = vsel %vm666, %v909, 0.0
  %v1016 = vadd.f32 %v1014, %v1015
  %v1017 = vsel %vm666, %v910, 0.0
  %v1018 = vadd.f32 %v1016, %v1017
  %v1019 = vsel %vm666, %v911, 0.0
  %v1020 = vadd.f32 %v1018, %v1019
  %v1021 = vsel %vm666, %v912, 0.0
  %v1022 = vadd.f32 %v1020, %v1021
  %v1023 = vsel %vm666, %v913, 0.0
  %v1024 = vadd.f32 %v1022, %v1023
  %v1025 = vsel %vm666, %v914, 0.0
  %v1026 = vadd.f32 %v1024, %v1025
  %v1027 = vsel %vm666, %v915, 0.0
  %v1028 = vadd.f32 %v1026, %v1027
  %v1029 = vsel %vm666, %v916, 0.0
  %v1030 = vadd.f32 %v1028, %v1029
  %v1031 = vsel %vm666, %v917, 0.0
  %v1032 = vadd.f32 %v1030, %v1031
  %v1033 = vsel %vm666, %v918, 0.0
  %v1034 = vadd.f32 %v1032, %v1033
  %v1035 = vsel %vm666, %v919, 0.0
  %v1036 = vadd.f32 %v1034, %v1035
  %v1037 = vsel %vm666, %v920, 0.0
  %v1038 = vadd.f32 %v1036, %v1037
  %v1039 = vsel %vm666, %v921, 0.0
  %v1040 = vadd.f32 %v1038, %v1039
  %v1041 = vsel %vm666, %v922, 0.0
  %v1042 = vadd.f32 %v1040, %v1041
  %v1043 = vsel %vm666, %v923, 0.0
  %v1044 = vadd.f32 %v1042, %v1043
  %v1045 = vsel %vm666, %v924, 0.0
  %v1046 = vadd.f32 %v1044, %v1045
  %v1047 = vsel %vm666, %v925, 0.0
  %v1048 = vadd.f32 %v1046, %v1047
  %v1049 = vsel %vm666, %v926, 0.0
  %v1050 = vadd.f32 %v1048, %v1049
  %v1051 = vsel %vm666, %v927, 0.0
  %v1052 = vadd.f32 %v1050, %v1051
  %v1053 = vsel %vm666, %v928, 0.0
  %v1054 = vadd.f32 %v1052, %v1053
  %v1055 = vsel %vm666, %v929, 0.0
  %v1056 = vadd.f32 %v1054, %v1055
  %v1057 = vrot.slane %v1056, 4
  %v1058 = vadd.f32 %v1056, %v1057
  %v1059 = vrot.slane %v1058, 2
  %v1060 = vadd.f32 %v1058, %v1059
  %v1061 = vrot.slane %v1060, 1
  %v1062 = vadd.f32 %v1060, %v1061
  %1063 = vst.msk [vmem:[%s5 + $0x1] sm:$0x1] %vm864, %v1062
  // Predicated region
  $region18: #{bottleneck_forward.8} parent=0 // pred_check
    _
  $region19: #{bottleneck_forward.8} parent=0 // pred_check_branch
    %1065 = sbr.rel (0) target = $region21
  $region20: #{bottleneck_forward.8} parent=0 // pred_region
    _
  $region21: #{bottleneck_forward.8} parent=0 // pred_fallthru
    _
  // Predicated region
  $region22: #{bottleneck_forward.8} parent=0 // pred_check
    _
  $region23: #{bottleneck_forward.8} parent=0 // pred_check_branch
    %1067 = sbr.rel (0) target = $region25
  $region24: #{bottleneck_forward.8} parent=0 // pred_region
    _
  $region25: #{bottleneck_forward.8} parent=0 // pred_fallthru
    _
  // Predicated region
  $region26: #{bottleneck_forward.8} parent=0 // pred_check
    _
  $region27: #{bottleneck_forward.8} parent=0 // pred_check_branch
    %1069 = sbr.rel (0) target = $region29
  $region28: #{bottleneck_forward.8} parent=0 // pred_region
    _
  $region29: #{bottleneck_forward.8} parent=0 // pred_fallthru
    _
  // Predicated region
  $region30: #{bottleneck_forward.8} parent=0 // pred_check
    _
  $region31: #{bottleneck_forward.8} parent=0 // pred_check_branch
    %1071 = sbr.rel (0) target = $region33
  $region32: #{bottleneck_forward.8} parent=0 // pred_region
    _
  $region33: #{bottleneck_forward.8} parent=0 // pred_fallthru
    _

// kernel: bottleneck_forward.5
$region0: #{bottleneck_forward.5}
  #allocation0 [shape = 'u32[]', space=smem, size = 0x4, offset = 0x4, fixed_abs, tag = 'smem constant byte address 0x4 - core index']
  #allocation1 [shape = 'u32[144,128]{1,0:T(1,128)}', space=vmem, size = 0x12000, scoped, tag = 'internal scratch']
  %s0 = inlined_call_operand.vmem [shape: f32[512,4], index: 0, kind: input, shape index: {}]
  %s1 = inlined_call_operand.vmem [shape: f32[4,4], index: 1, kind: input, shape index: {}]
  %s2 = inlined_call_operand.vmem [shape: f32[1,4], index: 2, kind: input, shape index: {}]
  %s3 = inlined_call_operand.vmem [shape: f32[1,4], index: 3, kind: input, shape index: {}]
  %s4 = inlined_call_operand.vmem [shape: f32[512,4], index: 4, kind: output, shape index: {0}]
  %s5 = inlined_call_operand.vmem [shape: f32[1,2,4], index: 5, kind: output, shape index: {1}]
  %6 = xla_tuple %s4, %s5
  %s7 = sld [smem:[#allocation0]]
  $region34: #{bottleneck_forward.5} parent=0
    _
  %s9 = ssub.s32 1, %s7
  %s10 = scalar_select 0, %s9, %s7
  // Predicated region
  $region2: #{bottleneck_forward.5} parent=0 // pred_check
    _
  $region3: #{bottleneck_forward.5} parent=0 // pred_check_branch
    %12 = sbr.rel (0) target = $region5
  $region4: #{bottleneck_forward.5} parent=0 // pred_region
    _
  $region5: #{bottleneck_forward.5} parent=0 // pred_fallthru
    _
  // Predicated region
  $region6: #{bottleneck_forward.5} parent=0 // pred_check
    _
  $region7: #{bottleneck_forward.5} parent=0 // pred_check_branch
    %14 = sbr.rel (0) target = $region9
  $region8: #{bottleneck_forward.5} parent=0 // pred_region
    _
  $region9: #{bottleneck_forward.5} parent=0 // pred_fallthru
    _
  // Predicated region
  $region10: #{bottleneck_forward.5} parent=0 // pred_check
    _
  $region11: #{bottleneck_forward.5} parent=0 // pred_check_branch
    %16 = sbr.rel (0) target = $region13
  $region12: #{bottleneck_forward.5} parent=0 // pred_region
    _
  $region13: #{bottleneck_forward.5} parent=0 // pred_fallthru
    _
  // Predicated region
  $region14: #{bottleneck_forward.5} parent=0 // pred_check
    _
  $region15: #{bottleneck_forward.5} parent=0 // pred_check_branch
    %18 = sbr.rel (0) target = $region17
  $region16: #{bottleneck_forward.5} parent=0 // pred_region
    _
  $region17: #{bottleneck_forward.5} parent=0 // pred_fallthru
    _
  %v19 = vld [vmem:[%s0] sm:$0xff]
  %v20 = vld [vmem:[%s0 + $0x8] sm:$0xff]
  %v21 = vld [vmem:[%s0 + $0x10] sm:$0xff]
  %v22 = vld [vmem:[%s0 + $0x18] sm:$0xff]
  %v23 = vld [vmem:[%s0 + $0x20] sm:$0xff]
  %v24 = vld [vmem:[%s0 + $0x28] sm:$0xff]
  %v25 = vld [vmem:[%s0 + $0x30] sm:$0xff]
  %v26 = vld [vmem:[%s0 + $0x38] sm:$0xff]
  %v27 = vld [vmem:[%s0 + $0x40] sm:$0xff]
  %v28 = vld [vmem:[%s0 + $0x48] sm:$0xff]
  %v29 = vld [vmem:[%s0 + $0x50] sm:$0xff]
  %v30 = vld [vmem:[%s0 + $0x58] sm:$0xff]
  %v31 = vld [vmem:[%s0 + $0x60] sm:$0xff]
  %v32 = vld [vmem:[%s0 + $0x68] sm:$0xff]
  %v33 = vld [vmem:[%s0 + $0x70] sm:$0xff]
  %v34 = vld [vmem:[%s0 + $0x78] sm:$0xff]
  %v35 = vld [vmem:[%s0 + $0x80] sm:$0xff]
  %v36 = vld [vmem:[%s0 + $0x88] sm:$0xff]
  %v37 = vld [vmem:[%s0 + $0x90] sm:$0xff]
  %v38 = vld [vmem:[%s0 + $0x98] sm:$0xff]
  %v39 = vld [vmem:[%s0 + $0xa0] sm:$0xff]
  %v40 = vld [vmem:[%s0 + $0xa8] sm:$0xff]
  %v41 = vld [vmem:[%s0 + $0xb0] sm:$0xff]
  %v42 = vld [vmem:[%s0 + $0xb8] sm:$0xff]
  %v43 = vld [vmem:[%s0 + $0xc0] sm:$0xff]
  %v44 = vld [vmem:[%s0 + $0xc8] sm:$0xff]
  %v45 = vld [vmem:[%s0 + $0xd0] sm:$0xff]
  %v46 = vld [vmem:[%s0 + $0xd8] sm:$0xff]
  %v47 = vld [vmem:[%s0 + $0xe0] sm:$0xff]
  %v48 = vld [vmem:[%s0 + $0xe8] sm:$0xff]
  %v49 = vld [vmem:[%s0 + $0xf0] sm:$0xff]
  %v50 = vld [vmem:[%s0 + $0xf8] sm:$0xff]
  %v51 = vld [vmem:[%s0 + $0x100] sm:$0xff]
  %v52 = vld [vmem:[%s0 + $0x108] sm:$0xff]
  %v53 = vld [vmem:[%s0 + $0x110] sm:$0xff]
  %v54 = vld [vmem:[%s0 + $0x118] sm:$0xff]
  %v55 = vld [vmem:[%s0 + $0x120] sm:$0xff]
  %v56 = vld [vmem:[%s0 + $0x128] sm:$0xff]
  %v57 = vld [vmem:[%s0 + $0x130] sm:$0xff]
  %v58 = vld [vmem:[%s0 + $0x138] sm:$0xff]
  %v59 = vld [vmem:[%s0 + $0x140] sm:$0xff]
  %v60 = vld [vmem:[%s0 + $0x148] sm:$0xff]
  %v61 = vld [vmem:[%s0 + $0x150] sm:$0xff]
  %v62 = vld [vmem:[%s0 + $0x158] sm:$0xff]
  %v63 = vld [vmem:[%s0 + $0x160] sm:$0xff]
  %v64 = vld [vmem:[%s0 + $0x168] sm:$0xff]
  %v65 = vld [vmem:[%s0 + $0x170] sm:$0xff]
  %v66 = vld [vmem:[%s0 + $0x178] sm:$0xff]
  %v67 = vld [vmem:[%s0 + $0x180] sm:$0xff]
  %v68 = vld [vmem:[%s0 + $0x188] sm:$0xff]
  %v69 = vld [vmem:[%s0 + $0x190] sm:$0xff]
  %v70 = vld [vmem:[%s0 + $0x198] sm:$0xff]
  %v71 = vld [vmem:[%s0 + $0x1a0] sm:$0xff]
  %v72 = vld [vmem:[%s0 + $0x1a8] sm:$0xff]
  %v73 = vld [vmem:[%s0 + $0x1b0] sm:$0xff]
  %v74 = vld [vmem:[%s0 + $0x1b8] sm:$0xff]
  %v75 = vld [vmem:[%s0 + $0x1c0] sm:$0xff]
  %v76 = vld [vmem:[%s0 + $0x1c8] sm:$0xff]
  %v77 = vld [vmem:[%s0 + $0x1d0] sm:$0xff]
  %v78 = vld [vmem:[%s0 + $0x1d8] sm:$0xff]
  %v79 = vld [vmem:[%s0 + $0x1e0] sm:$0xff]
  %v80 = vld [vmem:[%s0 + $0x1e8] sm:$0xff]
  %v81 = vld [vmem:[%s0 + $0x1f0] sm:$0xff]
  %v82 = vld [vmem:[%s0 + $0x1f8] sm:$0xff]
  %v83 = vld [vmem:[%s1] sm:$0xf]
  %vm84 = vcmask 31744
  %v86 = vsel %vm84, %v19, 0
  %v89 = vsel %vm84, %v20, 0
  %v92 = vsel %vm84, %v21, 0
  %v95 = vsel %vm84, %v22, 0
  %v98 = vsel %vm84, %v23, 0
  %v101 = vsel %vm84, %v24, 0
  %v104 = vsel %vm84, %v25, 0
  %v107 = vsel %vm84, %v26, 0
  %v110 = vsel %vm84, %v27, 0
  %v113 = vsel %vm84, %v28, 0
  %v116 = vsel %vm84, %v29, 0
  %v119 = vsel %vm84, %v30, 0
  %v122 = vsel %vm84, %v31, 0
  %v125 = vsel %vm84, %v32, 0
  %v128 = vsel %vm84, %v33, 0
  %v131 = vsel %vm84, %v34, 0
  %v134 = vsel %vm84, %v35, 0
  %v137 = vsel %vm84, %v36, 0
  %v140 = vsel %vm84, %v37, 0
  %v143 = vsel %vm84, %v38, 0
  %v146 = vsel %vm84, %v39, 0
  %v149 = vsel %vm84, %v40, 0
  %v152 = vsel %vm84, %v41, 0
  %v155 = vsel %vm84, %v42, 0
  %v158 = vsel %vm84, %v43, 0
  %v161 = vsel %vm84, %v44, 0
  %v164 = vsel %vm84, %v45, 0
  %v167 = vsel %vm84, %v46, 0
  %v170 = vsel %vm84, %v47, 0
  %v173 = vsel %vm84, %v48, 0
  %v176 = vsel %vm84, %v49, 0
  %v179 = vsel %vm84, %v50, 0
  %v182 = vsel %vm84, %v51, 0
  %v185 = vsel %vm84, %v52, 0
  %v188 = vsel %vm84, %v53, 0
  %v191 = vsel %vm84, %v54, 0
  %v194 = vsel %vm84, %v55, 0
  %v197 = vsel %vm84, %v56, 0
  %v200 = vsel %vm84, %v57, 0
  %v203 = vsel %vm84, %v58, 0
  %v206 = vsel %vm84, %v59, 0
  %v209 = vsel %vm84, %v60, 0
  %v212 = vsel %vm84, %v61, 0
  %v215 = vsel %vm84, %v62, 0
  %v218 = vsel %vm84, %v63, 0
  %v221 = vsel %vm84, %v64, 0
  %v224 = vsel %vm84, %v65, 0
  %v227 = vsel %vm84, %v66, 0
  %v230 = vsel %vm84, %v67, 0
  %v233 = vsel %vm84, %v68, 0
  %v236 = vsel %vm84, %v69, 0
  %v239 = vsel %vm84, %v70, 0
  %v242 = vsel %vm84, %v71, 0
  %v245 = vsel %vm84, %v72, 0
  %v248 = vsel %vm84, %v73, 0
  %v251 = vsel %vm84, %v74, 0
  %v254 = vsel %vm84, %v75, 0
  %v257 = vsel %vm84, %v76, 0
  %v260 = vsel %vm84, %v77, 0
  %v263 = vsel %vm84, %v78, 0
  %v266 = vsel %vm84, %v79, 0
  %v269 = vsel %vm84, %v80, 0
  %v272 = vsel %vm84, %v81, 0
  %v275 = vsel %vm84, %v82, 0
  %vm277 = vcmask 1043456
  %v279 = vsel %vm277, %v83, 0
  %281 = vmatprep.subr.mxu0 0.0
  %282 = vmatpush1.msra.mxu0 %v279
  %283 = vmatprep.subr.mxu0 0.0
  %284 = vmatpush1.msra.mxu0 0.0
  %285 = vmatprep.subr.mxu0 0.0
  %286 = vmatpush1.msra.mxu0 0.0
  %287 = vmatprep.subr.mxu0 0.0
  %288 = vmatpush1.msra.mxu0 0.0
  %289 = vmatprep.subr.mxu0 0.0
  %290 = vmatpush1.msra.mxu0 0.0
  %291 = vmatprep.subr.mxu0 0.0
  %292 = vmatpush1.msra.mxu0 0.0
  %293 = vmatprep.subr.mxu0 0.0
  %294 = vmatpush1.msra.mxu0 0.0
  %295 = vmatprep.subr.mxu0 0.0
  %296 = vmatpush1.msra.mxu0 0.0
  %297 = vmatprep.subr.mxu0 0.0
  %298 = vmatpush1.msra.mxu0 0.0
  %299 = vmatprep.subr.mxu0 0.0
  %300 = vmatpush1.msra.mxu0 0.0
  %301 = vmatprep.subr.mxu0 0.0
  %302 = vmatpush1.msra.mxu0 0.0
  %303 = vmatprep.subr.mxu0 0.0
  %304 = vmatpush1.msra.mxu0 0.0
  %305 = vmatprep.subr.mxu0 0.0
  %306 = vmatpush1.msra.mxu0 0.0
  %307 = vmatprep.subr.mxu0 0.0
  %308 = vmatpush1.msra.mxu0 0.0
  %309 = vmatprep.subr.mxu0 0.0
  %310 = vmatpush1.msra.mxu0 0.0
  %311 = vmatprep.subr.mxu0 0.0
  %312 = vmatpush1.msra.mxu0 0.0
  %313 = vmatprep.subr.mxu0 0.0
  %314 = vmatpush1.msra.mxu0 0.0
  %315 = vmatprep.subr.mxu0 0.0
  %316 = vmatpush1.msra.mxu0 0.0
  %317 = vmatprep.subr.mxu0 0.0
  %318 = vmatpush1.msra.mxu0 0.0
  %319 = vmatprep.subr.mxu0 0.0
  %320 = vmatpush1.msra.mxu0 0.0
  %321 = vmatprep.subr.mxu0 0.0
  %322 = vmatpush1.msra.mxu0 0.0
  %323 = vmatprep.subr.mxu0 0.0
  %324 = vmatpush1.msra.mxu0 0.0
  %325 = vmatprep.subr.mxu0 0.0
  %326 = vmatpush1.msra.mxu0 0.0
  %327 = vmatprep.subr.mxu0 0.0
  %328 = vmatpush1.msra.mxu0 0.0
  %329 = vmatprep.subr.mxu0 0.0
  %330 = vmatpush1.msra.mxu0 0.0
  %331 = vmatprep.subr.mxu0 0.0
  %332 = vmatpush1.msra.mxu0 0.0
  %333 = vmatprep.subr.mxu0 0.0
  %334 = vmatpush1.msra.mxu0 0.0
  %335 = vmatprep.subr.mxu0 0.0
  %336 = vmatpush1.msra.mxu0 0.0
  %337 = vmatprep.subr.mxu0 0.0
  %338 = vmatpush1.msra.mxu0 0.0
  %339 = vmatprep.subr.mxu0 0.0
  %340 = vmatpush1.msra.mxu0 0.0
  %341 = vmatprep.subr.mxu0 0.0
  %342 = vmatpush1.msra.mxu0 0.0
  %343 = vmatprep.subr.mxu0 0.0
  %344 = vmatpush1.msra.mxu0 0.0
  %345 = vmatprep.mubr.f32.mxu0 0.0
  %346 = vmatmul.mubr.f32.gmra.mrb[0].mxu0 %v86
  %v347 = vpop.f32.mrb[0].mxu0
  %v348 = vadd.f32 0.0, %v347
  %v349 = vpop.f32.mrb[0].mxu0
  %350 = vmatprep.mubr.f32.mxu0 0.0
  %351 = vmatmul.mubr.f32.gmra.mrb[0].mxu0 %v89
  %v352 = vpop.f32.mrb[0].mxu0
  %v353 = vadd.f32 0.0, %v352
  %v354 = vpop.f32.mrb[0].mxu0
  %355 = vmatprep.mubr.f32.mxu0 0.0
  %356 = vmatmul.mubr.f32.gmra.mrb[0].mxu0 %v92
  %v357 = vpop.f32.mrb[0].mxu0
  %v358 = vadd.f32 0.0, %v357
  %v359 = vpop.f32.mrb[0].mxu0
  %360 = vmatprep.mubr.f32.mxu0 0.0
  %361 = vmatmul.mubr.f32.gmra.mrb[0].mxu0 %v95
  %v362 = vpop.f32.mrb[0].mxu0
  %v363 = vadd.f32 0.0, %v362
  %v364 = vpop.f32.mrb[0].mxu0
  %365 = vmatprep.mubr.f32.mxu0 0.0
  %366 = vmatmul.mubr.f32.gmra.mrb[0].mxu0 %v98
  %v367 = vpop.f32.mrb[0].mxu0
  %v368 = vadd.f32 0.0, %v367
  %v369 = vpop.f32.mrb[0].mxu0
  %370 = vmatprep.mubr.f32.mxu0 0.0
  %371 = vmatmul.mubr.f32.gmra.mrb[0].mxu0 %v101
  %v372 = vpop.f32.mrb[0].mxu0
  %v373 = vadd.f32 0.0, %v372
  %v374 = vpop.f32.mrb[0].mxu0
  %375 = vmatprep.mubr.f32.mxu0 0.0
  %376 = vmatmul.mubr.f32.gmra.mrb[0].mxu0 %v104
  %v377 = vpop.f32.mrb[0].mxu0
  %v378 = vadd.f32 0.0, %v377
  %v379 = vpop.f32.mrb[0].mxu0
  %380 = vmatprep.mubr.f32.mxu0 0.0
  %381 = vmatmul.mubr.f32.gmra.mrb[0].mxu0 %v107
  %v382 = vpop.f32.mrb[0].mxu0
  %v383 = vadd.f32 0.0, %v382
  %v384 = vpop.f32.mrb[0].mxu0
  %385 = vmatprep.mubr.f32.mxu0 0.0
  %386 = vmatmul.mubr.f32.gmra.mrb[0].mxu0 %v110
  %v387 = vpop.f32.mrb[0].mxu0
  %v388 = vadd.f32 0.0, %v387
  %v389 = vpop.f32.mrb[0].mxu0
  %390 = vmatprep.mubr.f32.mxu0 0.0
  %391 = vmatmul.mubr.f32.gmra.mrb[0].mxu0 %v113
  %v392 = vpop.f32.mrb[0].mxu0
  %v393 = vadd.f32 0.0, %v392
  %v394 = vpop.f32.mrb[0].mxu0
  %395 = vmatprep.mubr.f32.mxu0 0.0
  %396 = vmatmul.mubr.f32.gmra.mrb[0].mxu0 %v116
  %v397 = vpop.f32.mrb[0].mxu0
  %v398 = vadd.f32 0.0, %v397
  %v399 = vpop.f32.mrb[0].mxu0
  %400 = vmatprep.mubr.f32.mxu0 0.0
  %401 = vmatmul.mubr.f32.gmra.mrb[0].mxu0 %v119
  %v402 = vpop.f32.mrb[0].mxu0
  %v403 = vadd.f32 0.0, %v402
  %v404 = vpop.f32.mrb[0].mxu0
  %405 = vmatprep.mubr.f32.mxu0 0.0
  %406 = vmatmul.mubr.f32.gmra.mrb[0].mxu0 %v122
  %v407 = vpop.f32.mrb[0].mxu0
  %v408 = vadd.f32 0.0, %v407
  %v409 = vpop.f32.mrb[0].mxu0
  %410 = vmatprep.mubr.f32.mxu0 0.0
  %411 = vmatmul.mubr.f32.gmra.mrb[0].mxu0 %v125
  %v412 = vpop.f32.mrb[0].mxu0
  %v413 = vadd.f32 0.0, %v412
  %v414 = vpop.f32.mrb[0].mxu0
  %415 = vmatprep.mubr.f32.mxu0 0.0
  %416 = vmatmul.mubr.f32.gmra.mrb[0].mxu0 %v128
  %v417 = vpop.f32.mrb[0].mxu0
  %v418 = vadd.f32 0.0, %v417
  %v419 = vpop.f32.mrb[0].mxu0
  %420 = vmatprep.mubr.f32.mxu0 0.0
  %421 = vmatmul.mubr.f32.gmra.mrb[0].mxu0 %v131
  %v422 = vpop.f32.mrb[0].mxu0
  %v423 = vadd.f32 0.0, %v422
  %v424 = vpop.f32.mrb[0].mxu0
  %425 = vmatprep.mubr.f32.mxu0 0.0
  %426 = vmatmul.mubr.f32.gmra.mrb[0].mxu0 %v134
  %v427 = vpop.f32.mrb[0].mxu0
  %v428 = vadd.f32 0.0, %v427
  %v429 = vpop.f32.mrb[0].mxu0
  %430 = vmatprep.mubr.f32.mxu0 0.0
  %431 = vmatmul.mubr.f32.gmra.mrb[0].mxu0 %v137
  %v432 = vpop.f32.mrb[0].mxu0
  %v433 = vadd.f32 0.0, %v432
  %v434 = vpop.f32.mrb[0].mxu0
  %435 = vmatprep.mubr.f32.mxu0 0.0
  %436 = vmatmul.mubr.f32.gmra.mrb[0].mxu0 %v140
  %v437 = vpop.f32.mrb[0].mxu0
  %v438 = vadd.f32 0.0, %v437
  %v439 = vpop.f32.mrb[0].mxu0
  %440 = vmatprep.mubr.f32.mxu0 0.0
  %441 = vmatmul.mubr.f32.gmra.mrb[0].mxu0 %v143
  %v442 = vpop.f32.mrb[0].mxu0
  %v443 = vadd.f32 0.0, %v442
  %v444 = vpop.f32.mrb[0].mxu0
  %445 = vmatprep.mubr.f32.mxu0 0.0
  %446 = vmatmul.mubr.f32.gmra.mrb[0].mxu0 %v146
  %v447 = vpop.f32.mrb[0].mxu0
  %v448 = vadd.f32 0.0, %v447
  %v449 = vpop.f32.mrb[0].mxu0
  %450 = vmatprep.mubr.f32.mxu0 0.0
  %451 = vmatmul.mubr.f32.gmra.mrb[0].mxu0 %v149
  %v452 = vpop.f32.mrb[0].mxu0
  %v453 = vadd.f32 0.0, %v452
  %v454 = vpop.f32.mrb[0].mxu0
  %455 = vmatprep.mubr.f32.mxu0 0.0
  %456 = vmatmul.mubr.f32.gmra.mrb[0].mxu0 %v152
  %v457 = vpop.f32.mrb[0].mxu0
  %v458 = vadd.f32 0.0, %v457
  %v459 = vpop.f32.mrb[0].mxu0
  %460 = vmatprep.mubr.f32.mxu0 0.0
  %461 = vmatmul.mubr.f32.gmra.mrb[0].mxu0 %v155
  %v462 = vpop.f32.mrb[0].mxu0
  %v463 = vadd.f32 0.0, %v462
  %v464 = vpop.f32.mrb[0].mxu0
  %465 = vmatprep.mubr.f32.mxu0 0.0
  %466 = vmatmul.mubr.f32.gmra.mrb[0].mxu0 %v158
  %v467 = vpop.f32.mrb[0].mxu0
  %v468 = vadd.f32 0.0, %v467
  %v469 = vpop.f32.mrb[0].mxu0
  %470 = vmatprep.mubr.f32.mxu0 0.0
  %471 = vmatmul.mubr.f32.gmra.mrb[0].mxu0 %v161
  %v472 = vpop.f32.mrb[0].mxu0
  %v473 = vadd.f32 0.0, %v472
  %v474 = vpop.f32.mrb[0].mxu0
  %475 = vmatprep.mubr.f32.mxu0 0.0
  %476 = vmatmul.mubr.f32.gmra.mrb[0].mxu0 %v164
  %v477 = vpop.f32.mrb[0].mxu0
  %v478 = vadd.f32 0.0, %v477
  %v479 = vpop.f32.mrb[0].mxu0
  %480 = vmatprep.mubr.f32.mxu0 0.0
  %481 = vmatmul.mubr.f32.gmra.mrb[0].mxu0 %v167
  %v482 = vpop.f32.mrb[0].mxu0
  %v483 = vadd.f32 0.0, %v482
  %v484 = vpop.f32.mrb[0].mxu0
  %485 = vmatprep.mubr.f32.mxu0 0.0
  %486 = vmatmul.mubr.f32.gmra.mrb[0].mxu0 %v170
  %v487 = vpop.f32.mrb[0].mxu0
  %v488 = vadd.f32 0.0, %v487
  %v489 = vpop.f32.mrb[0].mxu0
  %490 = vmatprep.mubr.f32.mxu0 0.0
  %491 = vmatmul.mubr.f32.gmra.mrb[0].mxu0 %v173
  %v492 = vpop.f32.mrb[0].mxu0
  %v493 = vadd.f32 0.0, %v492
  %v494 = vpop.f32.mrb[0].mxu0
  %495 = vmatprep.mubr.f32.mxu0 0.0
  %496 = vmatmul.mubr.f32.gmra.mrb[0].mxu0 %v176
  %v497 = vpop.f32.mrb[0].mxu0
  %v498 = vadd.f32 0.0, %v497
  %v499 = vpop.f32.mrb[0].mxu0
  %500 = vmatprep.mubr.f32.mxu0 0.0
  %501 = vmatmul.mubr.f32.gmra.mrb[0].mxu0 %v179
  %v502 = vpop.f32.mrb[0].mxu0
  %v503 = vadd.f32 0.0, %v502
  %v504 = vpop.f32.mrb[0].mxu0
  %505 = vmatprep.mubr.f32.mxu0 0.0
  %506 = vmatmul.mubr.f32.gmra.mrb[0].mxu0 %v182
  %v507 = vpop.f32.mrb[0].mxu0
  %v508 = vadd.f32 0.0, %v507
  %v509 = vpop.f32.mrb[0].mxu0
  %510 = vmatprep.mubr.f32.mxu0 0.0
  %511 = vmatmul.mubr.f32.gmra.mrb[0].mxu0 %v185
  %v512 = vpop.f32.mrb[0].mxu0
  %v513 = vadd.f32 0.0, %v512
  %v514 = vpop.f32.mrb[0].mxu0
  %515 = vmatprep.mubr.f32.mxu0 0.0
  %516 = vmatmul.mubr.f32.gmra.mrb[0].mxu0 %v188
  %v517 = vpop.f32.mrb[0].mxu0
  %v518 = vadd.f32 0.0, %v517
  %v519 = vpop.f32.mrb[0].mxu0
  %520 = vmatprep.mubr.f32.mxu0 0.0
  %521 = vmatmul.mubr.f32.gmra.mrb[0].mxu0 %v191
  %v522 = vpop.f32.mrb[0].mxu0
  %v523 = vadd.f32 0.0, %v522
  %v524 = vpop.f32.mrb[0].mxu0
  %525 = vmatprep.mubr.f32.mxu0 0.0
  %526 = vmatmul.mubr.f32.gmra.mrb[0].mxu0 %v194
  %v527 = vpop.f32.mrb[0].mxu0
  %v528 = vadd.f32 0.0, %v527
  %v529 = vpop.f32.mrb[0].mxu0
  %530 = vmatprep.mubr.f32.mxu0 0.0
  %531 = vmatmul.mubr.f32.gmra.mrb[0].mxu0 %v197
  %v532 = vpop.f32.mrb[0].mxu0
  %v533 = vadd.f32 0.0, %v532
  %v534 = vpop.f32.mrb[0].mxu0
  %535 = vmatprep.mubr.f32.mxu0 0.0
  %536 = vmatmul.mubr.f32.gmra.mrb[0].mxu0 %v200
  %v537 = vpop.f32.mrb[0].mxu0
  %v538 = vadd.f32 0.0, %v537
  %v539 = vpop.f32.mrb[0].mxu0
  %540 = vmatprep.mubr.f32.mxu0 0.0
  %541 = vmatmul.mubr.f32.gmra.mrb[0].mxu0 %v203
  %v542 = vpop.f32.mrb[0].mxu0
  %v543 = vadd.f32 0.0, %v542
  %v544 = vpop.f32.mrb[0].mxu0
  %545 = vmatprep.mubr.f32.mxu0 0.0
  %546 = vmatmul.mubr.f32.gmra.mrb[0].mxu0 %v206
  %v547 = vpop.f32.mrb[0].mxu0
  %v548 = vadd.f32 0.0, %v547
  %v549 = vpop.f32.mrb[0].mxu0
  %550 = vmatprep.mubr.f32.mxu0 0.0
  %551 = vmatmul.mubr.f32.gmra.mrb[0].mxu0 %v209
  %v552 = vpop.f32.mrb[0].mxu0
  %v553 = vadd.f32 0.0, %v552
  %v554 = vpop.f32.mrb[0].mxu0
  %555 = vmatprep.mubr.f32.mxu0 0.0
  %556 = vmatmul.mubr.f32.gmra.mrb[0].mxu0 %v212
  %v557 = vpop.f32.mrb[0].mxu0
  %v558 = vadd.f32 0.0, %v557
  %v559 = vpop.f32.mrb[0].mxu0
  %560 = vmatprep.mubr.f32.mxu0 0.0
  %561 = vmatmul.mubr.f32.gmra.mrb[0].mxu0 %v215
  %v562 = vpop.f32.mrb[0].mxu0
  %v563 = vadd.f32 0.0, %v562
  %v564 = vpop.f32.mrb[0].mxu0
  %565 = vmatprep.mubr.f32.mxu0 0.0
  %566 = vmatmul.mubr.f32.gmra.mrb[0].mxu0 %v218
  %v567 = vpop.f32.mrb[0].mxu0
  %v568 = vadd.f32 0.0, %v567
  %v569 = vpop.f32.mrb[0].mxu0
  %570 = vmatprep.mubr.f32.mxu0 0.0
  %571 = vmatmul.mubr.f32.gmra.mrb[0].mxu0 %v221
  %v572 = vpop.f32.mrb[0].mxu0
  %v573 = vadd.f32 0.0, %v572
  %v574 = vpop.f32.mrb[0].mxu0
  %575 = vmatprep.mubr.f32.mxu0 0.0
  %576 = vmatmul.mubr.f32.gmra.mrb[0].mxu0 %v224
  %v577 = vpop.f32.mrb[0].mxu0
  %v578 = vadd.f32 0.0, %v577
  %v579 = vpop.f32.mrb[0].mxu0
  %580 = vmatprep.mubr.f32.mxu0 0.0
  %581 = vmatmul.mubr.f32.gmra.mrb[0].mxu0 %v227
  %v582 = vpop.f32.mrb[0].mxu0
  %v583 = vadd.f32 0.0, %v582
  %v584 = vpop.f32.mrb[0].mxu0
  %585 = vmatprep.mubr.f32.mxu0 0.0
  %586 = vmatmul.mubr.f32.gmra.mrb[0].mxu0 %v230
  %v587 = vpop.f32.mrb[0].mxu0
  %v588 = vadd.f32 0.0, %v587
  %v589 = vpop.f32.mrb[0].mxu0
  %590 = vmatprep.mubr.f32.mxu0 0.0
  %591 = vmatmul.mubr.f32.gmra.mrb[0].mxu0 %v233
  %v592 = vpop.f32.mrb[0].mxu0
  %v593 = vadd.f32 0.0, %v592
  %v594 = vpop.f32.mrb[0].mxu0
  %595 = vmatprep.mubr.f32.mxu0 0.0
  %596 = vmatmul.mubr.f32.gmra.mrb[0].mxu0 %v236
  %v597 = vpop.f32.mrb[0].mxu0
  %v598 = vadd.f32 0.0, %v597
  %v599 = vpop.f32.mrb[0].mxu0
  %600 = vmatprep.mubr.f32.mxu0 0.0
  %601 = vmatmul.mubr.f32.gmra.mrb[0].mxu0 %v239
  %v602 = vpop.f32.mrb[0].mxu0
  %v603 = vadd.f32 0.0, %v602
  %v604 = vpop.f32.mrb[0].mxu0
  %605 = vmatprep.mubr.f32.mxu0 0.0
  %606 = vmatmul.mubr.f32.gmra.mrb[0].mxu0 %v242
  %v607 = vpop.f32.mrb[0].mxu0
  %v608 = vadd.f32 0.0, %v607
  %v609 = vpop.f32.mrb[0].mxu0
  %610 = vmatprep.mubr.f32.mxu0 0.0
  %611 = vmatmul.mubr.f32.gmra.mrb[0].mxu0 %v245
  %v612 = vpop.f32.mrb[0].mxu0
  %v613 = vadd.f32 0.0, %v612
  %v614 = vpop.f32.mrb[0].mxu0
  %615 = vmatprep.mubr.f32.mxu0 0.0
  %616 = vmatmul.mubr.f32.gmra.mrb[0].mxu0 %v248
  %v617 = vpop.f32.mrb[0].mxu0
  %v618 = vadd.f32 0.0, %v617
  %v619 = vpop.f32.mrb[0].mxu0
  %620 = vmatprep.mubr.f32.mxu0 0.0
  %621 = vmatmul.mubr.f32.gmra.mrb[0].mxu0 %v251
  %v622 = vpop.f32.mrb[0].mxu0
  %v623 = vadd.f32 0.0, %v622
  %v624 = vpop.f32.mrb[0].mxu0
  %625 = vmatprep.mubr.f32.mxu0 0.0
  %626 = vmatmul.mubr.f32.gmra.mrb[0].mxu0 %v254
  %v627 = vpop.f32.mrb[0].mxu0
  %v628 = vadd.f32 0.0, %v627
  %v629 = vpop.f32.mrb[0].mxu0
  %630 = vmatprep.mubr.f32.mxu0 0.0
  %631 = vmatmul.mubr.f32.gmra.mrb[0].mxu0 %v257
  %v632 = vpop.f32.mrb[0].mxu0
  %v633 = vadd.f32 0.0, %v632
  %v634 = vpop.f32.mrb[0].mxu0
  %635 = vmatprep.mubr.f32.mxu0 0.0
  %636 = vmatmul.mubr.f32.gmra.mrb[0].mxu0 %v260
  %v637 = vpop.f32.mrb[0].mxu0
  %v638 = vadd.f32 0.0, %v637
  %v639 = vpop.f32.mrb[0].mxu0
  %640 = vmatprep.mubr.f32.mxu0 0.0
  %641 = vmatmul.mubr.f32.gmra.mrb[0].mxu0 %v263
  %v642 = vpop.f32.mrb[0].mxu0
  %v643 = vadd.f32 0.0, %v642
  %v644 = vpop.f32.mrb[0].mxu0
  %645 = vmatprep.mubr.f32.mxu0 0.0
  %646 = vmatmul.mubr.f32.gmra.mrb[0].mxu0 %v266
  %v647 = vpop.f32.mrb[0].mxu0
  %v648 = vadd.f32 0.0, %v647
  %v649 = vpop.f32.mrb[0].mxu0
  %650 = vmatprep.mubr.f32.mxu0 0.0
  %651 = vmatmul.mubr.f32.gmra.mrb[0].mxu0 %v269
  %v652 = vpop.f32.mrb[0].mxu0
  %v653 = vadd.f32 0.0, %v652
  %v654 = vpop.f32.mrb[0].mxu0
  %655 = vmatprep.mubr.f32.mxu0 0.0
  %656 = vmatmul.mubr.f32.gmra.mrb[0].mxu0 %v272
  %v657 = vpop.f32.mrb[0].mxu0
  %v658 = vadd.f32 0.0, %v657
  %v659 = vpop.f32.mrb[0].mxu0
  %660 = vmatprep.mubr.f32.mxu0 0.0
  %661 = vmatmul.mubr.f32.gmra.mrb[0].mxu0 %v275
  %v662 = vpop.f32.mrb[0].mxu0
  %v663 = vadd.f32 0.0, %v662
  %v664 = vpop.f32.mrb[0].mxu0
  %665 = vdwg.mxu0
  %666 = vst.msk [vmem:[%s4] sm:$0xff] %vm84, %v348
  %667 = vst.msk [vmem:[%s4 + $0x8] sm:$0xff] %vm84, %v353
  %668 = vst.msk [vmem:[%s4 + $0x10] sm:$0xff] %vm84, %v358
  %669 = vst.msk [vmem:[%s4 + $0x18] sm:$0xff] %vm84, %v363
  %670 = vst.msk [vmem:[%s4 + $0x20] sm:$0xff] %vm84, %v368
  %671 = vst.msk [vmem:[%s4 + $0x28] sm:$0xff] %vm84, %v373
  %672 = vst.msk [vmem:[%s4 + $0x30] sm:$0xff] %vm84, %v378
  %673 = vst.msk [vmem:[%s4 + $0x38] sm:$0xff] %vm84, %v383
  %674 = vst.msk [vmem:[%s4 + $0x40] sm:$0xff] %vm84, %v388
  %675 = vst.msk [vmem:[%s4 + $0x48] sm:$0xff] %vm84, %v393
  %676 = vst.msk [vmem:[%s4 + $0x50] sm:$0xff] %vm84, %v398
  %677 = vst.msk [vmem:[%s4 + $0x58] sm:$0xff] %vm84, %v403
  %678 = vst.msk [vmem:[%s4 + $0x60] sm:$0xff] %vm84, %v408
  %679 = vst.msk [vmem:[%s4 + $0x68] sm:$0xff] %vm84, %v413
  %680 = vst.msk [vmem:[%s4 + $0x70] sm:$0xff] %vm84, %v418
  %681 = vst.msk [vmem:[%s4 + $0x78] sm:$0xff] %vm84, %v423
  %682 = vst.msk [vmem:[%s4 + $0x80] sm:$0xff] %vm84, %v428
  %683 = vst.msk [vmem:[%s4 + $0x88] sm:$0xff] %vm84, %v433
  %684 = vst.msk [vmem:[%s4 + $0x90] sm:$0xff] %vm84, %v438
  %685 = vst.msk [vmem:[%s4 + $0x98] sm:$0xff] %vm84, %v443
  %686 = vst.msk [vmem:[%s4 + $0xa0] sm:$0xff] %vm84, %v448
  %687 = vst.msk [vmem:[%s4 + $0xa8] sm:$0xff] %vm84, %v453
  %688 = vst.msk [vmem:[%s4 + $0xb0] sm:$0xff] %vm84, %v458
  %689 = vst.msk [vmem:[%s4 + $0xb8] sm:$0xff] %vm84, %v463
  %690 = vst.msk [vmem:[%s4 + $0xc0] sm:$0xff] %vm84, %v468
  %691 = vst.msk [vmem:[%s4 + $0xc8] sm:$0xff] %vm84, %v473
  %692 = vst.msk [vmem:[%s4 + $0xd0] sm:$0xff] %vm84, %v478
  %693 = vst.msk [vmem:[%s4 + $0xd8] sm:$0xff] %vm84, %v483
  %694 = vst.msk [vmem:[%s4 + $0xe0] sm:$0xff] %vm84, %v488
  %695 = vst.msk [vmem:[%s4 + $0xe8] sm:$0xff] %vm84, %v493
  %696 = vst.msk [vmem:[%s4 + $0xf0] sm:$0xff] %vm84, %v498
  %697 = vst.msk [vmem:[%s4 + $0xf8] sm:$0xff] %vm84, %v503
  %698 = vst.msk [vmem:[%s4 + $0x100] sm:$0xff] %vm84, %v508
  %699 = vst.msk [vmem:[%s4 + $0x108] sm:$0xff] %vm84, %v513
  %700 = vst.msk [vmem:[%s4 + $0x110] sm:$0xff] %vm84, %v518
  %701 = vst.msk [vmem:[%s4 + $0x118] sm:$0xff] %vm84, %v523
  %702 = vst.msk [vmem:[%s4 + $0x120] sm:$0xff] %vm84, %v528
  %703 = vst.msk [vmem:[%s4 + $0x128] sm:$0xff] %vm84, %v533
  %704 = vst.msk [vmem:[%s4 + $0x130] sm:$0xff] %vm84, %v538
  %705 = vst.msk [vmem:[%s4 + $0x138] sm:$0xff] %vm84, %v543
  %706 = vst.msk [vmem:[%s4 + $0x140] sm:$0xff] %vm84, %v548
  %707 = vst.msk [vmem:[%s4 + $0x148] sm:$0xff] %vm84, %v553
  %708 = vst.msk [vmem:[%s4 + $0x150] sm:$0xff] %vm84, %v558
  %709 = vst.msk [vmem:[%s4 + $0x158] sm:$0xff] %vm84, %v563
  %710 = vst.msk [vmem:[%s4 + $0x160] sm:$0xff] %vm84, %v568
  %711 = vst.msk [vmem:[%s4 + $0x168] sm:$0xff] %vm84, %v573
  %712 = vst.msk [vmem:[%s4 + $0x170] sm:$0xff] %vm84, %v578
  %713 = vst.msk [vmem:[%s4 + $0x178] sm:$0xff] %vm84, %v583
  %714 = vst.msk [vmem:[%s4 + $0x180] sm:$0xff] %vm84, %v588
  %715 = vst.msk [vmem:[%s4 + $0x188] sm:$0xff] %vm84, %v593
  %716 = vst.msk [vmem:[%s4 + $0x190] sm:$0xff] %vm84, %v598
  %717 = vst.msk [vmem:[%s4 + $0x198] sm:$0xff] %vm84, %v603
  %718 = vst.msk [vmem:[%s4 + $0x1a0] sm:$0xff] %vm84, %v608
  %719 = vst.msk [vmem:[%s4 + $0x1a8] sm:$0xff] %vm84, %v613
  %720 = vst.msk [vmem:[%s4 + $0x1b0] sm:$0xff] %vm84, %v618
  %721 = vst.msk [vmem:[%s4 + $0x1b8] sm:$0xff] %vm84, %v623
  %722 = vst.msk [vmem:[%s4 + $0x1c0] sm:$0xff] %vm84, %v628
  %723 = vst.msk [vmem:[%s4 + $0x1c8] sm:$0xff] %vm84, %v633
  %724 = vst.msk [vmem:[%s4 + $0x1d0] sm:$0xff] %vm84, %v638
  %725 = vst.msk [vmem:[%s4 + $0x1d8] sm:$0xff] %vm84, %v643
  %726 = vst.msk [vmem:[%s4 + $0x1e0] sm:$0xff] %vm84, %v648
  %727 = vst.msk [vmem:[%s4 + $0x1e8] sm:$0xff] %vm84, %v653
  %728 = vst.msk [vmem:[%s4 + $0x1f0] sm:$0xff] %vm84, %v658
  %729 = vst.msk [vmem:[%s4 + $0x1f8] sm:$0xff] %vm84, %v663
  %v730 = vsel %vm84, %v348, 0.0
  %v731 = vsel %vm84, %v353, 0.0
  %v732 = vadd.f32 %v730, %v731
  %v733 = vsel %vm84, %v358, 0.0
  %v734 = vadd.f32 %v732, %v733
  %v735 = vsel %vm84, %v363, 0.0
  %v736 = vadd.f32 %v734, %v735
  %v737 = vsel %vm84, %v368, 0.0
  %v738 = vadd.f32 %v736, %v737
  %v739 = vsel %vm84, %v373, 0.0
  %v740 = vadd.f32 %v738, %v739
  %v741 = vsel %vm84, %v378, 0.0
  %v742 = vadd.f32 %v740, %v741
  %v743 = vsel %vm84, %v383, 0.0
  %v744 = vadd.f32 %v742, %v743
  %v745 = vsel %vm84, %v388, 0.0
  %v746 = vadd.f32 %v744, %v745
  %v747 = vsel %vm84, %v393, 0.0
  %v748 = vadd.f32 %v746, %v747
  %v749 = vsel %vm84, %v398, 0.0
  %v750 = vadd.f32 %v748, %v749
  %v751 = vsel %vm84, %v403, 0.0
  %v752 = vadd.f32 %v750, %v751
  %v753 = vsel %vm84, %v408, 0.0
  %v754 = vadd.f32 %v752, %v753
  %v755 = vsel %vm84, %v413, 0.0
  %v756 = vadd.f32 %v754, %v755
  %v757 = vsel %vm84, %v418, 0.0
  %v758 = vadd.f32 %v756, %v757
  %v759 = vsel %vm84, %v423, 0.0
  %v760 = vadd.f32 %v758, %v759
  %v761 = vsel %vm84, %v428, 0.0
  %v762 = vadd.f32 %v760, %v761
  %v763 = vsel %vm84, %v433, 0.0
  %v764 = vadd.f32 %v762, %v763
  %v765 = vsel %vm84, %v438, 0.0
  %v766 = vadd.f32 %v764, %v765
  %v767 = vsel %vm84, %v443, 0.0
  %v768 = vadd.f32 %v766, %v767
  %v769 = vsel %vm84, %v448, 0.0
  %v770 = vadd.f32 %v768, %v769
  %v771 = vsel %vm84, %v453, 0.0
  %v772 = vadd.f32 %v770, %v771
  %v773 = vsel %vm84, %v458, 0.0
  %v774 = vadd.f32 %v772, %v773
  %v775 = vsel %vm84, %v463, 0.0
  %v776 = vadd.f32 %v774, %v775
  %v777 = vsel %vm84, %v468, 0.0
  %v778 = vadd.f32 %v776, %v777
  %v779 = vsel %vm84, %v473, 0.0
  %v780 = vadd.f32 %v778, %v779
  %v781 = vsel %vm84, %v478, 0.0
  %v782 = vadd.f32 %v780, %v781
  %v783 = vsel %vm84, %v483, 0.0
  %v784 = vadd.f32 %v782, %v783
  %v785 = vsel %vm84, %v488, 0.0
  %v786 = vadd.f32 %v784, %v785
  %v787 = vsel %vm84, %v493, 0.0
  %v788 = vadd.f32 %v786, %v787
  %v789 = vsel %vm84, %v498, 0.0
  %v790 = vadd.f32 %v788, %v789
  %v791 = vsel %vm84, %v503, 0.0
  %v792 = vadd.f32 %v790, %v791
  %v793 = vsel %vm84, %v508, 0.0
  %v794 = vadd.f32 %v792, %v793
  %v795 = vsel %vm84, %v513, 0.0
  %v796 = vadd.f32 %v794, %v795
  %v797 = vsel %vm84, %v518, 0.0
  %v798 = vadd.f32 %v796, %v797
  %v799 = vsel %vm84, %v523, 0.0
  %v800 = vadd.f32 %v798, %v799
  %v801 = vsel %vm84, %v528, 0.0
  %v802 = vadd.f32 %v800, %v801
  %v803 = vsel %vm84, %v533, 0.0
  %v804 = vadd.f32 %v802, %v803
  %v805 = vsel %vm84, %v538, 0.0
  %v806 = vadd.f32 %v804, %v805
  %v807 = vsel %vm84, %v543, 0.0
  %v808 = vadd.f32 %v806, %v807
  %v809 = vsel %vm84, %v548, 0.0
  %v810 = vadd.f32 %v808, %v809
  %v811 = vsel %vm84, %v553, 0.0
  %v812 = vadd.f32 %v810, %v811
  %v813 = vsel %vm84, %v558, 0.0
  %v814 = vadd.f32 %v812, %v813
  %v815 = vsel %vm84, %v563, 0.0
  %v816 = vadd.f32 %v814, %v815
  %v817 = vsel %vm84, %v568, 0.0
  %v818 = vadd.f32 %v816, %v817
  %v819 = vsel %vm84, %v573, 0.0
  %v820 = vadd.f32 %v818, %v819
  %v821 = vsel %vm84, %v578, 0.0
  %v822 = vadd.f32 %v820, %v821
  %v823 = vsel %vm84, %v583, 0.0
  %v824 = vadd.f32 %v822, %v823
  %v825 = vsel %vm84, %v588, 0.0
  %v826 = vadd.f32 %v824, %v825
  %v827 = vsel %vm84, %v593, 0.0
  %v828 = vadd.f32 %v826, %v827
  %v829 = vsel %vm84, %v598, 0.0
  %v830 = vadd.f32 %v828, %v829
  %v831 = vsel %vm84, %v603, 0.0
  %v832 = vadd.f32 %v830, %v831
  %v833 = vsel %vm84, %v608, 0.0
  %v834 = vadd.f32 %v832, %v833
  %v835 = vsel %vm84, %v613, 0.0
  %v836 = vadd.f32 %v834, %v835
  %v837 = vsel %vm84, %v618, 0.0
  %v838 = vadd.f32 %v836, %v837
  %v839 = vsel %vm84, %v623, 0.0
  %v840 = vadd.f32 %v838, %v839
  %v841 = vsel %vm84, %v628, 0.0
  %v842 = vadd.f32 %v840, %v841
  %v843 = vsel %vm84, %v633, 0.0
  %v844 = vadd.f32 %v842, %v843
  %v845 = vsel %vm84, %v638, 0.0
  %v846 = vadd.f32 %v844, %v845
  %v847 = vsel %vm84, %v643, 0.0
  %v848 = vadd.f32 %v846, %v847
  %v849 = vsel %vm84, %v648, 0.0
  %v850 = vadd.f32 %v848, %v849
  %v851 = vsel %vm84, %v653, 0.0
  %v852 = vadd.f32 %v850, %v851
  %v853 = vsel %vm84, %v658, 0.0
  %v854 = vadd.f32 %v852, %v853
  %v855 = vsel %vm84, %v663, 0.0
  %v856 = vadd.f32 %v854, %v855
  %v857 = vrot.slane %v856, 4
  %v858 = vadd.f32 %v856, %v857
  %v859 = vrot.slane %v858, 2
  %v860 = vadd.f32 %v858, %v859
  %v861 = vrot.slane %v860, 1
  %v862 = vadd.f32 %v860, %v861
  %vm863 = vcmask 24576
  %864 = vst.msk [vmem:[%s5] sm:$0x1] %vm863, %v862
  %v865 = vmul.f32 %v348, %v348
  %v866 = vmul.f32 %v353, %v353
  %v867 = vmul.f32 %v358, %v358
  %v868 = vmul.f32 %v363, %v363
  %v869 = vmul.f32 %v368, %v368
  %v870 = vmul.f32 %v373, %v373
  %v871 = vmul.f32 %v378, %v378
  %v872 = vmul.f32 %v383, %v383
  %v873 = vmul.f32 %v388, %v388
  %v874 = vmul.f32 %v393, %v393
  %v875 = vmul.f32 %v398, %v398
  %v876 = vmul.f32 %v403, %v403
  %v877 = vmul.f32 %v408, %v408
  %v878 = vmul.f32 %v413, %v413
  %v879 = vmul.f32 %v418, %v418
  %v880 = vmul.f32 %v423, %v423
  %v881 = vmul.f32 %v428, %v428
  %v882 = vmul.f32 %v433, %v433
  %v883 = vmul.f32 %v438, %v438
  %v884 = vmul.f32 %v443, %v443
  %v885 = vmul.f32 %v448, %v448
  %v886 = vmul.f32 %v453, %v453
  %v887 = vmul.f32 %v458, %v458
  %v888 = vmul.f32 %v463, %v463
  %v889 = vmul.f32 %v468, %v468
  %v890 = vmul.f32 %v473, %v473
  %v891 = vmul.f32 %v478, %v478
  %v892 = vmul.f32 %v483, %v483
  %v893 = vmul.f32 %v488, %v488
  %v894 = vmul.f32 %v493, %v493
  %v895 = vmul.f32 %v498, %v498
  %v896 = vmul.f32 %v503, %v503
  %v897 = vmul.f32 %v508, %v508
  %v898 = vmul.f32 %v513, %v513
  %v899 = vmul.f32 %v518, %v518
  %v900 = vmul.f32 %v523, %v523
  %v901 = vmul.f32 %v528, %v528
  %v902 = vmul.f32 %v533, %v533
  %v903 = vmul.f32 %v538, %v538
  %v904 = vmul.f32 %v543, %v543
  %v905 = vmul.f32 %v548, %v548
  %v906 = vmul.f32 %v553, %v553
  %v907 = vmul.f32 %v558, %v558
  %v908 = vmul.f32 %v563, %v563
  %v909 = vmul.f32 %v568, %v568
  %v910 = vmul.f32 %v573, %v573
  %v911 = vmul.f32 %v578, %v578
  %v912 = vmul.f32 %v583, %v583
  %v913 = vmul.f32 %v588, %v588
  %v914 = vmul.f32 %v593, %v593
  %v915 = vmul.f32 %v598, %v598
  %v916 = vmul.f32 %v603, %v603
  %v917 = vmul.f32 %v608, %v608
  %v918 = vmul.f32 %v613, %v613
  %v919 = vmul.f32 %v618, %v618
  %v920 = vmul.f32 %v623, %v623
  %v921 = vmul.f32 %v628, %v628
  %v922 = vmul.f32 %v633, %v633
  %v923 = vmul.f32 %v638, %v638
  %v924 = vmul.f32 %v643, %v643
  %v925 = vmul.f32 %v648, %v648
  %v926 = vmul.f32 %v653, %v653
  %v927 = vmul.f32 %v658, %v658
  %v928 = vmul.f32 %v663, %v663
  %v929 = vsel %vm84, %v865, 0.0
  %v930 = vsel %vm84, %v866, 0.0
  %v931 = vadd.f32 %v929, %v930
  %v932 = vsel %vm84, %v867, 0.0
  %v933 = vadd.f32 %v931, %v932
  %v934 = vsel %vm84, %v868, 0.0
  %v935 = vadd.f32 %v933, %v934
  %v936 = vsel %vm84, %v869, 0.0
  %v937 = vadd.f32 %v935, %v936
  %v938 = vsel %vm84, %v870, 0.0
  %v939 = vadd.f32 %v937, %v938
  %v940 = vsel %vm84, %v871, 0.0
  %v941 = vadd.f32 %v939, %v940
  %v942 = vsel %vm84, %v872, 0.0
  %v943 = vadd.f32 %v941, %v942
  %v944 = vsel %vm84, %v873, 0.0
  %v945 = vadd.f32 %v943, %v944
  %v946 = vsel %vm84, %v874, 0.0
  %v947 = vadd.f32 %v945, %v946
  %v948 = vsel %vm84, %v875, 0.0
  %v949 = vadd.f32 %v947, %v948
  %v950 = vsel %vm84, %v876, 0.0
  %v951 = vadd.f32 %v949, %v950
  %v952 = vsel %vm84, %v877, 0.0
  %v953 = vadd.f32 %v951, %v952
  %v954 = vsel %vm84, %v878, 0.0
  %v955 = vadd.f32 %v953, %v954
  %v956 = vsel %vm84, %v879, 0.0
  %v957 = vadd.f32 %v955, %v956
  %v958 = vsel %vm84, %v880, 0.0
  %v959 = vadd.f32 %v957, %v958
  %v960 = vsel %vm84, %v881, 0.0
  %v961 = vadd.f32 %v959, %v960
  %v962 = vsel %vm84, %v882, 0.0
  %v963 = vadd.f32 %v961, %v962
  %v964 = vsel %vm84, %v883, 0.0
  %v965 = vadd.f32 %v963, %v964
  %v966 = vsel %vm84, %v884, 0.0
  %v967 = vadd.f32 %v965, %v966
  %v968 = vsel %vm84, %v885, 0.0
  %v969 = vadd.f32 %v967, %v968
  %v970 = vsel %vm84, %v886, 0.0
  %v971 = vadd.f32 %v969, %v970
  %v972 = vsel %vm84, %v887, 0.0
  %v973 = vadd.f32 %v971, %v972
  %v974 = vsel %vm84, %v888, 0.0
  %v975 = vadd.f32 %v973, %v974
  %v976 = vsel %vm84, %v889, 0.0
  %v977 = vadd.f32 %v975, %v976
  %v978 = vsel %vm84, %v890, 0.0
  %v979 = vadd.f32 %v977, %v978
  %v980 = vsel %vm84, %v891, 0.0
  %v981 = vadd.f32 %v979, %v980
  %v982 = vsel %vm84, %v892, 0.0
  %v983 = vadd.f32 %v981, %v982
  %v984 = vsel %vm84, %v893, 0.0
  %v985 = vadd.f32 %v983, %v984
  %v986 = vsel %vm84, %v894, 0.0
  %v987 = vadd.f32 %v985, %v986
  %v988 = vsel %vm84, %v895, 0.0
  %v989 = vadd.f32 %v987, %v988
  %v990 = vsel %vm84, %v896, 0.0
  %v991 = vadd.f32 %v989, %v990
  %v992 = vsel %vm84, %v897, 0.0
  %v993 = vadd.f32 %v991, %v992
  %v994 = vsel %vm84, %v898, 0.0
  %v995 = vadd.f32 %v993, %v994
  %v996 = vsel %vm84, %v899, 0.0
  %v997 = vadd.f32 %v995, %v996
  %v998 = vsel %vm84, %v900, 0.0
  %v999 = vadd.f32 %v997, %v998
  %v1000 = vsel %vm84, %v901, 0.0
  %v1001 = vadd.f32 %v999, %v1000
  %v1002 = vsel %vm84, %v902, 0.0
  %v1003 = vadd.f32 %v1001, %v1002
  %v1004 = vsel %vm84, %v903, 0.0
  %v1005 = vadd.f32 %v1003, %v1004
  %v1006 = vsel %vm84, %v904, 0.0
  %v1007 = vadd.f32 %v1005, %v1006
  %v1008 = vsel %vm84, %v905, 0.0
  %v1009 = vadd.f32 %v1007, %v1008
  %v1010 = vsel %vm84, %v906, 0.0
  %v1011 = vadd.f32 %v1009, %v1010
  %v1012 = vsel %vm84, %v907, 0.0
  %v1013 = vadd.f32 %v1011, %v1012
  %v1014 = vsel %vm84, %v908, 0.0
  %v1015 = vadd.f32 %v1013, %v1014
  %v1016 = vsel %vm84, %v909, 0.0
  %v1017 = vadd.f32 %v1015, %v1016
  %v1018 = vsel %vm84, %v910, 0.0
  %v1019 = vadd.f32 %v1017, %v1018
  %v1020 = vsel %vm84, %v911, 0.0
  %v1021 = vadd.f32 %v1019, %v1020
  %v1022 = vsel %vm84, %v912, 0.0
  %v1023 = vadd.f32 %v1021, %v1022
  %v1024 = vsel %vm84, %v913, 0.0
  %v1025 = vadd.f32 %v1023, %v1024
  %v1026 = vsel %vm84, %v914, 0.0
  %v1027 = vadd.f32 %v1025, %v1026
  %v1028 = vsel %vm84, %v915, 0.0
  %v1029 = vadd.f32 %v1027, %v1028
  %v1030 = vsel %vm84, %v916, 0.0
  %v1031 = vadd.f32 %v1029, %v1030
  %v1032 = vsel %vm84, %v917, 0.0
  %v1033 = vadd.f32 %v1031, %v1032
  %v1034 = vsel %vm84, %v918, 0.0
  %v1035 = vadd.f32 %v1033, %v1034
  %v1036 = vsel %vm84, %v919, 0.0
  %v1037 = vadd.f32 %v1035, %v1036
  %v1038 = vsel %vm84, %v920, 0.0
  %v1039 = vadd.f32 %v1037, %v1038
  %v1040 = vsel %vm84, %v921, 0.0
  %v1041 = vadd.f32 %v1039, %v1040
  %v1042 = vsel %vm84, %v922, 0.0
  %v1043 = vadd.f32 %v1041, %v1042
  %v1044 = vsel %vm84, %v923, 0.0
  %v1045 = vadd.f32 %v1043, %v1044
  %v1046 = vsel %vm84, %v924, 0.0
  %v1047 = vadd.f32 %v1045, %v1046
  %v1048 = vsel %vm84, %v925, 0.0
  %v1049 = vadd.f32 %v1047, %v1048
  %v1050 = vsel %vm84, %v926, 0.0
  %v1051 = vadd.f32 %v1049, %v1050
  %v1052 = vsel %vm84, %v927, 0.0
  %v1053 = vadd.f32 %v1051, %v1052
  %v1054 = vsel %vm84, %v928, 0.0
  %v1055 = vadd.f32 %v1053, %v1054
  %v1056 = vrot.slane %v1055, 4
  %v1057 = vadd.f32 %v1055, %v1056
  %v1058 = vrot.slane %v1057, 2
  %v1059 = vadd.f32 %v1057, %v1058
  %v1060 = vrot.slane %v1059, 1
  %v1061 = vadd.f32 %v1059, %v1060
  %1062 = vst.msk [vmem:[%s5 + $0x1] sm:$0x1] %vm863, %v1061
  // Predicated region
  $region18: #{bottleneck_forward.5} parent=0 // pred_check
    _
  $region19: #{bottleneck_forward.5} parent=0 // pred_check_branch
    %1064 = sbr.rel (0) target = $region21
  $region20: #{bottleneck_forward.5} parent=0 // pred_region
    _
  $region21: #{bottleneck_forward.5} parent=0 // pred_fallthru
    _
  // Predicated region
  $region22: #{bottleneck_forward.5} parent=0 // pred_check
    _
  $region23: #{bottleneck_forward.5} parent=0 // pred_check_branch
    %1066 = sbr.rel (0) target = $region25
  $region24: #{bottleneck_forward.5} parent=0 // pred_region
    _
  $region25: #{bottleneck_forward.5} parent=0 // pred_fallthru
    _
  // Predicated region
  $region26: #{bottleneck_forward.5} parent=0 // pred_check
    _
  $region27: #{bottleneck_forward.5} parent=0 // pred_check_branch
    %1068 = sbr.rel (0) target = $region29
  $region28: #{bottleneck_forward.5} parent=0 // pred_region
    _
  $region29: #{bottleneck_forward.5} parent=0 // pred_fallthru
    _
  // Predicated region
  $region30: #{bottleneck_forward.5} parent=0 // pred_check
    _
  $region31: #{bottleneck_forward.5} parent=0 // pred_check_branch
    %1070 = sbr.rel (0) target = $region33
  $region32: #{bottleneck_forward.5} parent=0 // pred_region
    _
  $region33: #{bottleneck_forward.5} parent=0 // pred_fallthru
    _

// kernel: bottleneck_forward.9
$region0: #{bottleneck_forward.9}
  #allocation0 [shape = 'u32[]', space=smem, size = 0x4, offset = 0x4, fixed_abs, tag = 'smem constant byte address 0x4 - core index']
  #allocation1 [shape = 'u32[144,128]{1,0:T(1,128)}', space=vmem, size = 0x12000, scoped, tag = 'internal scratch']
  %s0 = inlined_call_operand.vmem [shape: f32[512,16], index: 0, kind: input, shape index: {}]
  %s1 = inlined_call_operand.vmem [shape: f32[512,16], index: 1, kind: input, shape index: {}]
  %s2 = inlined_call_operand.vmem [shape: f32[1,16], index: 2, kind: input, shape index: {}]
  %s3 = inlined_call_operand.vmem [shape: f32[1,16], index: 3, kind: input, shape index: {}]
  %s4 = inlined_call_operand.vmem [shape: f32[1,16], index: 4, kind: input, shape index: {}]
  %s5 = inlined_call_operand.vmem [shape: f32[1,16], index: 5, kind: input, shape index: {}]
  %s6 = inlined_call_operand.vmem [shape: f32[512,16], index: 6, kind: output, shape index: {}]
  %s7 = sld [smem:[#allocation0]]
  $region34: #{bottleneck_forward.9} parent=0
    _
  %s9 = ssub.s32 1, %s7
  %s10 = scalar_select 0, %s9, %s7
  // Predicated region
  $region2: #{bottleneck_forward.9} parent=0 // pred_check
    _
  $region3: #{bottleneck_forward.9} parent=0 // pred_check_branch
    %12 = sbr.rel (0) target = $region5
  $region4: #{bottleneck_forward.9} parent=0 // pred_region
    _
  $region5: #{bottleneck_forward.9} parent=0 // pred_fallthru
    _
  // Predicated region
  $region6: #{bottleneck_forward.9} parent=0 // pred_check
    _
  $region7: #{bottleneck_forward.9} parent=0 // pred_check_branch
    %14 = sbr.rel (0) target = $region9
  $region8: #{bottleneck_forward.9} parent=0 // pred_region
    _
  $region9: #{bottleneck_forward.9} parent=0 // pred_fallthru
    _
  // Predicated region
  $region10: #{bottleneck_forward.9} parent=0 // pred_check
    _
  $region11: #{bottleneck_forward.9} parent=0 // pred_check_branch
    %16 = sbr.rel (0) target = $region13
  $region12: #{bottleneck_forward.9} parent=0 // pred_region
    _
  $region13: #{bottleneck_forward.9} parent=0 // pred_fallthru
    _
  // Predicated region
  $region14: #{bottleneck_forward.9} parent=0 // pred_check
    _
  $region15: #{bottleneck_forward.9} parent=0 // pred_check_branch
    %18 = sbr.rel (0) target = $region17
  $region16: #{bottleneck_forward.9} parent=0 // pred_region
    _
  $region17: #{bottleneck_forward.9} parent=0 // pred_fallthru
    _
  // Predicated region
  $region18: #{bottleneck_forward.9} parent=0 // pred_check
    _
  $region19: #{bottleneck_forward.9} parent=0 // pred_check_branch
    %20 = sbr.rel (0) target = $region21
  $region20: #{bottleneck_forward.9} parent=0 // pred_region
    _
  $region21: #{bottleneck_forward.9} parent=0 // pred_fallthru
    _
  // Predicated region
  $region22: #{bottleneck_forward.9} parent=0 // pred_check
    _
  $region23: #{bottleneck_forward.9} parent=0 // pred_check_branch
    %22 = sbr.rel (0) target = $region25
  $region24: #{bottleneck_forward.9} parent=0 // pred_region
    _
  $region25: #{bottleneck_forward.9} parent=0 // pred_fallthru
    _
  %v23 = vld [vmem:[%s0] sm:$0xff]
  %v24 = vld [vmem:[%s0 + $0x8] sm:$0xff]
  %v25 = vld [vmem:[%s0 + $0x10] sm:$0xff]
  %v26 = vld [vmem:[%s0 + $0x18] sm:$0xff]
  %v27 = vld [vmem:[%s0 + $0x20] sm:$0xff]
  %v28 = vld [vmem:[%s0 + $0x28] sm:$0xff]
  %v29 = vld [vmem:[%s0 + $0x30] sm:$0xff]
  %v30 = vld [vmem:[%s0 + $0x38] sm:$0xff]
  %v31 = vld [vmem:[%s0 + $0x40] sm:$0xff]
  %v32 = vld [vmem:[%s0 + $0x48] sm:$0xff]
  %v33 = vld [vmem:[%s0 + $0x50] sm:$0xff]
  %v34 = vld [vmem:[%s0 + $0x58] sm:$0xff]
  %v35 = vld [vmem:[%s0 + $0x60] sm:$0xff]
  %v36 = vld [vmem:[%s0 + $0x68] sm:$0xff]
  %v37 = vld [vmem:[%s0 + $0x70] sm:$0xff]
  %v38 = vld [vmem:[%s0 + $0x78] sm:$0xff]
  %v39 = vld [vmem:[%s0 + $0x80] sm:$0xff]
  %v40 = vld [vmem:[%s0 + $0x88] sm:$0xff]
  %v41 = vld [vmem:[%s0 + $0x90] sm:$0xff]
  %v42 = vld [vmem:[%s0 + $0x98] sm:$0xff]
  %v43 = vld [vmem:[%s0 + $0xa0] sm:$0xff]
  %v44 = vld [vmem:[%s0 + $0xa8] sm:$0xff]
  %v45 = vld [vmem:[%s0 + $0xb0] sm:$0xff]
  %v46 = vld [vmem:[%s0 + $0xb8] sm:$0xff]
  %v47 = vld [vmem:[%s0 + $0xc0] sm:$0xff]
  %v48 = vld [vmem:[%s0 + $0xc8] sm:$0xff]
  %v49 = vld [vmem:[%s0 + $0xd0] sm:$0xff]
  %v50 = vld [vmem:[%s0 + $0xd8] sm:$0xff]
  %v51 = vld [vmem:[%s0 + $0xe0] sm:$0xff]
  %v52 = vld [vmem:[%s0 + $0xe8] sm:$0xff]
  %v53 = vld [vmem:[%s0 + $0xf0] sm:$0xff]
  %v54 = vld [vmem:[%s0 + $0xf8] sm:$0xff]
  %v55 = vld [vmem:[%s0 + $0x100] sm:$0xff]
  %v56 = vld [vmem:[%s0 + $0x108] sm:$0xff]
  %v57 = vld [vmem:[%s0 + $0x110] sm:$0xff]
  %v58 = vld [vmem:[%s0 + $0x118] sm:$0xff]
  %v59 = vld [vmem:[%s0 + $0x120] sm:$0xff]
  %v60 = vld [vmem:[%s0 + $0x128] sm:$0xff]
  %v61 = vld [vmem:[%s0 + $0x130] sm:$0xff]
  %v62 = vld [vmem:[%s0 + $0x138] sm:$0xff]
  %v63 = vld [vmem:[%s0 + $0x140] sm:$0xff]
  %v64 = vld [vmem:[%s0 + $0x148] sm:$0xff]
  %v65 = vld [vmem:[%s0 + $0x150] sm:$0xff]
  %v66 = vld [vmem:[%s0 + $0x158] sm:$0xff]
  %v67 = vld [vmem:[%s0 + $0x160] sm:$0xff]
  %v68 = vld [vmem:[%s0 + $0x168] sm:$0xff]
  %v69 = vld [vmem:[%s0 + $0x170] sm:$0xff]
  %v70 = vld [vmem:[%s0 + $0x178] sm:$0xff]
  %v71 = vld [vmem:[%s0 + $0x180] sm:$0xff]
  %v72 = vld [vmem:[%s0 + $0x188] sm:$0xff]
  %v73 = vld [vmem:[%s0 + $0x190] sm:$0xff]
  %v74 = vld [vmem:[%s0 + $0x198] sm:$0xff]
  %v75 = vld [vmem:[%s0 + $0x1a0] sm:$0xff]
  %v76 = vld [vmem:[%s0 + $0x1a8] sm:$0xff]
  %v77 = vld [vmem:[%s0 + $0x1b0] sm:$0xff]
  %v78 = vld [vmem:[%s0 + $0x1b8] sm:$0xff]
  %v79 = vld [vmem:[%s0 + $0x1c0] sm:$0xff]
  %v80 = vld [vmem:[%s0 + $0x1c8] sm:$0xff]
  %v81 = vld [vmem:[%s0 + $0x1d0] sm:$0xff]
  %v82 = vld [vmem:[%s0 + $0x1d8] sm:$0xff]
  %v83 = vld [vmem:[%s0 + $0x1e0] sm:$0xff]
  %v84 = vld [vmem:[%s0 + $0x1e8] sm:$0xff]
  %v85 = vld [vmem:[%s0 + $0x1f0] sm:$0xff]
  %v86 = vld [vmem:[%s0 + $0x1f8] sm:$0xff]
  %v87 = vld [vmem:[%s1] sm:$0xff]
  %v88 = vld [vmem:[%s1 + $0x8] sm:$0xff]
  %v89 = vld [vmem:[%s1 + $0x10] sm:$0xff]
  %v90 = vld [vmem:[%s1 + $0x18] sm:$0xff]
  %v91 = vld [vmem:[%s1 + $0x20] sm:$0xff]
  %v92 = vld [vmem:[%s1 + $0x28] sm:$0xff]
  %v93 = vld [vmem:[%s1 + $0x30] sm:$0xff]
  %v94 = vld [vmem:[%s1 + $0x38] sm:$0xff]
  %v95 = vld [vmem:[%s1 + $0x40] sm:$0xff]
  %v96 = vld [vmem:[%s1 + $0x48] sm:$0xff]
  %v97 = vld [vmem:[%s1 + $0x50] sm:$0xff]
  %v98 = vld [vmem:[%s1 + $0x58] sm:$0xff]
  %v99 = vld [vmem:[%s1 + $0x60] sm:$0xff]
  %v100 = vld [vmem:[%s1 + $0x68] sm:$0xff]
  %v101 = vld [vmem:[%s1 + $0x70] sm:$0xff]
  %v102 = vld [vmem:[%s1 + $0x78] sm:$0xff]
  %v103 = vld [vmem:[%s1 + $0x80] sm:$0xff]
  %v104 = vld [vmem:[%s1 + $0x88] sm:$0xff]
  %v105 = vld [vmem:[%s1 + $0x90] sm:$0xff]
  %v106 = vld [vmem:[%s1 + $0x98] sm:$0xff]
  %v107 = vld [vmem:[%s1 + $0xa0] sm:$0xff]
  %v108 = vld [vmem:[%s1 + $0xa8] sm:$0xff]
  %v109 = vld [vmem:[%s1 + $0xb0] sm:$0xff]
  %v110 = vld [vmem:[%s1 + $0xb8] sm:$0xff]
  %v111 = vld [vmem:[%s1 + $0xc0] sm:$0xff]
  %v112 = vld [vmem:[%s1 + $0xc8] sm:$0xff]
  %v113 = vld [vmem:[%s1 + $0xd0] sm:$0xff]
  %v114 = vld [vmem:[%s1 + $0xd8] sm:$0xff]
  %v115 = vld [vmem:[%s1 + $0xe0] sm:$0xff]
  %v116 = vld [vmem:[%s1 + $0xe8] sm:$0xff]
  %v117 = vld [vmem:[%s1 + $0xf0] sm:$0xff]
  %v118 = vld [vmem:[%s1 + $0xf8] sm:$0xff]
  %v119 = vld [vmem:[%s1 + $0x100] sm:$0xff]
  %v120 = vld [vmem:[%s1 + $0x108] sm:$0xff]
  %v121 = vld [vmem:[%s1 + $0x110] sm:$0xff]
  %v122 = vld [vmem:[%s1 + $0x118] sm:$0xff]
  %v123 = vld [vmem:[%s1 + $0x120] sm:$0xff]
  %v124 = vld [vmem:[%s1 + $0x128] sm:$0xff]
  %v125 = vld [vmem:[%s1 + $0x130] sm:$0xff]
  %v126 = vld [vmem:[%s1 + $0x138] sm:$0xff]
  %v127 = vld [vmem:[%s1 + $0x140] sm:$0xff]
  %v128 = vld [vmem:[%s1 + $0x148] sm:$0xff]
  %v129 = vld [vmem:[%s1 + $0x150] sm:$0xff]
  %v130 = vld [vmem:[%s1 + $0x158] sm:$0xff]
  %v131 = vld [vmem:[%s1 + $0x160] sm:$0xff]
  %v132 = vld [vmem:[%s1 + $0x168] sm:$0xff]
  %v133 = vld [vmem:[%s1 + $0x170] sm:$0xff]
  %v134 = vld [vmem:[%s1 + $0x178] sm:$0xff]
  %v135 = vld [vmem:[%s1 + $0x180] sm:$0xff]
  %v136 = vld [vmem:[%s1 + $0x188] sm:$0xff]
  %v137 = vld [vmem:[%s1 + $0x190] sm:$0xff]
  %v138 = vld [vmem:[%s1 + $0x198] sm:$0xff]
  %v139 = vld [vmem:[%s1 + $0x1a0] sm:$0xff]
  %v140 = vld [vmem:[%s1 + $0x1a8] sm:$0xff]
  %v141 = vld [vmem:[%s1 + $0x1b0] sm:$0xff]
  %v142 = vld [vmem:[%s1 + $0x1b8] sm:$0xff]
  %v143 = vld [vmem:[%s1 + $0x1c0] sm:$0xff]
  %v144 = vld [vmem:[%s1 + $0x1c8] sm:$0xff]
  %v145 = vld [vmem:[%s1 + $0x1d0] sm:$0xff]
  %v146 = vld [vmem:[%s1 + $0x1d8] sm:$0xff]
  %v147 = vld [vmem:[%s1 + $0x1e0] sm:$0xff]
  %v148 = vld [vmem:[%s1 + $0x1e8] sm:$0xff]
  %v149 = vld [vmem:[%s1 + $0x1f0] sm:$0xff]
  %v150 = vld [vmem:[%s1 + $0x1f8] sm:$0xff]
  %v151 = vld [vmem:[%s2] sm:$0x1]
  %v153 = vlaneseq
  %v154 = vshrl.u32 %v153, 7
  %v155 = vsub.s32 0, %v154
  %v156 = vrot.slane %v151, %v155
  %v158 = vmul.f32 %v23, %v156
  %v159 = vmul.f32 %v24, %v156
  %v160 = vmul.f32 %v25, %v156
  %v161 = vmul.f32 %v26, %v156
  %v162 = vmul.f32 %v27, %v156
  %v163 = vmul.f32 %v28, %v156
  %v164 = vmul.f32 %v29, %v156
  %v165 = vmul.f32 %v30, %v156
  %v166 = vmul.f32 %v31, %v156
  %v167 = vmul.f32 %v32, %v156
  %v168 = vmul.f32 %v33, %v156
  %v169 = vmul.f32 %v34, %v156
  %v170 = vmul.f32 %v35, %v156
  %v171 = vmul.f32 %v36, %v156
  %v172 = vmul.f32 %v37, %v156
  %v173 = vmul.f32 %v38, %v156
  %v174 = vmul.f32 %v39, %v156
  %v175 = vmul.f32 %v40, %v156
  %v176 = vmul.f32 %v41, %v156
  %v177 = vmul.f32 %v42, %v156
  %v178 = vmul.f32 %v43, %v156
  %v179 = vmul.f32 %v44, %v156
  %v180 = vmul.f32 %v45, %v156
  %v181 = vmul.f32 %v46, %v156
  %v182 = vmul.f32 %v47, %v156
  %v183 = vmul.f32 %v48, %v156
  %v184 = vmul.f32 %v49, %v156
  %v185 = vmul.f32 %v50, %v156
  %v186 = vmul.f32 %v51, %v156
  %v187 = vmul.f32 %v52, %v156
  %v188 = vmul.f32 %v53, %v156
  %v189 = vmul.f32 %v54, %v156
  %v190 = vmul.f32 %v55, %v156
  %v191 = vmul.f32 %v56, %v156
  %v192 = vmul.f32 %v57, %v156
  %v193 = vmul.f32 %v58, %v156
  %v194 = vmul.f32 %v59, %v156
  %v195 = vmul.f32 %v60, %v156
  %v196 = vmul.f32 %v61, %v156
  %v197 = vmul.f32 %v62, %v156
  %v198 = vmul.f32 %v63, %v156
  %v199 = vmul.f32 %v64, %v156
  %v200 = vmul.f32 %v65, %v156
  %v201 = vmul.f32 %v66, %v156
  %v202 = vmul.f32 %v67, %v156
  %v203 = vmul.f32 %v68, %v156
  %v204 = vmul.f32 %v69, %v156
  %v205 = vmul.f32 %v70, %v156
  %v206 = vmul.f32 %v71, %v156
  %v207 = vmul.f32 %v72, %v156
  %v208 = vmul.f32 %v73, %v156
  %v209 = vmul.f32 %v74, %v156
  %v210 = vmul.f32 %v75, %v156
  %v211 = vmul.f32 %v76, %v156
  %v212 = vmul.f32 %v77, %v156
  %v213 = vmul.f32 %v78, %v156
  %v214 = vmul.f32 %v79, %v156
  %v215 = vmul.f32 %v80, %v156
  %v216 = vmul.f32 %v81, %v156
  %v217 = vmul.f32 %v82, %v156
  %v218 = vmul.f32 %v83, %v156
  %v219 = vmul.f32 %v84, %v156
  %v220 = vmul.f32 %v85, %v156
  %v221 = vmul.f32 %v86, %v156
  %v222 = vld [vmem:[%s3] sm:$0x1]
  %v224 = vlaneseq
  %v225 = vshrl.u32 %v224, 7
  %v226 = vsub.s32 0, %v225
  %v227 = vrot.slane %v222, %v226
  %v229 = vadd.f32 %v158, %v227
  %v230 = vadd.f32 %v159, %v227
  %v231 = vadd.f32 %v160, %v227
  %v232 = vadd.f32 %v161, %v227
  %v233 = vadd.f32 %v162, %v227
  %v234 = vadd.f32 %v163, %v227
  %v235 = vadd.f32 %v164, %v227
  %v236 = vadd.f32 %v165, %v227
  %v237 = vadd.f32 %v166, %v227
  %v238 = vadd.f32 %v167, %v227
  %v239 = vadd.f32 %v168, %v227
  %v240 = vadd.f32 %v169, %v227
  %v241 = vadd.f32 %v170, %v227
  %v242 = vadd.f32 %v171, %v227
  %v243 = vadd.f32 %v172, %v227
  %v244 = vadd.f32 %v173, %v227
  %v245 = vadd.f32 %v174, %v227
  %v246 = vadd.f32 %v175, %v227
  %v247 = vadd.f32 %v176, %v227
  %v248 = vadd.f32 %v177, %v227
  %v249 = vadd.f32 %v178, %v227
  %v250 = vadd.f32 %v179, %v227
  %v251 = vadd.f32 %v180, %v227
  %v252 = vadd.f32 %v181, %v227
  %v253 = vadd.f32 %v182, %v227
  %v254 = vadd.f32 %v183, %v227
  %v255 = vadd.f32 %v184, %v227
  %v256 = vadd.f32 %v185, %v227
  %v257 = vadd.f32 %v186, %v227
  %v258 = vadd.f32 %v187, %v227
  %v259 = vadd.f32 %v188, %v227
  %v260 = vadd.f32 %v189, %v227
  %v261 = vadd.f32 %v190, %v227
  %v262 = vadd.f32 %v191, %v227
  %v263 = vadd.f32 %v192, %v227
  %v264 = vadd.f32 %v193, %v227
  %v265 = vadd.f32 %v194, %v227
  %v266 = vadd.f32 %v195, %v227
  %v267 = vadd.f32 %v196, %v227
  %v268 = vadd.f32 %v197, %v227
  %v269 = vadd.f32 %v198, %v227
  %v270 = vadd.f32 %v199, %v227
  %v271 = vadd.f32 %v200, %v227
  %v272 = vadd.f32 %v201, %v227
  %v273 = vadd.f32 %v202, %v227
  %v274 = vadd.f32 %v203, %v227
  %v275 = vadd.f32 %v204, %v227
  %v276 = vadd.f32 %v205, %v227
  %v277 = vadd.f32 %v206, %v227
  %v278 = vadd.f32 %v207, %v227
  %v279 = vadd.f32 %v208, %v227
  %v280 = vadd.f32 %v209, %v227
  %v281 = vadd.f32 %v210, %v227
  %v282 = vadd.f32 %v211, %v227
  %v283 = vadd.f32 %v212, %v227
  %v284 = vadd.f32 %v213, %v227
  %v285 = vadd.f32 %v214, %v227
  %v286 = vadd.f32 %v215, %v227
  %v287 = vadd.f32 %v216, %v227
  %v288 = vadd.f32 %v217, %v227
  %v289 = vadd.f32 %v218, %v227
  %v290 = vadd.f32 %v219, %v227
  %v291 = vadd.f32 %v220, %v227
  %v292 = vadd.f32 %v221, %v227
  %v293 = vld [vmem:[%s4] sm:$0x1]
  %v295 = vlaneseq
  %v296 = vshrl.u32 %v295, 7
  %v297 = vsub.s32 0, %v296
  %v298 = vrot.slane %v293, %v297
  %v300 = vmul.f32 %v87, %v298
  %v301 = vmul.f32 %v88, %v298
  %v302 = vmul.f32 %v89, %v298
  %v303 = vmul.f32 %v90, %v298
  %v304 = vmul.f32 %v91, %v298
  %v305 = vmul.f32 %v92, %v298
  %v306 = vmul.f32 %v93, %v298
  %v307 = vmul.f32 %v94, %v298
  %v308 = vmul.f32 %v95, %v298
  %v309 = vmul.f32 %v96, %v298
  %v310 = vmul.f32 %v97, %v298
  %v311 = vmul.f32 %v98, %v298
  %v312 = vmul.f32 %v99, %v298
  %v313 = vmul.f32 %v100, %v298
  %v314 = vmul.f32 %v101, %v298
  %v315 = vmul.f32 %v102, %v298
  %v316 = vmul.f32 %v103, %v298
  %v317 = vmul.f32 %v104, %v298
  %v318 = vmul.f32 %v105, %v298
  %v319 = vmul.f32 %v106, %v298
  %v320 = vmul.f32 %v107, %v298
  %v321 = vmul.f32 %v108, %v298
  %v322 = vmul.f32 %v109, %v298
  %v323 = vmul.f32 %v110, %v298
  %v324 = vmul.f32 %v111, %v298
  %v325 = vmul.f32 %v112, %v298
  %v326 = vmul.f32 %v113, %v298
  %v327 = vmul.f32 %v114, %v298
  %v328 = vmul.f32 %v115, %v298
  %v329 = vmul.f32 %v116, %v298
  %v330 = vmul.f32 %v117, %v298
  %v331 = vmul.f32 %v118, %v298
  %v332 = vmul.f32 %v119, %v298
  %v333 = vmul.f32 %v120, %v298
  %v334 = vmul.f32 %v121, %v298
  %v335 = vmul.f32 %v122, %v298
  %v336 = vmul.f32 %v123, %v298
  %v337 = vmul.f32 %v124, %v298
  %v338 = vmul.f32 %v125, %v298
  %v339 = vmul.f32 %v126, %v298
  %v340 = vmul.f32 %v127, %v298
  %v341 = vmul.f32 %v128, %v298
  %v342 = vmul.f32 %v129, %v298
  %v343 = vmul.f32 %v130, %v298
  %v344 = vmul.f32 %v131, %v298
  %v345 = vmul.f32 %v132, %v298
  %v346 = vmul.f32 %v133, %v298
  %v347 = vmul.f32 %v134, %v298
  %v348 = vmul.f32 %v135, %v298
  %v349 = vmul.f32 %v136, %v298
  %v350 = vmul.f32 %v137, %v298
  %v351 = vmul.f32 %v138, %v298
  %v352 = vmul.f32 %v139, %v298
  %v353 = vmul.f32 %v140, %v298
  %v354 = vmul.f32 %v141, %v298
  %v355 = vmul.f32 %v142, %v298
  %v356 = vmul.f32 %v143, %v298
  %v357 = vmul.f32 %v144, %v298
  %v358 = vmul.f32 %v145, %v298
  %v359 = vmul.f32 %v146, %v298
  %v360 = vmul.f32 %v147, %v298
  %v361 = vmul.f32 %v148, %v298
  %v362 = vmul.f32 %v149, %v298
  %v363 = vmul.f32 %v150, %v298
  %v364 = vld [vmem:[%s5] sm:$0x1]
  %v366 = vlaneseq
  %v367 = vshrl.u32 %v366, 7
  %v368 = vsub.s32 0, %v367
  %v369 = vrot.slane %v364, %v368
  %v371 = vadd.f32 %v300, %v369
  %v372 = vadd.f32 %v301, %v369
  %v373 = vadd.f32 %v302, %v369
  %v374 = vadd.f32 %v303, %v369
  %v375 = vadd.f32 %v304, %v369
  %v376 = vadd.f32 %v305, %v369
  %v377 = vadd.f32 %v306, %v369
  %v378 = vadd.f32 %v307, %v369
  %v379 = vadd.f32 %v308, %v369
  %v380 = vadd.f32 %v309, %v369
  %v381 = vadd.f32 %v310, %v369
  %v382 = vadd.f32 %v311, %v369
  %v383 = vadd.f32 %v312, %v369
  %v384 = vadd.f32 %v313, %v369
  %v385 = vadd.f32 %v314, %v369
  %v386 = vadd.f32 %v315, %v369
  %v387 = vadd.f32 %v316, %v369
  %v388 = vadd.f32 %v317, %v369
  %v389 = vadd.f32 %v318, %v369
  %v390 = vadd.f32 %v319, %v369
  %v391 = vadd.f32 %v320, %v369
  %v392 = vadd.f32 %v321, %v369
  %v393 = vadd.f32 %v322, %v369
  %v394 = vadd.f32 %v323, %v369
  %v395 = vadd.f32 %v324, %v369
  %v396 = vadd.f32 %v325, %v369
  %v397 = vadd.f32 %v326, %v369
  %v398 = vadd.f32 %v327, %v369
  %v399 = vadd.f32 %v328, %v369
  %v400 = vadd.f32 %v329, %v369
  %v401 = vadd.f32 %v330, %v369
  %v402 = vadd.f32 %v331, %v369
  %v403 = vadd.f32 %v332, %v369
  %v404 = vadd.f32 %v333, %v369
  %v405 = vadd.f32 %v334, %v369
  %v406 = vadd.f32 %v335, %v369
  %v407 = vadd.f32 %v336, %v369
  %v408 = vadd.f32 %v337, %v369
  %v409 = vadd.f32 %v338, %v369
  %v410 = vadd.f32 %v339, %v369
  %v411 = vadd.f32 %v340, %v369
  %v412 = vadd.f32 %v341, %v369
  %v413 = vadd.f32 %v342, %v369
  %v414 = vadd.f32 %v343, %v369
  %v415 = vadd.f32 %v344, %v369
  %v416 = vadd.f32 %v345, %v369
  %v417 = vadd.f32 %v346, %v369
  %v418 = vadd.f32 %v347, %v369
  %v419 = vadd.f32 %v348, %v369
  %v420 = vadd.f32 %v349, %v369
  %v421 = vadd.f32 %v350, %v369
  %v422 = vadd.f32 %v351, %v369
  %v423 = vadd.f32 %v352, %v369
  %v424 = vadd.f32 %v353, %v369
  %v425 = vadd.f32 %v354, %v369
  %v426 = vadd.f32 %v355, %v369
  %v427 = vadd.f32 %v356, %v369
  %v428 = vadd.f32 %v357, %v369
  %v429 = vadd.f32 %v358, %v369
  %v430 = vadd.f32 %v359, %v369
  %v431 = vadd.f32 %v360, %v369
  %v432 = vadd.f32 %v361, %v369
  %v433 = vadd.f32 %v362, %v369
  %v434 = vadd.f32 %v363, %v369
  %v435 = vadd.f32 %v229, %v371
  %v436 = vadd.f32 %v230, %v372
  %v437 = vadd.f32 %v231, %v373
  %v438 = vadd.f32 %v232, %v374
  %v439 = vadd.f32 %v233, %v375
  %v440 = vadd.f32 %v234, %v376
  %v441 = vadd.f32 %v235, %v377
  %v442 = vadd.f32 %v236, %v378
  %v443 = vadd.f32 %v237, %v379
  %v444 = vadd.f32 %v238, %v380
  %v445 = vadd.f32 %v239, %v381
  %v446 = vadd.f32 %v240, %v382
  %v447 = vadd.f32 %v241, %v383
  %v448 = vadd.f32 %v242, %v384
  %v449 = vadd.f32 %v243, %v385
  %v450 = vadd.f32 %v244, %v386
  %v451 = vadd.f32 %v245, %v387
  %v452 = vadd.f32 %v246, %v388
  %v453 = vadd.f32 %v247, %v389
  %v454 = vadd.f32 %v248, %v390
  %v455 = vadd.f32 %v249, %v391
  %v456 = vadd.f32 %v250, %v392
  %v457 = vadd.f32 %v251, %v393
  %v458 = vadd.f32 %v252, %v394
  %v459 = vadd.f32 %v253, %v395
  %v460 = vadd.f32 %v254, %v396
  %v461 = vadd.f32 %v255, %v397
  %v462 = vadd.f32 %v256, %v398
  %v463 = vadd.f32 %v257, %v399
  %v464 = vadd.f32 %v258, %v400
  %v465 = vadd.f32 %v259, %v401
  %v466 = vadd.f32 %v260, %v402
  %v467 = vadd.f32 %v261, %v403
  %v468 = vadd.f32 %v262, %v404
  %v469 = vadd.f32 %v263, %v405
  %v470 = vadd.f32 %v264, %v406
  %v471 = vadd.f32 %v265, %v407
  %v472 = vadd.f32 %v266, %v408
  %v473 = vadd.f32 %v267, %v409
  %v474 = vadd.f32 %v268, %v410
  %v475 = vadd.f32 %v269, %v411
  %v476 = vadd.f32 %v270, %v412
  %v477 = vadd.f32 %v271, %v413
  %v478 = vadd.f32 %v272, %v414
  %v479 = vadd.f32 %v273, %v415
  %v480 = vadd.f32 %v274, %v416
  %v481 = vadd.f32 %v275, %v417
  %v482 = vadd.f32 %v276, %v418
  %v483 = vadd.f32 %v277, %v419
  %v484 = vadd.f32 %v278, %v420
  %v485 = vadd.f32 %v279, %v421
  %v486 = vadd.f32 %v280, %v422
  %v487 = vadd.f32 %v281, %v423
  %v488 = vadd.f32 %v282, %v424
  %v489 = vadd.f32 %v283, %v425
  %v490 = vadd.f32 %v284, %v426
  %v491 = vadd.f32 %v285, %v427
  %v492 = vadd.f32 %v286, %v428
  %v493 = vadd.f32 %v287, %v429
  %v494 = vadd.f32 %v288, %v430
  %v495 = vadd.f32 %v289, %v431
  %v496 = vadd.f32 %v290, %v432
  %v497 = vadd.f32 %v291, %v433
  %v498 = vadd.f32 %v292, %v434
  %v499 = vmax.f32 %v435, 0.0
  %v500 = vmax.f32 %v436, 0.0
  %v501 = vmax.f32 %v437, 0.0
  %v502 = vmax.f32 %v438, 0.0
  %v503 = vmax.f32 %v439, 0.0
  %v504 = vmax.f32 %v440, 0.0
  %v505 = vmax.f32 %v441, 0.0
  %v506 = vmax.f32 %v442, 0.0
  %v507 = vmax.f32 %v443, 0.0
  %v508 = vmax.f32 %v444, 0.0
  %v509 = vmax.f32 %v445, 0.0
  %v510 = vmax.f32 %v446, 0.0
  %v511 = vmax.f32 %v447, 0.0
  %v512 = vmax.f32 %v448, 0.0
  %v513 = vmax.f32 %v449, 0.0
  %v514 = vmax.f32 %v450, 0.0
  %v515 = vmax.f32 %v451, 0.0
  %v516 = vmax.f32 %v452, 0.0
  %v517 = vmax.f32 %v453, 0.0
  %v518 = vmax.f32 %v454, 0.0
  %v519 = vmax.f32 %v455, 0.0
  %v520 = vmax.f32 %v456, 0.0
  %v521 = vmax.f32 %v457, 0.0
  %v522 = vmax.f32 %v458, 0.0
  %v523 = vmax.f32 %v459, 0.0
  %v524 = vmax.f32 %v460, 0.0
  %v525 = vmax.f32 %v461, 0.0
  %v526 = vmax.f32 %v462, 0.0
  %v527 = vmax.f32 %v463, 0.0
  %v528 = vmax.f32 %v464, 0.0
  %v529 = vmax.f32 %v465, 0.0
  %v530 = vmax.f32 %v466, 0.0
  %v531 = vmax.f32 %v467, 0.0
  %v532 = vmax.f32 %v468, 0.0
  %v533 = vmax.f32 %v469, 0.0
  %v534 = vmax.f32 %v470, 0.0
  %v535 = vmax.f32 %v471, 0.0
  %v536 = vmax.f32 %v472, 0.0
  %v537 = vmax.f32 %v473, 0.0
  %v538 = vmax.f32 %v474, 0.0
  %v539 = vmax.f32 %v475, 0.0
  %v540 = vmax.f32 %v476, 0.0
  %v541 = vmax.f32 %v477, 0.0
  %v542 = vmax.f32 %v478, 0.0
  %v543 = vmax.f32 %v479, 0.0
  %v544 = vmax.f32 %v480, 0.0
  %v545 = vmax.f32 %v481, 0.0
  %v546 = vmax.f32 %v482, 0.0
  %v547 = vmax.f32 %v483, 0.0
  %v548 = vmax.f32 %v484, 0.0
  %v549 = vmax.f32 %v485, 0.0
  %v550 = vmax.f32 %v486, 0.0
  %v551 = vmax.f32 %v487, 0.0
  %v552 = vmax.f32 %v488, 0.0
  %v553 = vmax.f32 %v489, 0.0
  %v554 = vmax.f32 %v490, 0.0
  %v555 = vmax.f32 %v491, 0.0
  %v556 = vmax.f32 %v492, 0.0
  %v557 = vmax.f32 %v493, 0.0
  %v558 = vmax.f32 %v494, 0.0
  %v559 = vmax.f32 %v495, 0.0
  %v560 = vmax.f32 %v496, 0.0
  %v561 = vmax.f32 %v497, 0.0
  %v562 = vmax.f32 %v498, 0.0
  %vm563 = vcmask 130048
  %564 = vst.msk [vmem:[%s6] sm:$0xff] %vm563, %v499
  %565 = vst.msk [vmem:[%s6 + $0x8] sm:$0xff] %vm563, %v500
  %566 = vst.msk [vmem:[%s6 + $0x10] sm:$0xff] %vm563, %v501
  %567 = vst.msk [vmem:[%s6 + $0x18] sm:$0xff] %vm563, %v502
  %568 = vst.msk [vmem:[%s6 + $0x20] sm:$0xff] %vm563, %v503
  %569 = vst.msk [vmem:[%s6 + $0x28] sm:$0xff] %vm563, %v504
  %570 = vst.msk [vmem:[%s6 + $0x30] sm:$0xff] %vm563, %v505
  %571 = vst.msk [vmem:[%s6 + $0x38] sm:$0xff] %vm563, %v506
  %572 = vst.msk [vmem:[%s6 + $0x40] sm:$0xff] %vm563, %v507
  %573 = vst.msk [vmem:[%s6 + $0x48] sm:$0xff] %vm563, %v508
  %574 = vst.msk [vmem:[%s6 + $0x50] sm:$0xff] %vm563, %v509
  %575 = vst.msk [vmem:[%s6 + $0x58] sm:$0xff] %vm563, %v510
  %576 = vst.msk [vmem:[%s6 + $0x60] sm:$0xff] %vm563, %v511
  %577 = vst.msk [vmem:[%s6 + $0x68] sm:$0xff] %vm563, %v512
  %578 = vst.msk [vmem:[%s6 + $0x70] sm:$0xff] %vm563, %v513
  %579 = vst.msk [vmem:[%s6 + $0x78] sm:$0xff] %vm563, %v514
  %580 = vst.msk [vmem:[%s6 + $0x80] sm:$0xff] %vm563, %v515
  %581 = vst.msk [vmem:[%s6 + $0x88] sm:$0xff] %vm563, %v516
  %582 = vst.msk [vmem:[%s6 + $0x90] sm:$0xff] %vm563, %v517
  %583 = vst.msk [vmem:[%s6 + $0x98] sm:$0xff] %vm563, %v518
  %584 = vst.msk [vmem:[%s6 + $0xa0] sm:$0xff] %vm563, %v519
  %585 = vst.msk [vmem:[%s6 + $0xa8] sm:$0xff] %vm563, %v520
  %586 = vst.msk [vmem:[%s6 + $0xb0] sm:$0xff] %vm563, %v521
  %587 = vst.msk [vmem:[%s6 + $0xb8] sm:$0xff] %vm563, %v522
  %588 = vst.msk [vmem:[%s6 + $0xc0] sm:$0xff] %vm563, %v523
  %589 = vst.msk [vmem:[%s6 + $0xc8] sm:$0xff] %vm563, %v524
  %590 = vst.msk [vmem:[%s6 + $0xd0] sm:$0xff] %vm563, %v525
  %591 = vst.msk [vmem:[%s6 + $0xd8] sm:$0xff] %vm563, %v526
  %592 = vst.msk [vmem:[%s6 + $0xe0] sm:$0xff] %vm563, %v527
  %593 = vst.msk [vmem:[%s6 + $0xe8] sm:$0xff] %vm563, %v528
  %594 = vst.msk [vmem:[%s6 + $0xf0] sm:$0xff] %vm563, %v529
  %595 = vst.msk [vmem:[%s6 + $0xf8] sm:$0xff] %vm563, %v530
  %596 = vst.msk [vmem:[%s6 + $0x100] sm:$0xff] %vm563, %v531
  %597 = vst.msk [vmem:[%s6 + $0x108] sm:$0xff] %vm563, %v532
  %598 = vst.msk [vmem:[%s6 + $0x110] sm:$0xff] %vm563, %v533
  %599 = vst.msk [vmem:[%s6 + $0x118] sm:$0xff] %vm563, %v534
  %600 = vst.msk [vmem:[%s6 + $0x120] sm:$0xff] %vm563, %v535
  %601 = vst.msk [vmem:[%s6 + $0x128] sm:$0xff] %vm563, %v536
  %602 = vst.msk [vmem:[%s6 + $0x130] sm:$0xff] %vm563, %v537
  %603 = vst.msk [vmem:[%s6 + $0x138] sm:$0xff] %vm563, %v538
  %604 = vst.msk [vmem:[%s6 + $0x140] sm:$0xff] %vm563, %v539
  %605 = vst.msk [vmem:[%s6 + $0x148] sm:$0xff] %vm563, %v540
  %606 = vst.msk [vmem:[%s6 + $0x150] sm:$0xff] %vm563, %v541
  %607 = vst.msk [vmem:[%s6 + $0x158] sm:$0xff] %vm563, %v542
  %608 = vst.msk [vmem:[%s6 + $0x160] sm:$0xff] %vm563, %v543
  %609 = vst.msk [vmem:[%s6 + $0x168] sm:$0xff] %vm563, %v544
  %610 = vst.msk [vmem:[%s6 + $0x170] sm:$0xff] %vm563, %v545
  %611 = vst.msk [vmem:[%s6 + $0x178] sm:$0xff] %vm563, %v546
  %612 = vst.msk [vmem:[%s6 + $0x180] sm:$0xff] %vm563, %v547
  %613 = vst.msk [vmem:[%s6 + $0x188] sm:$0xff] %vm563, %v548
  %614 = vst.msk [vmem:[%s6 + $0x190] sm:$0xff] %vm563, %v549
  %615 = vst.msk [vmem:[%s6 + $0x198] sm:$0xff] %vm563, %v550
  %616 = vst.msk [vmem:[%s6 + $0x1a0] sm:$0xff] %vm563, %v551
  %617 = vst.msk [vmem:[%s6 + $0x1a8] sm:$0xff] %vm563, %v552
  %618 = vst.msk [vmem:[%s6 + $0x1b0] sm:$0xff] %vm563, %v553
  %619 = vst.msk [vmem:[%s6 + $0x1b8] sm:$0xff] %vm563, %v554
  %620 = vst.msk [vmem:[%s6 + $0x1c0] sm:$0xff] %vm563, %v555
  %621 = vst.msk [vmem:[%s6 + $0x1c8] sm:$0xff] %vm563, %v556
  %622 = vst.msk [vmem:[%s6 + $0x1d0] sm:$0xff] %vm563, %v557
  %623 = vst.msk [vmem:[%s6 + $0x1d8] sm:$0xff] %vm563, %v558
  %624 = vst.msk [vmem:[%s6 + $0x1e0] sm:$0xff] %vm563, %v559
  %625 = vst.msk [vmem:[%s6 + $0x1e8] sm:$0xff] %vm563, %v560
  %626 = vst.msk [vmem:[%s6 + $0x1f0] sm:$0xff] %vm563, %v561
  %627 = vst.msk [vmem:[%s6 + $0x1f8] sm:$0xff] %vm563, %v562
  // Predicated region
  $region26: #{bottleneck_forward.9} parent=0 // pred_check
    _
  $region27: #{bottleneck_forward.9} parent=0 // pred_check_branch
    %629 = sbr.rel (0) target = $region29
  $region28: #{bottleneck_forward.9} parent=0 // pred_region
    _
  $region29: #{bottleneck_forward.9} parent=0 // pred_fallthru
    _
  // Predicated region
  $region30: #{bottleneck_forward.9} parent=0 // pred_check
    _
  $region31: #{bottleneck_forward.9} parent=0 // pred_check_branch
    %631 = sbr.rel (0) target = $region33
  $region32: #{bottleneck_forward.9} parent=0 // pred_region
    _
  $region33: #{bottleneck_forward.9} parent=0 // pred_fallthru
    _

// kernel: bottleneck_forward.7
$region0: #{bottleneck_forward.7}
  #allocation0 [shape = 'u32[]', space=smem, size = 0x4, offset = 0x4, fixed_abs, tag = 'smem constant byte address 0x4 - core index']
  #allocation1 [shape = 'u32[144,128]{1,0:T(1,128)}', space=vmem, size = 0x12000, scoped, tag = 'internal scratch']
  %s0 = inlined_call_operand.vmem [shape: f32[512,4], index: 0, kind: input, shape index: {}]
  %s1 = inlined_call_operand.vmem [shape: f32[4,16], index: 1, kind: input, shape index: {}]
  %s2 = inlined_call_operand.vmem [shape: f32[1,4], index: 2, kind: input, shape index: {}]
  %s3 = inlined_call_operand.vmem [shape: f32[1,4], index: 3, kind: input, shape index: {}]
  %s4 = inlined_call_operand.vmem [shape: f32[512,16], index: 4, kind: output, shape index: {0}]
  %s5 = inlined_call_operand.vmem [shape: f32[1,2,16], index: 5, kind: output, shape index: {1}]
  %6 = xla_tuple %s4, %s5
  %s7 = sld [smem:[#allocation0]]
  $region34: #{bottleneck_forward.7} parent=0
    _
  %s9 = ssub.s32 1, %s7
  %s10 = scalar_select 0, %s9, %s7
  // Predicated region
  $region2: #{bottleneck_forward.7} parent=0 // pred_check
    _
  $region3: #{bottleneck_forward.7} parent=0 // pred_check_branch
    %12 = sbr.rel (0) target = $region5
  $region4: #{bottleneck_forward.7} parent=0 // pred_region
    _
  $region5: #{bottleneck_forward.7} parent=0 // pred_fallthru
    _
  // Predicated region
  $region6: #{bottleneck_forward.7} parent=0 // pred_check
    _
  $region7: #{bottleneck_forward.7} parent=0 // pred_check_branch
    %14 = sbr.rel (0) target = $region9
  $region8: #{bottleneck_forward.7} parent=0 // pred_region
    _
  $region9: #{bottleneck_forward.7} parent=0 // pred_fallthru
    _
  // Predicated region
  $region10: #{bottleneck_forward.7} parent=0 // pred_check
    _
  $region11: #{bottleneck_forward.7} parent=0 // pred_check_branch
    %16 = sbr.rel (0) target = $region13
  $region12: #{bottleneck_forward.7} parent=0 // pred_region
    _
  $region13: #{bottleneck_forward.7} parent=0 // pred_fallthru
    _
  // Predicated region
  $region14: #{bottleneck_forward.7} parent=0 // pred_check
    _
  $region15: #{bottleneck_forward.7} parent=0 // pred_check_branch
    %18 = sbr.rel (0) target = $region17
  $region16: #{bottleneck_forward.7} parent=0 // pred_region
    _
  $region17: #{bottleneck_forward.7} parent=0 // pred_fallthru
    _
  %v19 = vld [vmem:[%s0] sm:$0xff]
  %v20 = vld [vmem:[%s0 + $0x8] sm:$0xff]
  %v21 = vld [vmem:[%s0 + $0x10] sm:$0xff]
  %v22 = vld [vmem:[%s0 + $0x18] sm:$0xff]
  %v23 = vld [vmem:[%s0 + $0x20] sm:$0xff]
  %v24 = vld [vmem:[%s0 + $0x28] sm:$0xff]
  %v25 = vld [vmem:[%s0 + $0x30] sm:$0xff]
  %v26 = vld [vmem:[%s0 + $0x38] sm:$0xff]
  %v27 = vld [vmem:[%s0 + $0x40] sm:$0xff]
  %v28 = vld [vmem:[%s0 + $0x48] sm:$0xff]
  %v29 = vld [vmem:[%s0 + $0x50] sm:$0xff]
  %v30 = vld [vmem:[%s0 + $0x58] sm:$0xff]
  %v31 = vld [vmem:[%s0 + $0x60] sm:$0xff]
  %v32 = vld [vmem:[%s0 + $0x68] sm:$0xff]
  %v33 = vld [vmem:[%s0 + $0x70] sm:$0xff]
  %v34 = vld [vmem:[%s0 + $0x78] sm:$0xff]
  %v35 = vld [vmem:[%s0 + $0x80] sm:$0xff]
  %v36 = vld [vmem:[%s0 + $0x88] sm:$0xff]
  %v37 = vld [vmem:[%s0 + $0x90] sm:$0xff]
  %v38 = vld [vmem:[%s0 + $0x98] sm:$0xff]
  %v39 = vld [vmem:[%s0 + $0xa0] sm:$0xff]
  %v40 = vld [vmem:[%s0 + $0xa8] sm:$0xff]
  %v41 = vld [vmem:[%s0 + $0xb0] sm:$0xff]
  %v42 = vld [vmem:[%s0 + $0xb8] sm:$0xff]
  %v43 = vld [vmem:[%s0 + $0xc0] sm:$0xff]
  %v44 = vld [vmem:[%s0 + $0xc8] sm:$0xff]
  %v45 = vld [vmem:[%s0 + $0xd0] sm:$0xff]
  %v46 = vld [vmem:[%s0 + $0xd8] sm:$0xff]
  %v47 = vld [vmem:[%s0 + $0xe0] sm:$0xff]
  %v48 = vld [vmem:[%s0 + $0xe8] sm:$0xff]
  %v49 = vld [vmem:[%s0 + $0xf0] sm:$0xff]
  %v50 = vld [vmem:[%s0 + $0xf8] sm:$0xff]
  %v51 = vld [vmem:[%s0 + $0x100] sm:$0xff]
  %v52 = vld [vmem:[%s0 + $0x108] sm:$0xff]
  %v53 = vld [vmem:[%s0 + $0x110] sm:$0xff]
  %v54 = vld [vmem:[%s0 + $0x118] sm:$0xff]
  %v55 = vld [vmem:[%s0 + $0x120] sm:$0xff]
  %v56 = vld [vmem:[%s0 + $0x128] sm:$0xff]
  %v57 = vld [vmem:[%s0 + $0x130] sm:$0xff]
  %v58 = vld [vmem:[%s0 + $0x138] sm:$0xff]
  %v59 = vld [vmem:[%s0 + $0x140] sm:$0xff]
  %v60 = vld [vmem:[%s0 + $0x148] sm:$0xff]
  %v61 = vld [vmem:[%s0 + $0x150] sm:$0xff]
  %v62 = vld [vmem:[%s0 + $0x158] sm:$0xff]
  %v63 = vld [vmem:[%s0 + $0x160] sm:$0xff]
  %v64 = vld [vmem:[%s0 + $0x168] sm:$0xff]
  %v65 = vld [vmem:[%s0 + $0x170] sm:$0xff]
  %v66 = vld [vmem:[%s0 + $0x178] sm:$0xff]
  %v67 = vld [vmem:[%s0 + $0x180] sm:$0xff]
  %v68 = vld [vmem:[%s0 + $0x188] sm:$0xff]
  %v69 = vld [vmem:[%s0 + $0x190] sm:$0xff]
  %v70 = vld [vmem:[%s0 + $0x198] sm:$0xff]
  %v71 = vld [vmem:[%s0 + $0x1a0] sm:$0xff]
  %v72 = vld [vmem:[%s0 + $0x1a8] sm:$0xff]
  %v73 = vld [vmem:[%s0 + $0x1b0] sm:$0xff]
  %v74 = vld [vmem:[%s0 + $0x1b8] sm:$0xff]
  %v75 = vld [vmem:[%s0 + $0x1c0] sm:$0xff]
  %v76 = vld [vmem:[%s0 + $0x1c8] sm:$0xff]
  %v77 = vld [vmem:[%s0 + $0x1d0] sm:$0xff]
  %v78 = vld [vmem:[%s0 + $0x1d8] sm:$0xff]
  %v79 = vld [vmem:[%s0 + $0x1e0] sm:$0xff]
  %v80 = vld [vmem:[%s0 + $0x1e8] sm:$0xff]
  %v81 = vld [vmem:[%s0 + $0x1f0] sm:$0xff]
  %v82 = vld [vmem:[%s0 + $0x1f8] sm:$0xff]
  %v83 = vld [vmem:[%s2] sm:$0x1]
  %v85 = vlaneseq
  %v86 = vshrl.u32 %v85, 7
  %v87 = vsub.s32 0, %v86
  %v88 = vrot.slane %v83, %v87
  %v90 = vmul.f32 %v19, %v88
  %v91 = vmul.f32 %v20, %v88
  %v92 = vmul.f32 %v21, %v88
  %v93 = vmul.f32 %v22, %v88
  %v94 = vmul.f32 %v23, %v88
  %v95 = vmul.f32 %v24, %v88
  %v96 = vmul.f32 %v25, %v88
  %v97 = vmul.f32 %v26, %v88
  %v98 = vmul.f32 %v27, %v88
  %v99 = vmul.f32 %v28, %v88
  %v100 = vmul.f32 %v29, %v88
  %v101 = vmul.f32 %v30, %v88
  %v102 = vmul.f32 %v31, %v88
  %v103 = vmul.f32 %v32, %v88
  %v104 = vmul.f32 %v33, %v88
  %v105 = vmul.f32 %v34, %v88
  %v106 = vmul.f32 %v35, %v88
  %v107 = vmul.f32 %v36, %v88
  %v108 = vmul.f32 %v37, %v88
  %v109 = vmul.f32 %v38, %v88
  %v110 = vmul.f32 %v39, %v88
  %v111 = vmul.f32 %v40, %v88
  %v112 = vmul.f32 %v41, %v88
  %v113 = vmul.f32 %v42, %v88
  %v114 = vmul.f32 %v43, %v88
  %v115 = vmul.f32 %v44, %v88
  %v116 = vmul.f32 %v45, %v88
  %v117 = vmul.f32 %v46, %v88
  %v118 = vmul.f32 %v47, %v88
  %v119 = vmul.f32 %v48, %v88
  %v120 = vmul.f32 %v49, %v88
  %v121 = vmul.f32 %v50, %v88
  %v122 = vmul.f32 %v51, %v88
  %v123 = vmul.f32 %v52, %v88
  %v124 = vmul.f32 %v53, %v88
  %v125 = vmul.f32 %v54, %v88
  %v126 = vmul.f32 %v55, %v88
  %v127 = vmul.f32 %v56, %v88
  %v128 = vmul.f32 %v57, %v88
  %v129 = vmul.f32 %v58, %v88
  %v130 = vmul.f32 %v59, %v88
  %v131 = vmul.f32 %v60, %v88
  %v132 = vmul.f32 %v61, %v88
  %v133 = vmul.f32 %v62, %v88
  %v134 = vmul.f32 %v63, %v88
  %v135 = vmul.f32 %v64, %v88
  %v136 = vmul.f32 %v65, %v88
  %v137 = vmul.f32 %v66, %v88
  %v138 = vmul.f32 %v67, %v88
  %v139 = vmul.f32 %v68, %v88
  %v140 = vmul.f32 %v69, %v88
  %v141 = vmul.f32 %v70, %v88
  %v142 = vmul.f32 %v71, %v88
  %v143 = vmul.f32 %v72, %v88
  %v144 = vmul.f32 %v73, %v88
  %v145 = vmul.f32 %v74, %v88
  %v146 = vmul.f32 %v75, %v88
  %v147 = vmul.f32 %v76, %v88
  %v148 = vmul.f32 %v77, %v88
  %v149 = vmul.f32 %v78, %v88
  %v150 = vmul.f32 %v79, %v88
  %v151 = vmul.f32 %v80, %v88
  %v152 = vmul.f32 %v81, %v88
  %v153 = vmul.f32 %v82, %v88
  %v154 = vld [vmem:[%s3] sm:$0x1]
  %v156 = vlaneseq
  %v157 = vshrl.u32 %v156, 7
  %v158 = vsub.s32 0, %v157
  %v159 = vrot.slane %v154, %v158
  %v161 = vadd.f32 %v90, %v159
  %v162 = vadd.f32 %v91, %v159
  %v163 = vadd.f32 %v92, %v159
  %v164 = vadd.f32 %v93, %v159
  %v165 = vadd.f32 %v94, %v159
  %v166 = vadd.f32 %v95, %v159
  %v167 = vadd.f32 %v96, %v159
  %v168 = vadd.f32 %v97, %v159
  %v169 = vadd.f32 %v98, %v159
  %v170 = vadd.f32 %v99, %v159
  %v171 = vadd.f32 %v100, %v159
  %v172 = vadd.f32 %v101, %v159
  %v173 = vadd.f32 %v102, %v159
  %v174 = vadd.f32 %v103, %v159
  %v175 = vadd.f32 %v104, %v159
  %v176 = vadd.f32 %v105, %v159
  %v177 = vadd.f32 %v106, %v159
  %v178 = vadd.f32 %v107, %v159
  %v179 = vadd.f32 %v108, %v159
  %v180 = vadd.f32 %v109, %v159
  %v181 = vadd.f32 %v110, %v159
  %v182 = vadd.f32 %v111, %v159
  %v183 = vadd.f32 %v112, %v159
  %v184 = vadd.f32 %v113, %v159
  %v185 = vadd.f32 %v114, %v159
  %v186 = vadd.f32 %v115, %v159
  %v187 = vadd.f32 %v116, %v159
  %v188 = vadd.f32 %v117, %v159
  %v189 = vadd.f32 %v118, %v159
  %v190 = vadd.f32 %v119, %v159
  %v191 = vadd.f32 %v120, %v159
  %v192 = vadd.f32 %v121, %v159
  %v193 = vadd.f32 %v122, %v159
  %v194 = vadd.f32 %v123, %v159
  %v195 = vadd.f32 %v124, %v159
  %v196 = vadd.f32 %v125, %v159
  %v197 = vadd.f32 %v126, %v159
  %v198 = vadd.f32 %v127, %v159
  %v199 = vadd.f32 %v128, %v159
  %v200 = vadd.f32 %v129, %v159
  %v201 = vadd.f32 %v130, %v159
  %v202 = vadd.f32 %v131, %v159
  %v203 = vadd.f32 %v132, %v159
  %v204 = vadd.f32 %v133, %v159
  %v205 = vadd.f32 %v134, %v159
  %v206 = vadd.f32 %v135, %v159
  %v207 = vadd.f32 %v136, %v159
  %v208 = vadd.f32 %v137, %v159
  %v209 = vadd.f32 %v138, %v159
  %v210 = vadd.f32 %v139, %v159
  %v211 = vadd.f32 %v140, %v159
  %v212 = vadd.f32 %v141, %v159
  %v213 = vadd.f32 %v142, %v159
  %v214 = vadd.f32 %v143, %v159
  %v215 = vadd.f32 %v144, %v159
  %v216 = vadd.f32 %v145, %v159
  %v217 = vadd.f32 %v146, %v159
  %v218 = vadd.f32 %v147, %v159
  %v219 = vadd.f32 %v148, %v159
  %v220 = vadd.f32 %v149, %v159
  %v221 = vadd.f32 %v150, %v159
  %v222 = vadd.f32 %v151, %v159
  %v223 = vadd.f32 %v152, %v159
  %v224 = vadd.f32 %v153, %v159
  %v225 = vmax.f32 %v161, 0.0
  %v226 = vmax.f32 %v162, 0.0
  %v227 = vmax.f32 %v163, 0.0
  %v228 = vmax.f32 %v164, 0.0
  %v229 = vmax.f32 %v165, 0.0
  %v230 = vmax.f32 %v166, 0.0
  %v231 = vmax.f32 %v167, 0.0
  %v232 = vmax.f32 %v168, 0.0
  %v233 = vmax.f32 %v169, 0.0
  %v234 = vmax.f32 %v170, 0.0
  %v235 = vmax.f32 %v171, 0.0
  %v236 = vmax.f32 %v172, 0.0
  %v237 = vmax.f32 %v173, 0.0
  %v238 = vmax.f32 %v174, 0.0
  %v239 = vmax.f32 %v175, 0.0
  %v240 = vmax.f32 %v176, 0.0
  %v241 = vmax.f32 %v177, 0.0
  %v242 = vmax.f32 %v178, 0.0
  %v243 = vmax.f32 %v179, 0.0
  %v244 = vmax.f32 %v180, 0.0
  %v245 = vmax.f32 %v181, 0.0
  %v246 = vmax.f32 %v182, 0.0
  %v247 = vmax.f32 %v183, 0.0
  %v248 = vmax.f32 %v184, 0.0
  %v249 = vmax.f32 %v185, 0.0
  %v250 = vmax.f32 %v186, 0.0
  %v251 = vmax.f32 %v187, 0.0
  %v252 = vmax.f32 %v188, 0.0
  %v253 = vmax.f32 %v189, 0.0
  %v254 = vmax.f32 %v190, 0.0
  %v255 = vmax.f32 %v191, 0.0
  %v256 = vmax.f32 %v192, 0.0
  %v257 = vmax.f32 %v193, 0.0
  %v258 = vmax.f32 %v194, 0.0
  %v259 = vmax.f32 %v195, 0.0
  %v260 = vmax.f32 %v196, 0.0
  %v261 = vmax.f32 %v197, 0.0
  %v262 = vmax.f32 %v198, 0.0
  %v263 = vmax.f32 %v199, 0.0
  %v264 = vmax.f32 %v200, 0.0
  %v265 = vmax.f32 %v201, 0.0
  %v266 = vmax.f32 %v202, 0.0
  %v267 = vmax.f32 %v203, 0.0
  %v268 = vmax.f32 %v204, 0.0
  %v269 = vmax.f32 %v205, 0.0
  %v270 = vmax.f32 %v206, 0.0
  %v271 = vmax.f32 %v207, 0.0
  %v272 = vmax.f32 %v208, 0.0
  %v273 = vmax.f32 %v209, 0.0
  %v274 = vmax.f32 %v210, 0.0
  %v275 = vmax.f32 %v211, 0.0
  %v276 = vmax.f32 %v212, 0.0
  %v277 = vmax.f32 %v213, 0.0
  %v278 = vmax.f32 %v214, 0.0
  %v279 = vmax.f32 %v215, 0.0
  %v280 = vmax.f32 %v216, 0.0
  %v281 = vmax.f32 %v217, 0.0
  %v282 = vmax.f32 %v218, 0.0
  %v283 = vmax.f32 %v219, 0.0
  %v284 = vmax.f32 %v220, 0.0
  %v285 = vmax.f32 %v221, 0.0
  %v286 = vmax.f32 %v222, 0.0
  %v287 = vmax.f32 %v223, 0.0
  %v288 = vmax.f32 %v224, 0.0
  %v289 = vld [vmem:[%s1] sm:$0xf]
  %vm290 = vcmask 31744
  %v292 = vsel %vm290, %v225, 0
  %v295 = vsel %vm290, %v226, 0
  %v298 = vsel %vm290, %v227, 0
  %v301 = vsel %vm290, %v228, 0
  %v304 = vsel %vm290, %v229, 0
  %v307 = vsel %vm290, %v230, 0
  %v310 = vsel %vm290, %v231, 0
  %v313 = vsel %vm290, %v232, 0
  %v316 = vsel %vm290, %v233, 0
  %v319 = vsel %vm290, %v234, 0
  %v322 = vsel %vm290, %v235, 0
  %v325 = vsel %vm290, %v236, 0
  %v328 = vsel %vm290, %v237, 0
  %v331 = vsel %vm290, %v238, 0
  %v334 = vsel %vm290, %v239, 0
  %v337 = vsel %vm290, %v240, 0
  %v340 = vsel %vm290, %v241, 0
  %v343 = vsel %vm290, %v242, 0
  %v346 = vsel %vm290, %v243, 0
  %v349 = vsel %vm290, %v244, 0
  %v352 = vsel %vm290, %v245, 0
  %v355 = vsel %vm290, %v246, 0
  %v358 = vsel %vm290, %v247, 0
  %v361 = vsel %vm290, %v248, 0
  %v364 = vsel %vm290, %v249, 0
  %v367 = vsel %vm290, %v250, 0
  %v370 = vsel %vm290, %v251, 0
  %v373 = vsel %vm290, %v252, 0
  %v376 = vsel %vm290, %v253, 0
  %v379 = vsel %vm290, %v254, 0
  %v382 = vsel %vm290, %v255, 0
  %v385 = vsel %vm290, %v256, 0
  %v388 = vsel %vm290, %v257, 0
  %v391 = vsel %vm290, %v258, 0
  %v394 = vsel %vm290, %v259, 0
  %v397 = vsel %vm290, %v260, 0
  %v400 = vsel %vm290, %v261, 0
  %v403 = vsel %vm290, %v262, 0
  %v406 = vsel %vm290, %v263, 0
  %v409 = vsel %vm290, %v264, 0
  %v412 = vsel %vm290, %v265, 0
  %v415 = vsel %vm290, %v266, 0
  %v418 = vsel %vm290, %v267, 0
  %v421 = vsel %vm290, %v268, 0
  %v424 = vsel %vm290, %v269, 0
  %v427 = vsel %vm290, %v270, 0
  %v430 = vsel %vm290, %v271, 0
  %v433 = vsel %vm290, %v272, 0
  %v436 = vsel %vm290, %v273, 0
  %v439 = vsel %vm290, %v274, 0
  %v442 = vsel %vm290, %v275, 0
  %v445 = vsel %vm290, %v276, 0
  %v448 = vsel %vm290, %v277, 0
  %v451 = vsel %vm290, %v278, 0
  %v454 = vsel %vm290, %v279, 0
  %v457 = vsel %vm290, %v280, 0
  %v460 = vsel %vm290, %v281, 0
  %v463 = vsel %vm290, %v282, 0
  %v466 = vsel %vm290, %v283, 0
  %v469 = vsel %vm290, %v284, 0
  %v472 = vsel %vm290, %v285, 0
  %v475 = vsel %vm290, %v286, 0
  %v478 = vsel %vm290, %v287, 0
  %v481 = vsel %vm290, %v288, 0
  %vm483 = vcmask 1043456
  %v485 = vsel %vm483, %v289, 0
  %487 = vmatprep.subr.mxu0 0.0
  %488 = vmatpush1.msra.mxu0 %v485
  %489 = vmatprep.subr.mxu0 0.0
  %490 = vmatpush1.msra.mxu0 0.0
  %491 = vmatprep.subr.mxu0 0.0
  %492 = vmatpush1.msra.mxu0 0.0
  %493 = vmatprep.subr.mxu0 0.0
  %494 = vmatpush1.msra.mxu0 0.0
  %495 = vmatprep.subr.mxu0 0.0
  %496 = vmatpush1.msra.mxu0 0.0
  %497 = vmatprep.subr.mxu0 0.0
  %498 = vmatpush1.msra.mxu0 0.0
  %499 = vmatprep.subr.mxu0 0.0
  %500 = vmatpush1.msra.mxu0 0.0
  %501 = vmatprep.subr.mxu0 0.0
  %502 = vmatpush1.msra.mxu0 0.0
  %503 = vmatprep.subr.mxu0 0.0
  %504 = vmatpush1.msra.mxu0 0.0
  %505 = vmatprep.subr.mxu0 0.0
  %506 = vmatpush1.msra.mxu0 0.0
  %507 = vmatprep.subr.mxu0 0.0
  %508 = vmatpush1.msra.mxu0 0.0
  %509 = vmatprep.subr.mxu0 0.0
  %510 = vmatpush1.msra.mxu0 0.0
  %511 = vmatprep.subr.mxu0 0.0
  %512 = vmatpush1.msra.mxu0 0.0
  %513 = vmatprep.subr.mxu0 0.0
  %514 = vmatpush1.msra.mxu0 0.0
  %515 = vmatprep.subr.mxu0 0.0
  %516 = vmatpush1.msra.mxu0 0.0
  %517 = vmatprep.subr.mxu0 0.0
  %518 = vmatpush1.msra.mxu0 0.0
  %519 = vmatprep.subr.mxu0 0.0
  %520 = vmatpush1.msra.mxu0 0.0
  %521 = vmatprep.subr.mxu0 0.0
  %522 = vmatpush1.msra.mxu0 0.0
  %523 = vmatprep.subr.mxu0 0.0
  %524 = vmatpush1.msra.mxu0 0.0
  %525 = vmatprep.subr.mxu0 0.0
  %526 = vmatpush1.msra.mxu0 0.0
  %527 = vmatprep.subr.mxu0 0.0
  %528 = vmatpush1.msra.mxu0 0.0
  %529 = vmatprep.subr.mxu0 0.0
  %530 = vmatpush1.msra.mxu0 0.0
  %531 = vmatprep.subr.mxu0 0.0
  %532 = vmatpush1.msra.mxu0 0.0
  %533 = vmatprep.subr.mxu0 0.0
  %534 = vmatpush1.msra.mxu0 0.0
  %535 = vmatprep.subr.mxu0 0.0
  %536 = vmatpush1.msra.mxu0 0.0
  %537 = vmatprep.subr.mxu0 0.0
  %538 = vmatpush1.msra.mxu0 0.0
  %539 = vmatprep.subr.mxu0 0.0
  %540 = vmatpush1.msra.mxu0 0.0
  %541 = vmatprep.subr.mxu0 0.0
  %542 = vmatpush1.msra.mxu0 0.0
  %543 = vmatprep.subr.mxu0 0.0
  %544 = vmatpush1.msra.mxu0 0.0
  %545 = vmatprep.subr.mxu0 0.0
  %546 = vmatpush1.msra.mxu0 0.0
  %547 = vmatprep.subr.mxu0 0.0
  %548 = vmatpush1.msra.mxu0 0.0
  %549 = vmatprep.subr.mxu0 0.0
  %550 = vmatpush1.msra.mxu0 0.0
  %551 = vmatprep.mubr.f32.mxu0 0.0
  %552 = vmatmul.mubr.f32.gmra.mrb[0].mxu0 %v292
  %v553 = vpop.f32.mrb[0].mxu0
  %v554 = vadd.f32 0.0, %v553
  %v555 = vpop.f32.mrb[0].mxu0
  %556 = vmatprep.mubr.f32.mxu0 0.0
  %557 = vmatmul.mubr.f32.gmra.mrb[0].mxu0 %v295
  %v558 = vpop.f32.mrb[0].mxu0
  %v559 = vadd.f32 0.0, %v558
  %v560 = vpop.f32.mrb[0].mxu0
  %561 = vmatprep.mubr.f32.mxu0 0.0
  %562 = vmatmul.mubr.f32.gmra.mrb[0].mxu0 %v298
  %v563 = vpop.f32.mrb[0].mxu0
  %v564 = vadd.f32 0.0, %v563
  %v565 = vpop.f32.mrb[0].mxu0
  %566 = vmatprep.mubr.f32.mxu0 0.0
  %567 = vmatmul.mubr.f32.gmra.mrb[0].mxu0 %v301
  %v568 = vpop.f32.mrb[0].mxu0
  %v569 = vadd.f32 0.0, %v568
  %v570 = vpop.f32.mrb[0].mxu0
  %571 = vmatprep.mubr.f32.mxu0 0.0
  %572 = vmatmul.mubr.f32.gmra.mrb[0].mxu0 %v304
  %v573 = vpop.f32.mrb[0].mxu0
  %v574 = vadd.f32 0.0, %v573
  %v575 = vpop.f32.mrb[0].mxu0
  %576 = vmatprep.mubr.f32.mxu0 0.0
  %577 = vmatmul.mubr.f32.gmra.mrb[0].mxu0 %v307
  %v578 = vpop.f32.mrb[0].mxu0
  %v579 = vadd.f32 0.0, %v578
  %v580 = vpop.f32.mrb[0].mxu0
  %581 = vmatprep.mubr.f32.mxu0 0.0
  %582 = vmatmul.mubr.f32.gmra.mrb[0].mxu0 %v310
  %v583 = vpop.f32.mrb[0].mxu0
  %v584 = vadd.f32 0.0, %v583
  %v585 = vpop.f32.mrb[0].mxu0
  %586 = vmatprep.mubr.f32.mxu0 0.0
  %587 = vmatmul.mubr.f32.gmra.mrb[0].mxu0 %v313
  %v588 = vpop.f32.mrb[0].mxu0
  %v589 = vadd.f32 0.0, %v588
  %v590 = vpop.f32.mrb[0].mxu0
  %591 = vmatprep.mubr.f32.mxu0 0.0
  %592 = vmatmul.mubr.f32.gmra.mrb[0].mxu0 %v316
  %v593 = vpop.f32.mrb[0].mxu0
  %v594 = vadd.f32 0.0, %v593
  %v595 = vpop.f32.mrb[0].mxu0
  %596 = vmatprep.mubr.f32.mxu0 0.0
  %597 = vmatmul.mubr.f32.gmra.mrb[0].mxu0 %v319
  %v598 = vpop.f32.mrb[0].mxu0
  %v599 = vadd.f32 0.0, %v598
  %v600 = vpop.f32.mrb[0].mxu0
  %601 = vmatprep.mubr.f32.mxu0 0.0
  %602 = vmatmul.mubr.f32.gmra.mrb[0].mxu0 %v322
  %v603 = vpop.f32.mrb[0].mxu0
  %v604 = vadd.f32 0.0, %v603
  %v605 = vpop.f32.mrb[0].mxu0
  %606 = vmatprep.mubr.f32.mxu0 0.0
  %607 = vmatmul.mubr.f32.gmra.mrb[0].mxu0 %v325
  %v608 = vpop.f32.mrb[0].mxu0
  %v609 = vadd.f32 0.0, %v608
  %v610 = vpop.f32.mrb[0].mxu0
  %611 = vmatprep.mubr.f32.mxu0 0.0
  %612 = vmatmul.mubr.f32.gmra.mrb[0].mxu0 %v328
  %v613 = vpop.f32.mrb[0].mxu0
  %v614 = vadd.f32 0.0, %v613
  %v615 = vpop.f32.mrb[0].mxu0
  %616 = vmatprep.mubr.f32.mxu0 0.0
  %617 = vmatmul.mubr.f32.gmra.mrb[0].mxu0 %v331
  %v618 = vpop.f32.mrb[0].mxu0
  %v619 = vadd.f32 0.0, %v618
  %v620 = vpop.f32.mrb[0].mxu0
  %621 = vmatprep.mubr.f32.mxu0 0.0
  %622 = vmatmul.mubr.f32.gmra.mrb[0].mxu0 %v334
  %v623 = vpop.f32.mrb[0].mxu0
  %v624 = vadd.f32 0.0, %v623
  %v625 = vpop.f32.mrb[0].mxu0
  %626 = vmatprep.mubr.f32.mxu0 0.0
  %627 = vmatmul.mubr.f32.gmra.mrb[0].mxu0 %v337
  %v628 = vpop.f32.mrb[0].mxu0
  %v629 = vadd.f32 0.0, %v628
  %v630 = vpop.f32.mrb[0].mxu0
  %631 = vmatprep.mubr.f32.mxu0 0.0
  %632 = vmatmul.mubr.f32.gmra.mrb[0].mxu0 %v340
  %v633 = vpop.f32.mrb[0].mxu0
  %v634 = vadd.f32 0.0, %v633
  %v635 = vpop.f32.mrb[0].mxu0
  %636 = vmatprep.mubr.f32.mxu0 0.0
  %637 = vmatmul.mubr.f32.gmra.mrb[0].mxu0 %v343
  %v638 = vpop.f32.mrb[0].mxu0
  %v639 = vadd.f32 0.0, %v638
  %v640 = vpop.f32.mrb[0].mxu0
  %641 = vmatprep.mubr.f32.mxu0 0.0
  %642 = vmatmul.mubr.f32.gmra.mrb[0].mxu0 %v346
  %v643 = vpop.f32.mrb[0].mxu0
  %v644 = vadd.f32 0.0, %v643
  %v645 = vpop.f32.mrb[0].mxu0
  %646 = vmatprep.mubr.f32.mxu0 0.0
  %647 = vmatmul.mubr.f32.gmra.mrb[0].mxu0 %v349
  %v648 = vpop.f32.mrb[0].mxu0
  %v649 = vadd.f32 0.0, %v648
  %v650 = vpop.f32.mrb[0].mxu0
  %651 = vmatprep.mubr.f32.mxu0 0.0
  %652 = vmatmul.mubr.f32.gmra.mrb[0].mxu0 %v352
  %v653 = vpop.f32.mrb[0].mxu0
  %v654 = vadd.f32 0.0, %v653
  %v655 = vpop.f32.mrb[0].mxu0
  %656 = vmatprep.mubr.f32.mxu0 0.0
  %657 = vmatmul.mubr.f32.gmra.mrb[0].mxu0 %v355
  %v658 = vpop.f32.mrb[0].mxu0
  %v659 = vadd.f32 0.0, %v658
  %v660 = vpop.f32.mrb[0].mxu0
  %661 = vmatprep.mubr.f32.mxu0 0.0
  %662 = vmatmul.mubr.f32.gmra.mrb[0].mxu0 %v358
  %v663 = vpop.f32.mrb[0].mxu0
  %v664 = vadd.f32 0.0, %v663
  %v665 = vpop.f32.mrb[0].mxu0
  %666 = vmatprep.mubr.f32.mxu0 0.0
  %667 = vmatmul.mubr.f32.gmra.mrb[0].mxu0 %v361
  %v668 = vpop.f32.mrb[0].mxu0
  %v669 = vadd.f32 0.0, %v668
  %v670 = vpop.f32.mrb[0].mxu0
  %671 = vmatprep.mubr.f32.mxu0 0.0
  %672 = vmatmul.mubr.f32.gmra.mrb[0].mxu0 %v364
  %v673 = vpop.f32.mrb[0].mxu0
  %v674 = vadd.f32 0.0, %v673
  %v675 = vpop.f32.mrb[0].mxu0
  %676 = vmatprep.mubr.f32.mxu0 0.0
  %677 = vmatmul.mubr.f32.gmra.mrb[0].mxu0 %v367
  %v678 = vpop.f32.mrb[0].mxu0
  %v679 = vadd.f32 0.0, %v678
  %v680 = vpop.f32.mrb[0].mxu0
  %681 = vmatprep.mubr.f32.mxu0 0.0
  %682 = vmatmul.mubr.f32.gmra.mrb[0].mxu0 %v370
  %v683 = vpop.f32.mrb[0].mxu0
  %v684 = vadd.f32 0.0, %v683
  %v685 = vpop.f32.mrb[0].mxu0
  %686 = vmatprep.mubr.f32.mxu0 0.0
  %687 = vmatmul.mubr.f32.gmra.mrb[0].mxu0 %v373
  %v688 = vpop.f32.mrb[0].mxu0
  %v689 = vadd.f32 0.0, %v688
  %v690 = vpop.f32.mrb[0].mxu0
  %691 = vmatprep.mubr.f32.mxu0 0.0
  %692 = vmatmul.mubr.f32.gmra.mrb[0].mxu0 %v376
  %v693 = vpop.f32.mrb[0].mxu0
  %v694 = vadd.f32 0.0, %v693
  %v695 = vpop.f32.mrb[0].mxu0
  %696 = vmatprep.mubr.f32.mxu0 0.0
  %697 = vmatmul.mubr.f32.gmra.mrb[0].mxu0 %v379
  %v698 = vpop.f32.mrb[0].mxu0
  %v699 = vadd.f32 0.0, %v698
  %v700 = vpop.f32.mrb[0].mxu0
  %701 = vmatprep.mubr.f32.mxu0 0.0
  %702 = vmatmul.mubr.f32.gmra.mrb[0].mxu0 %v382
  %v703 = vpop.f32.mrb[0].mxu0
  %v704 = vadd.f32 0.0, %v703
  %v705 = vpop.f32.mrb[0].mxu0
  %706 = vmatprep.mubr.f32.mxu0 0.0
  %707 = vmatmul.mubr.f32.gmra.mrb[0].mxu0 %v385
  %v708 = vpop.f32.mrb[0].mxu0
  %v709 = vadd.f32 0.0, %v708
  %v710 = vpop.f32.mrb[0].mxu0
  %711 = vmatprep.mubr.f32.mxu0 0.0
  %712 = vmatmul.mubr.f32.gmra.mrb[0].mxu0 %v388
  %v713 = vpop.f32.mrb[0].mxu0
  %v714 = vadd.f32 0.0, %v713
  %v715 = vpop.f32.mrb[0].mxu0
  %716 = vmatprep.mubr.f32.mxu0 0.0
  %717 = vmatmul.mubr.f32.gmra.mrb[0].mxu0 %v391
  %v718 = vpop.f32.mrb[0].mxu0
  %v719 = vadd.f32 0.0, %v718
  %v720 = vpop.f32.mrb[0].mxu0
  %721 = vmatprep.mubr.f32.mxu0 0.0
  %722 = vmatmul.mubr.f32.gmra.mrb[0].mxu0 %v394
  %v723 = vpop.f32.mrb[0].mxu0
  %v724 = vadd.f32 0.0, %v723
  %v725 = vpop.f32.mrb[0].mxu0
  %726 = vmatprep.mubr.f32.mxu0 0.0
  %727 = vmatmul.mubr.f32.gmra.mrb[0].mxu0 %v397
  %v728 = vpop.f32.mrb[0].mxu0
  %v729 = vadd.f32 0.0, %v728
  %v730 = vpop.f32.mrb[0].mxu0
  %731 = vmatprep.mubr.f32.mxu0 0.0
  %732 = vmatmul.mubr.f32.gmra.mrb[0].mxu0 %v400
  %v733 = vpop.f32.mrb[0].mxu0
  %v734 = vadd.f32 0.0, %v733
  %v735 = vpop.f32.mrb[0].mxu0
  %736 = vmatprep.mubr.f32.mxu0 0.0
  %737 = vmatmul.mubr.f32.gmra.mrb[0].mxu0 %v403
  %v738 = vpop.f32.mrb[0].mxu0
  %v739 = vadd.f32 0.0, %v738
  %v740 = vpop.f32.mrb[0].mxu0
  %741 = vmatprep.mubr.f32.mxu0 0.0
  %742 = vmatmul.mubr.f32.gmra.mrb[0].mxu0 %v406
  %v743 = vpop.f32.mrb[0].mxu0
  %v744 = vadd.f32 0.0, %v743
  %v745 = vpop.f32.mrb[0].mxu0
  %746 = vmatprep.mubr.f32.mxu0 0.0
  %747 = vmatmul.mubr.f32.gmra.mrb[0].mxu0 %v409
  %v748 = vpop.f32.mrb[0].mxu0
  %v749 = vadd.f32 0.0, %v748
  %v750 = vpop.f32.mrb[0].mxu0
  %751 = vmatprep.mubr.f32.mxu0 0.0
  %752 = vmatmul.mubr.f32.gmra.mrb[0].mxu0 %v412
  %v753 = vpop.f32.mrb[0].mxu0
  %v754 = vadd.f32 0.0, %v753
  %v755 = vpop.f32.mrb[0].mxu0
  %756 = vmatprep.mubr.f32.mxu0 0.0
  %757 = vmatmul.mubr.f32.gmra.mrb[0].mxu0 %v415
  %v758 = vpop.f32.mrb[0].mxu0
  %v759 = vadd.f32 0.0, %v758
  %v760 = vpop.f32.mrb[0].mxu0
  %761 = vmatprep.mubr.f32.mxu0 0.0
  %762 = vmatmul.mubr.f32.gmra.mrb[0].mxu0 %v418
  %v763 = vpop.f32.mrb[0].mxu0
  %v764 = vadd.f32 0.0, %v763
  %v765 = vpop.f32.mrb[0].mxu0
  %766 = vmatprep.mubr.f32.mxu0 0.0
  %767 = vmatmul.mubr.f32.gmra.mrb[0].mxu0 %v421
  %v768 = vpop.f32.mrb[0].mxu0
  %v769 = vadd.f32 0.0, %v768
  %v770 = vpop.f32.mrb[0].mxu0
  %771 = vmatprep.mubr.f32.mxu0 0.0
  %772 = vmatmul.mubr.f32.gmra.mrb[0].mxu0 %v424
  %v773 = vpop.f32.mrb[0].mxu0
  %v774 = vadd.f32 0.0, %v773
  %v775 = vpop.f32.mrb[0].mxu0
  %776 = vmatprep.mubr.f32.mxu0 0.0
  %777 = vmatmul.mubr.f32.gmra.mrb[0].mxu0 %v427
  %v778 = vpop.f32.mrb[0].mxu0
  %v779 = vadd.f32 0.0, %v778
  %v780 = vpop.f32.mrb[0].mxu0
  %781 = vmatprep.mubr.f32.mxu0 0.0
  %782 = vmatmul.mubr.f32.gmra.mrb[0].mxu0 %v430
  %v783 = vpop.f32.mrb[0].mxu0
  %v784 = vadd.f32 0.0, %v783
  %v785 = vpop.f32.mrb[0].mxu0
  %786 = vmatprep.mubr.f32.mxu0 0.0
  %787 = vmatmul.mubr.f32.gmra.mrb[0].mxu0 %v433
  %v788 = vpop.f32.mrb[0].mxu0
  %v789 = vadd.f32 0.0, %v788
  %v790 = vpop.f32.mrb[0].mxu0
  %791 = vmatprep.mubr.f32.mxu0 0.0
  %792 = vmatmul.mubr.f32.gmra.mrb[0].mxu0 %v436
  %v793 = vpop.f32.mrb[0].mxu0
  %v794 = vadd.f32 0.0, %v793
  %v795 = vpop.f32.mrb[0].mxu0
  %796 = vmatprep.mubr.f32.mxu0 0.0
  %797 = vmatmul.mubr.f32.gmra.mrb[0].mxu0 %v439
  %v798 = vpop.f32.mrb[0].mxu0
  %v799 = vadd.f32 0.0, %v798
  %v800 = vpop.f32.mrb[0].mxu0
  %801 = vmatprep.mubr.f32.mxu0 0.0
  %802 = vmatmul.mubr.f32.gmra.mrb[0].mxu0 %v442
  %v803 = vpop.f32.mrb[0].mxu0
  %v804 = vadd.f32 0.0, %v803
  %v805 = vpop.f32.mrb[0].mxu0
  %806 = vmatprep.mubr.f32.mxu0 0.0
  %807 = vmatmul.mubr.f32.gmra.mrb[0].mxu0 %v445
  %v808 = vpop.f32.mrb[0].mxu0
  %v809 = vadd.f32 0.0, %v808
  %v810 = vpop.f32.mrb[0].mxu0
  %811 = vmatprep.mubr.f32.mxu0 0.0
  %812 = vmatmul.mubr.f32.gmra.mrb[0].mxu0 %v448
  %v813 = vpop.f32.mrb[0].mxu0
  %v814 = vadd.f32 0.0, %v813
  %v815 = vpop.f32.mrb[0].mxu0
  %816 = vmatprep.mubr.f32.mxu0 0.0
  %817 = vmatmul.mubr.f32.gmra.mrb[0].mxu0 %v451
  %v818 = vpop.f32.mrb[0].mxu0
  %v819 = vadd.f32 0.0, %v818
  %v820 = vpop.f32.mrb[0].mxu0
  %821 = vmatprep.mubr.f32.mxu0 0.0
  %822 = vmatmul.mubr.f32.gmra.mrb[0].mxu0 %v454
  %v823 = vpop.f32.mrb[0].mxu0
  %v824 = vadd.f32 0.0, %v823
  %v825 = vpop.f32.mrb[0].mxu0
  %826 = vmatprep.mubr.f32.mxu0 0.0
  %827 = vmatmul.mubr.f32.gmra.mrb[0].mxu0 %v457
  %v828 = vpop.f32.mrb[0].mxu0
  %v829 = vadd.f32 0.0, %v828
  %v830 = vpop.f32.mrb[0].mxu0
  %831 = vmatprep.mubr.f32.mxu0 0.0
  %832 = vmatmul.mubr.f32.gmra.mrb[0].mxu0 %v460
  %v833 = vpop.f32.mrb[0].mxu0
  %v834 = vadd.f32 0.0, %v833
  %v835 = vpop.f32.mrb[0].mxu0
  %836 = vmatprep.mubr.f32.mxu0 0.0
  %837 = vmatmul.mubr.f32.gmra.mrb[0].mxu0 %v463
  %v838 = vpop.f32.mrb[0].mxu0
  %v839 = vadd.f32 0.0, %v838
  %v840 = vpop.f32.mrb[0].mxu0
  %841 = vmatprep.mubr.f32.mxu0 0.0
  %842 = vmatmul.mubr.f32.gmra.mrb[0].mxu0 %v466
  %v843 = vpop.f32.mrb[0].mxu0
  %v844 = vadd.f32 0.0, %v843
  %v845 = vpop.f32.mrb[0].mxu0
  %846 = vmatprep.mubr.f32.mxu0 0.0
  %847 = vmatmul.mubr.f32.gmra.mrb[0].mxu0 %v469
  %v848 = vpop.f32.mrb[0].mxu0
  %v849 = vadd.f32 0.0, %v848
  %v850 = vpop.f32.mrb[0].mxu0
  %851 = vmatprep.mubr.f32.mxu0 0.0
  %852 = vmatmul.mubr.f32.gmra.mrb[0].mxu0 %v472
  %v853 = vpop.f32.mrb[0].mxu0
  %v854 = vadd.f32 0.0, %v853
  %v855 = vpop.f32.mrb[0].mxu0
  %856 = vmatprep.mubr.f32.mxu0 0.0
  %857 = vmatmul.mubr.f32.gmra.mrb[0].mxu0 %v475
  %v858 = vpop.f32.mrb[0].mxu0
  %v859 = vadd.f32 0.0, %v858
  %v860 = vpop.f32.mrb[0].mxu0
  %861 = vmatprep.mubr.f32.mxu0 0.0
  %862 = vmatmul.mubr.f32.gmra.mrb[0].mxu0 %v478
  %v863 = vpop.f32.mrb[0].mxu0
  %v864 = vadd.f32 0.0, %v863
  %v865 = vpop.f32.mrb[0].mxu0
  %866 = vmatprep.mubr.f32.mxu0 0.0
  %867 = vmatmul.mubr.f32.gmra.mrb[0].mxu0 %v481
  %v868 = vpop.f32.mrb[0].mxu0
  %v869 = vadd.f32 0.0, %v868
  %v870 = vpop.f32.mrb[0].mxu0
  %871 = vdwg.mxu0
  %vm872 = vcmask 130048
  %873 = vst.msk [vmem:[%s4] sm:$0xff] %vm872, %v554
  %874 = vst.msk [vmem:[%s4 + $0x8] sm:$0xff] %vm872, %v559
  %875 = vst.msk [vmem:[%s4 + $0x10] sm:$0xff] %vm872, %v564
  %876 = vst.msk [vmem:[%s4 + $0x18] sm:$0xff] %vm872, %v569
  %877 = vst.msk [vmem:[%s4 + $0x20] sm:$0xff] %vm872, %v574
  %878 = vst.msk [vmem:[%s4 + $0x28] sm:$0xff] %vm872, %v579
  %879 = vst.msk [vmem:[%s4 + $0x30] sm:$0xff] %vm872, %v584
  %880 = vst.msk [vmem:[%s4 + $0x38] sm:$0xff] %vm872, %v589
  %881 = vst.msk [vmem:[%s4 + $0x40] sm:$0xff] %vm872, %v594
  %882 = vst.msk [vmem:[%s4 + $0x48] sm:$0xff] %vm872, %v599
  %883 = vst.msk [vmem:[%s4 + $0x50] sm:$0xff] %vm872, %v604
  %884 = vst.msk [vmem:[%s4 + $0x58] sm:$0xff] %vm872, %v609
  %885 = vst.msk [vmem:[%s4 + $0x60] sm:$0xff] %vm872, %v614
  %886 = vst.msk [vmem:[%s4 + $0x68] sm:$0xff] %vm872, %v619
  %887 = vst.msk [vmem:[%s4 + $0x70] sm:$0xff] %vm872, %v624
  %888 = vst.msk [vmem:[%s4 + $0x78] sm:$0xff] %vm872, %v629
  %889 = vst.msk [vmem:[%s4 + $0x80] sm:$0xff] %vm872, %v634
  %890 = vst.msk [vmem:[%s4 + $0x88] sm:$0xff] %vm872, %v639
  %891 = vst.msk [vmem:[%s4 + $0x90] sm:$0xff] %vm872, %v644
  %892 = vst.msk [vmem:[%s4 + $0x98] sm:$0xff] %vm872, %v649
  %893 = vst.msk [vmem:[%s4 + $0xa0] sm:$0xff] %vm872, %v654
  %894 = vst.msk [vmem:[%s4 + $0xa8] sm:$0xff] %vm872, %v659
  %895 = vst.msk [vmem:[%s4 + $0xb0] sm:$0xff] %vm872, %v664
  %896 = vst.msk [vmem:[%s4 + $0xb8] sm:$0xff] %vm872, %v669
  %897 = vst.msk [vmem:[%s4 + $0xc0] sm:$0xff] %vm872, %v674
  %898 = vst.msk [vmem:[%s4 + $0xc8] sm:$0xff] %vm872, %v679
  %899 = vst.msk [vmem:[%s4 + $0xd0] sm:$0xff] %vm872, %v684
  %900 = vst.msk [vmem:[%s4 + $0xd8] sm:$0xff] %vm872, %v689
  %901 = vst.msk [vmem:[%s4 + $0xe0] sm:$0xff] %vm872, %v694
  %902 = vst.msk [vmem:[%s4 + $0xe8] sm:$0xff] %vm872, %v699
  %903 = vst.msk [vmem:[%s4 + $0xf0] sm:$0xff] %vm872, %v704
  %904 = vst.msk [vmem:[%s4 + $0xf8] sm:$0xff] %vm872, %v709
  %905 = vst.msk [vmem:[%s4 + $0x100] sm:$0xff] %vm872, %v714
  %906 = vst.msk [vmem:[%s4 + $0x108] sm:$0xff] %vm872, %v719
  %907 = vst.msk [vmem:[%s4 + $0x110] sm:$0xff] %vm872, %v724
  %908 = vst.msk [vmem:[%s4 + $0x118] sm:$0xff] %vm872, %v729
  %909 = vst.msk [vmem:[%s4 + $0x120] sm:$0xff] %vm872, %v734
  %910 = vst.msk [vmem:[%s4 + $0x128] sm:$0xff] %vm872, %v739
  %911 = vst.msk [vmem:[%s4 + $0x130] sm:$0xff] %vm872, %v744
  %912 = vst.msk [vmem:[%s4 + $0x138] sm:$0xff] %vm872, %v749
  %913 = vst.msk [vmem:[%s4 + $0x140] sm:$0xff] %vm872, %v754
  %914 = vst.msk [vmem:[%s4 + $0x148] sm:$0xff] %vm872, %v759
  %915 = vst.msk [vmem:[%s4 + $0x150] sm:$0xff] %vm872, %v764
  %916 = vst.msk [vmem:[%s4 + $0x158] sm:$0xff] %vm872, %v769
  %917 = vst.msk [vmem:[%s4 + $0x160] sm:$0xff] %vm872, %v774
  %918 = vst.msk [vmem:[%s4 + $0x168] sm:$0xff] %vm872, %v779
  %919 = vst.msk [vmem:[%s4 + $0x170] sm:$0xff] %vm872, %v784
  %920 = vst.msk [vmem:[%s4 + $0x178] sm:$0xff] %vm872, %v789
  %921 = vst.msk [vmem:[%s4 + $0x180] sm:$0xff] %vm872, %v794
  %922 = vst.msk [vmem:[%s4 + $0x188] sm:$0xff] %vm872, %v799
  %923 = vst.msk [vmem:[%s4 + $0x190] sm:$0xff] %vm872, %v804
  %924 = vst.msk [vmem:[%s4 + $0x198] sm:$0xff] %vm872, %v809
  %925 = vst.msk [vmem:[%s4 + $0x1a0] sm:$0xff] %vm872, %v814
  %926 = vst.msk [vmem:[%s4 + $0x1a8] sm:$0xff] %vm872, %v819
  %927 = vst.msk [vmem:[%s4 + $0x1b0] sm:$0xff] %vm872, %v824
  %928 = vst.msk [vmem:[%s4 + $0x1b8] sm:$0xff] %vm872, %v829
  %929 = vst.msk [vmem:[%s4 + $0x1c0] sm:$0xff] %vm872, %v834
  %930 = vst.msk [vmem:[%s4 + $0x1c8] sm:$0xff] %vm872, %v839
  %931 = vst.msk [vmem:[%s4 + $0x1d0] sm:$0xff] %vm872, %v844
  %932 = vst.msk [vmem:[%s4 + $0x1d8] sm:$0xff] %vm872, %v849
  %933 = vst.msk [vmem:[%s4 + $0x1e0] sm:$0xff] %vm872, %v854
  %934 = vst.msk [vmem:[%s4 + $0x1e8] sm:$0xff] %vm872, %v859
  %935 = vst.msk [vmem:[%s4 + $0x1f0] sm:$0xff] %vm872, %v864
  %936 = vst.msk [vmem:[%s4 + $0x1f8] sm:$0xff] %vm872, %v869
  %v937 = vsel %vm872, %v554, 0.0
  %v938 = vsel %vm872, %v559, 0.0
  %v939 = vadd.f32 %v937, %v938
  %v940 = vsel %vm872, %v564, 0.0
  %v941 = vadd.f32 %v939, %v940
  %v942 = vsel %vm872, %v569, 0.0
  %v943 = vadd.f32 %v941, %v942
  %v944 = vsel %vm872, %v574, 0.0
  %v945 = vadd.f32 %v943, %v944
  %v946 = vsel %vm872, %v579, 0.0
  %v947 = vadd.f32 %v945, %v946
  %v948 = vsel %vm872, %v584, 0.0
  %v949 = vadd.f32 %v947, %v948
  %v950 = vsel %vm872, %v589, 0.0
  %v951 = vadd.f32 %v949, %v950
  %v952 = vsel %vm872, %v594, 0.0
  %v953 = vadd.f32 %v951, %v952
  %v954 = vsel %vm872, %v599, 0.0
  %v955 = vadd.f32 %v953, %v954
  %v956 = vsel %vm872, %v604, 0.0
  %v957 = vadd.f32 %v955, %v956
  %v958 = vsel %vm872, %v609, 0.0
  %v959 = vadd.f32 %v957, %v958
  %v960 = vsel %vm872, %v614, 0.0
  %v961 = vadd.f32 %v959, %v960
  %v962 = vsel %vm872, %v619, 0.0
  %v963 = vadd.f32 %v961, %v962
  %v964 = vsel %vm872, %v624, 0.0
  %v965 = vadd.f32 %v963, %v964
  %v966 = vsel %vm872, %v629, 0.0
  %v967 = vadd.f32 %v965, %v966
  %v968 = vsel %vm872, %v634, 0.0
  %v969 = vadd.f32 %v967, %v968
  %v970 = vsel %vm872, %v639, 0.0
  %v971 = vadd.f32 %v969, %v970
  %v972 = vsel %vm872, %v644, 0.0
  %v973 = vadd.f32 %v971, %v972
  %v974 = vsel %vm872, %v649, 0.0
  %v975 = vadd.f32 %v973, %v974
  %v976 = vsel %vm872, %v654, 0.0
  %v977 = vadd.f32 %v975, %v976
  %v978 = vsel %vm872, %v659, 0.0
  %v979 = vadd.f32 %v977, %v978
  %v980 = vsel %vm872, %v664, 0.0
  %v981 = vadd.f32 %v979, %v980
  %v982 = vsel %vm872, %v669, 0.0
  %v983 = vadd.f32 %v981, %v982
  %v984 = vsel %vm872, %v674, 0.0
  %v985 = vadd.f32 %v983, %v984
  %v986 = vsel %vm872, %v679, 0.0
  %v987 = vadd.f32 %v985, %v986
  %v988 = vsel %vm872, %v684, 0.0
  %v989 = vadd.f32 %v987, %v988
  %v990 = vsel %vm872, %v689, 0.0
  %v991 = vadd.f32 %v989, %v990
  %v992 = vsel %vm872, %v694, 0.0
  %v993 = vadd.f32 %v991, %v992
  %v994 = vsel %vm872, %v699, 0.0
  %v995 = vadd.f32 %v993, %v994
  %v996 = vsel %vm872, %v704, 0.0
  %v997 = vadd.f32 %v995, %v996
  %v998 = vsel %vm872, %v709, 0.0
  %v999 = vadd.f32 %v997, %v998
  %v1000 = vsel %vm872, %v714, 0.0
  %v1001 = vadd.f32 %v999, %v1000
  %v1002 = vsel %vm872, %v719, 0.0
  %v1003 = vadd.f32 %v1001, %v1002
  %v1004 = vsel %vm872, %v724, 0.0
  %v1005 = vadd.f32 %v1003, %v1004
  %v1006 = vsel %vm872, %v729, 0.0
  %v1007 = vadd.f32 %v1005, %v1006
  %v1008 = vsel %vm872, %v734, 0.0
  %v1009 = vadd.f32 %v1007, %v1008
  %v1010 = vsel %vm872, %v739, 0.0
  %v1011 = vadd.f32 %v1009, %v1010
  %v1012 = vsel %vm872, %v744, 0.0
  %v1013 = vadd.f32 %v1011, %v1012
  %v1014 = vsel %vm872, %v749, 0.0
  %v1015 = vadd.f32 %v1013, %v1014
  %v1016 = vsel %vm872, %v754, 0.0
  %v1017 = vadd.f32 %v1015, %v1016
  %v1018 = vsel %vm872, %v759, 0.0
  %v1019 = vadd.f32 %v1017, %v1018
  %v1020 = vsel %vm872, %v764, 0.0
  %v1021 = vadd.f32 %v1019, %v1020
  %v1022 = vsel %vm872, %v769, 0.0
  %v1023 = vadd.f32 %v1021, %v1022
  %v1024 = vsel %vm872, %v774, 0.0
  %v1025 = vadd.f32 %v1023, %v1024
  %v1026 = vsel %vm872, %v779, 0.0
  %v1027 = vadd.f32 %v1025, %v1026
  %v1028 = vsel %vm872, %v784, 0.0
  %v1029 = vadd.f32 %v1027, %v1028
  %v1030 = vsel %vm872, %v789, 0.0
  %v1031 = vadd.f32 %v1029, %v1030
  %v1032 = vsel %vm872, %v794, 0.0
  %v1033 = vadd.f32 %v1031, %v1032
  %v1034 = vsel %vm872, %v799, 0.0
  %v1035 = vadd.f32 %v1033, %v1034
  %v1036 = vsel %vm872, %v804, 0.0
  %v1037 = vadd.f32 %v1035, %v1036
  %v1038 = vsel %vm872, %v809, 0.0
  %v1039 = vadd.f32 %v1037, %v1038
  %v1040 = vsel %vm872, %v814, 0.0
  %v1041 = vadd.f32 %v1039, %v1040
  %v1042 = vsel %vm872, %v819, 0.0
  %v1043 = vadd.f32 %v1041, %v1042
  %v1044 = vsel %vm872, %v824, 0.0
  %v1045 = vadd.f32 %v1043, %v1044
  %v1046 = vsel %vm872, %v829, 0.0
  %v1047 = vadd.f32 %v1045, %v1046
  %v1048 = vsel %vm872, %v834, 0.0
  %v1049 = vadd.f32 %v1047, %v1048
  %v1050 = vsel %vm872, %v839, 0.0
  %v1051 = vadd.f32 %v1049, %v1050
  %v1052 = vsel %vm872, %v844, 0.0
  %v1053 = vadd.f32 %v1051, %v1052
  %v1054 = vsel %vm872, %v849, 0.0
  %v1055 = vadd.f32 %v1053, %v1054
  %v1056 = vsel %vm872, %v854, 0.0
  %v1057 = vadd.f32 %v1055, %v1056
  %v1058 = vsel %vm872, %v859, 0.0
  %v1059 = vadd.f32 %v1057, %v1058
  %v1060 = vsel %vm872, %v864, 0.0
  %v1061 = vadd.f32 %v1059, %v1060
  %v1062 = vsel %vm872, %v869, 0.0
  %v1063 = vadd.f32 %v1061, %v1062
  %v1064 = vrot.slane %v1063, 4
  %v1065 = vadd.f32 %v1063, %v1064
  %v1066 = vrot.slane %v1065, 2
  %v1067 = vadd.f32 %v1065, %v1066
  %v1068 = vrot.slane %v1067, 1
  %v1069 = vadd.f32 %v1067, %v1068
  %vm1070 = vcmask 122880
  %1071 = vst.msk [vmem:[%s5] sm:$0x1] %vm1070, %v1069
  %v1072 = vmul.f32 %v554, %v554
  %v1073 = vmul.f32 %v559, %v559
  %v1074 = vmul.f32 %v564, %v564
  %v1075 = vmul.f32 %v569, %v569
  %v1076 = vmul.f32 %v574, %v574
  %v1077 = vmul.f32 %v579, %v579
  %v1078 = vmul.f32 %v584, %v584
  %v1079 = vmul.f32 %v589, %v589
  %v1080 = vmul.f32 %v594, %v594
  %v1081 = vmul.f32 %v599, %v599
  %v1082 = vmul.f32 %v604, %v604
  %v1083 = vmul.f32 %v609, %v609
  %v1084 = vmul.f32 %v614, %v614
  %v1085 = vmul.f32 %v619, %v619
  %v1086 = vmul.f32 %v624, %v624
  %v1087 = vmul.f32 %v629, %v629
  %v1088 = vmul.f32 %v634, %v634
  %v1089 = vmul.f32 %v639, %v639
  %v1090 = vmul.f32 %v644, %v644
  %v1091 = vmul.f32 %v649, %v649
  %v1092 = vmul.f32 %v654, %v654
  %v1093 = vmul.f32 %v659, %v659
  %v1094 = vmul.f32 %v664, %v664
  %v1095 = vmul.f32 %v669, %v669
  %v1096 = vmul.f32 %v674, %v674
  %v1097 = vmul.f32 %v679, %v679
  %v1098 = vmul.f32 %v684, %v684
  %v1099 = vmul.f32 %v689, %v689
  %v1100 = vmul.f32 %v694, %v694
  %v1101 = vmul.f32 %v699, %v699
  %v1102 = vmul.f32 %v704, %v704
  %v1103 = vmul.f32 %v709, %v709
  %v1104 = vmul.f32 %v714, %v714
  %v1105 = vmul.f32 %v719, %v719
  %v1106 = vmul.f32 %v724, %v724
  %v1107 = vmul.f32 %v729, %v729
  %v1108 = vmul.f32 %v734, %v734
  %v1109 = vmul.f32 %v739, %v739
  %v1110 = vmul.f32 %v744, %v744
  %v1111 = vmul.f32 %v749, %v749
  %v1112 = vmul.f32 %v754, %v754
  %v1113 = vmul.f32 %v759, %v759
  %v1114 = vmul.f32 %v764, %v764
  %v1115 = vmul.f32 %v769, %v769
  %v1116 = vmul.f32 %v774, %v774
  %v1117 = vmul.f32 %v779, %v779
  %v1118 = vmul.f32 %v784, %v784
  %v1119 = vmul.f32 %v789, %v789
  %v1120 = vmul.f32 %v794, %v794
  %v1121 = vmul.f32 %v799, %v799
  %v1122 = vmul.f32 %v804, %v804
  %v1123 = vmul.f32 %v809, %v809
  %v1124 = vmul.f32 %v814, %v814
  %v1125 = vmul.f32 %v819, %v819
  %v1126 = vmul.f32 %v824, %v824
  %v1127 = vmul.f32 %v829, %v829
  %v1128 = vmul.f32 %v834, %v834
  %v1129 = vmul.f32 %v839, %v839
  %v1130 = vmul.f32 %v844, %v844
  %v1131 = vmul.f32 %v849, %v849
  %v1132 = vmul.f32 %v854, %v854
  %v1133 = vmul.f32 %v859, %v859
  %v1134 = vmul.f32 %v864, %v864
  %v1135 = vmul.f32 %v869, %v869
  %v1136 = vsel %vm872, %v1072, 0.0
  %v1137 = vsel %vm872, %v1073, 0.0
  %v1138 = vadd.f32 %v1136, %v1137
  %v1139 = vsel %vm872, %v1074, 0.0
  %v1140 = vadd.f32 %v1138, %v1139
  %v1141 = vsel %vm872, %v1075, 0.0
  %v1142 = vadd.f32 %v1140, %v1141
  %v1143 = vsel %vm872, %v1076, 0.0
  %v1144 = vadd.f32 %v1142, %v1143
  %v1145 = vsel %vm872, %v1077, 0.0
  %v1146 = vadd.f32 %v1144, %v1145
  %v1147 = vsel %vm872, %v1078, 0.0
  %v1148 = vadd.f32 %v1146, %v1147
  %v1149 = vsel %vm872, %v1079, 0.0
  %v1150 = vadd.f32 %v1148, %v1149
  %v1151 = vsel %vm872, %v1080, 0.0
  %v1152 = vadd.f32 %v1150, %v1151
  %v1153 = vsel %vm872, %v1081, 0.0
  %v1154 = vadd.f32 %v1152, %v1153
  %v1155 = vsel %vm872, %v1082, 0.0
  %v1156 = vadd.f32 %v1154, %v1155
  %v1157 = vsel %vm872, %v1083, 0.0
  %v1158 = vadd.f32 %v1156, %v1157
  %v1159 = vsel %vm872, %v1084, 0.0
  %v1160 = vadd.f32 %v1158, %v1159
  %v1161 = vsel %vm872, %v1085, 0.0
  %v1162 = vadd.f32 %v1160, %v1161
  %v1163 = vsel %vm872, %v1086, 0.0
  %v1164 = vadd.f32 %v1162, %v1163
  %v1165 = vsel %vm872, %v1087, 0.0
  %v1166 = vadd.f32 %v1164, %v1165
  %v1167 = vsel %vm872, %v1088, 0.0
  %v1168 = vadd.f32 %v1166, %v1167
  %v1169 = vsel %vm872, %v1089, 0.0
  %v1170 = vadd.f32 %v1168, %v1169
  %v1171 = vsel %vm872, %v1090, 0.0
  %v1172 = vadd.f32 %v1170, %v1171
  %v1173 = vsel %vm872, %v1091, 0.0
  %v1174 = vadd.f32 %v1172, %v1173
  %v1175 = vsel %vm872, %v1092, 0.0
  %v1176 = vadd.f32 %v1174, %v1175
  %v1177 = vsel %vm872, %v1093, 0.0
  %v1178 = vadd.f32 %v1176, %v1177
  %v1179 = vsel %vm872, %v1094, 0.0
  %v1180 = vadd.f32 %v1178, %v1179
  %v1181 = vsel %vm872, %v1095, 0.0
  %v1182 = vadd.f32 %v1180, %v1181
  %v1183 = vsel %vm872, %v1096, 0.0
  %v1184 = vadd.f32 %v1182, %v1183
  %v1185 = vsel %vm872, %v1097, 0.0
  %v1186 = vadd.f32 %v1184, %v1185
  %v1187 = vsel %vm872, %v1098, 0.0
  %v1188 = vadd.f32 %v1186, %v1187
  %v1189 = vsel %vm872, %v1099, 0.0
  %v1190 = vadd.f32 %v1188, %v1189
  %v1191 = vsel %vm872, %v1100, 0.0
  %v1192 = vadd.f32 %v1190, %v1191
  %v1193 = vsel %vm872, %v1101, 0.0
  %v1194 = vadd.f32 %v1192, %v1193
  %v1195 = vsel %vm872, %v1102, 0.0
  %v1196 = vadd.f32 %v1194, %v1195
  %v1197 = vsel %vm872, %v1103, 0.0
  %v1198 = vadd.f32 %v1196, %v1197
  %v1199 = vsel %vm872, %v1104, 0.0
  %v1200 = vadd.f32 %v1198, %v1199
  %v1201 = vsel %vm872, %v1105, 0.0
  %v1202 = vadd.f32 %v1200, %v1201
  %v1203 = vsel %vm872, %v1106, 0.0
  %v1204 = vadd.f32 %v1202, %v1203
  %v1205 = vsel %vm872, %v1107, 0.0
  %v1206 = vadd.f32 %v1204, %v1205
  %v1207 = vsel %vm872, %v1108, 0.0
  %v1208 = vadd.f32 %v1206, %v1207
  %v1209 = vsel %vm872, %v1109, 0.0
  %v1210 = vadd.f32 %v1208, %v1209
  %v1211 = vsel %vm872, %v1110, 0.0
  %v1212 = vadd.f32 %v1210, %v1211
  %v1213 = vsel %vm872, %v1111, 0.0
  %v1214 = vadd.f32 %v1212, %v1213
  %v1215 = vsel %vm872, %v1112, 0.0
  %v1216 = vadd.f32 %v1214, %v1215
  %v1217 = vsel %vm872, %v1113, 0.0
  %v1218 = vadd.f32 %v1216, %v1217
  %v1219 = vsel %vm872, %v1114, 0.0
  %v1220 = vadd.f32 %v1218, %v1219
  %v1221 = vsel %vm872, %v1115, 0.0
  %v1222 = vadd.f32 %v1220, %v1221
  %v1223 = vsel %vm872, %v1116, 0.0
  %v1224 = vadd.f32 %v1222, %v1223
  %v1225 = vsel %vm872, %v1117, 0.0
  %v1226 = vadd.f32 %v1224, %v1225
  %v1227 = vsel %vm872, %v1118, 0.0
  %v1228 = vadd.f32 %v1226, %v1227
  %v1229 = vsel %vm872, %v1119, 0.0
  %v1230 = vadd.f32 %v1228, %v1229
  %v1231 = vsel %vm872, %v1120, 0.0
  %v1232 = vadd.f32 %v1230, %v1231
  %v1233 = vsel %vm872, %v1121, 0.0
  %v1234 = vadd.f32 %v1232, %v1233
  %v1235 = vsel %vm872, %v1122, 0.0
  %v1236 = vadd.f32 %v1234, %v1235
  %v1237 = vsel %vm872, %v1123, 0.0
  %v1238 = vadd.f32 %v1236, %v1237
  %v1239 = vsel %vm872, %v1124, 0.0
  %v1240 = vadd.f32 %v1238, %v1239
  %v1241 = vsel %vm872, %v1125, 0.0
  %v1242 = vadd.f32 %v1240, %v1241
  %v1243 = vsel %vm872, %v1126, 0.0
  %v1244 = vadd.f32 %v1242, %v1243
  %v1245 = vsel %vm872, %v1127, 0.0
  %v1246 = vadd.f32 %v1244, %v1245
  %v1247 = vsel %vm872, %v1128, 0.0
  %v1248 = vadd.f32 %v1246, %v1247
  %v1249 = vsel %vm872, %v1129, 0.0
  %v1250 = vadd.f32 %v1248, %v1249
  %v1251 = vsel %vm872, %v1130, 0.0
  %v1252 = vadd.f32 %v1250, %v1251
  %v1253 = vsel %vm872, %v1131, 0.0
  %v1254 = vadd.f32 %v1252, %v1253
  %v1255 = vsel %vm872, %v1132, 0.0
  %v1256 = vadd.f32 %v1254, %v1255
  %v1257 = vsel %vm872, %v1133, 0.0
  %v1258 = vadd.f32 %v1256, %v1257
  %v1259 = vsel %vm872, %v1134, 0.0
  %v1260 = vadd.f32 %v1258, %v1259
  %v1261 = vsel %vm872, %v1135, 0.0
  %v1262 = vadd.f32 %v1260, %v1261
  %v1263 = vrot.slane %v1262, 4
  %v1264 = vadd.f32 %v1262, %v1263
  %v1265 = vrot.slane %v1264, 2
  %v1266 = vadd.f32 %v1264, %v1265
  %v1267 = vrot.slane %v1266, 1
  %v1268 = vadd.f32 %v1266, %v1267
  %1269 = vst.msk [vmem:[%s5 + $0x1] sm:$0x1] %vm1070, %v1268
  // Predicated region
  $region18: #{bottleneck_forward.7} parent=0 // pred_check
    _
  $region19: #{bottleneck_forward.7} parent=0 // pred_check_branch
    %1271 = sbr.rel (0) target = $region21
  $region20: #{bottleneck_forward.7} parent=0 // pred_region
    _
  $region21: #{bottleneck_forward.7} parent=0 // pred_fallthru
    _
  // Predicated region
  $region22: #{bottleneck_forward.7} parent=0 // pred_check
    _
  $region23: #{bottleneck_forward.7} parent=0 // pred_check_branch
    %1273 = sbr.rel (0) target = $region25
  $region24: #{bottleneck_forward.7} parent=0 // pred_region
    _
  $region25: #{bottleneck_forward.7} parent=0 // pred_fallthru
    _
  // Predicated region
  $region26: #{bottleneck_forward.7} parent=0 // pred_check
    _
  $region27: #{bottleneck_forward.7} parent=0 // pred_check_branch
    %1275 = sbr.rel (0) target = $region29
  $region28: #{bottleneck_forward.7} parent=0 // pred_region
    _
  $region29: #{bottleneck_forward.7} parent=0 // pred_fallthru
    _
  // Predicated region
  $region30: #{bottleneck_forward.7} parent=0 // pred_check
    _
  $region31: #{bottleneck_forward.7} parent=0 // pred_check_branch
    %1277 = sbr.rel (0) target = $region33
  $region32: #{bottleneck_forward.7} parent=0 // pred_region
    _
  $region33: #{bottleneck_forward.7} parent=0 // pred_fallthru
    _

// kernel: bottleneck_forward.6
$region0: #{bottleneck_forward.6}
  #allocation0 [shape = 'u32[]', space=smem, size = 0x4, offset = 0x4, fixed_abs, tag = 'smem constant byte address 0x4 - core index']
  #allocation1 [shape = 'u32[144,128]{1,0:T(1,128)}', space=vmem, size = 0x12000, scoped, tag = 'internal scratch']
  #allocation2 [shape = 'f32[256,4]{1,0:T(8,128)}', space=vmem, size = 0x20000, scoped, tag = 'scratch operand']
  %s0 = inlined_call_operand.vmem [shape: f32[1,2,18,18,4], index: 0, kind: input, shape index: {}]
  %s1 = inlined_call_operand.vmem [shape: f32[3,3,4,4], index: 1, kind: input, shape index: {}]
  %s2 = inlined_call_operand.vmem [shape: f32[1,4], index: 2, kind: input, shape index: {}]
  %s3 = inlined_call_operand.vmem [shape: f32[1,4], index: 3, kind: input, shape index: {}]
  %s4 = inlined_call_operand.vmem [shape: f32[2,16,16,4], index: 4, kind: output, shape index: {0}]
  %s5 = inlined_call_operand.vmem [shape: f32[2,1,2,4], index: 5, kind: output, shape index: {1}]
  %6 = xla_tuple %s4, %s5
  %s7 = sld [smem:[#allocation0]]
  $region57: #{bottleneck_forward.6} parent=0
    _
  %s9 = ssub.s32 1, %s7
  %s10 = scalar_select 0, %s9, %s7
  loop: start=0, step=1, limit=4
  $region2: #{bottleneck_forward.6} parent=0 // loop_pre_header
    _
  $region3: #{bottleneck_forward.6} parent=0 // loop_header
    %s12 = sphi 0, %s16
    %p13 = scmp.ge.s32.totalorder %s12, 4
    %s19 = sphi 0, %s31
    %s20 = sphi 0, %s27
    %s21 = sphi 0, %s19
    %s22 = sphi 0, %s20
    %s23 = sphi 0, %s21
    %s24 = sphi 0, %s22
    %s34 = sphi 0, %s36
    %s37 = sphi 0, %s34
    %s38 = sphi 0, %s37
    %s54 = sphi 0, %s38
    %s58 = sphi 0, %s58
    %s60 = sphi 0, %s58
    %s61 = sphi 0, %s60
    %s75 = sphi 0, %s61
    %s79 = sphi 0, %s79
    %s81 = sphi 0, %s79
    %s82 = sphi 0, %s81
    %s96 = sphi 0, %s82
    %s100 = sphi 0, %s100
    %s102 = sphi 0, %s100
    %s103 = sphi 0, %s102
    %s117 = sphi 0, %s103
    %s125 = sphi 0, %s127
    %s128 = sphi 0, %s125
    %s129 = sphi 0, %s128
    %s145 = sphi 0, %s129
    %s153 = sphi 0, %s155
    %s156 = sphi 0, %s153
    %s157 = sphi 0, %s156
    %s173 = sphi 0, %s157
  $region4: #{bottleneck_forward.6} parent=0 // loop_header_branch
    %15 = sbr.rel (%p13) target = $region8
  $region5: #{bottleneck_forward.6} parent=0 // loop_body
    %s17 = ssub.s32 %s12, 1
    %s18 = ssub.s32 %s12, 2
    %s25 = sadd.s32 1, %s20
    %p26 = scmp.ge.s32.totalorder %s25, 1
    %s27 = scalar_select %p26, 0, %s25
    %s28 = sadd.s32 1, %s19
    %s29 = scalar_select %p26, %s28, %s19
    %p30 = scmp.ge.s32.totalorder %s29, 2
    %s31 = scalar_select %p30, 0, %s29
    %s32 = ssub.s32 %s19, %s31
    %p33 = scmp.eq.s32.totalorder %s32, 0
    %s35 = sadd.s32 %s34, 1
    %s36 = scalar_select %p33, %s34, %s35
    %p39 = pneg %p33
    %p40 = scmp.eq.s32.totalorder %s12, 1
    %p41 = por %p39, %p40
    %p42 = scmp.ne.s32.totalorder %s34, %s37
    %p43 = scmp.eq.s32.totalorder %s12, 0
    %p44 = por %p42, %p43
    %p45 = scmp.ne.s32.totalorder %s34, %s37
    %p46 = scmp.eq.s32.totalorder %s17, 1
    %p47 = por %p45, %p46
    %p48 = scmp.ne.s32.totalorder %s37, %s38
    %p49 = scmp.eq.s32.totalorder %s17, 0
    %p50 = por %p48, %p49
    %p51 = scmp.ne.s32.totalorder %s37, %s38
    %p52 = scmp.eq.s32.totalorder %s18, 1
    %p53 = por %p51, %p52
    %p55 = scmp.ne.s32.totalorder %s38, %s54
    %p56 = scmp.eq.s32.totalorder %s18, 0
    %p57 = por %p55, %p56
    %s59 = sadd.s32 %s58, 1
    %p62 = scmp.eq.s32.totalorder %s12, 1
    %p63 = scmp.ne.s32.totalorder %s58, %s60
    %p64 = scmp.eq.s32.totalorder %s12, 0
    %p65 = por %p63, %p64
    %p66 = scmp.ne.s32.totalorder %s58, %s60
    %p67 = scmp.eq.s32.totalorder %s17, 1
    %p68 = por %p66, %p67
    %p69 = scmp.ne.s32.totalorder %s60, %s61
    %p70 = scmp.eq.s32.totalorder %s17, 0
    %p71 = por %p69, %p70
    %p72 = scmp.ne.s32.totalorder %s60, %s61
    %p73 = scmp.eq.s32.totalorder %s18, 1
    %p74 = por %p72, %p73
    %p76 = scmp.ne.s32.totalorder %s61, %s75
    %p77 = scmp.eq.s32.totalorder %s18, 0
    %p78 = por %p76, %p77
    %s80 = sadd.s32 %s79, 1
    %p83 = scmp.eq.s32.totalorder %s12, 1
    %p84 = scmp.ne.s32.totalorder %s79, %s81
    %p85 = scmp.eq.s32.totalorder %s12, 0
    %p86 = por %p84, %p85
    %p87 = scmp.ne.s32.totalorder %s79, %s81
    %p88 = scmp.eq.s32.totalorder %s17, 1
    %p89 = por %p87, %p88
    %p90 = scmp.ne.s32.totalorder %s81, %s82
    %p91 = scmp.eq.s32.totalorder %s17, 0
    %p92 = por %p90, %p91
    %p93 = scmp.ne.s32.totalorder %s81, %s82
    %p94 = scmp.eq.s32.totalorder %s18, 1
    %p95 = por %p93, %p94
    %p97 = scmp.ne.s32.totalorder %s82, %s96
    %p98 = scmp.eq.s32.totalorder %s18, 0
    %p99 = por %p97, %p98
    %s101 = sadd.s32 %s100, 1
    %p104 = scmp.eq.s32.totalorder %s12, 1
    %p105 = scmp.ne.s32.totalorder %s100, %s102
    %p106 = scmp.eq.s32.totalorder %s12, 0
    %p107 = por %p105, %p106
    %p108 = scmp.ne.s32.totalorder %s100, %s102
    %p109 = scmp.eq.s32.totalorder %s17, 1
    %p110 = por %p108, %p109
    %p111 = scmp.ne.s32.totalorder %s102, %s103
    %p112 = scmp.eq.s32.totalorder %s17, 0
    %p113 = por %p111, %p112
    %p114 = scmp.ne.s32.totalorder %s102, %s103
    %p115 = scmp.eq.s32.totalorder %s18, 1
    %p116 = por %p114, %p115
    %p118 = scmp.ne.s32.totalorder %s103, %s117
    %p119 = scmp.eq.s32.totalorder %s18, 0
    %p120 = por %p118, %p119
    %s121 = ssub.s32 %s19, %s31
    %s122 = ssub.s32 %s20, %s27
    %s123 = sor.u32 %s121, %s122
    %p124 = scmp.eq.s32.totalorder %s123, 0
    %s126 = sadd.s32 %s125, 1
    %s127 = scalar_select %p124, %s125, %s126
    %p130 = pneg %p124
    %p131 = scmp.eq.s32.totalorder %s12, 1
    %p132 = por %p130, %p131
    %p133 = scmp.ne.s32.totalorder %s125, %s128
    %p134 = scmp.eq.s32.totalorder %s12, 0
    %p135 = por %p133, %p134
    %p136 = scmp.ne.s32.totalorder %s125, %s128
    %p137 = scmp.eq.s32.totalorder %s17, 1
    %p138 = por %p136, %p137
    %p139 = scmp.ne.s32.totalorder %s128, %s129
    %p140 = scmp.eq.s32.totalorder %s17, 0
    %p141 = por %p139, %p140
    %p142 = scmp.ne.s32.totalorder %s128, %s129
    %p143 = scmp.eq.s32.totalorder %s18, 1
    %p144 = por %p142, %p143
    %p146 = scmp.ne.s32.totalorder %s129, %s145
    %p147 = scmp.eq.s32.totalorder %s18, 0
    %p148 = por %p146, %p147
    %s149 = ssub.s32 %s19, %s31
    %s150 = ssub.s32 %s20, %s27
    %s151 = sor.u32 %s149, %s150
    %p152 = scmp.eq.s32.totalorder %s151, 0
    %s154 = sadd.s32 %s153, 1
    %s155 = scalar_select %p152, %s153, %s154
    %p158 = pneg %p152
    %p159 = scmp.eq.s32.totalorder %s12, 1
    %p160 = por %p158, %p159
    %p161 = scmp.ne.s32.totalorder %s153, %s156
    %p162 = scmp.eq.s32.totalorder %s12, 0
    %p163 = por %p161, %p162
    %p164 = scmp.ne.s32.totalorder %s153, %s156
    %p165 = scmp.eq.s32.totalorder %s17, 1
    %p166 = por %p164, %p165
    %p167 = scmp.ne.s32.totalorder %s156, %s157
    %p168 = scmp.eq.s32.totalorder %s17, 0
    %p169 = por %p167, %p168
    %p170 = scmp.ne.s32.totalorder %s156, %s157
    %p171 = scmp.eq.s32.totalorder %s18, 1
    %p172 = por %p170, %p171
    %p174 = scmp.ne.s32.totalorder %s157, %s173
    %p175 = scmp.eq.s32.totalorder %s18, 0
    %p176 = por %p174, %p175
    %p177 = scmp.le.s32.totalorder 1, %s12
    %p178 = scmp.lt.s32.totalorder %s12, 3
    %p179 = pnand %p177, %p178
    %p180 = pneg %p179
    // Predicated region
    $region9: #{bottleneck_forward.6} parent=5 // pred_check
      _
    $region10: #{bottleneck_forward.6} parent=5 // pred_check_branch
      %182 = sbr.rel (%p179) target = $region12
    $region11: #{bottleneck_forward.6} parent=5 // pred_region
      %s183 = ssub.s32 %s12, 1
      // Predicated region
      $region13: #{bottleneck_forward.6} parent=11 // pred_check
        %p184 = pneg %p71
      $region14: #{bottleneck_forward.6} parent=11 // pred_check_branch
        %186 = sbr.rel (%p184) target = $region16
      $region15: #{bottleneck_forward.6} parent=11 // pred_region
        _
      $region16: #{bottleneck_forward.6} parent=11 // pred_fallthru
        _
      // Predicated region
      $region17: #{bottleneck_forward.6} parent=11 // pred_check
        %p187 = pneg %p92
      $region18: #{bottleneck_forward.6} parent=11 // pred_check_branch
        %189 = sbr.rel (%p187) target = $region20
      $region19: #{bottleneck_forward.6} parent=11 // pred_region
        _
      $region20: #{bottleneck_forward.6} parent=11 // pred_fallthru
        _
      // Predicated region
      $region21: #{bottleneck_forward.6} parent=11 // pred_check
        %p190 = pneg %p113
      $region22: #{bottleneck_forward.6} parent=11 // pred_check_branch
        %192 = sbr.rel (%p190) target = $region24
      $region23: #{bottleneck_forward.6} parent=11 // pred_region
        _
      $region24: #{bottleneck_forward.6} parent=11 // pred_fallthru
        _
    $region12: #{bottleneck_forward.6} parent=5 // pred_fallthru
      _
    %p193 = scmp.lt.s32.totalorder %s12, 2
    // Predicated region
    $region25: #{bottleneck_forward.6} parent=5 // pred_check
      %p194 = pneg %p193
    $region26: #{bottleneck_forward.6} parent=5 // pred_check_branch
      %196 = sbr.rel (%p194) target = $region28
    $region27: #{bottleneck_forward.6} parent=5 // pred_region
      // Predicated region
      $region29: #{bottleneck_forward.6} parent=27 // pred_check
        %p197 = pneg %p44
      $region30: #{bottleneck_forward.6} parent=27 // pred_check_branch
        %199 = sbr.rel (%p197) target = $region32
      $region31: #{bottleneck_forward.6} parent=27 // pred_region
        %p200 = scmp.lt.s32.totalorder %s19, 1
        %s201 = scalar_select %p200, %s19, 1
        %s202 = smul.addr %s201, 54
        %s203 = smul.addr %s202, 8
        %s204 = scalar_lea.vmem %s0, %s203
      $region32: #{bottleneck_forward.6} parent=27 // pred_fallthru
        _
    $region28: #{bottleneck_forward.6} parent=5 // pred_fallthru
      _
    %p205 = scmp.le.s32.totalorder 1, %s12
    %p206 = scmp.lt.s32.totalorder %s12, 3
    %p207 = pnand %p205, %p206
    %p208 = pneg %p207
    // Predicated region
    $region33: #{bottleneck_forward.6} parent=5 // pred_check
      _
    $region34: #{bottleneck_forward.6} parent=5 // pred_check_branch
      %210 = sbr.rel (%p207) target = $region36
    $region35: #{bottleneck_forward.6} parent=5 // pred_region
      %s211 = ssub.s32 %s12, 1
      %p212 = scmp.lt.s32.totalorder %s21, 1
      %s213 = scalar_select %p212, %s21, 1
      %s214 = smul.addr %s213, 54
      %s215 = smul.addr %s214, 8
      %s216 = scalar_lea.vmem %s0, %s215
      %p217 = pneg %p50
      %p218 = pneg %p47
      %p219 = pneg %p71
      %p220 = pneg %p68
      %p221 = pneg %p92
      %p222 = pneg %p89
      %p223 = pneg %p113
      %p224 = pneg %p110
      %p225 = pneg %p141
      %p226 = pneg %p138
      %s227 = smul.u32 16, %s22
      %p228 = scmp.lt.s32.totalorder %s21, 1
      %s229 = scalar_select %p228, %s21, 1
      %p230 = scmp.lt.s32.totalorder %s227, 15
      %s231 = scalar_select %p230, %s227, 15
      %s232 = smul.addr %s231, 2
      %s233 = smul.addr %s229, 32
      %s234 = sadd.s32 %s232, %s233
      %s235 = smul.addr %s234, 8
      %s236 = scalar_lea.vmem %s4, %s235
      %p237 = pneg %p169
      %p238 = pneg %p166
      %p239 = scmp.lt.s32.totalorder %s21, 1
      %s240 = scalar_select %p239, %s21, 1
      %p241 = scmp.lt.s32.totalorder %s22, 0
      %s242 = scalar_select %p241, %s22, 0
      %s243 = sadd.s32 %s242, %s240
      %s244 = smul.addr %s243, 2
      %s245 = scalar_lea.vmem %s5, %s244
      %p246 = scmp.lt.s32.totalorder %s21, 1
      %s247 = scalar_select %p246, %s21, 1
      %s248 = smul.addr %s247, 54
      %s249 = smul.addr %s248, 8
      %s250 = scalar_lea.vmem %s0, %s249
      %s251 = smul.u32 16, %s22
      %p252 = scmp.lt.s32.totalorder %s21, 1
      %s253 = scalar_select %p252, %s21, 1
      %p254 = scmp.lt.s32.totalorder %s251, 15
      %s255 = scalar_select %p254, %s251, 15
      %s256 = smul.addr %s255, 2
      %s257 = smul.addr %s253, 32
      %s258 = sadd.s32 %s256, %s257
      %s259 = smul.addr %s258, 8
      %s260 = scalar_lea.vmem %s4, %s259
      %s261 = smul.u32 16, %s22
      %p262 = scmp.lt.s32.totalorder %s21, 1
      %s263 = scalar_select %p262, %s21, 1
      %p264 = scmp.lt.s32.totalorder %s22, 0
      %s265 = scalar_select %p264, %s22, 0
      %s266 = sadd.s32 %s265, %s263
      %s267 = smul.addr %s266, 2
      %s268 = scalar_lea.vmem %s5, %s267
      %s269 = smul.u32 %s22, 16
      %vm270 = vcmask 31744
      %271 = vst.msk [vmem:[#allocation2] sm:$0xff] %vm270, 0.0
      %272 = vst.msk [vmem:[#allocation2 + $0x8] sm:$0xff] %vm270, 0.0
      %273 = vst.msk [vmem:[#allocation2 + $0x10] sm:$0xff] %vm270, 0.0
      %274 = vst.msk [vmem:[#allocation2 + $0x18] sm:$0xff] %vm270, 0.0
      %275 = vst.msk [vmem:[#allocation2 + $0x20] sm:$0xff] %vm270, 0.0
      %276 = vst.msk [vmem:[#allocation2 + $0x28] sm:$0xff] %vm270, 0.0
      %277 = vst.msk [vmem:[#allocation2 + $0x30] sm:$0xff] %vm270, 0.0
      %278 = vst.msk [vmem:[#allocation2 + $0x38] sm:$0xff] %vm270, 0.0
      %279 = vst.msk [vmem:[#allocation2 + $0x40] sm:$0xff] %vm270, 0.0
      %280 = vst.msk [vmem:[#allocation2 + $0x48] sm:$0xff] %vm270, 0.0
      %281 = vst.msk [vmem:[#allocation2 + $0x50] sm:$0xff] %vm270, 0.0
      %282 = vst.msk [vmem:[#allocation2 + $0x58] sm:$0xff] %vm270, 0.0
      %283 = vst.msk [vmem:[#allocation2 + $0x60] sm:$0xff] %vm270, 0.0
      %284 = vst.msk [vmem:[#allocation2 + $0x68] sm:$0xff] %vm270, 0.0
      %285 = vst.msk [vmem:[#allocation2 + $0x70] sm:$0xff] %vm270, 0.0
      %286 = vst.msk [vmem:[#allocation2 + $0x78] sm:$0xff] %vm270, 0.0
      %287 = vst.msk [vmem:[#allocation2 + $0x80] sm:$0xff] %vm270, 0.0
      %288 = vst.msk [vmem:[#allocation2 + $0x88] sm:$0xff] %vm270, 0.0
      %289 = vst.msk [vmem:[#allocation2 + $0x90] sm:$0xff] %vm270, 0.0
      %290 = vst.msk [vmem:[#allocation2 + $0x98] sm:$0xff] %vm270, 0.0
      %291 = vst.msk [vmem:[#allocation2 + $0xa0] sm:$0xff] %vm270, 0.0
      %292 = vst.msk [vmem:[#allocation2 + $0xa8] sm:$0xff] %vm270, 0.0
      %293 = vst.msk [vmem:[#allocation2 + $0xb0] sm:$0xff] %vm270, 0.0
      %294 = vst.msk [vmem:[#allocation2 + $0xb8] sm:$0xff] %vm270, 0.0
      %295 = vst.msk [vmem:[#allocation2 + $0xc0] sm:$0xff] %vm270, 0.0
      %296 = vst.msk [vmem:[#allocation2 + $0xc8] sm:$0xff] %vm270, 0.0
      %297 = vst.msk [vmem:[#allocation2 + $0xd0] sm:$0xff] %vm270, 0.0
      %298 = vst.msk [vmem:[#allocation2 + $0xd8] sm:$0xff] %vm270, 0.0
      %299 = vst.msk [vmem:[#allocation2 + $0xe0] sm:$0xff] %vm270, 0.0
      %300 = vst.msk [vmem:[#allocation2 + $0xe8] sm:$0xff] %vm270, 0.0
      %301 = vst.msk [vmem:[#allocation2 + $0xf0] sm:$0xff] %vm270, 0.0
      %302 = vst.msk [vmem:[#allocation2 + $0xf8] sm:$0xff] %vm270, 0.0
      %s303 = smul.u32 %s269, 24
      %s304 = scalar_lea.vmem %s250, %s303
      %v305 = vld [vmem:[%s304] sm:$0xff]
      %v306 = vld [vmem:[%s304 + $0x8] sm:$0xff]
      %v307 = vld [vmem:[%s304 + $0x18] sm:$0xff]
      %v308 = vld [vmem:[%s304 + $0x20] sm:$0xff]
      %v309 = vld [vmem:[%s304 + $0x30] sm:$0xff]
      %v310 = vld [vmem:[%s304 + $0x38] sm:$0xff]
      %v311 = vld [vmem:[%s304 + $0x48] sm:$0xff]
      %v312 = vld [vmem:[%s304 + $0x50] sm:$0xff]
      %v313 = vld [vmem:[%s304 + $0x60] sm:$0xff]
      %v314 = vld [vmem:[%s304 + $0x68] sm:$0xff]
      %v315 = vld [vmem:[%s304 + $0x78] sm:$0xff]
      %v316 = vld [vmem:[%s304 + $0x80] sm:$0xff]
      %v317 = vld [vmem:[%s304 + $0x90] sm:$0xff]
      %v318 = vld [vmem:[%s304 + $0x98] sm:$0xff]
      %v319 = vld [vmem:[%s304 + $0xa8] sm:$0xff]
      %v320 = vld [vmem:[%s304 + $0xb0] sm:$0xff]
      %v321 = vld [vmem:[%s304 + $0xc0] sm:$0xff]
      %v322 = vld [vmem:[%s304 + $0xc8] sm:$0xff]
      %v323 = vld [vmem:[%s304 + $0xd8] sm:$0xff]
      %v324 = vld [vmem:[%s304 + $0xe0] sm:$0xff]
      %v325 = vld [vmem:[%s304 + $0xf0] sm:$0xff]
      %v326 = vld [vmem:[%s304 + $0xf8] sm:$0xff]
      %v327 = vld [vmem:[%s304 + $0x108] sm:$0xff]
      %v328 = vld [vmem:[%s304 + $0x110] sm:$0xff]
      %v329 = vld [vmem:[%s304 + $0x120] sm:$0xff]
      %v330 = vld [vmem:[%s304 + $0x128] sm:$0xff]
      %v331 = vld [vmem:[%s304 + $0x138] sm:$0xff]
      %v332 = vld [vmem:[%s304 + $0x140] sm:$0xff]
      %v333 = vld [vmem:[%s304 + $0x150] sm:$0xff]
      %v334 = vld [vmem:[%s304 + $0x158] sm:$0xff]
      %v335 = vld [vmem:[%s304 + $0x168] sm:$0xff]
      %v336 = vld [vmem:[%s304 + $0x170] sm:$0xff]
      %v337 = vld [vmem:[%s2] sm:$0x1]
      %v339 = vlaneseq
      %v340 = vshrl.u32 %v339, 7
      %v341 = vsub.s32 0, %v340
      %v342 = vrot.slane %v337, %v341
      %v344 = vmul.f32 %v305, %v342
      %v345 = vmul.f32 %v306, %v342
      %v346 = vmul.f32 %v307, %v342
      %v347 = vmul.f32 %v308, %v342
      %v348 = vmul.f32 %v309, %v342
      %v349 = vmul.f32 %v310, %v342
      %v350 = vmul.f32 %v311, %v342
      %v351 = vmul.f32 %v312, %v342
      %v352 = vmul.f32 %v313, %v342
      %v353 = vmul.f32 %v314, %v342
      %v354 = vmul.f32 %v315, %v342
      %v355 = vmul.f32 %v316, %v342
      %v356 = vmul.f32 %v317, %v342
      %v357 = vmul.f32 %v318, %v342
      %v358 = vmul.f32 %v319, %v342
      %v359 = vmul.f32 %v320, %v342
      %v360 = vmul.f32 %v321, %v342
      %v361 = vmul.f32 %v322, %v342
      %v362 = vmul.f32 %v323, %v342
      %v363 = vmul.f32 %v324, %v342
      %v364 = vmul.f32 %v325, %v342
      %v365 = vmul.f32 %v326, %v342
      %v366 = vmul.f32 %v327, %v342
      %v367 = vmul.f32 %v328, %v342
      %v368 = vmul.f32 %v329, %v342
      %v369 = vmul.f32 %v330, %v342
      %v370 = vmul.f32 %v331, %v342
      %v371 = vmul.f32 %v332, %v342
      %v372 = vmul.f32 %v333, %v342
      %v373 = vmul.f32 %v334, %v342
      %v374 = vmul.f32 %v335, %v342
      %v375 = vmul.f32 %v336, %v342
      %v376 = vld [vmem:[%s3] sm:$0x1]
      %v378 = vlaneseq
      %v379 = vshrl.u32 %v378, 7
      %v380 = vsub.s32 0, %v379
      %v381 = vrot.slane %v376, %v380
      %v383 = vadd.f32 %v344, %v381
      %v384 = vadd.f32 %v345, %v381
      %v385 = vadd.f32 %v346, %v381
      %v386 = vadd.f32 %v347, %v381
      %v387 = vadd.f32 %v348, %v381
      %v388 = vadd.f32 %v349, %v381
      %v389 = vadd.f32 %v350, %v381
      %v390 = vadd.f32 %v351, %v381
      %v391 = vadd.f32 %v352, %v381
      %v392 = vadd.f32 %v353, %v381
      %v393 = vadd.f32 %v354, %v381
      %v394 = vadd.f32 %v355, %v381
      %v395 = vadd.f32 %v356, %v381
      %v396 = vadd.f32 %v357, %v381
      %v397 = vadd.f32 %v358, %v381
      %v398 = vadd.f32 %v359, %v381
      %v399 = vadd.f32 %v360, %v381
      %v400 = vadd.f32 %v361, %v381
      %v401 = vadd.f32 %v362, %v381
      %v402 = vadd.f32 %v363, %v381
      %v403 = vadd.f32 %v364, %v381
      %v404 = vadd.f32 %v365, %v381
      %v405 = vadd.f32 %v366, %v381
      %v406 = vadd.f32 %v367, %v381
      %v407 = vadd.f32 %v368, %v381
      %v408 = vadd.f32 %v369, %v381
      %v409 = vadd.f32 %v370, %v381
      %v410 = vadd.f32 %v371, %v381
      %v411 = vadd.f32 %v372, %v381
      %v412 = vadd.f32 %v373, %v381
      %v413 = vadd.f32 %v374, %v381
      %v414 = vadd.f32 %v375, %v381
      %v415 = vmax.f32 %v383, 0.0
      %v416 = vmax.f32 %v384, 0.0
      %v417 = vmax.f32 %v385, 0.0
      %v418 = vmax.f32 %v386, 0.0
      %v419 = vmax.f32 %v387, 0.0
      %v420 = vmax.f32 %v388, 0.0
      %v421 = vmax.f32 %v389, 0.0
      %v422 = vmax.f32 %v390, 0.0
      %v423 = vmax.f32 %v391, 0.0
      %v424 = vmax.f32 %v392, 0.0
      %v425 = vmax.f32 %v393, 0.0
      %v426 = vmax.f32 %v394, 0.0
      %v427 = vmax.f32 %v395, 0.0
      %v428 = vmax.f32 %v396, 0.0
      %v429 = vmax.f32 %v397, 0.0
      %v430 = vmax.f32 %v398, 0.0
      %v431 = vmax.f32 %v399, 0.0
      %v432 = vmax.f32 %v400, 0.0
      %v433 = vmax.f32 %v401, 0.0
      %v434 = vmax.f32 %v402, 0.0
      %v435 = vmax.f32 %v403, 0.0
      %v436 = vmax.f32 %v404, 0.0
      %v437 = vmax.f32 %v405, 0.0
      %v438 = vmax.f32 %v406, 0.0
      %v439 = vmax.f32 %v407, 0.0
      %v440 = vmax.f32 %v408, 0.0
      %v441 = vmax.f32 %v409, 0.0
      %v442 = vmax.f32 %v410, 0.0
      %v443 = vmax.f32 %v411, 0.0
      %v444 = vmax.f32 %v412, 0.0
      %v445 = vmax.f32 %v413, 0.0
      %v446 = vmax.f32 %v414, 0.0
      %v447 = vld [vmem:[#allocation2] sm:$0xff]
      %v448 = vld [vmem:[#allocation2 + $0x8] sm:$0xff]
      %v449 = vld [vmem:[#allocation2 + $0x10] sm:$0xff]
      %v450 = vld [vmem:[#allocation2 + $0x18] sm:$0xff]
      %v451 = vld [vmem:[#allocation2 + $0x20] sm:$0xff]
      %v452 = vld [vmem:[#allocation2 + $0x28] sm:$0xff]
      %v453 = vld [vmem:[#allocation2 + $0x30] sm:$0xff]
      %v454 = vld [vmem:[#allocation2 + $0x38] sm:$0xff]
      %v455 = vld [vmem:[#allocation2 + $0x40] sm:$0xff]
      %v456 = vld [vmem:[#allocation2 + $0x48] sm:$0xff]
      %v457 = vld [vmem:[#allocation2 + $0x50] sm:$0xff]
      %v458 = vld [vmem:[#allocation2 + $0x58] sm:$0xff]
      %v459 = vld [vmem:[#allocation2 + $0x60] sm:$0xff]
      %v460 = vld [vmem:[#allocation2 + $0x68] sm:$0xff]
      %v461 = vld [vmem:[#allocation2 + $0x70] sm:$0xff]
      %v462 = vld [vmem:[#allocation2 + $0x78] sm:$0xff]
      %v463 = vld [vmem:[#allocation2 + $0x80] sm:$0xff]
      %v464 = vld [vmem:[#allocation2 + $0x88] sm:$0xff]
      %v465 = vld [vmem:[#allocation2 + $0x90] sm:$0xff]
      %v466 = vld [vmem:[#allocation2 + $0x98] sm:$0xff]
      %v467 = vld [vmem:[#allocation2 + $0xa0] sm:$0xff]
      %v468 = vld [vmem:[#allocation2 + $0xa8] sm:$0xff]
      %v469 = vld [vmem:[#allocation2 + $0xb0] sm:$0xff]
      %v470 = vld [vmem:[#allocation2 + $0xb8] sm:$0xff]
      %v471 = vld [vmem:[#allocation2 + $0xc0] sm:$0xff]
      %v472 = vld [vmem:[#allocation2 + $0xc8] sm:$0xff]
      %v473 = vld [vmem:[#allocation2 + $0xd0] sm:$0xff]
      %v474 = vld [vmem:[#allocation2 + $0xd8] sm:$0xff]
      %v475 = vld [vmem:[#allocation2 + $0xe0] sm:$0xff]
      %v476 = vld [vmem:[#allocation2 + $0xe8] sm:$0xff]
      %v477 = vld [vmem:[#allocation2 + $0xf0] sm:$0xff]
      %v478 = vld [vmem:[#allocation2 + $0xf8] sm:$0xff]
      %v479 = vld [vmem:[%s1] sm:$0xf]
      %v481 = vsel %vm270, %v415, 0
      %v484 = vsel %vm270, %v416, 0
      %v487 = vsel %vm270, %v417, 0
      %v490 = vsel %vm270, %v418, 0
      %v493 = vsel %vm270, %v419, 0
      %v496 = vsel %vm270, %v420, 0
      %v499 = vsel %vm270, %v421, 0
      %v502 = vsel %vm270, %v422, 0
      %v505 = vsel %vm270, %v423, 0
      %v508 = vsel %vm270, %v424, 0
      %v511 = vsel %vm270, %v425, 0
      %v514 = vsel %vm270, %v426, 0
      %v517 = vsel %vm270, %v427, 0
      %v520 = vsel %vm270, %v428, 0
      %v523 = vsel %vm270, %v429, 0
      %v526 = vsel %vm270, %v430, 0
      %v529 = vsel %vm270, %v431, 0
      %v532 = vsel %vm270, %v432, 0
      %v535 = vsel %vm270, %v433, 0
      %v538 = vsel %vm270, %v434, 0
      %v541 = vsel %vm270, %v435, 0
      %v544 = vsel %vm270, %v436, 0
      %v547 = vsel %vm270, %v437, 0
      %v550 = vsel %vm270, %v438, 0
      %v553 = vsel %vm270, %v439, 0
      %v556 = vsel %vm270, %v440, 0
      %v559 = vsel %vm270, %v441, 0
      %v562 = vsel %vm270, %v442, 0
      %v565 = vsel %vm270, %v443, 0
      %v568 = vsel %vm270, %v444, 0
      %v571 = vsel %vm270, %v445, 0
      %v574 = vsel %vm270, %v446, 0
      %vm576 = vcmask 1043456
      %v578 = vsel %vm576, %v479, 0
      %580 = vmatprep.subr.mxu0 0.0
      %581 = vmatpush1.msra.mxu0 %v578
      %582 = vmatprep.subr.mxu0 0.0
      %583 = vmatpush1.msra.mxu0 0.0
      %584 = vmatprep.subr.mxu0 0.0
      %585 = vmatpush1.msra.mxu0 0.0
      %586 = vmatprep.subr.mxu0 0.0
      %587 = vmatpush1.msra.mxu0 0.0
      %588 = vmatprep.subr.mxu0 0.0
      %589 = vmatpush1.msra.mxu0 0.0
      %590 = vmatprep.subr.mxu0 0.0
      %591 = vmatpush1.msra.mxu0 0.0
      %592 = vmatprep.subr.mxu0 0.0
      %593 = vmatpush1.msra.mxu0 0.0
      %594 = vmatprep.subr.mxu0 0.0
      %595 = vmatpush1.msra.mxu0 0.0
      %596 = vmatprep.subr.mxu0 0.0
      %597 = vmatpush1.msra.mxu0 0.0
      %598 = vmatprep.subr.mxu0 0.0
      %599 = vmatpush1.msra.mxu0 0.0
      %600 = vmatprep.subr.mxu0 0.0
      %601 = vmatpush1.msra.mxu0 0.0
      %602 = vmatprep.subr.mxu0 0.0
      %603 = vmatpush1.msra.mxu0 0.0
      %604 = vmatprep.subr.mxu0 0.0
      %605 = vmatpush1.msra.mxu0 0.0
      %606 = vmatprep.subr.mxu0 0.0
      %607 = vmatpush1.msra.mxu0 0.0
      %608 = vmatprep.subr.mxu0 0.0
      %609 = vmatpush1.msra.mxu0 0.0
      %610 = vmatprep.subr.mxu0 0.0
      %611 = vmatpush1.msra.mxu0 0.0
      %612 = vmatprep.subr.mxu0 0.0
      %613 = vmatpush1.msra.mxu0 0.0
      %614 = vmatprep.subr.mxu0 0.0
      %615 = vmatpush1.msra.mxu0 0.0
      %616 = vmatprep.subr.mxu0 0.0
      %617 = vmatpush1.msra.mxu0 0.0
      %618 = vmatprep.subr.mxu0 0.0
      %619 = vmatpush1.msra.mxu0 0.0
      %620 = vmatprep.subr.mxu0 0.0
      %621 = vmatpush1.msra.mxu0 0.0
      %622 = vmatprep.subr.mxu0 0.0
      %623 = vmatpush1.msra.mxu0 0.0
      %624 = vmatprep.subr.mxu0 0.0
      %625 = vmatpush1.msra.mxu0 0.0
      %626 = vmatprep.subr.mxu0 0.0
      %627 = vmatpush1.msra.mxu0 0.0
      %628 = vmatprep.subr.mxu0 0.0
      %629 = vmatpush1.msra.mxu0 0.0
      %630 = vmatprep.subr.mxu0 0.0
      %631 = vmatpush1.msra.mxu0 0.0
      %632 = vmatprep.subr.mxu0 0.0
      %633 = vmatpush1.msra.mxu0 0.0
      %634 = vmatprep.subr.mxu0 0.0
      %635 = vmatpush1.msra.mxu0 0.0
      %636 = vmatprep.subr.mxu0 0.0
      %637 = vmatpush1.msra.mxu0 0.0
      %638 = vmatprep.subr.mxu0 0.0
      %639 = vmatpush1.msra.mxu0 0.0
      %640 = vmatprep.subr.mxu0 0.0
      %641 = vmatpush1.msra.mxu0 0.0
      %642 = vmatprep.subr.mxu0 0.0
      %643 = vmatpush1.msra.mxu0 0.0
      %644 = vmatprep.mubr.f32.mxu0 0.0
      %645 = vmatmul.mubr.f32.gmra.mrb[0].mxu0 %v481
      %v646 = vpop.f32.mrb[0].mxu0
      %v647 = vadd.f32 0.0, %v646
      %v648 = vpop.f32.mrb[0].mxu0
      %649 = vmatprep.mubr.f32.mxu0 0.0
      %650 = vmatmul.mubr.f32.gmra.mrb[0].mxu0 %v484
      %v651 = vpop.f32.mrb[0].mxu0
      %v652 = vadd.f32 0.0, %v651
      %v653 = vpop.f32.mrb[0].mxu0
      %654 = vmatprep.mubr.f32.mxu0 0.0
      %655 = vmatmul.mubr.f32.gmra.mrb[0].mxu0 %v487
      %v656 = vpop.f32.mrb[0].mxu0
      %v657 = vadd.f32 0.0, %v656
      %v658 = vpop.f32.mrb[0].mxu0
      %659 = vmatprep.mubr.f32.mxu0 0.0
      %660 = vmatmul.mubr.f32.gmra.mrb[0].mxu0 %v490
      %v661 = vpop.f32.mrb[0].mxu0
      %v662 = vadd.f32 0.0, %v661
      %v663 = vpop.f32.mrb[0].mxu0
      %664 = vmatprep.mubr.f32.mxu0 0.0
      %665 = vmatmul.mubr.f32.gmra.mrb[0].mxu0 %v493
      %v666 = vpop.f32.mrb[0].mxu0
      %v667 = vadd.f32 0.0, %v666
      %v668 = vpop.f32.mrb[0].mxu0
      %669 = vmatprep.mubr.f32.mxu0 0.0
      %670 = vmatmul.mubr.f32.gmra.mrb[0].mxu0 %v496
      %v671 = vpop.f32.mrb[0].mxu0
      %v672 = vadd.f32 0.0, %v671
      %v673 = vpop.f32.mrb[0].mxu0
      %674 = vmatprep.mubr.f32.mxu0 0.0
      %675 = vmatmul.mubr.f32.gmra.mrb[0].mxu0 %v499
      %v676 = vpop.f32.mrb[0].mxu0
      %v677 = vadd.f32 0.0, %v676
      %v678 = vpop.f32.mrb[0].mxu0
      %679 = vmatprep.mubr.f32.mxu0 0.0
      %680 = vmatmul.mubr.f32.gmra.mrb[0].mxu0 %v502
      %v681 = vpop.f32.mrb[0].mxu0
      %v682 = vadd.f32 0.0, %v681
      %v683 = vpop.f32.mrb[0].mxu0
      %684 = vmatprep.mubr.f32.mxu0 0.0
      %685 = vmatmul.mubr.f32.gmra.mrb[0].mxu0 %v505
      %v686 = vpop.f32.mrb[0].mxu0
      %v687 = vadd.f32 0.0, %v686
      %v688 = vpop.f32.mrb[0].mxu0
      %689 = vmatprep.mubr.f32.mxu0 0.0
      %690 = vmatmul.mubr.f32.gmra.mrb[0].mxu0 %v508
      %v691 = vpop.f32.mrb[0].mxu0
      %v692 = vadd.f32 0.0, %v691
      %v693 = vpop.f32.mrb[0].mxu0
      %694 = vmatprep.mubr.f32.mxu0 0.0
      %695 = vmatmul.mubr.f32.gmra.mrb[0].mxu0 %v511
      %v696 = vpop.f32.mrb[0].mxu0
      %v697 = vadd.f32 0.0, %v696
      %v698 = vpop.f32.mrb[0].mxu0
      %699 = vmatprep.mubr.f32.mxu0 0.0
      %700 = vmatmul.mubr.f32.gmra.mrb[0].mxu0 %v514
      %v701 = vpop.f32.mrb[0].mxu0
      %v702 = vadd.f32 0.0, %v701
      %v703 = vpop.f32.mrb[0].mxu0
      %704 = vmatprep.mubr.f32.mxu0 0.0
      %705 = vmatmul.mubr.f32.gmra.mrb[0].mxu0 %v517
      %v706 = vpop.f32.mrb[0].mxu0
      %v707 = vadd.f32 0.0, %v706
      %v708 = vpop.f32.mrb[0].mxu0
      %709 = vmatprep.mubr.f32.mxu0 0.0
      %710 = vmatmul.mubr.f32.gmra.mrb[0].mxu0 %v520
      %v711 = vpop.f32.mrb[0].mxu0
      %v712 = vadd.f32 0.0, %v711
      %v713 = vpop.f32.mrb[0].mxu0
      %714 = vmatprep.mubr.f32.mxu0 0.0
      %715 = vmatmul.mubr.f32.gmra.mrb[0].mxu0 %v523
      %v716 = vpop.f32.mrb[0].mxu0
      %v717 = vadd.f32 0.0, %v716
      %v718 = vpop.f32.mrb[0].mxu0
      %719 = vmatprep.mubr.f32.mxu0 0.0
      %720 = vmatmul.mubr.f32.gmra.mrb[0].mxu0 %v526
      %v721 = vpop.f32.mrb[0].mxu0
      %v722 = vadd.f32 0.0, %v721
      %v723 = vpop.f32.mrb[0].mxu0
      %724 = vmatprep.mubr.f32.mxu0 0.0
      %725 = vmatmul.mubr.f32.gmra.mrb[0].mxu0 %v529
      %v726 = vpop.f32.mrb[0].mxu0
      %v727 = vadd.f32 0.0, %v726
      %v728 = vpop.f32.mrb[0].mxu0
      %729 = vmatprep.mubr.f32.mxu0 0.0
      %730 = vmatmul.mubr.f32.gmra.mrb[0].mxu0 %v532
      %v731 = vpop.f32.mrb[0].mxu0
      %v732 = vadd.f32 0.0, %v731
      %v733 = vpop.f32.mrb[0].mxu0
      %734 = vmatprep.mubr.f32.mxu0 0.0
      %735 = vmatmul.mubr.f32.gmra.mrb[0].mxu0 %v535
      %v736 = vpop.f32.mrb[0].mxu0
      %v737 = vadd.f32 0.0, %v736
      %v738 = vpop.f32.mrb[0].mxu0
      %739 = vmatprep.mubr.f32.mxu0 0.0
      %740 = vmatmul.mubr.f32.gmra.mrb[0].mxu0 %v538
      %v741 = vpop.f32.mrb[0].mxu0
      %v742 = vadd.f32 0.0, %v741
      %v743 = vpop.f32.mrb[0].mxu0
      %744 = vmatprep.mubr.f32.mxu0 0.0
      %745 = vmatmul.mubr.f32.gmra.mrb[0].mxu0 %v541
      %v746 = vpop.f32.mrb[0].mxu0
      %v747 = vadd.f32 0.0, %v746
      %v748 = vpop.f32.mrb[0].mxu0
      %749 = vmatprep.mubr.f32.mxu0 0.0
      %750 = vmatmul.mubr.f32.gmra.mrb[0].mxu0 %v544
      %v751 = vpop.f32.mrb[0].mxu0
      %v752 = vadd.f32 0.0, %v751
      %v753 = vpop.f32.mrb[0].mxu0
      %754 = vmatprep.mubr.f32.mxu0 0.0
      %755 = vmatmul.mubr.f32.gmra.mrb[0].mxu0 %v547
      %v756 = vpop.f32.mrb[0].mxu0
      %v757 = vadd.f32 0.0, %v756
      %v758 = vpop.f32.mrb[0].mxu0
      %759 = vmatprep.mubr.f32.mxu0 0.0
      %760 = vmatmul.mubr.f32.gmra.mrb[0].mxu0 %v550
      %v761 = vpop.f32.mrb[0].mxu0
      %v762 = vadd.f32 0.0, %v761
      %v763 = vpop.f32.mrb[0].mxu0
      %764 = vmatprep.mubr.f32.mxu0 0.0
      %765 = vmatmul.mubr.f32.gmra.mrb[0].mxu0 %v553
      %v766 = vpop.f32.mrb[0].mxu0
      %v767 = vadd.f32 0.0, %v766
      %v768 = vpop.f32.mrb[0].mxu0
      %769 = vmatprep.mubr.f32.mxu0 0.0
      %770 = vmatmul.mubr.f32.gmra.mrb[0].mxu0 %v556
      %v771 = vpop.f32.mrb[0].mxu0
      %v772 = vadd.f32 0.0, %v771
      %v773 = vpop.f32.mrb[0].mxu0
      %774 = vmatprep.mubr.f32.mxu0 0.0
      %775 = vmatmul.mubr.f32.gmra.mrb[0].mxu0 %v559
      %v776 = vpop.f32.mrb[0].mxu0
      %v777 = vadd.f32 0.0, %v776
      %v778 = vpop.f32.mrb[0].mxu0
      %779 = vmatprep.mubr.f32.mxu0 0.0
      %780 = vmatmul.mubr.f32.gmra.mrb[0].mxu0 %v562
      %v781 = vpop.f32.mrb[0].mxu0
      %v782 = vadd.f32 0.0, %v781
      %v783 = vpop.f32.mrb[0].mxu0
      %784 = vmatprep.mubr.f32.mxu0 0.0
      %785 = vmatmul.mubr.f32.gmra.mrb[0].mxu0 %v565
      %v786 = vpop.f32.mrb[0].mxu0
      %v787 = vadd.f32 0.0, %v786
      %v788 = vpop.f32.mrb[0].mxu0
      %789 = vmatprep.mubr.f32.mxu0 0.0
      %790 = vmatmul.mubr.f32.gmra.mrb[0].mxu0 %v568
      %v791 = vpop.f32.mrb[0].mxu0
      %v792 = vadd.f32 0.0, %v791
      %v793 = vpop.f32.mrb[0].mxu0
      %794 = vmatprep.mubr.f32.mxu0 0.0
      %795 = vmatmul.mubr.f32.gmra.mrb[0].mxu0 %v571
      %v796 = vpop.f32.mrb[0].mxu0
      %v797 = vadd.f32 0.0, %v796
      %v798 = vpop.f32.mrb[0].mxu0
      %799 = vmatprep.mubr.f32.mxu0 0.0
      %800 = vmatmul.mubr.f32.gmra.mrb[0].mxu0 %v574
      %v801 = vpop.f32.mrb[0].mxu0
      %v802 = vadd.f32 0.0, %v801
      %v803 = vpop.f32.mrb[0].mxu0
      %804 = vdwg.mxu0
      %v805 = vadd.f32 %v447, %v647
      %v806 = vadd.f32 %v448, %v652
      %v807 = vadd.f32 %v449, %v657
      %v808 = vadd.f32 %v450, %v662
      %v809 = vadd.f32 %v451, %v667
      %v810 = vadd.f32 %v452, %v672
      %v811 = vadd.f32 %v453, %v677
      %v812 = vadd.f32 %v454, %v682
      %v813 = vadd.f32 %v455, %v687
      %v814 = vadd.f32 %v456, %v692
      %v815 = vadd.f32 %v457, %v697
      %v816 = vadd.f32 %v458, %v702
      %v817 = vadd.f32 %v459, %v707
      %v818 = vadd.f32 %v460, %v712
      %v819 = vadd.f32 %v461, %v717
      %v820 = vadd.f32 %v462, %v722
      %v821 = vadd.f32 %v463, %v727
      %v822 = vadd.f32 %v464, %v732
      %v823 = vadd.f32 %v465, %v737
      %v824 = vadd.f32 %v466, %v742
      %v825 = vadd.f32 %v467, %v747
      %v826 = vadd.f32 %v468, %v752
      %v827 = vadd.f32 %v469, %v757
      %v828 = vadd.f32 %v470, %v762
      %v829 = vadd.f32 %v471, %v767
      %v830 = vadd.f32 %v472, %v772
      %v831 = vadd.f32 %v473, %v777
      %v832 = vadd.f32 %v474, %v782
      %v833 = vadd.f32 %v475, %v787
      %v834 = vadd.f32 %v476, %v792
      %v835 = vadd.f32 %v477, %v797
      %v836 = vadd.f32 %v478, %v802
      %837 = vst.msk [vmem:[#allocation2] sm:$0xff] %vm270, %v805
      %838 = vst.msk [vmem:[#allocation2 + $0x8] sm:$0xff] %vm270, %v806
      %839 = vst.msk [vmem:[#allocation2 + $0x10] sm:$0xff] %vm270, %v807
      %840 = vst.msk [vmem:[#allocation2 + $0x18] sm:$0xff] %vm270, %v808
      %841 = vst.msk [vmem:[#allocation2 + $0x20] sm:$0xff] %vm270, %v809
      %842 = vst.msk [vmem:[#allocation2 + $0x28] sm:$0xff] %vm270, %v810
      %843 = vst.msk [vmem:[#allocation2 + $0x30] sm:$0xff] %vm270, %v811
      %844 = vst.msk [vmem:[#allocation2 + $0x38] sm:$0xff] %vm270, %v812
      %845 = vst.msk [vmem:[#allocation2 + $0x40] sm:$0xff] %vm270, %v813
      %846 = vst.msk [vmem:[#allocation2 + $0x48] sm:$0xff] %vm270, %v814
      %847 = vst.msk [vmem:[#allocation2 + $0x50] sm:$0xff] %vm270, %v815
      %848 = vst.msk [vmem:[#allocation2 + $0x58] sm:$0xff] %vm270, %v816
      %849 = vst.msk [vmem:[#allocation2 + $0x60] sm:$0xff] %vm270, %v817
      %850 = vst.msk [vmem:[#allocation2 + $0x68] sm:$0xff] %vm270, %v818
      %851 = vst.msk [vmem:[#allocation2 + $0x70] sm:$0xff] %vm270, %v819
      %852 = vst.msk [vmem:[#allocation2 + $0x78] sm:$0xff] %vm270, %v820
      %853 = vst.msk [vmem:[#allocation2 + $0x80] sm:$0xff] %vm270, %v821
      %854 = vst.msk [vmem:[#allocation2 + $0x88] sm:$0xff] %vm270, %v822
      %855 = vst.msk [vmem:[#allocation2 + $0x90] sm:$0xff] %vm270, %v823
      %856 = vst.msk [vmem:[#allocation2 + $0x98] sm:$0xff] %vm270, %v824
      %857 = vst.msk [vmem:[#allocation2 + $0xa0] sm:$0xff] %vm270, %v825
      %858 = vst.msk [vmem:[#allocation2 + $0xa8] sm:$0xff] %vm270, %v826
      %859 = vst.msk [vmem:[#allocation2 + $0xb0] sm:$0xff] %vm270, %v827
      %860 = vst.msk [vmem:[#allocation2 + $0xb8] sm:$0xff] %vm270, %v828
      %861 = vst.msk [vmem:[#allocation2 + $0xc0] sm:$0xff] %vm270, %v829
      %862 = vst.msk [vmem:[#allocation2 + $0xc8] sm:$0xff] %vm270, %v830
      %863 = vst.msk [vmem:[#allocation2 + $0xd0] sm:$0xff] %vm270, %v831
      %864 = vst.msk [vmem:[#allocation2 + $0xd8] sm:$0xff] %vm270, %v832
      %865 = vst.msk [vmem:[#allocation2 + $0xe0] sm:$0xff] %vm270, %v833
      %866 = vst.msk [vmem:[#allocation2 + $0xe8] sm:$0xff] %vm270, %v834
      %867 = vst.msk [vmem:[#allocation2 + $0xf0] sm:$0xff] %vm270, %v835
      %868 = vst.msk [vmem:[#allocation2 + $0xf8] sm:$0xff] %vm270, %v836
      %v869 = vld [vmem:[%s304 + $0x1] sm:$0xff]
      %v870 = vld [vmem:[%s304 + $0x9] sm:$0xff]
      %v871 = vld [vmem:[%s304 + $0x19] sm:$0xff]
      %v872 = vld [vmem:[%s304 + $0x21] sm:$0xff]
      %v873 = vld [vmem:[%s304 + $0x31] sm:$0xff]
      %v874 = vld [vmem:[%s304 + $0x39] sm:$0xff]
      %v875 = vld [vmem:[%s304 + $0x49] sm:$0xff]
      %v876 = vld [vmem:[%s304 + $0x51] sm:$0xff]
      %v877 = vld [vmem:[%s304 + $0x61] sm:$0xff]
      %v878 = vld [vmem:[%s304 + $0x69] sm:$0xff]
      %v879 = vld [vmem:[%s304 + $0x79] sm:$0xff]
      %v880 = vld [vmem:[%s304 + $0x81] sm:$0xff]
      %v881 = vld [vmem:[%s304 + $0x91] sm:$0xff]
      %v882 = vld [vmem:[%s304 + $0x99] sm:$0xff]
      %v883 = vld [vmem:[%s304 + $0xa9] sm:$0xff]
      %v884 = vld [vmem:[%s304 + $0xb1] sm:$0xff]
      %v885 = vld [vmem:[%s304 + $0xc1] sm:$0xff]
      %v886 = vld [vmem:[%s304 + $0xc9] sm:$0xff]
      %v887 = vld [vmem:[%s304 + $0xd9] sm:$0xff]
      %v888 = vld [vmem:[%s304 + $0xe1] sm:$0xff]
      %v889 = vld [vmem:[%s304 + $0xf1] sm:$0xff]
      %v890 = vld [vmem:[%s304 + $0xf9] sm:$0xff]
      %v891 = vld [vmem:[%s304 + $0x109] sm:$0xff]
      %v892 = vld [vmem:[%s304 + $0x111] sm:$0xff]
      %v893 = vld [vmem:[%s304 + $0x121] sm:$0xff]
      %v894 = vld [vmem:[%s304 + $0x129] sm:$0xff]
      %v895 = vld [vmem:[%s304 + $0x139] sm:$0xff]
      %v896 = vld [vmem:[%s304 + $0x141] sm:$0xff]
      %v897 = vld [vmem:[%s304 + $0x151] sm:$0xff]
      %v898 = vld [vmem:[%s304 + $0x159] sm:$0xff]
      %v899 = vld [vmem:[%s304 + $0x169] sm:$0xff]
      %v900 = vld [vmem:[%s304 + $0x171] sm:$0xff]
      %v901 = vld [vmem:[%s2] sm:$0x1]
      %v903 = vlaneseq
      %v904 = vshrl.u32 %v903, 7
      %v905 = vsub.s32 0, %v904
      %v906 = vrot.slane %v901, %v905
      %v908 = vmul.f32 %v869, %v906
      %v909 = vmul.f32 %v870, %v906
      %v910 = vmul.f32 %v871, %v906
      %v911 = vmul.f32 %v872, %v906
      %v912 = vmul.f32 %v873, %v906
      %v913 = vmul.f32 %v874, %v906
      %v914 = vmul.f32 %v875, %v906
      %v915 = vmul.f32 %v876, %v906
      %v916 = vmul.f32 %v877, %v906
      %v917 = vmul.f32 %v878, %v906
      %v918 = vmul.f32 %v879, %v906
      %v919 = vmul.f32 %v880, %v906
      %v920 = vmul.f32 %v881, %v906
      %v921 = vmul.f32 %v882, %v906
      %v922 = vmul.f32 %v883, %v906
      %v923 = vmul.f32 %v884, %v906
      %v924 = vmul.f32 %v885, %v906
      %v925 = vmul.f32 %v886, %v906
      %v926 = vmul.f32 %v887, %v906
      %v927 = vmul.f32 %v888, %v906
      %v928 = vmul.f32 %v889, %v906
      %v929 = vmul.f32 %v890, %v906
      %v930 = vmul.f32 %v891, %v906
      %v931 = vmul.f32 %v892, %v906
      %v932 = vmul.f32 %v893, %v906
      %v933 = vmul.f32 %v894, %v906
      %v934 = vmul.f32 %v895, %v906
      %v935 = vmul.f32 %v896, %v906
      %v936 = vmul.f32 %v897, %v906
      %v937 = vmul.f32 %v898, %v906
      %v938 = vmul.f32 %v899, %v906
      %v939 = vmul.f32 %v900, %v906
      %v940 = vld [vmem:[%s3] sm:$0x1]
      %v942 = vlaneseq
      %v943 = vshrl.u32 %v942, 7
      %v944 = vsub.s32 0, %v943
      %v945 = vrot.slane %v940, %v944
      %v947 = vadd.f32 %v908, %v945
      %v948 = vadd.f32 %v909, %v945
      %v949 = vadd.f32 %v910, %v945
      %v950 = vadd.f32 %v911, %v945
      %v951 = vadd.f32 %v912, %v945
      %v952 = vadd.f32 %v913, %v945
      %v953 = vadd.f32 %v914, %v945
      %v954 = vadd.f32 %v915, %v945
      %v955 = vadd.f32 %v916, %v945
      %v956 = vadd.f32 %v917, %v945
      %v957 = vadd.f32 %v918, %v945
      %v958 = vadd.f32 %v919, %v945
      %v959 = vadd.f32 %v920, %v945
      %v960 = vadd.f32 %v921, %v945
      %v961 = vadd.f32 %v922, %v945
      %v962 = vadd.f32 %v923, %v945
      %v963 = vadd.f32 %v924, %v945
      %v964 = vadd.f32 %v925, %v945
      %v965 = vadd.f32 %v926, %v945
      %v966 = vadd.f32 %v927, %v945
      %v967 = vadd.f32 %v928, %v945
      %v968 = vadd.f32 %v929, %v945
      %v969 = vadd.f32 %v930, %v945
      %v970 = vadd.f32 %v931, %v945
      %v971 = vadd.f32 %v932, %v945
      %v972 = vadd.f32 %v933, %v945
      %v973 = vadd.f32 %v934, %v945
      %v974 = vadd.f32 %v935, %v945
      %v975 = vadd.f32 %v936, %v945
      %v976 = vadd.f32 %v937, %v945
      %v977 = vadd.f32 %v938, %v945
      %v978 = vadd.f32 %v939, %v945
      %v979 = vmax.f32 %v947, 0.0
      %v980 = vmax.f32 %v948, 0.0
      %v981 = vmax.f32 %v949, 0.0
      %v982 = vmax.f32 %v950, 0.0
      %v983 = vmax.f32 %v951, 0.0
      %v984 = vmax.f32 %v952, 0.0
      %v985 = vmax.f32 %v953, 0.0
      %v986 = vmax.f32 %v954, 0.0
      %v987 = vmax.f32 %v955, 0.0
      %v988 = vmax.f32 %v956, 0.0
      %v989 = vmax.f32 %v957, 0.0
      %v990 = vmax.f32 %v958, 0.0
      %v991 = vmax.f32 %v959, 0.0
      %v992 = vmax.f32 %v960, 0.0
      %v993 = vmax.f32 %v961, 0.0
      %v994 = vmax.f32 %v962, 0.0
      %v995 = vmax.f32 %v963, 0.0
      %v996 = vmax.f32 %v964, 0.0
      %v997 = vmax.f32 %v965, 0.0
      %v998 = vmax.f32 %v966, 0.0
      %v999 = vmax.f32 %v967, 0.0
      %v1000 = vmax.f32 %v968, 0.0
      %v1001 = vmax.f32 %v969, 0.0
      %v1002 = vmax.f32 %v970, 0.0
      %v1003 = vmax.f32 %v971, 0.0
      %v1004 = vmax.f32 %v972, 0.0
      %v1005 = vmax.f32 %v973, 0.0
      %v1006 = vmax.f32 %v974, 0.0
      %v1007 = vmax.f32 %v975, 0.0
      %v1008 = vmax.f32 %v976, 0.0
      %v1009 = vmax.f32 %v977, 0.0
      %v1010 = vmax.f32 %v978, 0.0
      %v1011 = vld [vmem:[#allocation2] sm:$0xff]
      %v1012 = vld [vmem:[#allocation2 + $0x8] sm:$0xff]
      %v1013 = vld [vmem:[#allocation2 + $0x10] sm:$0xff]
      %v1014 = vld [vmem:[#allocation2 + $0x18] sm:$0xff]
      %v1015 = vld [vmem:[#allocation2 + $0x20] sm:$0xff]
      %v1016 = vld [vmem:[#allocation2 + $0x28] sm:$0xff]
      %v1017 = vld [vmem:[#allocation2 + $0x30] sm:$0xff]
      %v1018 = vld [vmem:[#allocation2 + $0x38] sm:$0xff]
      %v1019 = vld [vmem:[#allocation2 + $0x40] sm:$0xff]
      %v1020 = vld [vmem:[#allocation2 + $0x48] sm:$0xff]
      %v1021 = vld [vmem:[#allocation2 + $0x50] sm:$0xff]
      %v1022 = vld [vmem:[#allocation2 + $0x58] sm:$0xff]
      %v1023 = vld [vmem:[#allocation2 + $0x60] sm:$0xff]
      %v1024 = vld [vmem:[#allocation2 + $0x68] sm:$0xff]
      %v1025 = vld [vmem:[#allocation2 + $0x70] sm:$0xff]
      %v1026 = vld [vmem:[#allocation2 + $0x78] sm:$0xff]
      %v1027 = vld [vmem:[#allocation2 + $0x80] sm:$0xff]
      %v1028 = vld [vmem:[#allocation2 + $0x88] sm:$0xff]
      %v1029 = vld [vmem:[#allocation2 + $0x90] sm:$0xff]
      %v1030 = vld [vmem:[#allocation2 + $0x98] sm:$0xff]
      %v1031 = vld [vmem:[#allocation2 + $0xa0] sm:$0xff]
      %v1032 = vld [vmem:[#allocation2 + $0xa8] sm:$0xff]
      %v1033 = vld [vmem:[#allocation2 + $0xb0] sm:$0xff]
      %v1034 = vld [vmem:[#allocation2 + $0xb8] sm:$0xff]
      %v1035 = vld [vmem:[#allocation2 + $0xc0] sm:$0xff]
      %v1036 = vld [vmem:[#allocation2 + $0xc8] sm:$0xff]
      %v1037 = vld [vmem:[#allocation2 + $0xd0] sm:$0xff]
      %v1038 = vld [vmem:[#allocation2 + $0xd8] sm:$0xff]
      %v1039 = vld [vmem:[#allocation2 + $0xe0] sm:$0xff]
      %v1040 = vld [vmem:[#allocation2 + $0xe8] sm:$0xff]
      %v1041 = vld [vmem:[#allocation2 + $0xf0] sm:$0xff]
      %v1042 = vld [vmem:[#allocation2 + $0xf8] sm:$0xff]
      %s1043 = scalar_lea.vmem %s1, 4
      %v1044 = vld [vmem:[%s1043] sm:$0xf]
      %v1046 = vsel %vm270, %v979, 0
      %v1049 = vsel %vm270, %v980, 0
      %v1052 = vsel %vm270, %v981, 0
      %v1055 = vsel %vm270, %v982, 0
      %v1058 = vsel %vm270, %v983, 0
      %v1061 = vsel %vm270, %v984, 0
      %v1064 = vsel %vm270, %v985, 0
      %v1067 = vsel %vm270, %v986, 0
      %v1070 = vsel %vm270, %v987, 0
      %v1073 = vsel %vm270, %v988, 0
      %v1076 = vsel %vm270, %v989, 0
      %v1079 = vsel %vm270, %v990, 0
      %v1082 = vsel %vm270, %v991, 0
      %v1085 = vsel %vm270, %v992, 0
      %v1088 = vsel %vm270, %v993, 0
      %v1091 = vsel %vm270, %v994, 0
      %v1094 = vsel %vm270, %v995, 0
      %v1097 = vsel %vm270, %v996, 0
      %v1100 = vsel %vm270, %v997, 0
      %v1103 = vsel %vm270, %v998, 0
      %v1106 = vsel %vm270, %v999, 0
      %v1109 = vsel %vm270, %v1000, 0
      %v1112 = vsel %vm270, %v1001, 0
      %v1115 = vsel %vm270, %v1002, 0
      %v1118 = vsel %vm270, %v1003, 0
      %v1121 = vsel %vm270, %v1004, 0
      %v1124 = vsel %vm270, %v1005, 0
      %v1127 = vsel %vm270, %v1006, 0
      %v1130 = vsel %vm270, %v1007, 0
      %v1133 = vsel %vm270, %v1008, 0
      %v1136 = vsel %vm270, %v1009, 0
      %v1139 = vsel %vm270, %v1010, 0
      %v1142 = vsel %vm576, %v1044, 0
      %1144 = vmatprep.subr.mxu0 0.0
      %1145 = vmatpush1.msra.mxu0 %v1142
      %1146 = vmatprep.subr.mxu0 0.0
      %1147 = vmatpush1.msra.mxu0 0.0
      %1148 = vmatprep.subr.mxu0 0.0
      %1149 = vmatpush1.msra.mxu0 0.0
      %1150 = vmatprep.subr.mxu0 0.0
      %1151 = vmatpush1.msra.mxu0 0.0
      %1152 = vmatprep.subr.mxu0 0.0
      %1153 = vmatpush1.msra.mxu0 0.0
      %1154 = vmatprep.subr.mxu0 0.0
      %1155 = vmatpush1.msra.mxu0 0.0
      %1156 = vmatprep.subr.mxu0 0.0
      %1157 = vmatpush1.msra.mxu0 0.0
      %1158 = vmatprep.subr.mxu0 0.0
      %1159 = vmatpush1.msra.mxu0 0.0
      %1160 = vmatprep.subr.mxu0 0.0
      %1161 = vmatpush1.msra.mxu0 0.0
      %1162 = vmatprep.subr.mxu0 0.0
      %1163 = vmatpush1.msra.mxu0 0.0
      %1164 = vmatprep.subr.mxu0 0.0
      %1165 = vmatpush1.msra.mxu0 0.0
      %1166 = vmatprep.subr.mxu0 0.0
      %1167 = vmatpush1.msra.mxu0 0.0
      %1168 = vmatprep.subr.mxu0 0.0
      %1169 = vmatpush1.msra.mxu0 0.0
      %1170 = vmatprep.subr.mxu0 0.0
      %1171 = vmatpush1.msra.mxu0 0.0
      %1172 = vmatprep.subr.mxu0 0.0
      %1173 = vmatpush1.msra.mxu0 0.0
      %1174 = vmatprep.subr.mxu0 0.0
      %1175 = vmatpush1.msra.mxu0 0.0
      %1176 = vmatprep.subr.mxu0 0.0
      %1177 = vmatpush1.msra.mxu0 0.0
      %1178 = vmatprep.subr.mxu0 0.0
      %1179 = vmatpush1.msra.mxu0 0.0
      %1180 = vmatprep.subr.mxu0 0.0
      %1181 = vmatpush1.msra.mxu0 0.0
      %1182 = vmatprep.subr.mxu0 0.0
      %1183 = vmatpush1.msra.mxu0 0.0
      %1184 = vmatprep.subr.mxu0 0.0
      %1185 = vmatpush1.msra.mxu0 0.0
      %1186 = vmatprep.subr.mxu0 0.0
      %1187 = vmatpush1.msra.mxu0 0.0
      %1188 = vmatprep.subr.mxu0 0.0
      %1189 = vmatpush1.msra.mxu0 0.0
      %1190 = vmatprep.subr.mxu0 0.0
      %1191 = vmatpush1.msra.mxu0 0.0
      %1192 = vmatprep.subr.mxu0 0.0
      %1193 = vmatpush1.msra.mxu0 0.0
      %1194 = vmatprep.subr.mxu0 0.0
      %1195 = vmatpush1.msra.mxu0 0.0
      %1196 = vmatprep.subr.mxu0 0.0
      %1197 = vmatpush1.msra.mxu0 0.0
      %1198 = vmatprep.subr.mxu0 0.0
      %1199 = vmatpush1.msra.mxu0 0.0
      %1200 = vmatprep.subr.mxu0 0.0
      %1201 = vmatpush1.msra.mxu0 0.0
      %1202 = vmatprep.subr.mxu0 0.0
      %1203 = vmatpush1.msra.mxu0 0.0
      %1204 = vmatprep.subr.mxu0 0.0
      %1205 = vmatpush1.msra.mxu0 0.0
      %1206 = vmatprep.subr.mxu0 0.0
      %1207 = vmatpush1.msra.mxu0 0.0
      %1208 = vmatprep.mubr.f32.mxu0 0.0
      %1209 = vmatmul.mubr.f32.gmra.mrb[0].mxu0 %v1046
      %v1210 = vpop.f32.mrb[0].mxu0
      %v1211 = vadd.f32 0.0, %v1210
      %v1212 = vpop.f32.mrb[0].mxu0
      %1213 = vmatprep.mubr.f32.mxu0 0.0
      %1214 = vmatmul.mubr.f32.gmra.mrb[0].mxu0 %v1049
      %v1215 = vpop.f32.mrb[0].mxu0
      %v1216 = vadd.f32 0.0, %v1215
      %v1217 = vpop.f32.mrb[0].mxu0
      %1218 = vmatprep.mubr.f32.mxu0 0.0
      %1219 = vmatmul.mubr.f32.gmra.mrb[0].mxu0 %v1052
      %v1220 = vpop.f32.mrb[0].mxu0
      %v1221 = vadd.f32 0.0, %v1220
      %v1222 = vpop.f32.mrb[0].mxu0
      %1223 = vmatprep.mubr.f32.mxu0 0.0
      %1224 = vmatmul.mubr.f32.gmra.mrb[0].mxu0 %v1055
      %v1225 = vpop.f32.mrb[0].mxu0
      %v1226 = vadd.f32 0.0, %v1225
      %v1227 = vpop.f32.mrb[0].mxu0
      %1228 = vmatprep.mubr.f32.mxu0 0.0
      %1229 = vmatmul.mubr.f32.gmra.mrb[0].mxu0 %v1058
      %v1230 = vpop.f32.mrb[0].mxu0
      %v1231 = vadd.f32 0.0, %v1230
      %v1232 = vpop.f32.mrb[0].mxu0
      %1233 = vmatprep.mubr.f32.mxu0 0.0
      %1234 = vmatmul.mubr.f32.gmra.mrb[0].mxu0 %v1061
      %v1235 = vpop.f32.mrb[0].mxu0
      %v1236 = vadd.f32 0.0, %v1235
      %v1237 = vpop.f32.mrb[0].mxu0
      %1238 = vmatprep.mubr.f32.mxu0 0.0
      %1239 = vmatmul.mubr.f32.gmra.mrb[0].mxu0 %v1064
      %v1240 = vpop.f32.mrb[0].mxu0
      %v1241 = vadd.f32 0.0, %v1240
      %v1242 = vpop.f32.mrb[0].mxu0
      %1243 = vmatprep.mubr.f32.mxu0 0.0
      %1244 = vmatmul.mubr.f32.gmra.mrb[0].mxu0 %v1067
      %v1245 = vpop.f32.mrb[0].mxu0
      %v1246 = vadd.f32 0.0, %v1245
      %v1247 = vpop.f32.mrb[0].mxu0
      %1248 = vmatprep.mubr.f32.mxu0 0.0
      %1249 = vmatmul.mubr.f32.gmra.mrb[0].mxu0 %v1070
      %v1250 = vpop.f32.mrb[0].mxu0
      %v1251 = vadd.f32 0.0, %v1250
      %v1252 = vpop.f32.mrb[0].mxu0
      %1253 = vmatprep.mubr.f32.mxu0 0.0
      %1254 = vmatmul.mubr.f32.gmra.mrb[0].mxu0 %v1073
      %v1255 = vpop.f32.mrb[0].mxu0
      %v1256 = vadd.f32 0.0, %v1255
      %v1257 = vpop.f32.mrb[0].mxu0
      %1258 = vmatprep.mubr.f32.mxu0 0.0
      %1259 = vmatmul.mubr.f32.gmra.mrb[0].mxu0 %v1076
      %v1260 = vpop.f32.mrb[0].mxu0
      %v1261 = vadd.f32 0.0, %v1260
      %v1262 = vpop.f32.mrb[0].mxu0
      %1263 = vmatprep.mubr.f32.mxu0 0.0
      %1264 = vmatmul.mubr.f32.gmra.mrb[0].mxu0 %v1079
      %v1265 = vpop.f32.mrb[0].mxu0
      %v1266 = vadd.f32 0.0, %v1265
      %v1267 = vpop.f32.mrb[0].mxu0
      %1268 = vmatprep.mubr.f32.mxu0 0.0
      %1269 = vmatmul.mubr.f32.gmra.mrb[0].mxu0 %v1082
      %v1270 = vpop.f32.mrb[0].mxu0
      %v1271 = vadd.f32 0.0, %v1270
      %v1272 = vpop.f32.mrb[0].mxu0
      %1273 = vmatprep.mubr.f32.mxu0 0.0
      %1274 = vmatmul.mubr.f32.gmra.mrb[0].mxu0 %v1085
      %v1275 = vpop.f32.mrb[0].mxu0
      %v1276 = vadd.f32 0.0, %v1275
      %v1277 = vpop.f32.mrb[0].mxu0
      %1278 = vmatprep.mubr.f32.mxu0 0.0
      %1279 = vmatmul.mubr.f32.gmra.mrb[0].mxu0 %v1088
      %v1280 = vpop.f32.mrb[0].mxu0
      %v1281 = vadd.f32 0.0, %v1280
      %v1282 = vpop.f32.mrb[0].mxu0
      %1283 = vmatprep.mubr.f32.mxu0 0.0
      %1284 = vmatmul.mubr.f32.gmra.mrb[0].mxu0 %v1091
      %v1285 = vpop.f32.mrb[0].mxu0
      %v1286 = vadd.f32 0.0, %v1285
      %v1287 = vpop.f32.mrb[0].mxu0
      %1288 = vmatprep.mubr.f32.mxu0 0.0
      %1289 = vmatmul.mubr.f32.gmra.mrb[0].mxu0 %v1094
      %v1290 = vpop.f32.mrb[0].mxu0
      %v1291 = vadd.f32 0.0, %v1290
      %v1292 = vpop.f32.mrb[0].mxu0
      %1293 = vmatprep.mubr.f32.mxu0 0.0
      %1294 = vmatmul.mubr.f32.gmra.mrb[0].mxu0 %v1097
      %v1295 = vpop.f32.mrb[0].mxu0
      %v1296 = vadd.f32 0.0, %v1295
      %v1297 = vpop.f32.mrb[0].mxu0
      %1298 = vmatprep.mubr.f32.mxu0 0.0
      %1299 = vmatmul.mubr.f32.gmra.mrb[0].mxu0 %v1100
      %v1300 = vpop.f32.mrb[0].mxu0
      %v1301 = vadd.f32 0.0, %v1300
      %v1302 = vpop.f32.mrb[0].mxu0
      %1303 = vmatprep.mubr.f32.mxu0 0.0
      %1304 = vmatmul.mubr.f32.gmra.mrb[0].mxu0 %v1103
      %v1305 = vpop.f32.mrb[0].mxu0
      %v1306 = vadd.f32 0.0, %v1305
      %v1307 = vpop.f32.mrb[0].mxu0
      %1308 = vmatprep.mubr.f32.mxu0 0.0
      %1309 = vmatmul.mubr.f32.gmra.mrb[0].mxu0 %v1106
      %v1310 = vpop.f32.mrb[0].mxu0
      %v1311 = vadd.f32 0.0, %v1310
      %v1312 = vpop.f32.mrb[0].mxu0
      %1313 = vmatprep.mubr.f32.mxu0 0.0
      %1314 = vmatmul.mubr.f32.gmra.mrb[0].mxu0 %v1109
      %v1315 = vpop.f32.mrb[0].mxu0
      %v1316 = vadd.f32 0.0, %v1315
      %v1317 = vpop.f32.mrb[0].mxu0
      %1318 = vmatprep.mubr.f32.mxu0 0.0
      %1319 = vmatmul.mubr.f32.gmra.mrb[0].mxu0 %v1112
      %v1320 = vpop.f32.mrb[0].mxu0
      %v1321 = vadd.f32 0.0, %v1320
      %v1322 = vpop.f32.mrb[0].mxu0
      %1323 = vmatprep.mubr.f32.mxu0 0.0
      %1324 = vmatmul.mubr.f32.gmra.mrb[0].mxu0 %v1115
      %v1325 = vpop.f32.mrb[0].mxu0
      %v1326 = vadd.f32 0.0, %v1325
      %v1327 = vpop.f32.mrb[0].mxu0
      %1328 = vmatprep.mubr.f32.mxu0 0.0
      %1329 = vmatmul.mubr.f32.gmra.mrb[0].mxu0 %v1118
      %v1330 = vpop.f32.mrb[0].mxu0
      %v1331 = vadd.f32 0.0, %v1330
      %v1332 = vpop.f32.mrb[0].mxu0
      %1333 = vmatprep.mubr.f32.mxu0 0.0
      %1334 = vmatmul.mubr.f32.gmra.mrb[0].mxu0 %v1121
      %v1335 = vpop.f32.mrb[0].mxu0
      %v1336 = vadd.f32 0.0, %v1335
      %v1337 = vpop.f32.mrb[0].mxu0
      %1338 = vmatprep.mubr.f32.mxu0 0.0
      %1339 = vmatmul.mubr.f32.gmra.mrb[0].mxu0 %v1124
      %v1340 = vpop.f32.mrb[0].mxu0
      %v1341 = vadd.f32 0.0, %v1340
      %v1342 = vpop.f32.mrb[0].mxu0
      %1343 = vmatprep.mubr.f32.mxu0 0.0
      %1344 = vmatmul.mubr.f32.gmra.mrb[0].mxu0 %v1127
      %v1345 = vpop.f32.mrb[0].mxu0
      %v1346 = vadd.f32 0.0, %v1345
      %v1347 = vpop.f32.mrb[0].mxu0
      %1348 = vmatprep.mubr.f32.mxu0 0.0
      %1349 = vmatmul.mubr.f32.gmra.mrb[0].mxu0 %v1130
      %v1350 = vpop.f32.mrb[0].mxu0
      %v1351 = vadd.f32 0.0, %v1350
      %v1352 = vpop.f32.mrb[0].mxu0
      %1353 = vmatprep.mubr.f32.mxu0 0.0
      %1354 = vmatmul.mubr.f32.gmra.mrb[0].mxu0 %v1133
      %v1355 = vpop.f32.mrb[0].mxu0
      %v1356 = vadd.f32 0.0, %v1355
      %v1357 = vpop.f32.mrb[0].mxu0
      %1358 = vmatprep.mubr.f32.mxu0 0.0
      %1359 = vmatmul.mubr.f32.gmra.mrb[0].mxu0 %v1136
      %v1360 = vpop.f32.mrb[0].mxu0
      %v1361 = vadd.f32 0.0, %v1360
      %v1362 = vpop.f32.mrb[0].mxu0
      %1363 = vmatprep.mubr.f32.mxu0 0.0
      %1364 = vmatmul.mubr.f32.gmra.mrb[0].mxu0 %v1139
      %v1365 = vpop.f32.mrb[0].mxu0
      %v1366 = vadd.f32 0.0, %v1365
      %v1367 = vpop.f32.mrb[0].mxu0
      %1368 = vdwg.mxu0
      %v1369 = vadd.f32 %v1011, %v1211
      %v1370 = vadd.f32 %v1012, %v1216
      %v1371 = vadd.f32 %v1013, %v1221
      %v1372 = vadd.f32 %v1014, %v1226
      %v1373 = vadd.f32 %v1015, %v1231
      %v1374 = vadd.f32 %v1016, %v1236
      %v1375 = vadd.f32 %v1017, %v1241
      %v1376 = vadd.f32 %v1018, %v1246
      %v1377 = vadd.f32 %v1019, %v1251
      %v1378 = vadd.f32 %v1020, %v1256
      %v1379 = vadd.f32 %v1021, %v1261
      %v1380 = vadd.f32 %v1022, %v1266
      %v1381 = vadd.f32 %v1023, %v1271
      %v1382 = vadd.f32 %v1024, %v1276
      %v1383 = vadd.f32 %v1025, %v1281
      %v1384 = vadd.f32 %v1026, %v1286
      %v1385 = vadd.f32 %v1027, %v1291
      %v1386 = vadd.f32 %v1028, %v1296
      %v1387 = vadd.f32 %v1029, %v1301
      %v1388 = vadd.f32 %v1030, %v1306
      %v1389 = vadd.f32 %v1031, %v1311
      %v1390 = vadd.f32 %v1032, %v1316
      %v1391 = vadd.f32 %v1033, %v1321
      %v1392 = vadd.f32 %v1034, %v1326
      %v1393 = vadd.f32 %v1035, %v1331
      %v1394 = vadd.f32 %v1036, %v1336
      %v1395 = vadd.f32 %v1037, %v1341
      %v1396 = vadd.f32 %v1038, %v1346
      %v1397 = vadd.f32 %v1039, %v1351
      %v1398 = vadd.f32 %v1040, %v1356
      %v1399 = vadd.f32 %v1041, %v1361
      %v1400 = vadd.f32 %v1042, %v1366
      %1401 = vst.msk [vmem:[#allocation2] sm:$0xff] %vm270, %v1369
      %1402 = vst.msk [vmem:[#allocation2 + $0x8] sm:$0xff] %vm270, %v1370
      %1403 = vst.msk [vmem:[#allocation2 + $0x10] sm:$0xff] %vm270, %v1371
      %1404 = vst.msk [vmem:[#allocation2 + $0x18] sm:$0xff] %vm270, %v1372
      %1405 = vst.msk [vmem:[#allocation2 + $0x20] sm:$0xff] %vm270, %v1373
      %1406 = vst.msk [vmem:[#allocation2 + $0x28] sm:$0xff] %vm270, %v1374
      %1407 = vst.msk [vmem:[#allocation2 + $0x30] sm:$0xff] %vm270, %v1375
      %1408 = vst.msk [vmem:[#allocation2 + $0x38] sm:$0xff] %vm270, %v1376
      %1409 = vst.msk [vmem:[#allocation2 + $0x40] sm:$0xff] %vm270, %v1377
      %1410 = vst.msk [vmem:[#allocation2 + $0x48] sm:$0xff] %vm270, %v1378
      %1411 = vst.msk [vmem:[#allocation2 + $0x50] sm:$0xff] %vm270, %v1379
      %1412 = vst.msk [vmem:[#allocation2 + $0x58] sm:$0xff] %vm270, %v1380
      %1413 = vst.msk [vmem:[#allocation2 + $0x60] sm:$0xff] %vm270, %v1381
      %1414 = vst.msk [vmem:[#allocation2 + $0x68] sm:$0xff] %vm270, %v1382
      %1415 = vst.msk [vmem:[#allocation2 + $0x70] sm:$0xff] %vm270, %v1383
      %1416 = vst.msk [vmem:[#allocation2 + $0x78] sm:$0xff] %vm270, %v1384
      %1417 = vst.msk [vmem:[#allocation2 + $0x80] sm:$0xff] %vm270, %v1385
      %1418 = vst.msk [vmem:[#allocation2 + $0x88] sm:$0xff] %vm270, %v1386
      %1419 = vst.msk [vmem:[#allocation2 + $0x90] sm:$0xff] %vm270, %v1387
      %1420 = vst.msk [vmem:[#allocation2 + $0x98] sm:$0xff] %vm270, %v1388
      %1421 = vst.msk [vmem:[#allocation2 + $0xa0] sm:$0xff] %vm270, %v1389
      %1422 = vst.msk [vmem:[#allocation2 + $0xa8] sm:$0xff] %vm270, %v1390
      %1423 = vst.msk [vmem:[#allocation2 + $0xb0] sm:$0xff] %vm270, %v1391
      %1424 = vst.msk [vmem:[#allocation2 + $0xb8] sm:$0xff] %vm270, %v1392
      %1425 = vst.msk [vmem:[#allocation2 + $0xc0] sm:$0xff] %vm270, %v1393
      %1426 = vst.msk [vmem:[#allocation2 + $0xc8] sm:$0xff] %vm270, %v1394
      %1427 = vst.msk [vmem:[#allocation2 + $0xd0] sm:$0xff] %vm270, %v1395
      %1428 = vst.msk [vmem:[#allocation2 + $0xd8] sm:$0xff] %vm270, %v1396
      %1429 = vst.msk [vmem:[#allocation2 + $0xe0] sm:$0xff] %vm270, %v1397
      %1430 = vst.msk [vmem:[#allocation2 + $0xe8] sm:$0xff] %vm270, %v1398
      %1431 = vst.msk [vmem:[#allocation2 + $0xf0] sm:$0xff] %vm270, %v1399
      %1432 = vst.msk [vmem:[#allocation2 + $0xf8] sm:$0xff] %vm270, %v1400
      %v1433 = vld [vmem:[%s304 + $0x2] sm:$0xff]
      %v1434 = vld [vmem:[%s304 + $0xa] sm:$0xff]
      %v1435 = vld [vmem:[%s304 + $0x1a] sm:$0xff]
      %v1436 = vld [vmem:[%s304 + $0x22] sm:$0xff]
      %v1437 = vld [vmem:[%s304 + $0x32] sm:$0xff]
      %v1438 = vld [vmem:[%s304 + $0x3a] sm:$0xff]
      %v1439 = vld [vmem:[%s304 + $0x4a] sm:$0xff]
      %v1440 = vld [vmem:[%s304 + $0x52] sm:$0xff]
      %v1441 = vld [vmem:[%s304 + $0x62] sm:$0xff]
      %v1442 = vld [vmem:[%s304 + $0x6a] sm:$0xff]
      %v1443 = vld [vmem:[%s304 + $0x7a] sm:$0xff]
      %v1444 = vld [vmem:[%s304 + $0x82] sm:$0xff]
      %v1445 = vld [vmem:[%s304 + $0x92] sm:$0xff]
      %v1446 = vld [vmem:[%s304 + $0x9a] sm:$0xff]
      %v1447 = vld [vmem:[%s304 + $0xaa] sm:$0xff]
      %v1448 = vld [vmem:[%s304 + $0xb2] sm:$0xff]
      %v1449 = vld [vmem:[%s304 + $0xc2] sm:$0xff]
      %v1450 = vld [vmem:[%s304 + $0xca] sm:$0xff]
      %v1451 = vld [vmem:[%s304 + $0xda] sm:$0xff]
      %v1452 = vld [vmem:[%s304 + $0xe2] sm:$0xff]
      %v1453 = vld [vmem:[%s304 + $0xf2] sm:$0xff]
      %v1454 = vld [vmem:[%s304 + $0xfa] sm:$0xff]
      %v1455 = vld [vmem:[%s304 + $0x10a] sm:$0xff]
      %v1456 = vld [vmem:[%s304 + $0x112] sm:$0xff]
      %v1457 = vld [vmem:[%s304 + $0x122] sm:$0xff]
      %v1458 = vld [vmem:[%s304 + $0x12a] sm:$0xff]
      %v1459 = vld [vmem:[%s304 + $0x13a] sm:$0xff]
      %v1460 = vld [vmem:[%s304 + $0x142] sm:$0xff]
      %v1461 = vld [vmem:[%s304 + $0x152] sm:$0xff]
      %v1462 = vld [vmem:[%s304 + $0x15a] sm:$0xff]
      %v1463 = vld [vmem:[%s304 + $0x16a] sm:$0xff]
      %v1464 = vld [vmem:[%s304 + $0x172] sm:$0xff]
      %v1465 = vld [vmem:[%s2] sm:$0x1]
      %v1467 = vlaneseq
      %v1468 = vshrl.u32 %v1467, 7
      %v1469 = vsub.s32 0, %v1468
      %v1470 = vrot.slane %v1465, %v1469
      %v1472 = vmul.f32 %v1433, %v1470
      %v1473 = vmul.f32 %v1434, %v1470
      %v1474 = vmul.f32 %v1435, %v1470
      %v1475 = vmul.f32 %v1436, %v1470
      %v1476 = vmul.f32 %v1437, %v1470
      %v1477 = vmul.f32 %v1438, %v1470
      %v1478 = vmul.f32 %v1439, %v1470
      %v1479 = vmul.f32 %v1440, %v1470
      %v1480 = vmul.f32 %v1441, %v1470
      %v1481 = vmul.f32 %v1442, %v1470
      %v1482 = vmul.f32 %v1443, %v1470
      %v1483 = vmul.f32 %v1444, %v1470
      %v1484 = vmul.f32 %v1445, %v1470
      %v1485 = vmul.f32 %v1446, %v1470
      %v1486 = vmul.f32 %v1447, %v1470
      %v1487 = vmul.f32 %v1448, %v1470
      %v1488 = vmul.f32 %v1449, %v1470
      %v1489 = vmul.f32 %v1450, %v1470
      %v1490 = vmul.f32 %v1451, %v1470
      %v1491 = vmul.f32 %v1452, %v1470
      %v1492 = vmul.f32 %v1453, %v1470
      %v1493 = vmul.f32 %v1454, %v1470
      %v1494 = vmul.f32 %v1455, %v1470
      %v1495 = vmul.f32 %v1456, %v1470
      %v1496 = vmul.f32 %v1457, %v1470
      %v1497 = vmul.f32 %v1458, %v1470
      %v1498 = vmul.f32 %v1459, %v1470
      %v1499 = vmul.f32 %v1460, %v1470
      %v1500 = vmul.f32 %v1461, %v1470
      %v1501 = vmul.f32 %v1462, %v1470
      %v1502 = vmul.f32 %v1463, %v1470
      %v1503 = vmul.f32 %v1464, %v1470
      %v1504 = vld [vmem:[%s3] sm:$0x1]
      %v1506 = vlaneseq
      %v1507 = vshrl.u32 %v1506, 7
      %v1508 = vsub.s32 0, %v1507
      %v1509 = vrot.slane %v1504, %v1508
      %v1511 = vadd.f32 %v1472, %v1509
      %v1512 = vadd.f32 %v1473, %v1509
      %v1513 = vadd.f32 %v1474, %v1509
      %v1514 = vadd.f32 %v1475, %v1509
      %v1515 = vadd.f32 %v1476, %v1509
      %v1516 = vadd.f32 %v1477, %v1509
      %v1517 = vadd.f32 %v1478, %v1509
      %v1518 = vadd.f32 %v1479, %v1509
      %v1519 = vadd.f32 %v1480, %v1509
      %v1520 = vadd.f32 %v1481, %v1509
      %v1521 = vadd.f32 %v1482, %v1509
      %v1522 = vadd.f32 %v1483, %v1509
      %v1523 = vadd.f32 %v1484, %v1509
      %v1524 = vadd.f32 %v1485, %v1509
      %v1525 = vadd.f32 %v1486, %v1509
      %v1526 = vadd.f32 %v1487, %v1509
      %v1527 = vadd.f32 %v1488, %v1509
      %v1528 = vadd.f32 %v1489, %v1509
      %v1529 = vadd.f32 %v1490, %v1509
      %v1530 = vadd.f32 %v1491, %v1509
      %v1531 = vadd.f32 %v1492, %v1509
      %v1532 = vadd.f32 %v1493, %v1509
      %v1533 = vadd.f32 %v1494, %v1509
      %v1534 = vadd.f32 %v1495, %v1509
      %v1535 = vadd.f32 %v1496, %v1509
      %v1536 = vadd.f32 %v1497, %v1509
      %v1537 = vadd.f32 %v1498, %v1509
      %v1538 = vadd.f32 %v1499, %v1509
      %v1539 = vadd.f32 %v1500, %v1509
      %v1540 = vadd.f32 %v1501, %v1509
      %v1541 = vadd.f32 %v1502, %v1509
      %v1542 = vadd.f32 %v1503, %v1509
      %v1543 = vmax.f32 %v1511, 0.0
      %v1544 = vmax.f32 %v1512, 0.0
      %v1545 = vmax.f32 %v1513, 0.0
      %v1546 = vmax.f32 %v1514, 0.0
      %v1547 = vmax.f32 %v1515, 0.0
      %v1548 = vmax.f32 %v1516, 0.0
      %v1549 = vmax.f32 %v1517, 0.0
      %v1550 = vmax.f32 %v1518, 0.0
      %v1551 = vmax.f32 %v1519, 0.0
      %v1552 = vmax.f32 %v1520, 0.0
      %v1553 = vmax.f32 %v1521, 0.0
      %v1554 = vmax.f32 %v1522, 0.0
      %v1555 = vmax.f32 %v1523, 0.0
      %v1556 = vmax.f32 %v1524, 0.0
      %v1557 = vmax.f32 %v1525, 0.0
      %v1558 = vmax.f32 %v1526, 0.0
      %v1559 = vmax.f32 %v1527, 0.0
      %v1560 = vmax.f32 %v1528, 0.0
      %v1561 = vmax.f32 %v1529, 0.0
      %v1562 = vmax.f32 %v1530, 0.0
      %v1563 = vmax.f32 %v1531, 0.0
      %v1564 = vmax.f32 %v1532, 0.0
      %v1565 = vmax.f32 %v1533, 0.0
      %v1566 = vmax.f32 %v1534, 0.0
      %v1567 = vmax.f32 %v1535, 0.0
      %v1568 = vmax.f32 %v1536, 0.0
      %v1569 = vmax.f32 %v1537, 0.0
      %v1570 = vmax.f32 %v1538, 0.0
      %v1571 = vmax.f32 %v1539, 0.0
      %v1572 = vmax.f32 %v1540, 0.0
      %v1573 = vmax.f32 %v1541, 0.0
      %v1574 = vmax.f32 %v1542, 0.0
      %v1575 = vld [vmem:[#allocation2] sm:$0xff]
      %v1576 = vld [vmem:[#allocation2 + $0x8] sm:$0xff]
      %v1577 = vld [vmem:[#allocation2 + $0x10] sm:$0xff]
      %v1578 = vld [vmem:[#allocation2 + $0x18] sm:$0xff]
      %v1579 = vld [vmem:[#allocation2 + $0x20] sm:$0xff]
      %v1580 = vld [vmem:[#allocation2 + $0x28] sm:$0xff]
      %v1581 = vld [vmem:[#allocation2 + $0x30] sm:$0xff]
      %v1582 = vld [vmem:[#allocation2 + $0x38] sm:$0xff]
      %v1583 = vld [vmem:[#allocation2 + $0x40] sm:$0xff]
      %v1584 = vld [vmem:[#allocation2 + $0x48] sm:$0xff]
      %v1585 = vld [vmem:[#allocation2 + $0x50] sm:$0xff]
      %v1586 = vld [vmem:[#allocation2 + $0x58] sm:$0xff]
      %v1587 = vld [vmem:[#allocation2 + $0x60] sm:$0xff]
      %v1588 = vld [vmem:[#allocation2 + $0x68] sm:$0xff]
      %v1589 = vld [vmem:[#allocation2 + $0x70] sm:$0xff]
      %v1590 = vld [vmem:[#allocation2 + $0x78] sm:$0xff]
      %v1591 = vld [vmem:[#allocation2 + $0x80] sm:$0xff]
      %v1592 = vld [vmem:[#allocation2 + $0x88] sm:$0xff]
      %v1593 = vld [vmem:[#allocation2 + $0x90] sm:$0xff]
      %v1594 = vld [vmem:[#allocation2 + $0x98] sm:$0xff]
      %v1595 = vld [vmem:[#allocation2 + $0xa0] sm:$0xff]
      %v1596 = vld [vmem:[#allocation2 + $0xa8] sm:$0xff]
      %v1597 = vld [vmem:[#allocation2 + $0xb0] sm:$0xff]
      %v1598 = vld [vmem:[#allocation2 + $0xb8] sm:$0xff]
      %v1599 = vld [vmem:[#allocation2 + $0xc0] sm:$0xff]
      %v1600 = vld [vmem:[#allocation2 + $0xc8] sm:$0xff]
      %v1601 = vld [vmem:[#allocation2 + $0xd0] sm:$0xff]
      %v1602 = vld [vmem:[#allocation2 + $0xd8] sm:$0xff]
      %v1603 = vld [vmem:[#allocation2 + $0xe0] sm:$0xff]
      %v1604 = vld [vmem:[#allocation2 + $0xe8] sm:$0xff]
      %v1605 = vld [vmem:[#allocation2 + $0xf0] sm:$0xff]
      %v1606 = vld [vmem:[#allocation2 + $0xf8] sm:$0xff]
      %s1607 = scalar_lea.vmem %s1, 8
      %v1608 = vld [vmem:[%s1607] sm:$0xf]
      %v1610 = vsel %vm270, %v1543, 0
      %v1613 = vsel %vm270, %v1544, 0
      %v1616 = vsel %vm270, %v1545, 0
      %v1619 = vsel %vm270, %v1546, 0
      %v1622 = vsel %vm270, %v1547, 0
      %v1625 = vsel %vm270, %v1548, 0
      %v1628 = vsel %vm270, %v1549, 0
      %v1631 = vsel %vm270, %v1550, 0
      %v1634 = vsel %vm270, %v1551, 0
      %v1637 = vsel %vm270, %v1552, 0
      %v1640 = vsel %vm270, %v1553, 0
      %v1643 = vsel %vm270, %v1554, 0
      %v1646 = vsel %vm270, %v1555, 0
      %v1649 = vsel %vm270, %v1556, 0
      %v1652 = vsel %vm270, %v1557, 0
      %v1655 = vsel %vm270, %v1558, 0
      %v1658 = vsel %vm270, %v1559, 0
      %v1661 = vsel %vm270, %v1560, 0
      %v1664 = vsel %vm270, %v1561, 0
      %v1667 = vsel %vm270, %v1562, 0
      %v1670 = vsel %vm270, %v1563, 0
      %v1673 = vsel %vm270, %v1564, 0
      %v1676 = vsel %vm270, %v1565, 0
      %v1679 = vsel %vm270, %v1566, 0
      %v1682 = vsel %vm270, %v1567, 0
      %v1685 = vsel %vm270, %v1568, 0
      %v1688 = vsel %vm270, %v1569, 0
      %v1691 = vsel %vm270, %v1570, 0
      %v1694 = vsel %vm270, %v1571, 0
      %v1697 = vsel %vm270, %v1572, 0
      %v1700 = vsel %vm270, %v1573, 0
      %v1703 = vsel %vm270, %v1574, 0
      %v1706 = vsel %vm576, %v1608, 0
      %1708 = vmatprep.subr.mxu0 0.0
      %1709 = vmatpush1.msra.mxu0 %v1706
      %1710 = vmatprep.subr.mxu0 0.0
      %1711 = vmatpush1.msra.mxu0 0.0
      %1712 = vmatprep.subr.mxu0 0.0
      %1713 = vmatpush1.msra.mxu0 0.0
      %1714 = vmatprep.subr.mxu0 0.0
      %1715 = vmatpush1.msra.mxu0 0.0
      %1716 = vmatprep.subr.mxu0 0.0
      %1717 = vmatpush1.msra.mxu0 0.0
      %1718 = vmatprep.subr.mxu0 0.0
      %1719 = vmatpush1.msra.mxu0 0.0
      %1720 = vmatprep.subr.mxu0 0.0
      %1721 = vmatpush1.msra.mxu0 0.0
      %1722 = vmatprep.subr.mxu0 0.0
      %1723 = vmatpush1.msra.mxu0 0.0
      %1724 = vmatprep.subr.mxu0 0.0
      %1725 = vmatpush1.msra.mxu0 0.0
      %1726 = vmatprep.subr.mxu0 0.0
      %1727 = vmatpush1.msra.mxu0 0.0
      %1728 = vmatprep.subr.mxu0 0.0
      %1729 = vmatpush1.msra.mxu0 0.0
      %1730 = vmatprep.subr.mxu0 0.0
      %1731 = vmatpush1.msra.mxu0 0.0
      %1732 = vmatprep.subr.mxu0 0.0
      %1733 = vmatpush1.msra.mxu0 0.0
      %1734 = vmatprep.subr.mxu0 0.0
      %1735 = vmatpush1.msra.mxu0 0.0
      %1736 = vmatprep.subr.mxu0 0.0
      %1737 = vmatpush1.msra.mxu0 0.0
      %1738 = vmatprep.subr.mxu0 0.0
      %1739 = vmatpush1.msra.mxu0 0.0
      %1740 = vmatprep.subr.mxu0 0.0
      %1741 = vmatpush1.msra.mxu0 0.0
      %1742 = vmatprep.subr.mxu0 0.0
      %1743 = vmatpush1.msra.mxu0 0.0
      %1744 = vmatprep.subr.mxu0 0.0
      %1745 = vmatpush1.msra.mxu0 0.0
      %1746 = vmatprep.subr.mxu0 0.0
      %1747 = vmatpush1.msra.mxu0 0.0
      %1748 = vmatprep.subr.mxu0 0.0
      %1749 = vmatpush1.msra.mxu0 0.0
      %1750 = vmatprep.subr.mxu0 0.0
      %1751 = vmatpush1.msra.mxu0 0.0
      %1752 = vmatprep.subr.mxu0 0.0
      %1753 = vmatpush1.msra.mxu0 0.0
      %1754 = vmatprep.subr.mxu0 0.0
      %1755 = vmatpush1.msra.mxu0 0.0
      %1756 = vmatprep.subr.mxu0 0.0
      %1757 = vmatpush1.msra.mxu0 0.0
      %1758 = vmatprep.subr.mxu0 0.0
      %1759 = vmatpush1.msra.mxu0 0.0
      %1760 = vmatprep.subr.mxu0 0.0
      %1761 = vmatpush1.msra.mxu0 0.0
      %1762 = vmatprep.subr.mxu0 0.0
      %1763 = vmatpush1.msra.mxu0 0.0
      %1764 = vmatprep.subr.mxu0 0.0
      %1765 = vmatpush1.msra.mxu0 0.0
      %1766 = vmatprep.subr.mxu0 0.0
      %1767 = vmatpush1.msra.mxu0 0.0
      %1768 = vmatprep.subr.mxu0 0.0
      %1769 = vmatpush1.msra.mxu0 0.0
      %1770 = vmatprep.subr.mxu0 0.0
      %1771 = vmatpush1.msra.mxu0 0.0
      %1772 = vmatprep.mubr.f32.mxu0 0.0
      %1773 = vmatmul.mubr.f32.gmra.mrb[0].mxu0 %v1610
      %v1774 = vpop.f32.mrb[0].mxu0
      %v1775 = vadd.f32 0.0, %v1774
      %v1776 = vpop.f32.mrb[0].mxu0
      %1777 = vmatprep.mubr.f32.mxu0 0.0
      %1778 = vmatmul.mubr.f32.gmra.mrb[0].mxu0 %v1613
      %v1779 = vpop.f32.mrb[0].mxu0
      %v1780 = vadd.f32 0.0, %v1779
      %v1781 = vpop.f32.mrb[0].mxu0
      %1782 = vmatprep.mubr.f32.mxu0 0.0
      %1783 = vmatmul.mubr.f32.gmra.mrb[0].mxu0 %v1616
      %v1784 = vpop.f32.mrb[0].mxu0
      %v1785 = vadd.f32 0.0, %v1784
      %v1786 = vpop.f32.mrb[0].mxu0
      %1787 = vmatprep.mubr.f32.mxu0 0.0
      %1788 = vmatmul.mubr.f32.gmra.mrb[0].mxu0 %v1619
      %v1789 = vpop.f32.mrb[0].mxu0
      %v1790 = vadd.f32 0.0, %v1789
      %v1791 = vpop.f32.mrb[0].mxu0
      %1792 = vmatprep.mubr.f32.mxu0 0.0
      %1793 = vmatmul.mubr.f32.gmra.mrb[0].mxu0 %v1622
      %v1794 = vpop.f32.mrb[0].mxu0
      %v1795 = vadd.f32 0.0, %v1794
      %v1796 = vpop.f32.mrb[0].mxu0
      %1797 = vmatprep.mubr.f32.mxu0 0.0
      %1798 = vmatmul.mubr.f32.gmra.mrb[0].mxu0 %v1625
      %v1799 = vpop.f32.mrb[0].mxu0
      %v1800 = vadd.f32 0.0, %v1799
      %v1801 = vpop.f32.mrb[0].mxu0
      %1802 = vmatprep.mubr.f32.mxu0 0.0
      %1803 = vmatmul.mubr.f32.gmra.mrb[0].mxu0 %v1628
      %v1804 = vpop.f32.mrb[0].mxu0
      %v1805 = vadd.f32 0.0, %v1804
      %v1806 = vpop.f32.mrb[0].mxu0
      %1807 = vmatprep.mubr.f32.mxu0 0.0
      %1808 = vmatmul.mubr.f32.gmra.mrb[0].mxu0 %v1631
      %v1809 = vpop.f32.mrb[0].mxu0
      %v1810 = vadd.f32 0.0, %v1809
      %v1811 = vpop.f32.mrb[0].mxu0
      %1812 = vmatprep.mubr.f32.mxu0 0.0
      %1813 = vmatmul.mubr.f32.gmra.mrb[0].mxu0 %v1634
      %v1814 = vpop.f32.mrb[0].mxu0
      %v1815 = vadd.f32 0.0, %v1814
      %v1816 = vpop.f32.mrb[0].mxu0
      %1817 = vmatprep.mubr.f32.mxu0 0.0
      %1818 = vmatmul.mubr.f32.gmra.mrb[0].mxu0 %v1637
      %v1819 = vpop.f32.mrb[0].mxu0
      %v1820 = vadd.f32 0.0, %v1819
      %v1821 = vpop.f32.mrb[0].mxu0
      %1822 = vmatprep.mubr.f32.mxu0 0.0
      %1823 = vmatmul.mubr.f32.gmra.mrb[0].mxu0 %v1640
      %v1824 = vpop.f32.mrb[0].mxu0
      %v1825 = vadd.f32 0.0, %v1824
      %v1826 = vpop.f32.mrb[0].mxu0
      %1827 = vmatprep.mubr.f32.mxu0 0.0
      %1828 = vmatmul.mubr.f32.gmra.mrb[0].mxu0 %v1643
      %v1829 = vpop.f32.mrb[0].mxu0
      %v1830 = vadd.f32 0.0, %v1829
      %v1831 = vpop.f32.mrb[0].mxu0
      %1832 = vmatprep.mubr.f32.mxu0 0.0
      %1833 = vmatmul.mubr.f32.gmra.mrb[0].mxu0 %v1646
      %v1834 = vpop.f32.mrb[0].mxu0
      %v1835 = vadd.f32 0.0, %v1834
      %v1836 = vpop.f32.mrb[0].mxu0
      %1837 = vmatprep.mubr.f32.mxu0 0.0
      %1838 = vmatmul.mubr.f32.gmra.mrb[0].mxu0 %v1649
      %v1839 = vpop.f32.mrb[0].mxu0
      %v1840 = vadd.f32 0.0, %v1839
      %v1841 = vpop.f32.mrb[0].mxu0
      %1842 = vmatprep.mubr.f32.mxu0 0.0
      %1843 = vmatmul.mubr.f32.gmra.mrb[0].mxu0 %v1652
      %v1844 = vpop.f32.mrb[0].mxu0
      %v1845 = vadd.f32 0.0, %v1844
      %v1846 = vpop.f32.mrb[0].mxu0
      %1847 = vmatprep.mubr.f32.mxu0 0.0
      %1848 = vmatmul.mubr.f32.gmra.mrb[0].mxu0 %v1655
      %v1849 = vpop.f32.mrb[0].mxu0
      %v1850 = vadd.f32 0.0, %v1849
      %v1851 = vpop.f32.mrb[0].mxu0
      %1852 = vmatprep.mubr.f32.mxu0 0.0
      %1853 = vmatmul.mubr.f32.gmra.mrb[0].mxu0 %v1658
      %v1854 = vpop.f32.mrb[0].mxu0
      %v1855 = vadd.f32 0.0, %v1854
      %v1856 = vpop.f32.mrb[0].mxu0
      %1857 = vmatprep.mubr.f32.mxu0 0.0
      %1858 = vmatmul.mubr.f32.gmra.mrb[0].mxu0 %v1661
      %v1859 = vpop.f32.mrb[0].mxu0
      %v1860 = vadd.f32 0.0, %v1859
      %v1861 = vpop.f32.mrb[0].mxu0
      %1862 = vmatprep.mubr.f32.mxu0 0.0
      %1863 = vmatmul.mubr.f32.gmra.mrb[0].mxu0 %v1664
      %v1864 = vpop.f32.mrb[0].mxu0
      %v1865 = vadd.f32 0.0, %v1864
      %v1866 = vpop.f32.mrb[0].mxu0
      %1867 = vmatprep.mubr.f32.mxu0 0.0
      %1868 = vmatmul.mubr.f32.gmra.mrb[0].mxu0 %v1667
      %v1869 = vpop.f32.mrb[0].mxu0
      %v1870 = vadd.f32 0.0, %v1869
      %v1871 = vpop.f32.mrb[0].mxu0
      %1872 = vmatprep.mubr.f32.mxu0 0.0
      %1873 = vmatmul.mubr.f32.gmra.mrb[0].mxu0 %v1670
      %v1874 = vpop.f32.mrb[0].mxu0
      %v1875 = vadd.f32 0.0, %v1874
      %v1876 = vpop.f32.mrb[0].mxu0
      %1877 = vmatprep.mubr.f32.mxu0 0.0
      %1878 = vmatmul.mubr.f32.gmra.mrb[0].mxu0 %v1673
      %v1879 = vpop.f32.mrb[0].mxu0
      %v1880 = vadd.f32 0.0, %v1879
      %v1881 = vpop.f32.mrb[0].mxu0
      %1882 = vmatprep.mubr.f32.mxu0 0.0
      %1883 = vmatmul.mubr.f32.gmra.mrb[0].mxu0 %v1676
      %v1884 = vpop.f32.mrb[0].mxu0
      %v1885 = vadd.f32 0.0, %v1884
      %v1886 = vpop.f32.mrb[0].mxu0
      %1887 = vmatprep.mubr.f32.mxu0 0.0
      %1888 = vmatmul.mubr.f32.gmra.mrb[0].mxu0 %v1679
      %v1889 = vpop.f32.mrb[0].mxu0
      %v1890 = vadd.f32 0.0, %v1889
      %v1891 = vpop.f32.mrb[0].mxu0
      %1892 = vmatprep.mubr.f32.mxu0 0.0
      %1893 = vmatmul.mubr.f32.gmra.mrb[0].mxu0 %v1682
      %v1894 = vpop.f32.mrb[0].mxu0
      %v1895 = vadd.f32 0.0, %v1894
      %v1896 = vpop.f32.mrb[0].mxu0
      %1897 = vmatprep.mubr.f32.mxu0 0.0
      %1898 = vmatmul.mubr.f32.gmra.mrb[0].mxu0 %v1685
      %v1899 = vpop.f32.mrb[0].mxu0
      %v1900 = vadd.f32 0.0, %v1899
      %v1901 = vpop.f32.mrb[0].mxu0
      %1902 = vmatprep.mubr.f32.mxu0 0.0
      %1903 = vmatmul.mubr.f32.gmra.mrb[0].mxu0 %v1688
      %v1904 = vpop.f32.mrb[0].mxu0
      %v1905 = vadd.f32 0.0, %v1904
      %v1906 = vpop.f32.mrb[0].mxu0
      %1907 = vmatprep.mubr.f32.mxu0 0.0
      %1908 = vmatmul.mubr.f32.gmra.mrb[0].mxu0 %v1691
      %v1909 = vpop.f32.mrb[0].mxu0
      %v1910 = vadd.f32 0.0, %v1909
      %v1911 = vpop.f32.mrb[0].mxu0
      %1912 = vmatprep.mubr.f32.mxu0 0.0
      %1913 = vmatmul.mubr.f32.gmra.mrb[0].mxu0 %v1694
      %v1914 = vpop.f32.mrb[0].mxu0
      %v1915 = vadd.f32 0.0, %v1914
      %v1916 = vpop.f32.mrb[0].mxu0
      %1917 = vmatprep.mubr.f32.mxu0 0.0
      %1918 = vmatmul.mubr.f32.gmra.mrb[0].mxu0 %v1697
      %v1919 = vpop.f32.mrb[0].mxu0
      %v1920 = vadd.f32 0.0, %v1919
      %v1921 = vpop.f32.mrb[0].mxu0
      %1922 = vmatprep.mubr.f32.mxu0 0.0
      %1923 = vmatmul.mubr.f32.gmra.mrb[0].mxu0 %v1700
      %v1924 = vpop.f32.mrb[0].mxu0
      %v1925 = vadd.f32 0.0, %v1924
      %v1926 = vpop.f32.mrb[0].mxu0
      %1927 = vmatprep.mubr.f32.mxu0 0.0
      %1928 = vmatmul.mubr.f32.gmra.mrb[0].mxu0 %v1703
      %v1929 = vpop.f32.mrb[0].mxu0
      %v1930 = vadd.f32 0.0, %v1929
      %v1931 = vpop.f32.mrb[0].mxu0
      %1932 = vdwg.mxu0
      %v1933 = vadd.f32 %v1575, %v1775
      %v1934 = vadd.f32 %v1576, %v1780
      %v1935 = vadd.f32 %v1577, %v1785
      %v1936 = vadd.f32 %v1578, %v1790
      %v1937 = vadd.f32 %v1579, %v1795
      %v1938 = vadd.f32 %v1580, %v1800
      %v1939 = vadd.f32 %v1581, %v1805
      %v1940 = vadd.f32 %v1582, %v1810
      %v1941 = vadd.f32 %v1583, %v1815
      %v1942 = vadd.f32 %v1584, %v1820
      %v1943 = vadd.f32 %v1585, %v1825
      %v1944 = vadd.f32 %v1586, %v1830
      %v1945 = vadd.f32 %v1587, %v1835
      %v1946 = vadd.f32 %v1588, %v1840
      %v1947 = vadd.f32 %v1589, %v1845
      %v1948 = vadd.f32 %v1590, %v1850
      %v1949 = vadd.f32 %v1591, %v1855
      %v1950 = vadd.f32 %v1592, %v1860
      %v1951 = vadd.f32 %v1593, %v1865
      %v1952 = vadd.f32 %v1594, %v1870
      %v1953 = vadd.f32 %v1595, %v1875
      %v1954 = vadd.f32 %v1596, %v1880
      %v1955 = vadd.f32 %v1597, %v1885
      %v1956 = vadd.f32 %v1598, %v1890
      %v1957 = vadd.f32 %v1599, %v1895
      %v1958 = vadd.f32 %v1600, %v1900
      %v1959 = vadd.f32 %v1601, %v1905
      %v1960 = vadd.f32 %v1602, %v1910
      %v1961 = vadd.f32 %v1603, %v1915
      %v1962 = vadd.f32 %v1604, %v1920
      %v1963 = vadd.f32 %v1605, %v1925
      %v1964 = vadd.f32 %v1606, %v1930
      %1965 = vst.msk [vmem:[#allocation2] sm:$0xff] %vm270, %v1933
      %1966 = vst.msk [vmem:[#allocation2 + $0x8] sm:$0xff] %vm270, %v1934
      %1967 = vst.msk [vmem:[#allocation2 + $0x10] sm:$0xff] %vm270, %v1935
      %1968 = vst.msk [vmem:[#allocation2 + $0x18] sm:$0xff] %vm270, %v1936
      %1969 = vst.msk [vmem:[#allocation2 + $0x20] sm:$0xff] %vm270, %v1937
      %1970 = vst.msk [vmem:[#allocation2 + $0x28] sm:$0xff] %vm270, %v1938
      %1971 = vst.msk [vmem:[#allocation2 + $0x30] sm:$0xff] %vm270, %v1939
      %1972 = vst.msk [vmem:[#allocation2 + $0x38] sm:$0xff] %vm270, %v1940
      %1973 = vst.msk [vmem:[#allocation2 + $0x40] sm:$0xff] %vm270, %v1941
      %1974 = vst.msk [vmem:[#allocation2 + $0x48] sm:$0xff] %vm270, %v1942
      %1975 = vst.msk [vmem:[#allocation2 + $0x50] sm:$0xff] %vm270, %v1943
      %1976 = vst.msk [vmem:[#allocation2 + $0x58] sm:$0xff] %vm270, %v1944
      %1977 = vst.msk [vmem:[#allocation2 + $0x60] sm:$0xff] %vm270, %v1945
      %1978 = vst.msk [vmem:[#allocation2 + $0x68] sm:$0xff] %vm270, %v1946
      %1979 = vst.msk [vmem:[#allocation2 + $0x70] sm:$0xff] %vm270, %v1947
      %1980 = vst.msk [vmem:[#allocation2 + $0x78] sm:$0xff] %vm270, %v1948
      %1981 = vst.msk [vmem:[#allocation2 + $0x80] sm:$0xff] %vm270, %v1949
      %1982 = vst.msk [vmem:[#allocation2 + $0x88] sm:$0xff] %vm270, %v1950
      %1983 = vst.msk [vmem:[#allocation2 + $0x90] sm:$0xff] %vm270, %v1951
      %1984 = vst.msk [vmem:[#allocation2 + $0x98] sm:$0xff] %vm270, %v1952
      %1985 = vst.msk [vmem:[#allocation2 + $0xa0] sm:$0xff] %vm270, %v1953
      %1986 = vst.msk [vmem:[#allocation2 + $0xa8] sm:$0xff] %vm270, %v1954
      %1987 = vst.msk [vmem:[#allocation2 + $0xb0] sm:$0xff] %vm270, %v1955
      %1988 = vst.msk [vmem:[#allocation2 + $0xb8] sm:$0xff] %vm270, %v1956
      %1989 = vst.msk [vmem:[#allocation2 + $0xc0] sm:$0xff] %vm270, %v1957
      %1990 = vst.msk [vmem:[#allocation2 + $0xc8] sm:$0xff] %vm270, %v1958
      %1991 = vst.msk [vmem:[#allocation2 + $0xd0] sm:$0xff] %vm270, %v1959
      %1992 = vst.msk [vmem:[#allocation2 + $0xd8] sm:$0xff] %vm270, %v1960
      %1993 = vst.msk [vmem:[#allocation2 + $0xe0] sm:$0xff] %vm270, %v1961
      %1994 = vst.msk [vmem:[#allocation2 + $0xe8] sm:$0xff] %vm270, %v1962
      %1995 = vst.msk [vmem:[#allocation2 + $0xf0] sm:$0xff] %vm270, %v1963
      %1996 = vst.msk [vmem:[#allocation2 + $0xf8] sm:$0xff] %vm270, %v1964
      %s1997 = sadd.s32 %s269, 1
      %s1998 = smul.u32 %s1997, 24
      %s1999 = scalar_lea.vmem %s250, %s1998
      %v2000 = vld [vmem:[%s1999] sm:$0xff]
      %v2001 = vld [vmem:[%s1999 + $0x8] sm:$0xff]
      %v2002 = vld [vmem:[%s1999 + $0x18] sm:$0xff]
      %v2003 = vld [vmem:[%s1999 + $0x20] sm:$0xff]
      %v2004 = vld [vmem:[%s1999 + $0x30] sm:$0xff]
      %v2005 = vld [vmem:[%s1999 + $0x38] sm:$0xff]
      %v2006 = vld [vmem:[%s1999 + $0x48] sm:$0xff]
      %v2007 = vld [vmem:[%s1999 + $0x50] sm:$0xff]
      %v2008 = vld [vmem:[%s1999 + $0x60] sm:$0xff]
      %v2009 = vld [vmem:[%s1999 + $0x68] sm:$0xff]
      %v2010 = vld [vmem:[%s1999 + $0x78] sm:$0xff]
      %v2011 = vld [vmem:[%s1999 + $0x80] sm:$0xff]
      %v2012 = vld [vmem:[%s1999 + $0x90] sm:$0xff]
      %v2013 = vld [vmem:[%s1999 + $0x98] sm:$0xff]
      %v2014 = vld [vmem:[%s1999 + $0xa8] sm:$0xff]
      %v2015 = vld [vmem:[%s1999 + $0xb0] sm:$0xff]
      %v2016 = vld [vmem:[%s1999 + $0xc0] sm:$0xff]
      %v2017 = vld [vmem:[%s1999 + $0xc8] sm:$0xff]
      %v2018 = vld [vmem:[%s1999 + $0xd8] sm:$0xff]
      %v2019 = vld [vmem:[%s1999 + $0xe0] sm:$0xff]
      %v2020 = vld [vmem:[%s1999 + $0xf0] sm:$0xff]
      %v2021 = vld [vmem:[%s1999 + $0xf8] sm:$0xff]
      %v2022 = vld [vmem:[%s1999 + $0x108] sm:$0xff]
      %v2023 = vld [vmem:[%s1999 + $0x110] sm:$0xff]
      %v2024 = vld [vmem:[%s1999 + $0x120] sm:$0xff]
      %v2025 = vld [vmem:[%s1999 + $0x128] sm:$0xff]
      %v2026 = vld [vmem:[%s1999 + $0x138] sm:$0xff]
      %v2027 = vld [vmem:[%s1999 + $0x140] sm:$0xff]
      %v2028 = vld [vmem:[%s1999 + $0x150] sm:$0xff]
      %v2029 = vld [vmem:[%s1999 + $0x158] sm:$0xff]
      %v2030 = vld [vmem:[%s1999 + $0x168] sm:$0xff]
      %v2031 = vld [vmem:[%s1999 + $0x170] sm:$0xff]
      %v2032 = vld [vmem:[%s2] sm:$0x1]
      %v2034 = vlaneseq
      %v2035 = vshrl.u32 %v2034, 7
      %v2036 = vsub.s32 0, %v2035
      %v2037 = vrot.slane %v2032, %v2036
      %v2039 = vmul.f32 %v2000, %v2037
      %v2040 = vmul.f32 %v2001, %v2037
      %v2041 = vmul.f32 %v2002, %v2037
      %v2042 = vmul.f32 %v2003, %v2037
      %v2043 = vmul.f32 %v2004, %v2037
      %v2044 = vmul.f32 %v2005, %v2037
      %v2045 = vmul.f32 %v2006, %v2037
      %v2046 = vmul.f32 %v2007, %v2037
      %v2047 = vmul.f32 %v2008, %v2037
      %v2048 = vmul.f32 %v2009, %v2037
      %v2049 = vmul.f32 %v2010, %v2037
      %v2050 = vmul.f32 %v2011, %v2037
      %v2051 = vmul.f32 %v2012, %v2037
      %v2052 = vmul.f32 %v2013, %v2037
      %v2053 = vmul.f32 %v2014, %v2037
      %v2054 = vmul.f32 %v2015, %v2037
      %v2055 = vmul.f32 %v2016, %v2037
      %v2056 = vmul.f32 %v2017, %v2037
      %v2057 = vmul.f32 %v2018, %v2037
      %v2058 = vmul.f32 %v2019, %v2037
      %v2059 = vmul.f32 %v2020, %v2037
      %v2060 = vmul.f32 %v2021, %v2037
      %v2061 = vmul.f32 %v2022, %v2037
      %v2062 = vmul.f32 %v2023, %v2037
      %v2063 = vmul.f32 %v2024, %v2037
      %v2064 = vmul.f32 %v2025, %v2037
      %v2065 = vmul.f32 %v2026, %v2037
      %v2066 = vmul.f32 %v2027, %v2037
      %v2067 = vmul.f32 %v2028, %v2037
      %v2068 = vmul.f32 %v2029, %v2037
      %v2069 = vmul.f32 %v2030, %v2037
      %v2070 = vmul.f32 %v2031, %v2037
      %v2071 = vld [vmem:[%s3] sm:$0x1]
      %v2073 = vlaneseq
      %v2074 = vshrl.u32 %v2073, 7
      %v2075 = vsub.s32 0, %v2074
      %v2076 = vrot.slane %v2071, %v2075
      %v2078 = vadd.f32 %v2039, %v2076
      %v2079 = vadd.f32 %v2040, %v2076
      %v2080 = vadd.f32 %v2041, %v2076
      %v2081 = vadd.f32 %v2042, %v2076
      %v2082 = vadd.f32 %v2043, %v2076
      %v2083 = vadd.f32 %v2044, %v2076
      %v2084 = vadd.f32 %v2045, %v2076
      %v2085 = vadd.f32 %v2046, %v2076
      %v2086 = vadd.f32 %v2047, %v2076
      %v2087 = vadd.f32 %v2048, %v2076
      %v2088 = vadd.f32 %v2049, %v2076
      %v2089 = vadd.f32 %v2050, %v2076
      %v2090 = vadd.f32 %v2051, %v2076
      %v2091 = vadd.f32 %v2052, %v2076
      %v2092 = vadd.f32 %v2053, %v2076
      %v2093 = vadd.f32 %v2054, %v2076
      %v2094 = vadd.f32 %v2055, %v2076
      %v2095 = vadd.f32 %v2056, %v2076
      %v2096 = vadd.f32 %v2057, %v2076
      %v2097 = vadd.f32 %v2058, %v2076
      %v2098 = vadd.f32 %v2059, %v2076
      %v2099 = vadd.f32 %v2060, %v2076
      %v2100 = vadd.f32 %v2061, %v2076
      %v2101 = vadd.f32 %v2062, %v2076
      %v2102 = vadd.f32 %v2063, %v2076
      %v2103 = vadd.f32 %v2064, %v2076
      %v2104 = vadd.f32 %v2065, %v2076
      %v2105 = vadd.f32 %v2066, %v2076
      %v2106 = vadd.f32 %v2067, %v2076
      %v2107 = vadd.f32 %v2068, %v2076
      %v2108 = vadd.f32 %v2069, %v2076
      %v2109 = vadd.f32 %v2070, %v2076
      %v2110 = vmax.f32 %v2078, 0.0
      %v2111 = vmax.f32 %v2079, 0.0
      %v2112 = vmax.f32 %v2080, 0.0
      %v2113 = vmax.f32 %v2081, 0.0
      %v2114 = vmax.f32 %v2082, 0.0
      %v2115 = vmax.f32 %v2083, 0.0
      %v2116 = vmax.f32 %v2084, 0.0
      %v2117 = vmax.f32 %v2085, 0.0
      %v2118 = vmax.f32 %v2086, 0.0
      %v2119 = vmax.f32 %v2087, 0.0
      %v2120 = vmax.f32 %v2088, 0.0
      %v2121 = vmax.f32 %v2089, 0.0
      %v2122 = vmax.f32 %v2090, 0.0
      %v2123 = vmax.f32 %v2091, 0.0
      %v2124 = vmax.f32 %v2092, 0.0
      %v2125 = vmax.f32 %v2093, 0.0
      %v2126 = vmax.f32 %v2094, 0.0
      %v2127 = vmax.f32 %v2095, 0.0
      %v2128 = vmax.f32 %v2096, 0.0
      %v2129 = vmax.f32 %v2097, 0.0
      %v2130 = vmax.f32 %v2098, 0.0
      %v2131 = vmax.f32 %v2099, 0.0
      %v2132 = vmax.f32 %v2100, 0.0
      %v2133 = vmax.f32 %v2101, 0.0
      %v2134 = vmax.f32 %v2102, 0.0
      %v2135 = vmax.f32 %v2103, 0.0
      %v2136 = vmax.f32 %v2104, 0.0
      %v2137 = vmax.f32 %v2105, 0.0
      %v2138 = vmax.f32 %v2106, 0.0
      %v2139 = vmax.f32 %v2107, 0.0
      %v2140 = vmax.f32 %v2108, 0.0
      %v2141 = vmax.f32 %v2109, 0.0
      %v2142 = vld [vmem:[#allocation2] sm:$0xff]
      %v2143 = vld [vmem:[#allocation2 + $0x8] sm:$0xff]
      %v2144 = vld [vmem:[#allocation2 + $0x10] sm:$0xff]
      %v2145 = vld [vmem:[#allocation2 + $0x18] sm:$0xff]
      %v2146 = vld [vmem:[#allocation2 + $0x20] sm:$0xff]
      %v2147 = vld [vmem:[#allocation2 + $0x28] sm:$0xff]
      %v2148 = vld [vmem:[#allocation2 + $0x30] sm:$0xff]
      %v2149 = vld [vmem:[#allocation2 + $0x38] sm:$0xff]
      %v2150 = vld [vmem:[#allocation2 + $0x40] sm:$0xff]
      %v2151 = vld [vmem:[#allocation2 + $0x48] sm:$0xff]
      %v2152 = vld [vmem:[#allocation2 + $0x50] sm:$0xff]
      %v2153 = vld [vmem:[#allocation2 + $0x58] sm:$0xff]
      %v2154 = vld [vmem:[#allocation2 + $0x60] sm:$0xff]
      %v2155 = vld [vmem:[#allocation2 + $0x68] sm:$0xff]
      %v2156 = vld [vmem:[#allocation2 + $0x70] sm:$0xff]
      %v2157 = vld [vmem:[#allocation2 + $0x78] sm:$0xff]
      %v2158 = vld [vmem:[#allocation2 + $0x80] sm:$0xff]
      %v2159 = vld [vmem:[#allocation2 + $0x88] sm:$0xff]
      %v2160 = vld [vmem:[#allocation2 + $0x90] sm:$0xff]
      %v2161 = vld [vmem:[#allocation2 + $0x98] sm:$0xff]
      %v2162 = vld [vmem:[#allocation2 + $0xa0] sm:$0xff]
      %v2163 = vld [vmem:[#allocation2 + $0xa8] sm:$0xff]
      %v2164 = vld [vmem:[#allocation2 + $0xb0] sm:$0xff]
      %v2165 = vld [vmem:[#allocation2 + $0xb8] sm:$0xff]
      %v2166 = vld [vmem:[#allocation2 + $0xc0] sm:$0xff]
      %v2167 = vld [vmem:[#allocation2 + $0xc8] sm:$0xff]
      %v2168 = vld [vmem:[#allocation2 + $0xd0] sm:$0xff]
      %v2169 = vld [vmem:[#allocation2 + $0xd8] sm:$0xff]
      %v2170 = vld [vmem:[#allocation2 + $0xe0] sm:$0xff]
      %v2171 = vld [vmem:[#allocation2 + $0xe8] sm:$0xff]
      %v2172 = vld [vmem:[#allocation2 + $0xf0] sm:$0xff]
      %v2173 = vld [vmem:[#allocation2 + $0xf8] sm:$0xff]
      %s2174 = scalar_lea.vmem %s1, 12
      %v2175 = vld [vmem:[%s2174] sm:$0xf]
      %v2177 = vsel %vm270, %v2110, 0
      %v2180 = vsel %vm270, %v2111, 0
      %v2183 = vsel %vm270, %v2112, 0
      %v2186 = vsel %vm270, %v2113, 0
      %v2189 = vsel %vm270, %v2114, 0
      %v2192 = vsel %vm270, %v2115, 0
      %v2195 = vsel %vm270, %v2116, 0
      %v2198 = vsel %vm270, %v2117, 0
      %v2201 = vsel %vm270, %v2118, 0
      %v2204 = vsel %vm270, %v2119, 0
      %v2207 = vsel %vm270, %v2120, 0
      %v2210 = vsel %vm270, %v2121, 0
      %v2213 = vsel %vm270, %v2122, 0
      %v2216 = vsel %vm270, %v2123, 0
      %v2219 = vsel %vm270, %v2124, 0
      %v2222 = vsel %vm270, %v2125, 0
      %v2225 = vsel %vm270, %v2126, 0
      %v2228 = vsel %vm270, %v2127, 0
      %v2231 = vsel %vm270, %v2128, 0
      %v2234 = vsel %vm270, %v2129, 0
      %v2237 = vsel %vm270, %v2130, 0
      %v2240 = vsel %vm270, %v2131, 0
      %v2243 = vsel %vm270, %v2132, 0
      %v2246 = vsel %vm270, %v2133, 0
      %v2249 = vsel %vm270, %v2134, 0
      %v2252 = vsel %vm270, %v2135, 0
      %v2255 = vsel %vm270, %v2136, 0
      %v2258 = vsel %vm270, %v2137, 0
      %v2261 = vsel %vm270, %v2138, 0
      %v2264 = vsel %vm270, %v2139, 0
      %v2267 = vsel %vm270, %v2140, 0
      %v2270 = vsel %vm270, %v2141, 0
      %v2273 = vsel %vm576, %v2175, 0
      %2275 = vmatprep.subr.mxu0 0.0
      %2276 = vmatpush1.msra.mxu0 %v2273
      %2277 = vmatprep.subr.mxu0 0.0
      %2278 = vmatpush1.msra.mxu0 0.0
      %2279 = vmatprep.subr.mxu0 0.0
      %2280 = vmatpush1.msra.mxu0 0.0
      %2281 = vmatprep.subr.mxu0 0.0
      %2282 = vmatpush1.msra.mxu0 0.0
      %2283 = vmatprep.subr.mxu0 0.0
      %2284 = vmatpush1.msra.mxu0 0.0
      %2285 = vmatprep.subr.mxu0 0.0
      %2286 = vmatpush1.msra.mxu0 0.0
      %2287 = vmatprep.subr.mxu0 0.0
      %2288 = vmatpush1.msra.mxu0 0.0
      %2289 = vmatprep.subr.mxu0 0.0
      %2290 = vmatpush1.msra.mxu0 0.0
      %2291 = vmatprep.subr.mxu0 0.0
      %2292 = vmatpush1.msra.mxu0 0.0
      %2293 = vmatprep.subr.mxu0 0.0
      %2294 = vmatpush1.msra.mxu0 0.0
      %2295 = vmatprep.subr.mxu0 0.0
      %2296 = vmatpush1.msra.mxu0 0.0
      %2297 = vmatprep.subr.mxu0 0.0
      %2298 = vmatpush1.msra.mxu0 0.0
      %2299 = vmatprep.subr.mxu0 0.0
      %2300 = vmatpush1.msra.mxu0 0.0
      %2301 = vmatprep.subr.mxu0 0.0
      %2302 = vmatpush1.msra.mxu0 0.0
      %2303 = vmatprep.subr.mxu0 0.0
      %2304 = vmatpush1.msra.mxu0 0.0
      %2305 = vmatprep.subr.mxu0 0.0
      %2306 = vmatpush1.msra.mxu0 0.0
      %2307 = vmatprep.subr.mxu0 0.0
      %2308 = vmatpush1.msra.mxu0 0.0
      %2309 = vmatprep.subr.mxu0 0.0
      %2310 = vmatpush1.msra.mxu0 0.0
      %2311 = vmatprep.subr.mxu0 0.0
      %2312 = vmatpush1.msra.mxu0 0.0
      %2313 = vmatprep.subr.mxu0 0.0
      %2314 = vmatpush1.msra.mxu0 0.0
      %2315 = vmatprep.subr.mxu0 0.0
      %2316 = vmatpush1.msra.mxu0 0.0
      %2317 = vmatprep.subr.mxu0 0.0
      %2318 = vmatpush1.msra.mxu0 0.0
      %2319 = vmatprep.subr.mxu0 0.0
      %2320 = vmatpush1.msra.mxu0 0.0
      %2321 = vmatprep.subr.mxu0 0.0
      %2322 = vmatpush1.msra.mxu0 0.0
      %2323 = vmatprep.subr.mxu0 0.0
      %2324 = vmatpush1.msra.mxu0 0.0
      %2325 = vmatprep.subr.mxu0 0.0
      %2326 = vmatpush1.msra.mxu0 0.0
      %2327 = vmatprep.subr.mxu0 0.0
      %2328 = vmatpush1.msra.mxu0 0.0
      %2329 = vmatprep.subr.mxu0 0.0
      %2330 = vmatpush1.msra.mxu0 0.0
      %2331 = vmatprep.subr.mxu0 0.0
      %2332 = vmatpush1.msra.mxu0 0.0
      %2333 = vmatprep.subr.mxu0 0.0
      %2334 = vmatpush1.msra.mxu0 0.0
      %2335 = vmatprep.subr.mxu0 0.0
      %2336 = vmatpush1.msra.mxu0 0.0
      %2337 = vmatprep.subr.mxu0 0.0
      %2338 = vmatpush1.msra.mxu0 0.0
      %2339 = vmatprep.mubr.f32.mxu0 0.0
      %2340 = vmatmul.mubr.f32.gmra.mrb[0].mxu0 %v2177
      %v2341 = vpop.f32.mrb[0].mxu0
      %v2342 = vadd.f32 0.0, %v2341
      %v2343 = vpop.f32.mrb[0].mxu0
      %2344 = vmatprep.mubr.f32.mxu0 0.0
      %2345 = vmatmul.mubr.f32.gmra.mrb[0].mxu0 %v2180
      %v2346 = vpop.f32.mrb[0].mxu0
      %v2347 = vadd.f32 0.0, %v2346
      %v2348 = vpop.f32.mrb[0].mxu0
      %2349 = vmatprep.mubr.f32.mxu0 0.0
      %2350 = vmatmul.mubr.f32.gmra.mrb[0].mxu0 %v2183
      %v2351 = vpop.f32.mrb[0].mxu0
      %v2352 = vadd.f32 0.0, %v2351
      %v2353 = vpop.f32.mrb[0].mxu0
      %2354 = vmatprep.mubr.f32.mxu0 0.0
      %2355 = vmatmul.mubr.f32.gmra.mrb[0].mxu0 %v2186
      %v2356 = vpop.f32.mrb[0].mxu0
      %v2357 = vadd.f32 0.0, %v2356
      %v2358 = vpop.f32.mrb[0].mxu0
      %2359 = vmatprep.mubr.f32.mxu0 0.0
      %2360 = vmatmul.mubr.f32.gmra.mrb[0].mxu0 %v2189
      %v2361 = vpop.f32.mrb[0].mxu0
      %v2362 = vadd.f32 0.0, %v2361
      %v2363 = vpop.f32.mrb[0].mxu0
      %2364 = vmatprep.mubr.f32.mxu0 0.0
      %2365 = vmatmul.mubr.f32.gmra.mrb[0].mxu0 %v2192
      %v2366 = vpop.f32.mrb[0].mxu0
      %v2367 = vadd.f32 0.0, %v2366
      %v2368 = vpop.f32.mrb[0].mxu0
      %2369 = vmatprep.mubr.f32.mxu0 0.0
      %2370 = vmatmul.mubr.f32.gmra.mrb[0].mxu0 %v2195
      %v2371 = vpop.f32.mrb[0].mxu0
      %v2372 = vadd.f32 0.0, %v2371
      %v2373 = vpop.f32.mrb[0].mxu0
      %2374 = vmatprep.mubr.f32.mxu0 0.0
      %2375 = vmatmul.mubr.f32.gmra.mrb[0].mxu0 %v2198
      %v2376 = vpop.f32.mrb[0].mxu0
      %v2377 = vadd.f32 0.0, %v2376
      %v2378 = vpop.f32.mrb[0].mxu0
      %2379 = vmatprep.mubr.f32.mxu0 0.0
      %2380 = vmatmul.mubr.f32.gmra.mrb[0].mxu0 %v2201
      %v2381 = vpop.f32.mrb[0].mxu0
      %v2382 = vadd.f32 0.0, %v2381
      %v2383 = vpop.f32.mrb[0].mxu0
      %2384 = vmatprep.mubr.f32.mxu0 0.0
      %2385 = vmatmul.mubr.f32.gmra.mrb[0].mxu0 %v2204
      %v2386 = vpop.f32.mrb[0].mxu0
      %v2387 = vadd.f32 0.0, %v2386
      %v2388 = vpop.f32.mrb[0].mxu0
      %2389 = vmatprep.mubr.f32.mxu0 0.0
      %2390 = vmatmul.mubr.f32.gmra.mrb[0].mxu0 %v2207
      %v2391 = vpop.f32.mrb[0].mxu0
      %v2392 = vadd.f32 0.0, %v2391
      %v2393 = vpop.f32.mrb[0].mxu0
      %2394 = vmatprep.mubr.f32.mxu0 0.0
      %2395 = vmatmul.mubr.f32.gmra.mrb[0].mxu0 %v2210
      %v2396 = vpop.f32.mrb[0].mxu0
      %v2397 = vadd.f32 0.0, %v2396
      %v2398 = vpop.f32.mrb[0].mxu0
      %2399 = vmatprep.mubr.f32.mxu0 0.0
      %2400 = vmatmul.mubr.f32.gmra.mrb[0].mxu0 %v2213
      %v2401 = vpop.f32.mrb[0].mxu0
      %v2402 = vadd.f32 0.0, %v2401
      %v2403 = vpop.f32.mrb[0].mxu0
      %2404 = vmatprep.mubr.f32.mxu0 0.0
      %2405 = vmatmul.mubr.f32.gmra.mrb[0].mxu0 %v2216
      %v2406 = vpop.f32.mrb[0].mxu0
      %v2407 = vadd.f32 0.0, %v2406
      %v2408 = vpop.f32.mrb[0].mxu0
      %2409 = vmatprep.mubr.f32.mxu0 0.0
      %2410 = vmatmul.mubr.f32.gmra.mrb[0].mxu0 %v2219
      %v2411 = vpop.f32.mrb[0].mxu0
      %v2412 = vadd.f32 0.0, %v2411
      %v2413 = vpop.f32.mrb[0].mxu0
      %2414 = vmatprep.mubr.f32.mxu0 0.0
      %2415 = vmatmul.mubr.f32.gmra.mrb[0].mxu0 %v2222
      %v2416 = vpop.f32.mrb[0].mxu0
      %v2417 = vadd.f32 0.0, %v2416
      %v2418 = vpop.f32.mrb[0].mxu0
      %2419 = vmatprep.mubr.f32.mxu0 0.0
      %2420 = vmatmul.mubr.f32.gmra.mrb[0].mxu0 %v2225
      %v2421 = vpop.f32.mrb[0].mxu0
      %v2422 = vadd.f32 0.0, %v2421
      %v2423 = vpop.f32.mrb[0].mxu0
      %2424 = vmatprep.mubr.f32.mxu0 0.0
      %2425 = vmatmul.mubr.f32.gmra.mrb[0].mxu0 %v2228
      %v2426 = vpop.f32.mrb[0].mxu0
      %v2427 = vadd.f32 0.0, %v2426
      %v2428 = vpop.f32.mrb[0].mxu0
      %2429 = vmatprep.mubr.f32.mxu0 0.0
      %2430 = vmatmul.mubr.f32.gmra.mrb[0].mxu0 %v2231
      %v2431 = vpop.f32.mrb[0].mxu0
      %v2432 = vadd.f32 0.0, %v2431
      %v2433 = vpop.f32.mrb[0].mxu0
      %2434 = vmatprep.mubr.f32.mxu0 0.0
      %2435 = vmatmul.mubr.f32.gmra.mrb[0].mxu0 %v2234
      %v2436 = vpop.f32.mrb[0].mxu0
      %v2437 = vadd.f32 0.0, %v2436
      %v2438 = vpop.f32.mrb[0].mxu0
      %2439 = vmatprep.mubr.f32.mxu0 0.0
      %2440 = vmatmul.mubr.f32.gmra.mrb[0].mxu0 %v2237
      %v2441 = vpop.f32.mrb[0].mxu0
      %v2442 = vadd.f32 0.0, %v2441
      %v2443 = vpop.f32.mrb[0].mxu0
      %2444 = vmatprep.mubr.f32.mxu0 0.0
      %2445 = vmatmul.mubr.f32.gmra.mrb[0].mxu0 %v2240
      %v2446 = vpop.f32.mrb[0].mxu0
      %v2447 = vadd.f32 0.0, %v2446
      %v2448 = vpop.f32.mrb[0].mxu0
      %2449 = vmatprep.mubr.f32.mxu0 0.0
      %2450 = vmatmul.mubr.f32.gmra.mrb[0].mxu0 %v2243
      %v2451 = vpop.f32.mrb[0].mxu0
      %v2452 = vadd.f32 0.0, %v2451
      %v2453 = vpop.f32.mrb[0].mxu0
      %2454 = vmatprep.mubr.f32.mxu0 0.0
      %2455 = vmatmul.mubr.f32.gmra.mrb[0].mxu0 %v2246
      %v2456 = vpop.f32.mrb[0].mxu0
      %v2457 = vadd.f32 0.0, %v2456
      %v2458 = vpop.f32.mrb[0].mxu0
      %2459 = vmatprep.mubr.f32.mxu0 0.0
      %2460 = vmatmul.mubr.f32.gmra.mrb[0].mxu0 %v2249
      %v2461 = vpop.f32.mrb[0].mxu0
      %v2462 = vadd.f32 0.0, %v2461
      %v2463 = vpop.f32.mrb[0].mxu0
      %2464 = vmatprep.mubr.f32.mxu0 0.0
      %2465 = vmatmul.mubr.f32.gmra.mrb[0].mxu0 %v2252
      %v2466 = vpop.f32.mrb[0].mxu0
      %v2467 = vadd.f32 0.0, %v2466
      %v2468 = vpop.f32.mrb[0].mxu0
      %2469 = vmatprep.mubr.f32.mxu0 0.0
      %2470 = vmatmul.mubr.f32.gmra.mrb[0].mxu0 %v2255
      %v2471 = vpop.f32.mrb[0].mxu0
      %v2472 = vadd.f32 0.0, %v2471
      %v2473 = vpop.f32.mrb[0].mxu0
      %2474 = vmatprep.mubr.f32.mxu0 0.0
      %2475 = vmatmul.mubr.f32.gmra.mrb[0].mxu0 %v2258
      %v2476 = vpop.f32.mrb[0].mxu0
      %v2477 = vadd.f32 0.0, %v2476
      %v2478 = vpop.f32.mrb[0].mxu0
      %2479 = vmatprep.mubr.f32.mxu0 0.0
      %2480 = vmatmul.mubr.f32.gmra.mrb[0].mxu0 %v2261
      %v2481 = vpop.f32.mrb[0].mxu0
      %v2482 = vadd.f32 0.0, %v2481
      %v2483 = vpop.f32.mrb[0].mxu0
      %2484 = vmatprep.mubr.f32.mxu0 0.0
      %2485 = vmatmul.mubr.f32.gmra.mrb[0].mxu0 %v2264
      %v2486 = vpop.f32.mrb[0].mxu0
      %v2487 = vadd.f32 0.0, %v2486
      %v2488 = vpop.f32.mrb[0].mxu0
      %2489 = vmatprep.mubr.f32.mxu0 0.0
      %2490 = vmatmul.mubr.f32.gmra.mrb[0].mxu0 %v2267
      %v2491 = vpop.f32.mrb[0].mxu0
      %v2492 = vadd.f32 0.0, %v2491
      %v2493 = vpop.f32.mrb[0].mxu0
      %2494 = vmatprep.mubr.f32.mxu0 0.0
      %2495 = vmatmul.mubr.f32.gmra.mrb[0].mxu0 %v2270
      %v2496 = vpop.f32.mrb[0].mxu0
      %v2497 = vadd.f32 0.0, %v2496
      %v2498 = vpop.f32.mrb[0].mxu0
      %2499 = vdwg.mxu0
      %v2500 = vadd.f32 %v2142, %v2342
      %v2501 = vadd.f32 %v2143, %v2347
      %v2502 = vadd.f32 %v2144, %v2352
      %v2503 = vadd.f32 %v2145, %v2357
      %v2504 = vadd.f32 %v2146, %v2362
      %v2505 = vadd.f32 %v2147, %v2367
      %v2506 = vadd.f32 %v2148, %v2372
      %v2507 = vadd.f32 %v2149, %v2377
      %v2508 = vadd.f32 %v2150, %v2382
      %v2509 = vadd.f32 %v2151, %v2387
      %v2510 = vadd.f32 %v2152, %v2392
      %v2511 = vadd.f32 %v2153, %v2397
      %v2512 = vadd.f32 %v2154, %v2402
      %v2513 = vadd.f32 %v2155, %v2407
      %v2514 = vadd.f32 %v2156, %v2412
      %v2515 = vadd.f32 %v2157, %v2417
      %v2516 = vadd.f32 %v2158, %v2422
      %v2517 = vadd.f32 %v2159, %v2427
      %v2518 = vadd.f32 %v2160, %v2432
      %v2519 = vadd.f32 %v2161, %v2437
      %v2520 = vadd.f32 %v2162, %v2442
      %v2521 = vadd.f32 %v2163, %v2447
      %v2522 = vadd.f32 %v2164, %v2452
      %v2523 = vadd.f32 %v2165, %v2457
      %v2524 = vadd.f32 %v2166, %v2462
      %v2525 = vadd.f32 %v2167, %v2467
      %v2526 = vadd.f32 %v2168, %v2472
      %v2527 = vadd.f32 %v2169, %v2477
      %v2528 = vadd.f32 %v2170, %v2482
      %v2529 = vadd.f32 %v2171, %v2487
      %v2530 = vadd.f32 %v2172, %v2492
      %v2531 = vadd.f32 %v2173, %v2497
      %2532 = vst.msk [vmem:[#allocation2] sm:$0xff] %vm270, %v2500
      %2533 = vst.msk [vmem:[#allocation2 + $0x8] sm:$0xff] %vm270, %v2501
      %2534 = vst.msk [vmem:[#allocation2 + $0x10] sm:$0xff] %vm270, %v2502
      %2535 = vst.msk [vmem:[#allocation2 + $0x18] sm:$0xff] %vm270, %v2503
      %2536 = vst.msk [vmem:[#allocation2 + $0x20] sm:$0xff] %vm270, %v2504
      %2537 = vst.msk [vmem:[#allocation2 + $0x28] sm:$0xff] %vm270, %v2505
      %2538 = vst.msk [vmem:[#allocation2 + $0x30] sm:$0xff] %vm270, %v2506
      %2539 = vst.msk [vmem:[#allocation2 + $0x38] sm:$0xff] %vm270, %v2507
      %2540 = vst.msk [vmem:[#allocation2 + $0x40] sm:$0xff] %vm270, %v2508
      %2541 = vst.msk [vmem:[#allocation2 + $0x48] sm:$0xff] %vm270, %v2509
      %2542 = vst.msk [vmem:[#allocation2 + $0x50] sm:$0xff] %vm270, %v2510
      %2543 = vst.msk [vmem:[#allocation2 + $0x58] sm:$0xff] %vm270, %v2511
      %2544 = vst.msk [vmem:[#allocation2 + $0x60] sm:$0xff] %vm270, %v2512
      %2545 = vst.msk [vmem:[#allocation2 + $0x68] sm:$0xff] %vm270, %v2513
      %2546 = vst.msk [vmem:[#allocation2 + $0x70] sm:$0xff] %vm270, %v2514
      %2547 = vst.msk [vmem:[#allocation2 + $0x78] sm:$0xff] %vm270, %v2515
      %2548 = vst.msk [vmem:[#allocation2 + $0x80] sm:$0xff] %vm270, %v2516
      %2549 = vst.msk [vmem:[#allocation2 + $0x88] sm:$0xff] %vm270, %v2517
      %2550 = vst.msk [vmem:[#allocation2 + $0x90] sm:$0xff] %vm270, %v2518
      %2551 = vst.msk [vmem:[#allocation2 + $0x98] sm:$0xff] %vm270, %v2519
      %2552 = vst.msk [vmem:[#allocation2 + $0xa0] sm:$0xff] %vm270, %v2520
      %2553 = vst.msk [vmem:[#allocation2 + $0xa8] sm:$0xff] %vm270, %v2521
      %2554 = vst.msk [vmem:[#allocation2 + $0xb0] sm:$0xff] %vm270, %v2522
      %2555 = vst.msk [vmem:[#allocation2 + $0xb8] sm:$0xff] %vm270, %v2523
      %2556 = vst.msk [vmem:[#allocation2 + $0xc0] sm:$0xff] %vm270, %v2524
      %2557 = vst.msk [vmem:[#allocation2 + $0xc8] sm:$0xff] %vm270, %v2525
      %2558 = vst.msk [vmem:[#allocation2 + $0xd0] sm:$0xff] %vm270, %v2526
      %2559 = vst.msk [vmem:[#allocation2 + $0xd8] sm:$0xff] %vm270, %v2527
      %2560 = vst.msk [vmem:[#allocation2 + $0xe0] sm:$0xff] %vm270, %v2528
      %2561 = vst.msk [vmem:[#allocation2 + $0xe8] sm:$0xff] %vm270, %v2529
      %2562 = vst.msk [vmem:[#allocation2 + $0xf0] sm:$0xff] %vm270, %v2530
      %2563 = vst.msk [vmem:[#allocation2 + $0xf8] sm:$0xff] %vm270, %v2531
      %v2564 = vld [vmem:[%s1999 + $0x1] sm:$0xff]
      %v2565 = vld [vmem:[%s1999 + $0x9] sm:$0xff]
      %v2566 = vld [vmem:[%s1999 + $0x19] sm:$0xff]
      %v2567 = vld [vmem:[%s1999 + $0x21] sm:$0xff]
      %v2568 = vld [vmem:[%s1999 + $0x31] sm:$0xff]
      %v2569 = vld [vmem:[%s1999 + $0x39] sm:$0xff]
      %v2570 = vld [vmem:[%s1999 + $0x49] sm:$0xff]
      %v2571 = vld [vmem:[%s1999 + $0x51] sm:$0xff]
      %v2572 = vld [vmem:[%s1999 + $0x61] sm:$0xff]
      %v2573 = vld [vmem:[%s1999 + $0x69] sm:$0xff]
      %v2574 = vld [vmem:[%s1999 + $0x79] sm:$0xff]
      %v2575 = vld [vmem:[%s1999 + $0x81] sm:$0xff]
      %v2576 = vld [vmem:[%s1999 + $0x91] sm:$0xff]
      %v2577 = vld [vmem:[%s1999 + $0x99] sm:$0xff]
      %v2578 = vld [vmem:[%s1999 + $0xa9] sm:$0xff]
      %v2579 = vld [vmem:[%s1999 + $0xb1] sm:$0xff]
      %v2580 = vld [vmem:[%s1999 + $0xc1] sm:$0xff]
      %v2581 = vld [vmem:[%s1999 + $0xc9] sm:$0xff]
      %v2582 = vld [vmem:[%s1999 + $0xd9] sm:$0xff]
      %v2583 = vld [vmem:[%s1999 + $0xe1] sm:$0xff]
      %v2584 = vld [vmem:[%s1999 + $0xf1] sm:$0xff]
      %v2585 = vld [vmem:[%s1999 + $0xf9] sm:$0xff]
      %v2586 = vld [vmem:[%s1999 + $0x109] sm:$0xff]
      %v2587 = vld [vmem:[%s1999 + $0x111] sm:$0xff]
      %v2588 = vld [vmem:[%s1999 + $0x121] sm:$0xff]
      %v2589 = vld [vmem:[%s1999 + $0x129] sm:$0xff]
      %v2590 = vld [vmem:[%s1999 + $0x139] sm:$0xff]
      %v2591 = vld [vmem:[%s1999 + $0x141] sm:$0xff]
      %v2592 = vld [vmem:[%s1999 + $0x151] sm:$0xff]
      %v2593 = vld [vmem:[%s1999 + $0x159] sm:$0xff]
      %v2594 = vld [vmem:[%s1999 + $0x169] sm:$0xff]
      %v2595 = vld [vmem:[%s1999 + $0x171] sm:$0xff]
      %v2596 = vld [vmem:[%s2] sm:$0x1]
      %v2598 = vlaneseq
      %v2599 = vshrl.u32 %v2598, 7
      %v2600 = vsub.s32 0, %v2599
      %v2601 = vrot.slane %v2596, %v2600
      %v2603 = vmul.f32 %v2564, %v2601
      %v2604 = vmul.f32 %v2565, %v2601
      %v2605 = vmul.f32 %v2566, %v2601
      %v2606 = vmul.f32 %v2567, %v2601
      %v2607 = vmul.f32 %v2568, %v2601
      %v2608 = vmul.f32 %v2569, %v2601
      %v2609 = vmul.f32 %v2570, %v2601
      %v2610 = vmul.f32 %v2571, %v2601
      %v2611 = vmul.f32 %v2572, %v2601
      %v2612 = vmul.f32 %v2573, %v2601
      %v2613 = vmul.f32 %v2574, %v2601
      %v2614 = vmul.f32 %v2575, %v2601
      %v2615 = vmul.f32 %v2576, %v2601
      %v2616 = vmul.f32 %v2577, %v2601
      %v2617 = vmul.f32 %v2578, %v2601
      %v2618 = vmul.f32 %v2579, %v2601
      %v2619 = vmul.f32 %v2580, %v2601
      %v2620 = vmul.f32 %v2581, %v2601
      %v2621 = vmul.f32 %v2582, %v2601
      %v2622 = vmul.f32 %v2583, %v2601
      %v2623 = vmul.f32 %v2584, %v2601
      %v2624 = vmul.f32 %v2585, %v2601
      %v2625 = vmul.f32 %v2586, %v2601
      %v2626 = vmul.f32 %v2587, %v2601
      %v2627 = vmul.f32 %v2588, %v2601
      %v2628 = vmul.f32 %v2589, %v2601
      %v2629 = vmul.f32 %v2590, %v2601
      %v2630 = vmul.f32 %v2591, %v2601
      %v2631 = vmul.f32 %v2592, %v2601
      %v2632 = vmul.f32 %v2593, %v2601
      %v2633 = vmul.f32 %v2594, %v2601
      %v2634 = vmul.f32 %v2595, %v2601
      %v2635 = vld [vmem:[%s3] sm:$0x1]
      %v2637 = vlaneseq
      %v2638 = vshrl.u32 %v2637, 7
      %v2639 = vsub.s32 0, %v2638
      %v2640 = vrot.slane %v2635, %v2639
      %v2642 = vadd.f32 %v2603, %v2640
      %v2643 = vadd.f32 %v2604, %v2640
      %v2644 = vadd.f32 %v2605, %v2640
      %v2645 = vadd.f32 %v2606, %v2640
      %v2646 = vadd.f32 %v2607, %v2640
      %v2647 = vadd.f32 %v2608, %v2640
      %v2648 = vadd.f32 %v2609, %v2640
      %v2649 = vadd.f32 %v2610, %v2640
      %v2650 = vadd.f32 %v2611, %v2640
      %v2651 = vadd.f32 %v2612, %v2640
      %v2652 = vadd.f32 %v2613, %v2640
      %v2653 = vadd.f32 %v2614, %v2640
      %v2654 = vadd.f32 %v2615, %v2640
      %v2655 = vadd.f32 %v2616, %v2640
      %v2656 = vadd.f32 %v2617, %v2640
      %v2657 = vadd.f32 %v2618, %v2640
      %v2658 = vadd.f32 %v2619, %v2640
      %v2659 = vadd.f32 %v2620, %v2640
      %v2660 = vadd.f32 %v2621, %v2640
      %v2661 = vadd.f32 %v2622, %v2640
      %v2662 = vadd.f32 %v2623, %v2640
      %v2663 = vadd.f32 %v2624, %v2640
      %v2664 = vadd.f32 %v2625, %v2640
      %v2665 = vadd.f32 %v2626, %v2640
      %v2666 = vadd.f32 %v2627, %v2640
      %v2667 = vadd.f32 %v2628, %v2640
      %v2668 = vadd.f32 %v2629, %v2640
      %v2669 = vadd.f32 %v2630, %v2640
      %v2670 = vadd.f32 %v2631, %v2640
      %v2671 = vadd.f32 %v2632, %v2640
      %v2672 = vadd.f32 %v2633, %v2640
      %v2673 = vadd.f32 %v2634, %v2640
      %v2674 = vmax.f32 %v2642, 0.0
      %v2675 = vmax.f32 %v2643, 0.0
      %v2676 = vmax.f32 %v2644, 0.0
      %v2677 = vmax.f32 %v2645, 0.0
      %v2678 = vmax.f32 %v2646, 0.0
      %v2679 = vmax.f32 %v2647, 0.0
      %v2680 = vmax.f32 %v2648, 0.0
      %v2681 = vmax.f32 %v2649, 0.0
      %v2682 = vmax.f32 %v2650, 0.0
      %v2683 = vmax.f32 %v2651, 0.0
      %v2684 = vmax.f32 %v2652, 0.0
      %v2685 = vmax.f32 %v2653, 0.0
      %v2686 = vmax.f32 %v2654, 0.0
      %v2687 = vmax.f32 %v2655, 0.0
      %v2688 = vmax.f32 %v2656, 0.0
      %v2689 = vmax.f32 %v2657, 0.0
      %v2690 = vmax.f32 %v2658, 0.0
      %v2691 = vmax.f32 %v2659, 0.0
      %v2692 = vmax.f32 %v2660, 0.0
      %v2693 = vmax.f32 %v2661, 0.0
      %v2694 = vmax.f32 %v2662, 0.0
      %v2695 = vmax.f32 %v2663, 0.0
      %v2696 = vmax.f32 %v2664, 0.0
      %v2697 = vmax.f32 %v2665, 0.0
      %v2698 = vmax.f32 %v2666, 0.0
      %v2699 = vmax.f32 %v2667, 0.0
      %v2700 = vmax.f32 %v2668, 0.0
      %v2701 = vmax.f32 %v2669, 0.0
      %v2702 = vmax.f32 %v2670, 0.0
      %v2703 = vmax.f32 %v2671, 0.0
      %v2704 = vmax.f32 %v2672, 0.0
      %v2705 = vmax.f32 %v2673, 0.0
      %v2706 = vld [vmem:[#allocation2] sm:$0xff]
      %v2707 = vld [vmem:[#allocation2 + $0x8] sm:$0xff]
      %v2708 = vld [vmem:[#allocation2 + $0x10] sm:$0xff]
      %v2709 = vld [vmem:[#allocation2 + $0x18] sm:$0xff]
      %v2710 = vld [vmem:[#allocation2 + $0x20] sm:$0xff]
      %v2711 = vld [vmem:[#allocation2 + $0x28] sm:$0xff]
      %v2712 = vld [vmem:[#allocation2 + $0x30] sm:$0xff]
      %v2713 = vld [vmem:[#allocation2 + $0x38] sm:$0xff]
      %v2714 = vld [vmem:[#allocation2 + $0x40] sm:$0xff]
      %v2715 = vld [vmem:[#allocation2 + $0x48] sm:$0xff]
      %v2716 = vld [vmem:[#allocation2 + $0x50] sm:$0xff]
      %v2717 = vld [vmem:[#allocation2 + $0x58] sm:$0xff]
      %v2718 = vld [vmem:[#allocation2 + $0x60] sm:$0xff]
      %v2719 = vld [vmem:[#allocation2 + $0x68] sm:$0xff]
      %v2720 = vld [vmem:[#allocation2 + $0x70] sm:$0xff]
      %v2721 = vld [vmem:[#allocation2 + $0x78] sm:$0xff]
      %v2722 = vld [vmem:[#allocation2 + $0x80] sm:$0xff]
      %v2723 = vld [vmem:[#allocation2 + $0x88] sm:$0xff]
      %v2724 = vld [vmem:[#allocation2 + $0x90] sm:$0xff]
      %v2725 = vld [vmem:[#allocation2 + $0x98] sm:$0xff]
      %v2726 = vld [vmem:[#allocation2 + $0xa0] sm:$0xff]
      %v2727 = vld [vmem:[#allocation2 + $0xa8] sm:$0xff]
      %v2728 = vld [vmem:[#allocation2 + $0xb0] sm:$0xff]
      %v2729 = vld [vmem:[#allocation2 + $0xb8] sm:$0xff]
      %v2730 = vld [vmem:[#allocation2 + $0xc0] sm:$0xff]
      %v2731 = vld [vmem:[#allocation2 + $0xc8] sm:$0xff]
      %v2732 = vld [vmem:[#allocation2 + $0xd0] sm:$0xff]
      %v2733 = vld [vmem:[#allocation2 + $0xd8] sm:$0xff]
      %v2734 = vld [vmem:[#allocation2 + $0xe0] sm:$0xff]
      %v2735 = vld [vmem:[#allocation2 + $0xe8] sm:$0xff]
      %v2736 = vld [vmem:[#allocation2 + $0xf0] sm:$0xff]
      %v2737 = vld [vmem:[#allocation2 + $0xf8] sm:$0xff]
      %s2738 = scalar_lea.vmem %s1, 16
      %v2739 = vld [vmem:[%s2738] sm:$0xf]
      %v2741 = vsel %vm270, %v2674, 0
      %v2744 = vsel %vm270, %v2675, 0
      %v2747 = vsel %vm270, %v2676, 0
      %v2750 = vsel %vm270, %v2677, 0
      %v2753 = vsel %vm270, %v2678, 0
      %v2756 = vsel %vm270, %v2679, 0
      %v2759 = vsel %vm270, %v2680, 0
      %v2762 = vsel %vm270, %v2681, 0
      %v2765 = vsel %vm270, %v2682, 0
      %v2768 = vsel %vm270, %v2683, 0
      %v2771 = vsel %vm270, %v2684, 0
      %v2774 = vsel %vm270, %v2685, 0
      %v2777 = vsel %vm270, %v2686, 0
      %v2780 = vsel %vm270, %v2687, 0
      %v2783 = vsel %vm270, %v2688, 0
      %v2786 = vsel %vm270, %v2689, 0
      %v2789 = vsel %vm270, %v2690, 0
      %v2792 = vsel %vm270, %v2691, 0
      %v2795 = vsel %vm270, %v2692, 0
      %v2798 = vsel %vm270, %v2693, 0
      %v2801 = vsel %vm270, %v2694, 0
      %v2804 = vsel %vm270, %v2695, 0
      %v2807 = vsel %vm270, %v2696, 0
      %v2810 = vsel %vm270, %v2697, 0
      %v2813 = vsel %vm270, %v2698, 0
      %v2816 = vsel %vm270, %v2699, 0
      %v2819 = vsel %vm270, %v2700, 0
      %v2822 = vsel %vm270, %v2701, 0
      %v2825 = vsel %vm270, %v2702, 0
      %v2828 = vsel %vm270, %v2703, 0
      %v2831 = vsel %vm270, %v2704, 0
      %v2834 = vsel %vm270, %v2705, 0
      %v2837 = vsel %vm576, %v2739, 0
      %2839 = vmatprep.subr.mxu0 0.0
      %2840 = vmatpush1.msra.mxu0 %v2837
      %2841 = vmatprep.subr.mxu0 0.0
      %2842 = vmatpush1.msra.mxu0 0.0
      %2843 = vmatprep.subr.mxu0 0.0
      %2844 = vmatpush1.msra.mxu0 0.0
      %2845 = vmatprep.subr.mxu0 0.0
      %2846 = vmatpush1.msra.mxu0 0.0
      %2847 = vmatprep.subr.mxu0 0.0
      %2848 = vmatpush1.msra.mxu0 0.0
      %2849 = vmatprep.subr.mxu0 0.0
      %2850 = vmatpush1.msra.mxu0 0.0
      %2851 = vmatprep.subr.mxu0 0.0
      %2852 = vmatpush1.msra.mxu0 0.0
      %2853 = vmatprep.subr.mxu0 0.0
      %2854 = vmatpush1.msra.mxu0 0.0
      %2855 = vmatprep.subr.mxu0 0.0
      %2856 = vmatpush1.msra.mxu0 0.0
      %2857 = vmatprep.subr.mxu0 0.0
      %2858 = vmatpush1.msra.mxu0 0.0
      %2859 = vmatprep.subr.mxu0 0.0
      %2860 = vmatpush1.msra.mxu0 0.0
      %2861 = vmatprep.subr.mxu0 0.0
      %2862 = vmatpush1.msra.mxu0 0.0
      %2863 = vmatprep.subr.mxu0 0.0
      %2864 = vmatpush1.msra.mxu0 0.0
      %2865 = vmatprep.subr.mxu0 0.0
      %2866 = vmatpush1.msra.mxu0 0.0
      %2867 = vmatprep.subr.mxu0 0.0
      %2868 = vmatpush1.msra.mxu0 0.0
      %2869 = vmatprep.subr.mxu0 0.0
      %2870 = vmatpush1.msra.mxu0 0.0
      %2871 = vmatprep.subr.mxu0 0.0
      %2872 = vmatpush1.msra.mxu0 0.0
      %2873 = vmatprep.subr.mxu0 0.0
      %2874 = vmatpush1.msra.mxu0 0.0
      %2875 = vmatprep.subr.mxu0 0.0
      %2876 = vmatpush1.msra.mxu0 0.0
      %2877 = vmatprep.subr.mxu0 0.0
      %2878 = vmatpush1.msra.mxu0 0.0
      %2879 = vmatprep.subr.mxu0 0.0
      %2880 = vmatpush1.msra.mxu0 0.0
      %2881 = vmatprep.subr.mxu0 0.0
      %2882 = vmatpush1.msra.mxu0 0.0
      %2883 = vmatprep.subr.mxu0 0.0
      %2884 = vmatpush1.msra.mxu0 0.0
      %2885 = vmatprep.subr.mxu0 0.0
      %2886 = vmatpush1.msra.mxu0 0.0
      %2887 = vmatprep.subr.mxu0 0.0
      %2888 = vmatpush1.msra.mxu0 0.0
      %2889 = vmatprep.subr.mxu0 0.0
      %2890 = vmatpush1.msra.mxu0 0.0
      %2891 = vmatprep.subr.mxu0 0.0
      %2892 = vmatpush1.msra.mxu0 0.0
      %2893 = vmatprep.subr.mxu0 0.0
      %2894 = vmatpush1.msra.mxu0 0.0
      %2895 = vmatprep.subr.mxu0 0.0
      %2896 = vmatpush1.msra.mxu0 0.0
      %2897 = vmatprep.subr.mxu0 0.0
      %2898 = vmatpush1.msra.mxu0 0.0
      %2899 = vmatprep.subr.mxu0 0.0
      %2900 = vmatpush1.msra.mxu0 0.0
      %2901 = vmatprep.subr.mxu0 0.0
      %2902 = vmatpush1.msra.mxu0 0.0
      %2903 = vmatprep.mubr.f32.mxu0 0.0
      %2904 = vmatmul.mubr.f32.gmra.mrb[0].mxu0 %v2741
      %v2905 = vpop.f32.mrb[0].mxu0
      %v2906 = vadd.f32 0.0, %v2905
      %v2907 = vpop.f32.mrb[0].mxu0
      %2908 = vmatprep.mubr.f32.mxu0 0.0
      %2909 = vmatmul.mubr.f32.gmra.mrb[0].mxu0 %v2744
      %v2910 = vpop.f32.mrb[0].mxu0
      %v2911 = vadd.f32 0.0, %v2910
      %v2912 = vpop.f32.mrb[0].mxu0
      %2913 = vmatprep.mubr.f32.mxu0 0.0
      %2914 = vmatmul.mubr.f32.gmra.mrb[0].mxu0 %v2747
      %v2915 = vpop.f32.mrb[0].mxu0
      %v2916 = vadd.f32 0.0, %v2915
      %v2917 = vpop.f32.mrb[0].mxu0
      %2918 = vmatprep.mubr.f32.mxu0 0.0
      %2919 = vmatmul.mubr.f32.gmra.mrb[0].mxu0 %v2750
      %v2920 = vpop.f32.mrb[0].mxu0
      %v2921 = vadd.f32 0.0, %v2920
      %v2922 = vpop.f32.mrb[0].mxu0
      %2923 = vmatprep.mubr.f32.mxu0 0.0
      %2924 = vmatmul.mubr.f32.gmra.mrb[0].mxu0 %v2753
      %v2925 = vpop.f32.mrb[0].mxu0
      %v2926 = vadd.f32 0.0, %v2925
      %v2927 = vpop.f32.mrb[0].mxu0
      %2928 = vmatprep.mubr.f32.mxu0 0.0
      %2929 = vmatmul.mubr.f32.gmra.mrb[0].mxu0 %v2756
      %v2930 = vpop.f32.mrb[0].mxu0
      %v2931 = vadd.f32 0.0, %v2930
      %v2932 = vpop.f32.mrb[0].mxu0
      %2933 = vmatprep.mubr.f32.mxu0 0.0
      %2934 = vmatmul.mubr.f32.gmra.mrb[0].mxu0 %v2759
      %v2935 = vpop.f32.mrb[0].mxu0
      %v2936 = vadd.f32 0.0, %v2935
      %v2937 = vpop.f32.mrb[0].mxu0
      %2938 = vmatprep.mubr.f32.mxu0 0.0
      %2939 = vmatmul.mubr.f32.gmra.mrb[0].mxu0 %v2762
      %v2940 = vpop.f32.mrb[0].mxu0
      %v2941 = vadd.f32 0.0, %v2940
      %v2942 = vpop.f32.mrb[0].mxu0
      %2943 = vmatprep.mubr.f32.mxu0 0.0
      %2944 = vmatmul.mubr.f32.gmra.mrb[0].mxu0 %v2765
      %v2945 = vpop.f32.mrb[0].mxu0
      %v2946 = vadd.f32 0.0, %v2945
      %v2947 = vpop.f32.mrb[0].mxu0
      %2948 = vmatprep.mubr.f32.mxu0 0.0
      %2949 = vmatmul.mubr.f32.gmra.mrb[0].mxu0 %v2768
      %v2950 = vpop.f32.mrb[0].mxu0
      %v2951 = vadd.f32 0.0, %v2950
      %v2952 = vpop.f32.mrb[0].mxu0
      %2953 = vmatprep.mubr.f32.mxu0 0.0
      %2954 = vmatmul.mubr.f32.gmra.mrb[0].mxu0 %v2771
      %v2955 = vpop.f32.mrb[0].mxu0
      %v2956 = vadd.f32 0.0, %v2955
      %v2957 = vpop.f32.mrb[0].mxu0
      %2958 = vmatprep.mubr.f32.mxu0 0.0
      %2959 = vmatmul.mubr.f32.gmra.mrb[0].mxu0 %v2774
      %v2960 = vpop.f32.mrb[0].mxu0
      %v2961 = vadd.f32 0.0, %v2960
      %v2962 = vpop.f32.mrb[0].mxu0
      %2963 = vmatprep.mubr.f32.mxu0 0.0
      %2964 = vmatmul.mubr.f32.gmra.mrb[0].mxu0 %v2777
      %v2965 = vpop.f32.mrb[0].mxu0
      %v2966 = vadd.f32 0.0, %v2965
      %v2967 = vpop.f32.mrb[0].mxu0
      %2968 = vmatprep.mubr.f32.mxu0 0.0
      %2969 = vmatmul.mubr.f32.gmra.mrb[0].mxu0 %v2780
      %v2970 = vpop.f32.mrb[0].mxu0
      %v2971 = vadd.f32 0.0, %v2970
      %v2972 = vpop.f32.mrb[0].mxu0
      %2973 = vmatprep.mubr.f32.mxu0 0.0
      %2974 = vmatmul.mubr.f32.gmra.mrb[0].mxu0 %v2783
      %v2975 = vpop.f32.mrb[0].mxu0
      %v2976 = vadd.f32 0.0, %v2975
      %v2977 = vpop.f32.mrb[0].mxu0
      %2978 = vmatprep.mubr.f32.mxu0 0.0
      %2979 = vmatmul.mubr.f32.gmra.mrb[0].mxu0 %v2786
      %v2980 = vpop.f32.mrb[0].mxu0
      %v2981 = vadd.f32 0.0, %v2980
      %v2982 = vpop.f32.mrb[0].mxu0
      %2983 = vmatprep.mubr.f32.mxu0 0.0
      %2984 = vmatmul.mubr.f32.gmra.mrb[0].mxu0 %v2789
      %v2985 = vpop.f32.mrb[0].mxu0
      %v2986 = vadd.f32 0.0, %v2985
      %v2987 = vpop.f32.mrb[0].mxu0
      %2988 = vmatprep.mubr.f32.mxu0 0.0
      %2989 = vmatmul.mubr.f32.gmra.mrb[0].mxu0 %v2792
      %v2990 = vpop.f32.mrb[0].mxu0
      %v2991 = vadd.f32 0.0, %v2990
      %v2992 = vpop.f32.mrb[0].mxu0
      %2993 = vmatprep.mubr.f32.mxu0 0.0
      %2994 = vmatmul.mubr.f32.gmra.mrb[0].mxu0 %v2795
      %v2995 = vpop.f32.mrb[0].mxu0
      %v2996 = vadd.f32 0.0, %v2995
      %v2997 = vpop.f32.mrb[0].mxu0
      %2998 = vmatprep.mubr.f32.mxu0 0.0
      %2999 = vmatmul.mubr.f32.gmra.mrb[0].mxu0 %v2798
      %v3000 = vpop.f32.mrb[0].mxu0
      %v3001 = vadd.f32 0.0, %v3000
      %v3002 = vpop.f32.mrb[0].mxu0
      %3003 = vmatprep.mubr.f32.mxu0 0.0
      %3004 = vmatmul.mubr.f32.gmra.mrb[0].mxu0 %v2801
      %v3005 = vpop.f32.mrb[0].mxu0
      %v3006 = vadd.f32 0.0, %v3005
      %v3007 = vpop.f32.mrb[0].mxu0
      %3008 = vmatprep.mubr.f32.mxu0 0.0
      %3009 = vmatmul.mubr.f32.gmra.mrb[0].mxu0 %v2804
      %v3010 = vpop.f32.mrb[0].mxu0
      %v3011 = vadd.f32 0.0, %v3010
      %v3012 = vpop.f32.mrb[0].mxu0
      %3013 = vmatprep.mubr.f32.mxu0 0.0
      %3014 = vmatmul.mubr.f32.gmra.mrb[0].mxu0 %v2807
      %v3015 = vpop.f32.mrb[0].mxu0
      %v3016 = vadd.f32 0.0, %v3015
      %v3017 = vpop.f32.mrb[0].mxu0
      %3018 = vmatprep.mubr.f32.mxu0 0.0
      %3019 = vmatmul.mubr.f32.gmra.mrb[0].mxu0 %v2810
      %v3020 = vpop.f32.mrb[0].mxu0
      %v3021 = vadd.f32 0.0, %v3020
      %v3022 = vpop.f32.mrb[0].mxu0
      %3023 = vmatprep.mubr.f32.mxu0 0.0
      %3024 = vmatmul.mubr.f32.gmra.mrb[0].mxu0 %v2813
      %v3025 = vpop.f32.mrb[0].mxu0
      %v3026 = vadd.f32 0.0, %v3025
      %v3027 = vpop.f32.mrb[0].mxu0
      %3028 = vmatprep.mubr.f32.mxu0 0.0
      %3029 = vmatmul.mubr.f32.gmra.mrb[0].mxu0 %v2816
      %v3030 = vpop.f32.mrb[0].mxu0
      %v3031 = vadd.f32 0.0, %v3030
      %v3032 = vpop.f32.mrb[0].mxu0
      %3033 = vmatprep.mubr.f32.mxu0 0.0
      %3034 = vmatmul.mubr.f32.gmra.mrb[0].mxu0 %v2819
      %v3035 = vpop.f32.mrb[0].mxu0
      %v3036 = vadd.f32 0.0, %v3035
      %v3037 = vpop.f32.mrb[0].mxu0
      %3038 = vmatprep.mubr.f32.mxu0 0.0
      %3039 = vmatmul.mubr.f32.gmra.mrb[0].mxu0 %v2822
      %v3040 = vpop.f32.mrb[0].mxu0
      %v3041 = vadd.f32 0.0, %v3040
      %v3042 = vpop.f32.mrb[0].mxu0
      %3043 = vmatprep.mubr.f32.mxu0 0.0
      %3044 = vmatmul.mubr.f32.gmra.mrb[0].mxu0 %v2825
      %v3045 = vpop.f32.mrb[0].mxu0
      %v3046 = vadd.f32 0.0, %v3045
      %v3047 = vpop.f32.mrb[0].mxu0
      %3048 = vmatprep.mubr.f32.mxu0 0.0
      %3049 = vmatmul.mubr.f32.gmra.mrb[0].mxu0 %v2828
      %v3050 = vpop.f32.mrb[0].mxu0
      %v3051 = vadd.f32 0.0, %v3050
      %v3052 = vpop.f32.mrb[0].mxu0
      %3053 = vmatprep.mubr.f32.mxu0 0.0
      %3054 = vmatmul.mubr.f32.gmra.mrb[0].mxu0 %v2831
      %v3055 = vpop.f32.mrb[0].mxu0
      %v3056 = vadd.f32 0.0, %v3055
      %v3057 = vpop.f32.mrb[0].mxu0
      %3058 = vmatprep.mubr.f32.mxu0 0.0
      %3059 = vmatmul.mubr.f32.gmra.mrb[0].mxu0 %v2834
      %v3060 = vpop.f32.mrb[0].mxu0
      %v3061 = vadd.f32 0.0, %v3060
      %v3062 = vpop.f32.mrb[0].mxu0
      %3063 = vdwg.mxu0
      %v3064 = vadd.f32 %v2706, %v2906
      %v3065 = vadd.f32 %v2707, %v2911
      %v3066 = vadd.f32 %v2708, %v2916
      %v3067 = vadd.f32 %v2709, %v2921
      %v3068 = vadd.f32 %v2710, %v2926
      %v3069 = vadd.f32 %v2711, %v2931
      %v3070 = vadd.f32 %v2712, %v2936
      %v3071 = vadd.f32 %v2713, %v2941
      %v3072 = vadd.f32 %v2714, %v2946
      %v3073 = vadd.f32 %v2715, %v2951
      %v3074 = vadd.f32 %v2716, %v2956
      %v3075 = vadd.f32 %v2717, %v2961
      %v3076 = vadd.f32 %v2718, %v2966
      %v3077 = vadd.f32 %v2719, %v2971
      %v3078 = vadd.f32 %v2720, %v2976
      %v3079 = vadd.f32 %v2721, %v2981
      %v3080 = vadd.f32 %v2722, %v2986
      %v3081 = vadd.f32 %v2723, %v2991
      %v3082 = vadd.f32 %v2724, %v2996
      %v3083 = vadd.f32 %v2725, %v3001
      %v3084 = vadd.f32 %v2726, %v3006
      %v3085 = vadd.f32 %v2727, %v3011
      %v3086 = vadd.f32 %v2728, %v3016
      %v3087 = vadd.f32 %v2729, %v3021
      %v3088 = vadd.f32 %v2730, %v3026
      %v3089 = vadd.f32 %v2731, %v3031
      %v3090 = vadd.f32 %v2732, %v3036
      %v3091 = vadd.f32 %v2733, %v3041
      %v3092 = vadd.f32 %v2734, %v3046
      %v3093 = vadd.f32 %v2735, %v3051
      %v3094 = vadd.f32 %v2736, %v3056
      %v3095 = vadd.f32 %v2737, %v3061
      %3096 = vst.msk [vmem:[#allocation2] sm:$0xff] %vm270, %v3064
      %3097 = vst.msk [vmem:[#allocation2 + $0x8] sm:$0xff] %vm270, %v3065
      %3098 = vst.msk [vmem:[#allocation2 + $0x10] sm:$0xff] %vm270, %v3066
      %3099 = vst.msk [vmem:[#allocation2 + $0x18] sm:$0xff] %vm270, %v3067
      %3100 = vst.msk [vmem:[#allocation2 + $0x20] sm:$0xff] %vm270, %v3068
      %3101 = vst.msk [vmem:[#allocation2 + $0x28] sm:$0xff] %vm270, %v3069
      %3102 = vst.msk [vmem:[#allocation2 + $0x30] sm:$0xff] %vm270, %v3070
      %3103 = vst.msk [vmem:[#allocation2 + $0x38] sm:$0xff] %vm270, %v3071
      %3104 = vst.msk [vmem:[#allocation2 + $0x40] sm:$0xff] %vm270, %v3072
      %3105 = vst.msk [vmem:[#allocation2 + $0x48] sm:$0xff] %vm270, %v3073
      %3106 = vst.msk [vmem:[#allocation2 + $0x50] sm:$0xff] %vm270, %v3074
      %3107 = vst.msk [vmem:[#allocation2 + $0x58] sm:$0xff] %vm270, %v3075
      %3108 = vst.msk [vmem:[#allocation2 + $0x60] sm:$0xff] %vm270, %v3076
      %3109 = vst.msk [vmem:[#allocation2 + $0x68] sm:$0xff] %vm270, %v3077
      %3110 = vst.msk [vmem:[#allocation2 + $0x70] sm:$0xff] %vm270, %v3078
      %3111 = vst.msk [vmem:[#allocation2 + $0x78] sm:$0xff] %vm270, %v3079
      %3112 = vst.msk [vmem:[#allocation2 + $0x80] sm:$0xff] %vm270, %v3080
      %3113 = vst.msk [vmem:[#allocation2 + $0x88] sm:$0xff] %vm270, %v3081
      %3114 = vst.msk [vmem:[#allocation2 + $0x90] sm:$0xff] %vm270, %v3082
      %3115 = vst.msk [vmem:[#allocation2 + $0x98] sm:$0xff] %vm270, %v3083
      %3116 = vst.msk [vmem:[#allocation2 + $0xa0] sm:$0xff] %vm270, %v3084
      %3117 = vst.msk [vmem:[#allocation2 + $0xa8] sm:$0xff] %vm270, %v3085
      %3118 = vst.msk [vmem:[#allocation2 + $0xb0] sm:$0xff] %vm270, %v3086
      %3119 = vst.msk [vmem:[#allocation2 + $0xb8] sm:$0xff] %vm270, %v3087
      %3120 = vst.msk [vmem:[#allocation2 + $0xc0] sm:$0xff] %vm270, %v3088
      %3121 = vst.msk [vmem:[#allocation2 + $0xc8] sm:$0xff] %vm270, %v3089
      %3122 = vst.msk [vmem:[#allocation2 + $0xd0] sm:$0xff] %vm270, %v3090
      %3123 = vst.msk [vmem:[#allocation2 + $0xd8] sm:$0xff] %vm270, %v3091
      %3124 = vst.msk [vmem:[#allocation2 + $0xe0] sm:$0xff] %vm270, %v3092
      %3125 = vst.msk [vmem:[#allocation2 + $0xe8] sm:$0xff] %vm270, %v3093
      %3126 = vst.msk [vmem:[#allocation2 + $0xf0] sm:$0xff] %vm270, %v3094
      %3127 = vst.msk [vmem:[#allocation2 + $0xf8] sm:$0xff] %vm270, %v3095
      %v3128 = vld [vmem:[%s1999 + $0x2] sm:$0xff]
      %v3129 = vld [vmem:[%s1999 + $0xa] sm:$0xff]
      %v3130 = vld [vmem:[%s1999 + $0x1a] sm:$0xff]
      %v3131 = vld [vmem:[%s1999 + $0x22] sm:$0xff]
      %v3132 = vld [vmem:[%s1999 + $0x32] sm:$0xff]
      %v3133 = vld [vmem:[%s1999 + $0x3a] sm:$0xff]
      %v3134 = vld [vmem:[%s1999 + $0x4a] sm:$0xff]
      %v3135 = vld [vmem:[%s1999 + $0x52] sm:$0xff]
      %v3136 = vld [vmem:[%s1999 + $0x62] sm:$0xff]
      %v3137 = vld [vmem:[%s1999 + $0x6a] sm:$0xff]
      %v3138 = vld [vmem:[%s1999 + $0x7a] sm:$0xff]
      %v3139 = vld [vmem:[%s1999 + $0x82] sm:$0xff]
      %v3140 = vld [vmem:[%s1999 + $0x92] sm:$0xff]
      %v3141 = vld [vmem:[%s1999 + $0x9a] sm:$0xff]
      %v3142 = vld [vmem:[%s1999 + $0xaa] sm:$0xff]
      %v3143 = vld [vmem:[%s1999 + $0xb2] sm:$0xff]
      %v3144 = vld [vmem:[%s1999 + $0xc2] sm:$0xff]
      %v3145 = vld [vmem:[%s1999 + $0xca] sm:$0xff]
      %v3146 = vld [vmem:[%s1999 + $0xda] sm:$0xff]
      %v3147 = vld [vmem:[%s1999 + $0xe2] sm:$0xff]
      %v3148 = vld [vmem:[%s1999 + $0xf2] sm:$0xff]
      %v3149 = vld [vmem:[%s1999 + $0xfa] sm:$0xff]
      %v3150 = vld [vmem:[%s1999 + $0x10a] sm:$0xff]
      %v3151 = vld [vmem:[%s1999 + $0x112] sm:$0xff]
      %v3152 = vld [vmem:[%s1999 + $0x122] sm:$0xff]
      %v3153 = vld [vmem:[%s1999 + $0x12a] sm:$0xff]
      %v3154 = vld [vmem:[%s1999 + $0x13a] sm:$0xff]
      %v3155 = vld [vmem:[%s1999 + $0x142] sm:$0xff]
      %v3156 = vld [vmem:[%s1999 + $0x152] sm:$0xff]
      %v3157 = vld [vmem:[%s1999 + $0x15a] sm:$0xff]
      %v3158 = vld [vmem:[%s1999 + $0x16a] sm:$0xff]
      %v3159 = vld [vmem:[%s1999 + $0x172] sm:$0xff]
      %v3160 = vld [vmem:[%s2] sm:$0x1]
      %v3162 = vlaneseq
      %v3163 = vshrl.u32 %v3162, 7
      %v3164 = vsub.s32 0, %v3163
      %v3165 = vrot.slane %v3160, %v3164
      %v3167 = vmul.f32 %v3128, %v3165
      %v3168 = vmul.f32 %v3129, %v3165
      %v3169 = vmul.f32 %v3130, %v3165
      %v3170 = vmul.f32 %v3131, %v3165
      %v3171 = vmul.f32 %v3132, %v3165
      %v3172 = vmul.f32 %v3133, %v3165
      %v3173 = vmul.f32 %v3134, %v3165
      %v3174 = vmul.f32 %v3135, %v3165
      %v3175 = vmul.f32 %v3136, %v3165
      %v3176 = vmul.f32 %v3137, %v3165
      %v3177 = vmul.f32 %v3138, %v3165
      %v3178 = vmul.f32 %v3139, %v3165
      %v3179 = vmul.f32 %v3140, %v3165
      %v3180 = vmul.f32 %v3141, %v3165
      %v3181 = vmul.f32 %v3142, %v3165
      %v3182 = vmul.f32 %v3143, %v3165
      %v3183 = vmul.f32 %v3144, %v3165
      %v3184 = vmul.f32 %v3145, %v3165
      %v3185 = vmul.f32 %v3146, %v3165
      %v3186 = vmul.f32 %v3147, %v3165
      %v3187 = vmul.f32 %v3148, %v3165
      %v3188 = vmul.f32 %v3149, %v3165
      %v3189 = vmul.f32 %v3150, %v3165
      %v3190 = vmul.f32 %v3151, %v3165
      %v3191 = vmul.f32 %v3152, %v3165
      %v3192 = vmul.f32 %v3153, %v3165
      %v3193 = vmul.f32 %v3154, %v3165
      %v3194 = vmul.f32 %v3155, %v3165
      %v3195 = vmul.f32 %v3156, %v3165
      %v3196 = vmul.f32 %v3157, %v3165
      %v3197 = vmul.f32 %v3158, %v3165
      %v3198 = vmul.f32 %v3159, %v3165
      %v3199 = vld [vmem:[%s3] sm:$0x1]
      %v3201 = vlaneseq
      %v3202 = vshrl.u32 %v3201, 7
      %v3203 = vsub.s32 0, %v3202
      %v3204 = vrot.slane %v3199, %v3203
      %v3206 = vadd.f32 %v3167, %v3204
      %v3207 = vadd.f32 %v3168, %v3204
      %v3208 = vadd.f32 %v3169, %v3204
      %v3209 = vadd.f32 %v3170, %v3204
      %v3210 = vadd.f32 %v3171, %v3204
      %v3211 = vadd.f32 %v3172, %v3204
      %v3212 = vadd.f32 %v3173, %v3204
      %v3213 = vadd.f32 %v3174, %v3204
      %v3214 = vadd.f32 %v3175, %v3204
      %v3215 = vadd.f32 %v3176, %v3204
      %v3216 = vadd.f32 %v3177, %v3204
      %v3217 = vadd.f32 %v3178, %v3204
      %v3218 = vadd.f32 %v3179, %v3204
      %v3219 = vadd.f32 %v3180, %v3204
      %v3220 = vadd.f32 %v3181, %v3204
      %v3221 = vadd.f32 %v3182, %v3204
      %v3222 = vadd.f32 %v3183, %v3204
      %v3223 = vadd.f32 %v3184, %v3204
      %v3224 = vadd.f32 %v3185, %v3204
      %v3225 = vadd.f32 %v3186, %v3204
      %v3226 = vadd.f32 %v3187, %v3204
      %v3227 = vadd.f32 %v3188, %v3204
      %v3228 = vadd.f32 %v3189, %v3204
      %v3229 = vadd.f32 %v3190, %v3204
      %v3230 = vadd.f32 %v3191, %v3204
      %v3231 = vadd.f32 %v3192, %v3204
      %v3232 = vadd.f32 %v3193, %v3204
      %v3233 = vadd.f32 %v3194, %v3204
      %v3234 = vadd.f32 %v3195, %v3204
      %v3235 = vadd.f32 %v3196, %v3204
      %v3236 = vadd.f32 %v3197, %v3204
      %v3237 = vadd.f32 %v3198, %v3204
      %v3238 = vmax.f32 %v3206, 0.0
      %v3239 = vmax.f32 %v3207, 0.0
      %v3240 = vmax.f32 %v3208, 0.0
      %v3241 = vmax.f32 %v3209, 0.0
      %v3242 = vmax.f32 %v3210, 0.0
      %v3243 = vmax.f32 %v3211, 0.0
      %v3244 = vmax.f32 %v3212, 0.0
      %v3245 = vmax.f32 %v3213, 0.0
      %v3246 = vmax.f32 %v3214, 0.0
      %v3247 = vmax.f32 %v3215, 0.0
      %v3248 = vmax.f32 %v3216, 0.0
      %v3249 = vmax.f32 %v3217, 0.0
      %v3250 = vmax.f32 %v3218, 0.0
      %v3251 = vmax.f32 %v3219, 0.0
      %v3252 = vmax.f32 %v3220, 0.0
      %v3253 = vmax.f32 %v3221, 0.0
      %v3254 = vmax.f32 %v3222, 0.0
      %v3255 = vmax.f32 %v3223, 0.0
      %v3256 = vmax.f32 %v3224, 0.0
      %v3257 = vmax.f32 %v3225, 0.0
      %v3258 = vmax.f32 %v3226, 0.0
      %v3259 = vmax.f32 %v3227, 0.0
      %v3260 = vmax.f32 %v3228, 0.0
      %v3261 = vmax.f32 %v3229, 0.0
      %v3262 = vmax.f32 %v3230, 0.0
      %v3263 = vmax.f32 %v3231, 0.0
      %v3264 = vmax.f32 %v3232, 0.0
      %v3265 = vmax.f32 %v3233, 0.0
      %v3266 = vmax.f32 %v3234, 0.0
      %v3267 = vmax.f32 %v3235, 0.0
      %v3268 = vmax.f32 %v3236, 0.0
      %v3269 = vmax.f32 %v3237, 0.0
      %v3270 = vld [vmem:[#allocation2] sm:$0xff]
      %v3271 = vld [vmem:[#allocation2 + $0x8] sm:$0xff]
      %v3272 = vld [vmem:[#allocation2 + $0x10] sm:$0xff]
      %v3273 = vld [vmem:[#allocation2 + $0x18] sm:$0xff]
      %v3274 = vld [vmem:[#allocation2 + $0x20] sm:$0xff]
      %v3275 = vld [vmem:[#allocation2 + $0x28] sm:$0xff]
      %v3276 = vld [vmem:[#allocation2 + $0x30] sm:$0xff]
      %v3277 = vld [vmem:[#allocation2 + $0x38] sm:$0xff]
      %v3278 = vld [vmem:[#allocation2 + $0x40] sm:$0xff]
      %v3279 = vld [vmem:[#allocation2 + $0x48] sm:$0xff]
      %v3280 = vld [vmem:[#allocation2 + $0x50] sm:$0xff]
      %v3281 = vld [vmem:[#allocation2 + $0x58] sm:$0xff]
      %v3282 = vld [vmem:[#allocation2 + $0x60] sm:$0xff]
      %v3283 = vld [vmem:[#allocation2 + $0x68] sm:$0xff]
      %v3284 = vld [vmem:[#allocation2 + $0x70] sm:$0xff]
      %v3285 = vld [vmem:[#allocation2 + $0x78] sm:$0xff]
      %v3286 = vld [vmem:[#allocation2 + $0x80] sm:$0xff]
      %v3287 = vld [vmem:[#allocation2 + $0x88] sm:$0xff]
      %v3288 = vld [vmem:[#allocation2 + $0x90] sm:$0xff]
      %v3289 = vld [vmem:[#allocation2 + $0x98] sm:$0xff]
      %v3290 = vld [vmem:[#allocation2 + $0xa0] sm:$0xff]
      %v3291 = vld [vmem:[#allocation2 + $0xa8] sm:$0xff]
      %v3292 = vld [vmem:[#allocation2 + $0xb0] sm:$0xff]
      %v3293 = vld [vmem:[#allocation2 + $0xb8] sm:$0xff]
      %v3294 = vld [vmem:[#allocation2 + $0xc0] sm:$0xff]
      %v3295 = vld [vmem:[#allocation2 + $0xc8] sm:$0xff]
      %v3296 = vld [vmem:[#allocation2 + $0xd0] sm:$0xff]
      %v3297 = vld [vmem:[#allocation2 + $0xd8] sm:$0xff]
      %v3298 = vld [vmem:[#allocation2 + $0xe0] sm:$0xff]
      %v3299 = vld [vmem:[#allocation2 + $0xe8] sm:$0xff]
      %v3300 = vld [vmem:[#allocation2 + $0xf0] sm:$0xff]
      %v3301 = vld [vmem:[#allocation2 + $0xf8] sm:$0xff]
      %s3302 = scalar_lea.vmem %s1, 20
      %v3303 = vld [vmem:[%s3302] sm:$0xf]
      %v3305 = vsel %vm270, %v3238, 0
      %v3308 = vsel %vm270, %v3239, 0
      %v3311 = vsel %vm270, %v3240, 0
      %v3314 = vsel %vm270, %v3241, 0
      %v3317 = vsel %vm270, %v3242, 0
      %v3320 = vsel %vm270, %v3243, 0
      %v3323 = vsel %vm270, %v3244, 0
      %v3326 = vsel %vm270, %v3245, 0
      %v3329 = vsel %vm270, %v3246, 0
      %v3332 = vsel %vm270, %v3247, 0
      %v3335 = vsel %vm270, %v3248, 0
      %v3338 = vsel %vm270, %v3249, 0
      %v3341 = vsel %vm270, %v3250, 0
      %v3344 = vsel %vm270, %v3251, 0
      %v3347 = vsel %vm270, %v3252, 0
      %v3350 = vsel %vm270, %v3253, 0
      %v3353 = vsel %vm270, %v3254, 0
      %v3356 = vsel %vm270, %v3255, 0
      %v3359 = vsel %vm270, %v3256, 0
      %v3362 = vsel %vm270, %v3257, 0
      %v3365 = vsel %vm270, %v3258, 0
      %v3368 = vsel %vm270, %v3259, 0
      %v3371 = vsel %vm270, %v3260, 0
      %v3374 = vsel %vm270, %v3261, 0
      %v3377 = vsel %vm270, %v3262, 0
      %v3380 = vsel %vm270, %v3263, 0
      %v3383 = vsel %vm270, %v3264, 0
      %v3386 = vsel %vm270, %v3265, 0
      %v3389 = vsel %vm270, %v3266, 0
      %v3392 = vsel %vm270, %v3267, 0
      %v3395 = vsel %vm270, %v3268, 0
      %v3398 = vsel %vm270, %v3269, 0
      %v3401 = vsel %vm576, %v3303, 0
      %3403 = vmatprep.subr.mxu0 0.0
      %3404 = vmatpush1.msra.mxu0 %v3401
      %3405 = vmatprep.subr.mxu0 0.0
      %3406 = vmatpush1.msra.mxu0 0.0
      %3407 = vmatprep.subr.mxu0 0.0
      %3408 = vmatpush1.msra.mxu0 0.0
      %3409 = vmatprep.subr.mxu0 0.0
      %3410 = vmatpush1.msra.mxu0 0.0
      %3411 = vmatprep.subr.mxu0 0.0
      %3412 = vmatpush1.msra.mxu0 0.0
      %3413 = vmatprep.subr.mxu0 0.0
      %3414 = vmatpush1.msra.mxu0 0.0
      %3415 = vmatprep.subr.mxu0 0.0
      %3416 = vmatpush1.msra.mxu0 0.0
      %3417 = vmatprep.subr.mxu0 0.0
      %3418 = vmatpush1.msra.mxu0 0.0
      %3419 = vmatprep.subr.mxu0 0.0
      %3420 = vmatpush1.msra.mxu0 0.0
      %3421 = vmatprep.subr.mxu0 0.0
      %3422 = vmatpush1.msra.mxu0 0.0
      %3423 = vmatprep.subr.mxu0 0.0
      %3424 = vmatpush1.msra.mxu0 0.0
      %3425 = vmatprep.subr.mxu0 0.0
      %3426 = vmatpush1.msra.mxu0 0.0
      %3427 = vmatprep.subr.mxu0 0.0
      %3428 = vmatpush1.msra.mxu0 0.0
      %3429 = vmatprep.subr.mxu0 0.0
      %3430 = vmatpush1.msra.mxu0 0.0
      %3431 = vmatprep.subr.mxu0 0.0
      %3432 = vmatpush1.msra.mxu0 0.0
      %3433 = vmatprep.subr.mxu0 0.0
      %3434 = vmatpush1.msra.mxu0 0.0
      %3435 = vmatprep.subr.mxu0 0.0
      %3436 = vmatpush1.msra.mxu0 0.0
      %3437 = vmatprep.subr.mxu0 0.0
      %3438 = vmatpush1.msra.mxu0 0.0
      %3439 = vmatprep.subr.mxu0 0.0
      %3440 = vmatpush1.msra.mxu0 0.0
      %3441 = vmatprep.subr.mxu0 0.0
      %3442 = vmatpush1.msra.mxu0 0.0
      %3443 = vmatprep.subr.mxu0 0.0
      %3444 = vmatpush1.msra.mxu0 0.0
      %3445 = vmatprep.subr.mxu0 0.0
      %3446 = vmatpush1.msra.mxu0 0.0
      %3447 = vmatprep.subr.mxu0 0.0
      %3448 = vmatpush1.msra.mxu0 0.0
      %3449 = vmatprep.subr.mxu0 0.0
      %3450 = vmatpush1.msra.mxu0 0.0
      %3451 = vmatprep.subr.mxu0 0.0
      %3452 = vmatpush1.msra.mxu0 0.0
      %3453 = vmatprep.subr.mxu0 0.0
      %3454 = vmatpush1.msra.mxu0 0.0
      %3455 = vmatprep.subr.mxu0 0.0
      %3456 = vmatpush1.msra.mxu0 0.0
      %3457 = vmatprep.subr.mxu0 0.0
      %3458 = vmatpush1.msra.mxu0 0.0
      %3459 = vmatprep.subr.mxu0 0.0
      %3460 = vmatpush1.msra.mxu0 0.0
      %3461 = vmatprep.subr.mxu0 0.0
      %3462 = vmatpush1.msra.mxu0 0.0
      %3463 = vmatprep.subr.mxu0 0.0
      %3464 = vmatpush1.msra.mxu0 0.0
      %3465 = vmatprep.subr.mxu0 0.0
      %3466 = vmatpush1.msra.mxu0 0.0
      %3467 = vmatprep.mubr.f32.mxu0 0.0
      %3468 = vmatmul.mubr.f32.gmra.mrb[0].mxu0 %v3305
      %v3469 = vpop.f32.mrb[0].mxu0
      %v3470 = vadd.f32 0.0, %v3469
      %v3471 = vpop.f32.mrb[0].mxu0
      %3472 = vmatprep.mubr.f32.mxu0 0.0
      %3473 = vmatmul.mubr.f32.gmra.mrb[0].mxu0 %v3308
      %v3474 = vpop.f32.mrb[0].mxu0
      %v3475 = vadd.f32 0.0, %v3474
      %v3476 = vpop.f32.mrb[0].mxu0
      %3477 = vmatprep.mubr.f32.mxu0 0.0
      %3478 = vmatmul.mubr.f32.gmra.mrb[0].mxu0 %v3311
      %v3479 = vpop.f32.mrb[0].mxu0
      %v3480 = vadd.f32 0.0, %v3479
      %v3481 = vpop.f32.mrb[0].mxu0
      %3482 = vmatprep.mubr.f32.mxu0 0.0
      %3483 = vmatmul.mubr.f32.gmra.mrb[0].mxu0 %v3314
      %v3484 = vpop.f32.mrb[0].mxu0
      %v3485 = vadd.f32 0.0, %v3484
      %v3486 = vpop.f32.mrb[0].mxu0
      %3487 = vmatprep.mubr.f32.mxu0 0.0
      %3488 = vmatmul.mubr.f32.gmra.mrb[0].mxu0 %v3317
      %v3489 = vpop.f32.mrb[0].mxu0
      %v3490 = vadd.f32 0.0, %v3489
      %v3491 = vpop.f32.mrb[0].mxu0
      %3492 = vmatprep.mubr.f32.mxu0 0.0
      %3493 = vmatmul.mubr.f32.gmra.mrb[0].mxu0 %v3320
      %v3494 = vpop.f32.mrb[0].mxu0
      %v3495 = vadd.f32 0.0, %v3494
      %v3496 = vpop.f32.mrb[0].mxu0
      %3497 = vmatprep.mubr.f32.mxu0 0.0
      %3498 = vmatmul.mubr.f32.gmra.mrb[0].mxu0 %v3323
      %v3499 = vpop.f32.mrb[0].mxu0
      %v3500 = vadd.f32 0.0, %v3499
      %v3501 = vpop.f32.mrb[0].mxu0
      %3502 = vmatprep.mubr.f32.mxu0 0.0
      %3503 = vmatmul.mubr.f32.gmra.mrb[0].mxu0 %v3326
      %v3504 = vpop.f32.mrb[0].mxu0
      %v3505 = vadd.f32 0.0, %v3504
      %v3506 = vpop.f32.mrb[0].mxu0
      %3507 = vmatprep.mubr.f32.mxu0 0.0
      %3508 = vmatmul.mubr.f32.gmra.mrb[0].mxu0 %v3329
      %v3509 = vpop.f32.mrb[0].mxu0
      %v3510 = vadd.f32 0.0, %v3509
      %v3511 = vpop.f32.mrb[0].mxu0
      %3512 = vmatprep.mubr.f32.mxu0 0.0
      %3513 = vmatmul.mubr.f32.gmra.mrb[0].mxu0 %v3332
      %v3514 = vpop.f32.mrb[0].mxu0
      %v3515 = vadd.f32 0.0, %v3514
      %v3516 = vpop.f32.mrb[0].mxu0
      %3517 = vmatprep.mubr.f32.mxu0 0.0
      %3518 = vmatmul.mubr.f32.gmra.mrb[0].mxu0 %v3335
      %v3519 = vpop.f32.mrb[0].mxu0
      %v3520 = vadd.f32 0.0, %v3519
      %v3521 = vpop.f32.mrb[0].mxu0
      %3522 = vmatprep.mubr.f32.mxu0 0.0
      %3523 = vmatmul.mubr.f32.gmra.mrb[0].mxu0 %v3338
      %v3524 = vpop.f32.mrb[0].mxu0
      %v3525 = vadd.f32 0.0, %v3524
      %v3526 = vpop.f32.mrb[0].mxu0
      %3527 = vmatprep.mubr.f32.mxu0 0.0
      %3528 = vmatmul.mubr.f32.gmra.mrb[0].mxu0 %v3341
      %v3529 = vpop.f32.mrb[0].mxu0
      %v3530 = vadd.f32 0.0, %v3529
      %v3531 = vpop.f32.mrb[0].mxu0
      %3532 = vmatprep.mubr.f32.mxu0 0.0
      %3533 = vmatmul.mubr.f32.gmra.mrb[0].mxu0 %v3344
      %v3534 = vpop.f32.mrb[0].mxu0
      %v3535 = vadd.f32 0.0, %v3534
      %v3536 = vpop.f32.mrb[0].mxu0
      %3537 = vmatprep.mubr.f32.mxu0 0.0
      %3538 = vmatmul.mubr.f32.gmra.mrb[0].mxu0 %v3347
      %v3539 = vpop.f32.mrb[0].mxu0
      %v3540 = vadd.f32 0.0, %v3539
      %v3541 = vpop.f32.mrb[0].mxu0
      %3542 = vmatprep.mubr.f32.mxu0 0.0
      %3543 = vmatmul.mubr.f32.gmra.mrb[0].mxu0 %v3350
      %v3544 = vpop.f32.mrb[0].mxu0
      %v3545 = vadd.f32 0.0, %v3544
      %v3546 = vpop.f32.mrb[0].mxu0
      %3547 = vmatprep.mubr.f32.mxu0 0.0
      %3548 = vmatmul.mubr.f32.gmra.mrb[0].mxu0 %v3353
      %v3549 = vpop.f32.mrb[0].mxu0
      %v3550 = vadd.f32 0.0, %v3549
      %v3551 = vpop.f32.mrb[0].mxu0
      %3552 = vmatprep.mubr.f32.mxu0 0.0
      %3553 = vmatmul.mubr.f32.gmra.mrb[0].mxu0 %v3356
      %v3554 = vpop.f32.mrb[0].mxu0
      %v3555 = vadd.f32 0.0, %v3554
      %v3556 = vpop.f32.mrb[0].mxu0
      %3557 = vmatprep.mubr.f32.mxu0 0.0
      %3558 = vmatmul.mubr.f32.gmra.mrb[0].mxu0 %v3359
      %v3559 = vpop.f32.mrb[0].mxu0
      %v3560 = vadd.f32 0.0, %v3559
      %v3561 = vpop.f32.mrb[0].mxu0
      %3562 = vmatprep.mubr.f32.mxu0 0.0
      %3563 = vmatmul.mubr.f32.gmra.mrb[0].mxu0 %v3362
      %v3564 = vpop.f32.mrb[0].mxu0
      %v3565 = vadd.f32 0.0, %v3564
      %v3566 = vpop.f32.mrb[0].mxu0
      %3567 = vmatprep.mubr.f32.mxu0 0.0
      %3568 = vmatmul.mubr.f32.gmra.mrb[0].mxu0 %v3365
      %v3569 = vpop.f32.mrb[0].mxu0
      %v3570 = vadd.f32 0.0, %v3569
      %v3571 = vpop.f32.mrb[0].mxu0
      %3572 = vmatprep.mubr.f32.mxu0 0.0
      %3573 = vmatmul.mubr.f32.gmra.mrb[0].mxu0 %v3368
      %v3574 = vpop.f32.mrb[0].mxu0
      %v3575 = vadd.f32 0.0, %v3574
      %v3576 = vpop.f32.mrb[0].mxu0
      %3577 = vmatprep.mubr.f32.mxu0 0.0
      %3578 = vmatmul.mubr.f32.gmra.mrb[0].mxu0 %v3371
      %v3579 = vpop.f32.mrb[0].mxu0
      %v3580 = vadd.f32 0.0, %v3579
      %v3581 = vpop.f32.mrb[0].mxu0
      %3582 = vmatprep.mubr.f32.mxu0 0.0
      %3583 = vmatmul.mubr.f32.gmra.mrb[0].mxu0 %v3374
      %v3584 = vpop.f32.mrb[0].mxu0
      %v3585 = vadd.f32 0.0, %v3584
      %v3586 = vpop.f32.mrb[0].mxu0
      %3587 = vmatprep.mubr.f32.mxu0 0.0
      %3588 = vmatmul.mubr.f32.gmra.mrb[0].mxu0 %v3377
      %v3589 = vpop.f32.mrb[0].mxu0
      %v3590 = vadd.f32 0.0, %v3589
      %v3591 = vpop.f32.mrb[0].mxu0
      %3592 = vmatprep.mubr.f32.mxu0 0.0
      %3593 = vmatmul.mubr.f32.gmra.mrb[0].mxu0 %v3380
      %v3594 = vpop.f32.mrb[0].mxu0
      %v3595 = vadd.f32 0.0, %v3594
      %v3596 = vpop.f32.mrb[0].mxu0
      %3597 = vmatprep.mubr.f32.mxu0 0.0
      %3598 = vmatmul.mubr.f32.gmra.mrb[0].mxu0 %v3383
      %v3599 = vpop.f32.mrb[0].mxu0
      %v3600 = vadd.f32 0.0, %v3599
      %v3601 = vpop.f32.mrb[0].mxu0
      %3602 = vmatprep.mubr.f32.mxu0 0.0
      %3603 = vmatmul.mubr.f32.gmra.mrb[0].mxu0 %v3386
      %v3604 = vpop.f32.mrb[0].mxu0
      %v3605 = vadd.f32 0.0, %v3604
      %v3606 = vpop.f32.mrb[0].mxu0
      %3607 = vmatprep.mubr.f32.mxu0 0.0
      %3608 = vmatmul.mubr.f32.gmra.mrb[0].mxu0 %v3389
      %v3609 = vpop.f32.mrb[0].mxu0
      %v3610 = vadd.f32 0.0, %v3609
      %v3611 = vpop.f32.mrb[0].mxu0
      %3612 = vmatprep.mubr.f32.mxu0 0.0
      %3613 = vmatmul.mubr.f32.gmra.mrb[0].mxu0 %v3392
      %v3614 = vpop.f32.mrb[0].mxu0
      %v3615 = vadd.f32 0.0, %v3614
      %v3616 = vpop.f32.mrb[0].mxu0
      %3617 = vmatprep.mubr.f32.mxu0 0.0
      %3618 = vmatmul.mubr.f32.gmra.mrb[0].mxu0 %v3395
      %v3619 = vpop.f32.mrb[0].mxu0
      %v3620 = vadd.f32 0.0, %v3619
      %v3621 = vpop.f32.mrb[0].mxu0
      %3622 = vmatprep.mubr.f32.mxu0 0.0
      %3623 = vmatmul.mubr.f32.gmra.mrb[0].mxu0 %v3398
      %v3624 = vpop.f32.mrb[0].mxu0
      %v3625 = vadd.f32 0.0, %v3624
      %v3626 = vpop.f32.mrb[0].mxu0
      %3627 = vdwg.mxu0
      %v3628 = vadd.f32 %v3270, %v3470
      %v3629 = vadd.f32 %v3271, %v3475
      %v3630 = vadd.f32 %v3272, %v3480
      %v3631 = vadd.f32 %v3273, %v3485
      %v3632 = vadd.f32 %v3274, %v3490
      %v3633 = vadd.f32 %v3275, %v3495
      %v3634 = vadd.f32 %v3276, %v3500
      %v3635 = vadd.f32 %v3277, %v3505
      %v3636 = vadd.f32 %v3278, %v3510
      %v3637 = vadd.f32 %v3279, %v3515
      %v3638 = vadd.f32 %v3280, %v3520
      %v3639 = vadd.f32 %v3281, %v3525
      %v3640 = vadd.f32 %v3282, %v3530
      %v3641 = vadd.f32 %v3283, %v3535
      %v3642 = vadd.f32 %v3284, %v3540
      %v3643 = vadd.f32 %v3285, %v3545
      %v3644 = vadd.f32 %v3286, %v3550
      %v3645 = vadd.f32 %v3287, %v3555
      %v3646 = vadd.f32 %v3288, %v3560
      %v3647 = vadd.f32 %v3289, %v3565
      %v3648 = vadd.f32 %v3290, %v3570
      %v3649 = vadd.f32 %v3291, %v3575
      %v3650 = vadd.f32 %v3292, %v3580
      %v3651 = vadd.f32 %v3293, %v3585
      %v3652 = vadd.f32 %v3294, %v3590
      %v3653 = vadd.f32 %v3295, %v3595
      %v3654 = vadd.f32 %v3296, %v3600
      %v3655 = vadd.f32 %v3297, %v3605
      %v3656 = vadd.f32 %v3298, %v3610
      %v3657 = vadd.f32 %v3299, %v3615
      %v3658 = vadd.f32 %v3300, %v3620
      %v3659 = vadd.f32 %v3301, %v3625
      %3660 = vst.msk [vmem:[#allocation2] sm:$0xff] %vm270, %v3628
      %3661 = vst.msk [vmem:[#allocation2 + $0x8] sm:$0xff] %vm270, %v3629
      %3662 = vst.msk [vmem:[#allocation2 + $0x10] sm:$0xff] %vm270, %v3630
      %3663 = vst.msk [vmem:[#allocation2 + $0x18] sm:$0xff] %vm270, %v3631
      %3664 = vst.msk [vmem:[#allocation2 + $0x20] sm:$0xff] %vm270, %v3632
      %3665 = vst.msk [vmem:[#allocation2 + $0x28] sm:$0xff] %vm270, %v3633
      %3666 = vst.msk [vmem:[#allocation2 + $0x30] sm:$0xff] %vm270, %v3634
      %3667 = vst.msk [vmem:[#allocation2 + $0x38] sm:$0xff] %vm270, %v3635
      %3668 = vst.msk [vmem:[#allocation2 + $0x40] sm:$0xff] %vm270, %v3636
      %3669 = vst.msk [vmem:[#allocation2 + $0x48] sm:$0xff] %vm270, %v3637
      %3670 = vst.msk [vmem:[#allocation2 + $0x50] sm:$0xff] %vm270, %v3638
      %3671 = vst.msk [vmem:[#allocation2 + $0x58] sm:$0xff] %vm270, %v3639
      %3672 = vst.msk [vmem:[#allocation2 + $0x60] sm:$0xff] %vm270, %v3640
      %3673 = vst.msk [vmem:[#allocation2 + $0x68] sm:$0xff] %vm270, %v3641
      %3674 = vst.msk [vmem:[#allocation2 + $0x70] sm:$0xff] %vm270, %v3642
      %3675 = vst.msk [vmem:[#allocation2 + $0x78] sm:$0xff] %vm270, %v3643
      %3676 = vst.msk [vmem:[#allocation2 + $0x80] sm:$0xff] %vm270, %v3644
      %3677 = vst.msk [vmem:[#allocation2 + $0x88] sm:$0xff] %vm270, %v3645
      %3678 = vst.msk [vmem:[#allocation2 + $0x90] sm:$0xff] %vm270, %v3646
      %3679 = vst.msk [vmem:[#allocation2 + $0x98] sm:$0xff] %vm270, %v3647
      %3680 = vst.msk [vmem:[#allocation2 + $0xa0] sm:$0xff] %vm270, %v3648
      %3681 = vst.msk [vmem:[#allocation2 + $0xa8] sm:$0xff] %vm270, %v3649
      %3682 = vst.msk [vmem:[#allocation2 + $0xb0] sm:$0xff] %vm270, %v3650
      %3683 = vst.msk [vmem:[#allocation2 + $0xb8] sm:$0xff] %vm270, %v3651
      %3684 = vst.msk [vmem:[#allocation2 + $0xc0] sm:$0xff] %vm270, %v3652
      %3685 = vst.msk [vmem:[#allocation2 + $0xc8] sm:$0xff] %vm270, %v3653
      %3686 = vst.msk [vmem:[#allocation2 + $0xd0] sm:$0xff] %vm270, %v3654
      %3687 = vst.msk [vmem:[#allocation2 + $0xd8] sm:$0xff] %vm270, %v3655
      %3688 = vst.msk [vmem:[#allocation2 + $0xe0] sm:$0xff] %vm270, %v3656
      %3689 = vst.msk [vmem:[#allocation2 + $0xe8] sm:$0xff] %vm270, %v3657
      %3690 = vst.msk [vmem:[#allocation2 + $0xf0] sm:$0xff] %vm270, %v3658
      %3691 = vst.msk [vmem:[#allocation2 + $0xf8] sm:$0xff] %vm270, %v3659
      %s3692 = sadd.s32 %s269, 2
      %s3693 = smul.u32 %s3692, 24
      %s3694 = scalar_lea.vmem %s250, %s3693
      %v3695 = vld [vmem:[%s3694] sm:$0xff]
      %v3696 = vld [vmem:[%s3694 + $0x8] sm:$0xff]
      %v3697 = vld [vmem:[%s3694 + $0x18] sm:$0xff]
      %v3698 = vld [vmem:[%s3694 + $0x20] sm:$0xff]
      %v3699 = vld [vmem:[%s3694 + $0x30] sm:$0xff]
      %v3700 = vld [vmem:[%s3694 + $0x38] sm:$0xff]
      %v3701 = vld [vmem:[%s3694 + $0x48] sm:$0xff]
      %v3702 = vld [vmem:[%s3694 + $0x50] sm:$0xff]
      %v3703 = vld [vmem:[%s3694 + $0x60] sm:$0xff]
      %v3704 = vld [vmem:[%s3694 + $0x68] sm:$0xff]
      %v3705 = vld [vmem:[%s3694 + $0x78] sm:$0xff]
      %v3706 = vld [vmem:[%s3694 + $0x80] sm:$0xff]
      %v3707 = vld [vmem:[%s3694 + $0x90] sm:$0xff]
      %v3708 = vld [vmem:[%s3694 + $0x98] sm:$0xff]
      %v3709 = vld [vmem:[%s3694 + $0xa8] sm:$0xff]
      %v3710 = vld [vmem:[%s3694 + $0xb0] sm:$0xff]
      %v3711 = vld [vmem:[%s3694 + $0xc0] sm:$0xff]
      %v3712 = vld [vmem:[%s3694 + $0xc8] sm:$0xff]
      %v3713 = vld [vmem:[%s3694 + $0xd8] sm:$0xff]
      %v3714 = vld [vmem:[%s3694 + $0xe0] sm:$0xff]
      %v3715 = vld [vmem:[%s3694 + $0xf0] sm:$0xff]
      %v3716 = vld [vmem:[%s3694 + $0xf8] sm:$0xff]
      %v3717 = vld [vmem:[%s3694 + $0x108] sm:$0xff]
      %v3718 = vld [vmem:[%s3694 + $0x110] sm:$0xff]
      %v3719 = vld [vmem:[%s3694 + $0x120] sm:$0xff]
      %v3720 = vld [vmem:[%s3694 + $0x128] sm:$0xff]
      %v3721 = vld [vmem:[%s3694 + $0x138] sm:$0xff]
      %v3722 = vld [vmem:[%s3694 + $0x140] sm:$0xff]
      %v3723 = vld [vmem:[%s3694 + $0x150] sm:$0xff]
      %v3724 = vld [vmem:[%s3694 + $0x158] sm:$0xff]
      %v3725 = vld [vmem:[%s3694 + $0x168] sm:$0xff]
      %v3726 = vld [vmem:[%s3694 + $0x170] sm:$0xff]
      %v3727 = vld [vmem:[%s2] sm:$0x1]
      %v3729 = vlaneseq
      %v3730 = vshrl.u32 %v3729, 7
      %v3731 = vsub.s32 0, %v3730
      %v3732 = vrot.slane %v3727, %v3731
      %v3734 = vmul.f32 %v3695, %v3732
      %v3735 = vmul.f32 %v3696, %v3732
      %v3736 = vmul.f32 %v3697, %v3732
      %v3737 = vmul.f32 %v3698, %v3732
      %v3738 = vmul.f32 %v3699, %v3732
      %v3739 = vmul.f32 %v3700, %v3732
      %v3740 = vmul.f32 %v3701, %v3732
      %v3741 = vmul.f32 %v3702, %v3732
      %v3742 = vmul.f32 %v3703, %v3732
      %v3743 = vmul.f32 %v3704, %v3732
      %v3744 = vmul.f32 %v3705, %v3732
      %v3745 = vmul.f32 %v3706, %v3732
      %v3746 = vmul.f32 %v3707, %v3732
      %v3747 = vmul.f32 %v3708, %v3732
      %v3748 = vmul.f32 %v3709, %v3732
      %v3749 = vmul.f32 %v3710, %v3732
      %v3750 = vmul.f32 %v3711, %v3732
      %v3751 = vmul.f32 %v3712, %v3732
      %v3752 = vmul.f32 %v3713, %v3732
      %v3753 = vmul.f32 %v3714, %v3732
      %v3754 = vmul.f32 %v3715, %v3732
      %v3755 = vmul.f32 %v3716, %v3732
      %v3756 = vmul.f32 %v3717, %v3732
      %v3757 = vmul.f32 %v3718, %v3732
      %v3758 = vmul.f32 %v3719, %v3732
      %v3759 = vmul.f32 %v3720, %v3732
      %v3760 = vmul.f32 %v3721, %v3732
      %v3761 = vmul.f32 %v3722, %v3732
      %v3762 = vmul.f32 %v3723, %v3732
      %v3763 = vmul.f32 %v3724, %v3732
      %v3764 = vmul.f32 %v3725, %v3732
      %v3765 = vmul.f32 %v3726, %v3732
      %v3766 = vld [vmem:[%s3] sm:$0x1]
      %v3768 = vlaneseq
      %v3769 = vshrl.u32 %v3768, 7
      %v3770 = vsub.s32 0, %v3769
      %v3771 = vrot.slane %v3766, %v3770
      %v3773 = vadd.f32 %v3734, %v3771
      %v3774 = vadd.f32 %v3735, %v3771
      %v3775 = vadd.f32 %v3736, %v3771
      %v3776 = vadd.f32 %v3737, %v3771
      %v3777 = vadd.f32 %v3738, %v3771
      %v3778 = vadd.f32 %v3739, %v3771
      %v3779 = vadd.f32 %v3740, %v3771
      %v3780 = vadd.f32 %v3741, %v3771
      %v3781 = vadd.f32 %v3742, %v3771
      %v3782 = vadd.f32 %v3743, %v3771
      %v3783 = vadd.f32 %v3744, %v3771
      %v3784 = vadd.f32 %v3745, %v3771
      %v3785 = vadd.f32 %v3746, %v3771
      %v3786 = vadd.f32 %v3747, %v3771
      %v3787 = vadd.f32 %v3748, %v3771
      %v3788 = vadd.f32 %v3749, %v3771
      %v3789 = vadd.f32 %v3750, %v3771
      %v3790 = vadd.f32 %v3751, %v3771
      %v3791 = vadd.f32 %v3752, %v3771
      %v3792 = vadd.f32 %v3753, %v3771
      %v3793 = vadd.f32 %v3754, %v3771
      %v3794 = vadd.f32 %v3755, %v3771
      %v3795 = vadd.f32 %v3756, %v3771
      %v3796 = vadd.f32 %v3757, %v3771
      %v3797 = vadd.f32 %v3758, %v3771
      %v3798 = vadd.f32 %v3759, %v3771
      %v3799 = vadd.f32 %v3760, %v3771
      %v3800 = vadd.f32 %v3761, %v3771
      %v3801 = vadd.f32 %v3762, %v3771
      %v3802 = vadd.f32 %v3763, %v3771
      %v3803 = vadd.f32 %v3764, %v3771
      %v3804 = vadd.f32 %v3765, %v3771
      %v3805 = vmax.f32 %v3773, 0.0
      %v3806 = vmax.f32 %v3774, 0.0
      %v3807 = vmax.f32 %v3775, 0.0
      %v3808 = vmax.f32 %v3776, 0.0
      %v3809 = vmax.f32 %v3777, 0.0
      %v3810 = vmax.f32 %v3778, 0.0
      %v3811 = vmax.f32 %v3779, 0.0
      %v3812 = vmax.f32 %v3780, 0.0
      %v3813 = vmax.f32 %v3781, 0.0
      %v3814 = vmax.f32 %v3782, 0.0
      %v3815 = vmax.f32 %v3783, 0.0
      %v3816 = vmax.f32 %v3784, 0.0
      %v3817 = vmax.f32 %v3785, 0.0
      %v3818 = vmax.f32 %v3786, 0.0
      %v3819 = vmax.f32 %v3787, 0.0
      %v3820 = vmax.f32 %v3788, 0.0
      %v3821 = vmax.f32 %v3789, 0.0
      %v3822 = vmax.f32 %v3790, 0.0
      %v3823 = vmax.f32 %v3791, 0.0
      %v3824 = vmax.f32 %v3792, 0.0
      %v3825 = vmax.f32 %v3793, 0.0
      %v3826 = vmax.f32 %v3794, 0.0
      %v3827 = vmax.f32 %v3795, 0.0
      %v3828 = vmax.f32 %v3796, 0.0
      %v3829 = vmax.f32 %v3797, 0.0
      %v3830 = vmax.f32 %v3798, 0.0
      %v3831 = vmax.f32 %v3799, 0.0
      %v3832 = vmax.f32 %v3800, 0.0
      %v3833 = vmax.f32 %v3801, 0.0
      %v3834 = vmax.f32 %v3802, 0.0
      %v3835 = vmax.f32 %v3803, 0.0
      %v3836 = vmax.f32 %v3804, 0.0
      %v3837 = vld [vmem:[#allocation2] sm:$0xff]
      %v3838 = vld [vmem:[#allocation2 + $0x8] sm:$0xff]
      %v3839 = vld [vmem:[#allocation2 + $0x10] sm:$0xff]
      %v3840 = vld [vmem:[#allocation2 + $0x18] sm:$0xff]
      %v3841 = vld [vmem:[#allocation2 + $0x20] sm:$0xff]
      %v3842 = vld [vmem:[#allocation2 + $0x28] sm:$0xff]
      %v3843 = vld [vmem:[#allocation2 + $0x30] sm:$0xff]
      %v3844 = vld [vmem:[#allocation2 + $0x38] sm:$0xff]
      %v3845 = vld [vmem:[#allocation2 + $0x40] sm:$0xff]
      %v3846 = vld [vmem:[#allocation2 + $0x48] sm:$0xff]
      %v3847 = vld [vmem:[#allocation2 + $0x50] sm:$0xff]
      %v3848 = vld [vmem:[#allocation2 + $0x58] sm:$0xff]
      %v3849 = vld [vmem:[#allocation2 + $0x60] sm:$0xff]
      %v3850 = vld [vmem:[#allocation2 + $0x68] sm:$0xff]
      %v3851 = vld [vmem:[#allocation2 + $0x70] sm:$0xff]
      %v3852 = vld [vmem:[#allocation2 + $0x78] sm:$0xff]
      %v3853 = vld [vmem:[#allocation2 + $0x80] sm:$0xff]
      %v3854 = vld [vmem:[#allocation2 + $0x88] sm:$0xff]
      %v3855 = vld [vmem:[#allocation2 + $0x90] sm:$0xff]
      %v3856 = vld [vmem:[#allocation2 + $0x98] sm:$0xff]
      %v3857 = vld [vmem:[#allocation2 + $0xa0] sm:$0xff]
      %v3858 = vld [vmem:[#allocation2 + $0xa8] sm:$0xff]
      %v3859 = vld [vmem:[#allocation2 + $0xb0] sm:$0xff]
      %v3860 = vld [vmem:[#allocation2 + $0xb8] sm:$0xff]
      %v3861 = vld [vmem:[#allocation2 + $0xc0] sm:$0xff]
      %v3862 = vld [vmem:[#allocation2 + $0xc8] sm:$0xff]
      %v3863 = vld [vmem:[#allocation2 + $0xd0] sm:$0xff]
      %v3864 = vld [vmem:[#allocation2 + $0xd8] sm:$0xff]
      %v3865 = vld [vmem:[#allocation2 + $0xe0] sm:$0xff]
      %v3866 = vld [vmem:[#allocation2 + $0xe8] sm:$0xff]
      %v3867 = vld [vmem:[#allocation2 + $0xf0] sm:$0xff]
      %v3868 = vld [vmem:[#allocation2 + $0xf8] sm:$0xff]
      %s3869 = scalar_lea.vmem %s1, 24
      %v3870 = vld [vmem:[%s3869] sm:$0xf]
      %v3872 = vsel %vm270, %v3805, 0
      %v3875 = vsel %vm270, %v3806, 0
      %v3878 = vsel %vm270, %v3807, 0
      %v3881 = vsel %vm270, %v3808, 0
      %v3884 = vsel %vm270, %v3809, 0
      %v3887 = vsel %vm270, %v3810, 0
      %v3890 = vsel %vm270, %v3811, 0
      %v3893 = vsel %vm270, %v3812, 0
      %v3896 = vsel %vm270, %v3813, 0
      %v3899 = vsel %vm270, %v3814, 0
      %v3902 = vsel %vm270, %v3815, 0
      %v3905 = vsel %vm270, %v3816, 0
      %v3908 = vsel %vm270, %v3817, 0
      %v3911 = vsel %vm270, %v3818, 0
      %v3914 = vsel %vm270, %v3819, 0
      %v3917 = vsel %vm270, %v3820, 0
      %v3920 = vsel %vm270, %v3821, 0
      %v3923 = vsel %vm270, %v3822, 0
      %v3926 = vsel %vm270, %v3823, 0
      %v3929 = vsel %vm270, %v3824, 0
      %v3932 = vsel %vm270, %v3825, 0
      %v3935 = vsel %vm270, %v3826, 0
      %v3938 = vsel %vm270, %v3827, 0
      %v3941 = vsel %vm270, %v3828, 0
      %v3944 = vsel %vm270, %v3829, 0
      %v3947 = vsel %vm270, %v3830, 0
      %v3950 = vsel %vm270, %v3831, 0
      %v3953 = vsel %vm270, %v3832, 0
      %v3956 = vsel %vm270, %v3833, 0
      %v3959 = vsel %vm270, %v3834, 0
      %v3962 = vsel %vm270, %v3835, 0
      %v3965 = vsel %vm270, %v3836, 0
      %v3968 = vsel %vm576, %v3870, 0
      %3970 = vmatprep.subr.mxu0 0.0
      %3971 = vmatpush1.msra.mxu0 %v3968
      %3972 = vmatprep.subr.mxu0 0.0
      %3973 = vmatpush1.msra.mxu0 0.0
      %3974 = vmatprep.subr.mxu0 0.0
      %3975 = vmatpush1.msra.mxu0 0.0
      %3976 = vmatprep.subr.mxu0 0.0
      %3977 = vmatpush1.msra.mxu0 0.0
      %3978 = vmatprep.subr.mxu0 0.0
      %3979 = vmatpush1.msra.mxu0 0.0
      %3980 = vmatprep.subr.mxu0 0.0
      %3981 = vmatpush1.msra.mxu0 0.0
      %3982 = vmatprep.subr.mxu0 0.0
      %3983 = vmatpush1.msra.mxu0 0.0
      %3984 = vmatprep.subr.mxu0 0.0
      %3985 = vmatpush1.msra.mxu0 0.0
      %3986 = vmatprep.subr.mxu0 0.0
      %3987 = vmatpush1.msra.mxu0 0.0
      %3988 = vmatprep.subr.mxu0 0.0
      %3989 = vmatpush1.msra.mxu0 0.0
      %3990 = vmatprep.subr.mxu0 0.0
      %3991 = vmatpush1.msra.mxu0 0.0
      %3992 = vmatprep.subr.mxu0 0.0
      %3993 = vmatpush1.msra.mxu0 0.0
      %3994 = vmatprep.subr.mxu0 0.0
      %3995 = vmatpush1.msra.mxu0 0.0
      %3996 = vmatprep.subr.mxu0 0.0
      %3997 = vmatpush1.msra.mxu0 0.0
      %3998 = vmatprep.subr.mxu0 0.0
      %3999 = vmatpush1.msra.mxu0 0.0
      %4000 = vmatprep.subr.mxu0 0.0
      %4001 = vmatpush1.msra.mxu0 0.0
      %4002 = vmatprep.subr.mxu0 0.0
      %4003 = vmatpush1.msra.mxu0 0.0
      %4004 = vmatprep.subr.mxu0 0.0
      %4005 = vmatpush1.msra.mxu0 0.0
      %4006 = vmatprep.subr.mxu0 0.0
      %4007 = vmatpush1.msra.mxu0 0.0
      %4008 = vmatprep.subr.mxu0 0.0
      %4009 = vmatpush1.msra.mxu0 0.0
      %4010 = vmatprep.subr.mxu0 0.0
      %4011 = vmatpush1.msra.mxu0 0.0
      %4012 = vmatprep.subr.mxu0 0.0
      %4013 = vmatpush1.msra.mxu0 0.0
      %4014 = vmatprep.subr.mxu0 0.0
      %4015 = vmatpush1.msra.mxu0 0.0
      %4016 = vmatprep.subr.mxu0 0.0
      %4017 = vmatpush1.msra.mxu0 0.0
      %4018 = vmatprep.subr.mxu0 0.0
      %4019 = vmatpush1.msra.mxu0 0.0
      %4020 = vmatprep.subr.mxu0 0.0
      %4021 = vmatpush1.msra.mxu0 0.0
      %4022 = vmatprep.subr.mxu0 0.0
      %4023 = vmatpush1.msra.mxu0 0.0
      %4024 = vmatprep.subr.mxu0 0.0
      %4025 = vmatpush1.msra.mxu0 0.0
      %4026 = vmatprep.subr.mxu0 0.0
      %4027 = vmatpush1.msra.mxu0 0.0
      %4028 = vmatprep.subr.mxu0 0.0
      %4029 = vmatpush1.msra.mxu0 0.0
      %4030 = vmatprep.subr.mxu0 0.0
      %4031 = vmatpush1.msra.mxu0 0.0
      %4032 = vmatprep.subr.mxu0 0.0
      %4033 = vmatpush1.msra.mxu0 0.0
      %4034 = vmatprep.mubr.f32.mxu0 0.0
      %4035 = vmatmul.mubr.f32.gmra.mrb[0].mxu0 %v3872
      %v4036 = vpop.f32.mrb[0].mxu0
      %v4037 = vadd.f32 0.0, %v4036
      %v4038 = vpop.f32.mrb[0].mxu0
      %4039 = vmatprep.mubr.f32.mxu0 0.0
      %4040 = vmatmul.mubr.f32.gmra.mrb[0].mxu0 %v3875
      %v4041 = vpop.f32.mrb[0].mxu0
      %v4042 = vadd.f32 0.0, %v4041
      %v4043 = vpop.f32.mrb[0].mxu0
      %4044 = vmatprep.mubr.f32.mxu0 0.0
      %4045 = vmatmul.mubr.f32.gmra.mrb[0].mxu0 %v3878
      %v4046 = vpop.f32.mrb[0].mxu0
      %v4047 = vadd.f32 0.0, %v4046
      %v4048 = vpop.f32.mrb[0].mxu0
      %4049 = vmatprep.mubr.f32.mxu0 0.0
      %4050 = vmatmul.mubr.f32.gmra.mrb[0].mxu0 %v3881
      %v4051 = vpop.f32.mrb[0].mxu0
      %v4052 = vadd.f32 0.0, %v4051
      %v4053 = vpop.f32.mrb[0].mxu0
      %4054 = vmatprep.mubr.f32.mxu0 0.0
      %4055 = vmatmul.mubr.f32.gmra.mrb[0].mxu0 %v3884
      %v4056 = vpop.f32.mrb[0].mxu0
      %v4057 = vadd.f32 0.0, %v4056
      %v4058 = vpop.f32.mrb[0].mxu0
      %4059 = vmatprep.mubr.f32.mxu0 0.0
      %4060 = vmatmul.mubr.f32.gmra.mrb[0].mxu0 %v3887
      %v4061 = vpop.f32.mrb[0].mxu0
      %v4062 = vadd.f32 0.0, %v4061
      %v4063 = vpop.f32.mrb[0].mxu0
      %4064 = vmatprep.mubr.f32.mxu0 0.0
      %4065 = vmatmul.mubr.f32.gmra.mrb[0].mxu0 %v3890
      %v4066 = vpop.f32.mrb[0].mxu0
      %v4067 = vadd.f32 0.0, %v4066
      %v4068 = vpop.f32.mrb[0].mxu0
      %4069 = vmatprep.mubr.f32.mxu0 0.0
      %4070 = vmatmul.mubr.f32.gmra.mrb[0].mxu0 %v3893
      %v4071 = vpop.f32.mrb[0].mxu0
      %v4072 = vadd.f32 0.0, %v4071
      %v4073 = vpop.f32.mrb[0].mxu0
      %4074 = vmatprep.mubr.f32.mxu0 0.0
      %4075 = vmatmul.mubr.f32.gmra.mrb[0].mxu0 %v3896
      %v4076 = vpop.f32.mrb[0].mxu0
      %v4077 = vadd.f32 0.0, %v4076
      %v4078 = vpop.f32.mrb[0].mxu0
      %4079 = vmatprep.mubr.f32.mxu0 0.0
      %4080 = vmatmul.mubr.f32.gmra.mrb[0].mxu0 %v3899
      %v4081 = vpop.f32.mrb[0].mxu0
      %v4082 = vadd.f32 0.0, %v4081
      %v4083 = vpop.f32.mrb[0].mxu0
      %4084 = vmatprep.mubr.f32.mxu0 0.0
      %4085 = vmatmul.mubr.f32.gmra.mrb[0].mxu0 %v3902
      %v4086 = vpop.f32.mrb[0].mxu0
      %v4087 = vadd.f32 0.0, %v4086
      %v4088 = vpop.f32.mrb[0].mxu0
      %4089 = vmatprep.mubr.f32.mxu0 0.0
      %4090 = vmatmul.mubr.f32.gmra.mrb[0].mxu0 %v3905
      %v4091 = vpop.f32.mrb[0].mxu0
      %v4092 = vadd.f32 0.0, %v4091
      %v4093 = vpop.f32.mrb[0].mxu0
      %4094 = vmatprep.mubr.f32.mxu0 0.0
      %4095 = vmatmul.mubr.f32.gmra.mrb[0].mxu0 %v3908
      %v4096 = vpop.f32.mrb[0].mxu0
      %v4097 = vadd.f32 0.0, %v4096
      %v4098 = vpop.f32.mrb[0].mxu0
      %4099 = vmatprep.mubr.f32.mxu0 0.0
      %4100 = vmatmul.mubr.f32.gmra.mrb[0].mxu0 %v3911
      %v4101 = vpop.f32.mrb[0].mxu0
      %v4102 = vadd.f32 0.0, %v4101
      %v4103 = vpop.f32.mrb[0].mxu0
      %4104 = vmatprep.mubr.f32.mxu0 0.0
      %4105 = vmatmul.mubr.f32.gmra.mrb[0].mxu0 %v3914
      %v4106 = vpop.f32.mrb[0].mxu0
      %v4107 = vadd.f32 0.0, %v4106
      %v4108 = vpop.f32.mrb[0].mxu0
      %4109 = vmatprep.mubr.f32.mxu0 0.0
      %4110 = vmatmul.mubr.f32.gmra.mrb[0].mxu0 %v3917
      %v4111 = vpop.f32.mrb[0].mxu0
      %v4112 = vadd.f32 0.0, %v4111
      %v4113 = vpop.f32.mrb[0].mxu0
      %4114 = vmatprep.mubr.f32.mxu0 0.0
      %4115 = vmatmul.mubr.f32.gmra.mrb[0].mxu0 %v3920
      %v4116 = vpop.f32.mrb[0].mxu0
      %v4117 = vadd.f32 0.0, %v4116
      %v4118 = vpop.f32.mrb[0].mxu0
      %4119 = vmatprep.mubr.f32.mxu0 0.0
      %4120 = vmatmul.mubr.f32.gmra.mrb[0].mxu0 %v3923
      %v4121 = vpop.f32.mrb[0].mxu0
      %v4122 = vadd.f32 0.0, %v4121
      %v4123 = vpop.f32.mrb[0].mxu0
      %4124 = vmatprep.mubr.f32.mxu0 0.0
      %4125 = vmatmul.mubr.f32.gmra.mrb[0].mxu0 %v3926
      %v4126 = vpop.f32.mrb[0].mxu0
      %v4127 = vadd.f32 0.0, %v4126
      %v4128 = vpop.f32.mrb[0].mxu0
      %4129 = vmatprep.mubr.f32.mxu0 0.0
      %4130 = vmatmul.mubr.f32.gmra.mrb[0].mxu0 %v3929
      %v4131 = vpop.f32.mrb[0].mxu0
      %v4132 = vadd.f32 0.0, %v4131
      %v4133 = vpop.f32.mrb[0].mxu0
      %4134 = vmatprep.mubr.f32.mxu0 0.0
      %4135 = vmatmul.mubr.f32.gmra.mrb[0].mxu0 %v3932
      %v4136 = vpop.f32.mrb[0].mxu0
      %v4137 = vadd.f32 0.0, %v4136
      %v4138 = vpop.f32.mrb[0].mxu0
      %4139 = vmatprep.mubr.f32.mxu0 0.0
      %4140 = vmatmul.mubr.f32.gmra.mrb[0].mxu0 %v3935
      %v4141 = vpop.f32.mrb[0].mxu0
      %v4142 = vadd.f32 0.0, %v4141
      %v4143 = vpop.f32.mrb[0].mxu0
      %4144 = vmatprep.mubr.f32.mxu0 0.0
      %4145 = vmatmul.mubr.f32.gmra.mrb[0].mxu0 %v3938
      %v4146 = vpop.f32.mrb[0].mxu0
      %v4147 = vadd.f32 0.0, %v4146
      %v4148 = vpop.f32.mrb[0].mxu0
      %4149 = vmatprep.mubr.f32.mxu0 0.0
      %4150 = vmatmul.mubr.f32.gmra.mrb[0].mxu0 %v3941
      %v4151 = vpop.f32.mrb[0].mxu0
      %v4152 = vadd.f32 0.0, %v4151
      %v4153 = vpop.f32.mrb[0].mxu0
      %4154 = vmatprep.mubr.f32.mxu0 0.0
      %4155 = vmatmul.mubr.f32.gmra.mrb[0].mxu0 %v3944
      %v4156 = vpop.f32.mrb[0].mxu0
      %v4157 = vadd.f32 0.0, %v4156
      %v4158 = vpop.f32.mrb[0].mxu0
      %4159 = vmatprep.mubr.f32.mxu0 0.0
      %4160 = vmatmul.mubr.f32.gmra.mrb[0].mxu0 %v3947
      %v4161 = vpop.f32.mrb[0].mxu0
      %v4162 = vadd.f32 0.0, %v4161
      %v4163 = vpop.f32.mrb[0].mxu0
      %4164 = vmatprep.mubr.f32.mxu0 0.0
      %4165 = vmatmul.mubr.f32.gmra.mrb[0].mxu0 %v3950
      %v4166 = vpop.f32.mrb[0].mxu0
      %v4167 = vadd.f32 0.0, %v4166
      %v4168 = vpop.f32.mrb[0].mxu0
      %4169 = vmatprep.mubr.f32.mxu0 0.0
      %4170 = vmatmul.mubr.f32.gmra.mrb[0].mxu0 %v3953
      %v4171 = vpop.f32.mrb[0].mxu0
      %v4172 = vadd.f32 0.0, %v4171
      %v4173 = vpop.f32.mrb[0].mxu0
      %4174 = vmatprep.mubr.f32.mxu0 0.0
      %4175 = vmatmul.mubr.f32.gmra.mrb[0].mxu0 %v3956
      %v4176 = vpop.f32.mrb[0].mxu0
      %v4177 = vadd.f32 0.0, %v4176
      %v4178 = vpop.f32.mrb[0].mxu0
      %4179 = vmatprep.mubr.f32.mxu0 0.0
      %4180 = vmatmul.mubr.f32.gmra.mrb[0].mxu0 %v3959
      %v4181 = vpop.f32.mrb[0].mxu0
      %v4182 = vadd.f32 0.0, %v4181
      %v4183 = vpop.f32.mrb[0].mxu0
      %4184 = vmatprep.mubr.f32.mxu0 0.0
      %4185 = vmatmul.mubr.f32.gmra.mrb[0].mxu0 %v3962
      %v4186 = vpop.f32.mrb[0].mxu0
      %v4187 = vadd.f32 0.0, %v4186
      %v4188 = vpop.f32.mrb[0].mxu0
      %4189 = vmatprep.mubr.f32.mxu0 0.0
      %4190 = vmatmul.mubr.f32.gmra.mrb[0].mxu0 %v3965
      %v4191 = vpop.f32.mrb[0].mxu0
      %v4192 = vadd.f32 0.0, %v4191
      %v4193 = vpop.f32.mrb[0].mxu0
      %4194 = vdwg.mxu0
      %v4195 = vadd.f32 %v3837, %v4037
      %v4196 = vadd.f32 %v3838, %v4042
      %v4197 = vadd.f32 %v3839, %v4047
      %v4198 = vadd.f32 %v3840, %v4052
      %v4199 = vadd.f32 %v3841, %v4057
      %v4200 = vadd.f32 %v3842, %v4062
      %v4201 = vadd.f32 %v3843, %v4067
      %v4202 = vadd.f32 %v3844, %v4072
      %v4203 = vadd.f32 %v3845, %v4077
      %v4204 = vadd.f32 %v3846, %v4082
      %v4205 = vadd.f32 %v3847, %v4087
      %v4206 = vadd.f32 %v3848, %v4092
      %v4207 = vadd.f32 %v3849, %v4097
      %v4208 = vadd.f32 %v3850, %v4102
      %v4209 = vadd.f32 %v3851, %v4107
      %v4210 = vadd.f32 %v3852, %v4112
      %v4211 = vadd.f32 %v3853, %v4117
      %v4212 = vadd.f32 %v3854, %v4122
      %v4213 = vadd.f32 %v3855, %v4127
      %v4214 = vadd.f32 %v3856, %v4132
      %v4215 = vadd.f32 %v3857, %v4137
      %v4216 = vadd.f32 %v3858, %v4142
      %v4217 = vadd.f32 %v3859, %v4147
      %v4218 = vadd.f32 %v3860, %v4152
      %v4219 = vadd.f32 %v3861, %v4157
      %v4220 = vadd.f32 %v3862, %v4162
      %v4221 = vadd.f32 %v3863, %v4167
      %v4222 = vadd.f32 %v3864, %v4172
      %v4223 = vadd.f32 %v3865, %v4177
      %v4224 = vadd.f32 %v3866, %v4182
      %v4225 = vadd.f32 %v3867, %v4187
      %v4226 = vadd.f32 %v3868, %v4192
      %4227 = vst.msk [vmem:[#allocation2] sm:$0xff] %vm270, %v4195
      %4228 = vst.msk [vmem:[#allocation2 + $0x8] sm:$0xff] %vm270, %v4196
      %4229 = vst.msk [vmem:[#allocation2 + $0x10] sm:$0xff] %vm270, %v4197
      %4230 = vst.msk [vmem:[#allocation2 + $0x18] sm:$0xff] %vm270, %v4198
      %4231 = vst.msk [vmem:[#allocation2 + $0x20] sm:$0xff] %vm270, %v4199
      %4232 = vst.msk [vmem:[#allocation2 + $0x28] sm:$0xff] %vm270, %v4200
      %4233 = vst.msk [vmem:[#allocation2 + $0x30] sm:$0xff] %vm270, %v4201
      %4234 = vst.msk [vmem:[#allocation2 + $0x38] sm:$0xff] %vm270, %v4202
      %4235 = vst.msk [vmem:[#allocation2 + $0x40] sm:$0xff] %vm270, %v4203
      %4236 = vst.msk [vmem:[#allocation2 + $0x48] sm:$0xff] %vm270, %v4204
      %4237 = vst.msk [vmem:[#allocation2 + $0x50] sm:$0xff] %vm270, %v4205
      %4238 = vst.msk [vmem:[#allocation2 + $0x58] sm:$0xff] %vm270, %v4206
      %4239 = vst.msk [vmem:[#allocation2 + $0x60] sm:$0xff] %vm270, %v4207
      %4240 = vst.msk [vmem:[#allocation2 + $0x68] sm:$0xff] %vm270, %v4208
      %4241 = vst.msk [vmem:[#allocation2 + $0x70] sm:$0xff] %vm270, %v4209
      %4242 = vst.msk [vmem:[#allocation2 + $0x78] sm:$0xff] %vm270, %v4210
      %4243 = vst.msk [vmem:[#allocation2 + $0x80] sm:$0xff] %vm270, %v4211
      %4244 = vst.msk [vmem:[#allocation2 + $0x88] sm:$0xff] %vm270, %v4212
      %4245 = vst.msk [vmem:[#allocation2 + $0x90] sm:$0xff] %vm270, %v4213
      %4246 = vst.msk [vmem:[#allocation2 + $0x98] sm:$0xff] %vm270, %v4214
      %4247 = vst.msk [vmem:[#allocation2 + $0xa0] sm:$0xff] %vm270, %v4215
      %4248 = vst.msk [vmem:[#allocation2 + $0xa8] sm:$0xff] %vm270, %v4216
      %4249 = vst.msk [vmem:[#allocation2 + $0xb0] sm:$0xff] %vm270, %v4217
      %4250 = vst.msk [vmem:[#allocation2 + $0xb8] sm:$0xff] %vm270, %v4218
      %4251 = vst.msk [vmem:[#allocation2 + $0xc0] sm:$0xff] %vm270, %v4219
      %4252 = vst.msk [vmem:[#allocation2 + $0xc8] sm:$0xff] %vm270, %v4220
      %4253 = vst.msk [vmem:[#allocation2 + $0xd0] sm:$0xff] %vm270, %v4221
      %4254 = vst.msk [vmem:[#allocation2 + $0xd8] sm:$0xff] %vm270, %v4222
      %4255 = vst.msk [vmem:[#allocation2 + $0xe0] sm:$0xff] %vm270, %v4223
      %4256 = vst.msk [vmem:[#allocation2 + $0xe8] sm:$0xff] %vm270, %v4224
      %4257 = vst.msk [vmem:[#allocation2 + $0xf0] sm:$0xff] %vm270, %v4225
      %4258 = vst.msk [vmem:[#allocation2 + $0xf8] sm:$0xff] %vm270, %v4226
      %v4259 = vld [vmem:[%s3694 + $0x1] sm:$0xff]
      %v4260 = vld [vmem:[%s3694 + $0x9] sm:$0xff]
      %v4261 = vld [vmem:[%s3694 + $0x19] sm:$0xff]
      %v4262 = vld [vmem:[%s3694 + $0x21] sm:$0xff]
      %v4263 = vld [vmem:[%s3694 + $0x31] sm:$0xff]
      %v4264 = vld [vmem:[%s3694 + $0x39] sm:$0xff]
      %v4265 = vld [vmem:[%s3694 + $0x49] sm:$0xff]
      %v4266 = vld [vmem:[%s3694 + $0x51] sm:$0xff]
      %v4267 = vld [vmem:[%s3694 + $0x61] sm:$0xff]
      %v4268 = vld [vmem:[%s3694 + $0x69] sm:$0xff]
      %v4269 = vld [vmem:[%s3694 + $0x79] sm:$0xff]
      %v4270 = vld [vmem:[%s3694 + $0x81] sm:$0xff]
      %v4271 = vld [vmem:[%s3694 + $0x91] sm:$0xff]
      %v4272 = vld [vmem:[%s3694 + $0x99] sm:$0xff]
      %v4273 = vld [vmem:[%s3694 + $0xa9] sm:$0xff]
      %v4274 = vld [vmem:[%s3694 + $0xb1] sm:$0xff]
      %v4275 = vld [vmem:[%s3694 + $0xc1] sm:$0xff]
      %v4276 = vld [vmem:[%s3694 + $0xc9] sm:$0xff]
      %v4277 = vld [vmem:[%s3694 + $0xd9] sm:$0xff]
      %v4278 = vld [vmem:[%s3694 + $0xe1] sm:$0xff]
      %v4279 = vld [vmem:[%s3694 + $0xf1] sm:$0xff]
      %v4280 = vld [vmem:[%s3694 + $0xf9] sm:$0xff]
      %v4281 = vld [vmem:[%s3694 + $0x109] sm:$0xff]
      %v4282 = vld [vmem:[%s3694 + $0x111] sm:$0xff]
      %v4283 = vld [vmem:[%s3694 + $0x121] sm:$0xff]
      %v4284 = vld [vmem:[%s3694 + $0x129] sm:$0xff]
      %v4285 = vld [vmem:[%s3694 + $0x139] sm:$0xff]
      %v4286 = vld [vmem:[%s3694 + $0x141] sm:$0xff]
      %v4287 = vld [vmem:[%s3694 + $0x151] sm:$0xff]
      %v4288 = vld [vmem:[%s3694 + $0x159] sm:$0xff]
      %v4289 = vld [vmem:[%s3694 + $0x169] sm:$0xff]
      %v4290 = vld [vmem:[%s3694 + $0x171] sm:$0xff]
      %v4291 = vld [vmem:[%s2] sm:$0x1]
      %v4293 = vlaneseq
      %v4294 = vshrl.u32 %v4293, 7
      %v4295 = vsub.s32 0, %v4294
      %v4296 = vrot.slane %v4291, %v4295
      %v4298 = vmul.f32 %v4259, %v4296
      %v4299 = vmul.f32 %v4260, %v4296
      %v4300 = vmul.f32 %v4261, %v4296
      %v4301 = vmul.f32 %v4262, %v4296
      %v4302 = vmul.f32 %v4263, %v4296
      %v4303 = vmul.f32 %v4264, %v4296
      %v4304 = vmul.f32 %v4265, %v4296
      %v4305 = vmul.f32 %v4266, %v4296
      %v4306 = vmul.f32 %v4267, %v4296
      %v4307 = vmul.f32 %v4268, %v4296
      %v4308 = vmul.f32 %v4269, %v4296
      %v4309 = vmul.f32 %v4270, %v4296
      %v4310 = vmul.f32 %v4271, %v4296
      %v4311 = vmul.f32 %v4272, %v4296
      %v4312 = vmul.f32 %v4273, %v4296
      %v4313 = vmul.f32 %v4274, %v4296
      %v4314 = vmul.f32 %v4275, %v4296
      %v4315 = vmul.f32 %v4276, %v4296
      %v4316 = vmul.f32 %v4277, %v4296
      %v4317 = vmul.f32 %v4278, %v4296
      %v4318 = vmul.f32 %v4279, %v4296
      %v4319 = vmul.f32 %v4280, %v4296
      %v4320 = vmul.f32 %v4281, %v4296
      %v4321 = vmul.f32 %v4282, %v4296
      %v4322 = vmul.f32 %v4283, %v4296
      %v4323 = vmul.f32 %v4284, %v4296
      %v4324 = vmul.f32 %v4285, %v4296
      %v4325 = vmul.f32 %v4286, %v4296
      %v4326 = vmul.f32 %v4287, %v4296
      %v4327 = vmul.f32 %v4288, %v4296
      %v4328 = vmul.f32 %v4289, %v4296
      %v4329 = vmul.f32 %v4290, %v4296
      %v4330 = vld [vmem:[%s3] sm:$0x1]
      %v4332 = vlaneseq
      %v4333 = vshrl.u32 %v4332, 7
      %v4334 = vsub.s32 0, %v4333
      %v4335 = vrot.slane %v4330, %v4334
      %v4337 = vadd.f32 %v4298, %v4335
      %v4338 = vadd.f32 %v4299, %v4335
      %v4339 = vadd.f32 %v4300, %v4335
      %v4340 = vadd.f32 %v4301, %v4335
      %v4341 = vadd.f32 %v4302, %v4335
      %v4342 = vadd.f32 %v4303, %v4335
      %v4343 = vadd.f32 %v4304, %v4335
      %v4344 = vadd.f32 %v4305, %v4335
      %v4345 = vadd.f32 %v4306, %v4335
      %v4346 = vadd.f32 %v4307, %v4335
      %v4347 = vadd.f32 %v4308, %v4335
      %v4348 = vadd.f32 %v4309, %v4335
      %v4349 = vadd.f32 %v4310, %v4335
      %v4350 = vadd.f32 %v4311, %v4335
      %v4351 = vadd.f32 %v4312, %v4335
      %v4352 = vadd.f32 %v4313, %v4335
      %v4353 = vadd.f32 %v4314, %v4335
      %v4354 = vadd.f32 %v4315, %v4335
      %v4355 = vadd.f32 %v4316, %v4335
      %v4356 = vadd.f32 %v4317, %v4335
      %v4357 = vadd.f32 %v4318, %v4335
      %v4358 = vadd.f32 %v4319, %v4335
      %v4359 = vadd.f32 %v4320, %v4335
      %v4360 = vadd.f32 %v4321, %v4335
      %v4361 = vadd.f32 %v4322, %v4335
      %v4362 = vadd.f32 %v4323, %v4335
      %v4363 = vadd.f32 %v4324, %v4335
      %v4364 = vadd.f32 %v4325, %v4335
      %v4365 = vadd.f32 %v4326, %v4335
      %v4366 = vadd.f32 %v4327, %v4335
      %v4367 = vadd.f32 %v4328, %v4335
      %v4368 = vadd.f32 %v4329, %v4335
      %v4369 = vmax.f32 %v4337, 0.0
      %v4370 = vmax.f32 %v4338, 0.0
      %v4371 = vmax.f32 %v4339, 0.0
      %v4372 = vmax.f32 %v4340, 0.0
      %v4373 = vmax.f32 %v4341, 0.0
      %v4374 = vmax.f32 %v4342, 0.0
      %v4375 = vmax.f32 %v4343, 0.0
      %v4376 = vmax.f32 %v4344, 0.0
      %v4377 = vmax.f32 %v4345, 0.0
      %v4378 = vmax.f32 %v4346, 0.0
      %v4379 = vmax.f32 %v4347, 0.0
      %v4380 = vmax.f32 %v4348, 0.0
      %v4381 = vmax.f32 %v4349, 0.0
      %v4382 = vmax.f32 %v4350, 0.0
      %v4383 = vmax.f32 %v4351, 0.0
      %v4384 = vmax.f32 %v4352, 0.0
      %v4385 = vmax.f32 %v4353, 0.0
      %v4386 = vmax.f32 %v4354, 0.0
      %v4387 = vmax.f32 %v4355, 0.0
      %v4388 = vmax.f32 %v4356, 0.0
      %v4389 = vmax.f32 %v4357, 0.0
      %v4390 = vmax.f32 %v4358, 0.0
      %v4391 = vmax.f32 %v4359, 0.0
      %v4392 = vmax.f32 %v4360, 0.0
      %v4393 = vmax.f32 %v4361, 0.0
      %v4394 = vmax.f32 %v4362, 0.0
      %v4395 = vmax.f32 %v4363, 0.0
      %v4396 = vmax.f32 %v4364, 0.0
      %v4397 = vmax.f32 %v4365, 0.0
      %v4398 = vmax.f32 %v4366, 0.0
      %v4399 = vmax.f32 %v4367, 0.0
      %v4400 = vmax.f32 %v4368, 0.0
      %v4401 = vld [vmem:[#allocation2] sm:$0xff]
      %v4402 = vld [vmem:[#allocation2 + $0x8] sm:$0xff]
      %v4403 = vld [vmem:[#allocation2 + $0x10] sm:$0xff]
      %v4404 = vld [vmem:[#allocation2 + $0x18] sm:$0xff]
      %v4405 = vld [vmem:[#allocation2 + $0x20] sm:$0xff]
      %v4406 = vld [vmem:[#allocation2 + $0x28] sm:$0xff]
      %v4407 = vld [vmem:[#allocation2 + $0x30] sm:$0xff]
      %v4408 = vld [vmem:[#allocation2 + $0x38] sm:$0xff]
      %v4409 = vld [vmem:[#allocation2 + $0x40] sm:$0xff]
      %v4410 = vld [vmem:[#allocation2 + $0x48] sm:$0xff]
      %v4411 = vld [vmem:[#allocation2 + $0x50] sm:$0xff]
      %v4412 = vld [vmem:[#allocation2 + $0x58] sm:$0xff]
      %v4413 = vld [vmem:[#allocation2 + $0x60] sm:$0xff]
      %v4414 = vld [vmem:[#allocation2 + $0x68] sm:$0xff]
      %v4415 = vld [vmem:[#allocation2 + $0x70] sm:$0xff]
      %v4416 = vld [vmem:[#allocation2 + $0x78] sm:$0xff]
      %v4417 = vld [vmem:[#allocation2 + $0x80] sm:$0xff]
      %v4418 = vld [vmem:[#allocation2 + $0x88] sm:$0xff]
      %v4419 = vld [vmem:[#allocation2 + $0x90] sm:$0xff]
      %v4420 = vld [vmem:[#allocation2 + $0x98] sm:$0xff]
      %v4421 = vld [vmem:[#allocation2 + $0xa0] sm:$0xff]
      %v4422 = vld [vmem:[#allocation2 + $0xa8] sm:$0xff]
      %v4423 = vld [vmem:[#allocation2 + $0xb0] sm:$0xff]
      %v4424 = vld [vmem:[#allocation2 + $0xb8] sm:$0xff]
      %v4425 = vld [vmem:[#allocation2 + $0xc0] sm:$0xff]
      %v4426 = vld [vmem:[#allocation2 + $0xc8] sm:$0xff]
      %v4427 = vld [vmem:[#allocation2 + $0xd0] sm:$0xff]
      %v4428 = vld [vmem:[#allocation2 + $0xd8] sm:$0xff]
      %v4429 = vld [vmem:[#allocation2 + $0xe0] sm:$0xff]
      %v4430 = vld [vmem:[#allocation2 + $0xe8] sm:$0xff]
      %v4431 = vld [vmem:[#allocation2 + $0xf0] sm:$0xff]
      %v4432 = vld [vmem:[#allocation2 + $0xf8] sm:$0xff]
      %s4433 = scalar_lea.vmem %s1, 28
      %v4434 = vld [vmem:[%s4433] sm:$0xf]
      %v4436 = vsel %vm270, %v4369, 0
      %v4439 = vsel %vm270, %v4370, 0
      %v4442 = vsel %vm270, %v4371, 0
      %v4445 = vsel %vm270, %v4372, 0
      %v4448 = vsel %vm270, %v4373, 0
      %v4451 = vsel %vm270, %v4374, 0
      %v4454 = vsel %vm270, %v4375, 0
      %v4457 = vsel %vm270, %v4376, 0
      %v4460 = vsel %vm270, %v4377, 0
      %v4463 = vsel %vm270, %v4378, 0
      %v4466 = vsel %vm270, %v4379, 0
      %v4469 = vsel %vm270, %v4380, 0
      %v4472 = vsel %vm270, %v4381, 0
      %v4475 = vsel %vm270, %v4382, 0
      %v4478 = vsel %vm270, %v4383, 0
      %v4481 = vsel %vm270, %v4384, 0
      %v4484 = vsel %vm270, %v4385, 0
      %v4487 = vsel %vm270, %v4386, 0
      %v4490 = vsel %vm270, %v4387, 0
      %v4493 = vsel %vm270, %v4388, 0
      %v4496 = vsel %vm270, %v4389, 0
      %v4499 = vsel %vm270, %v4390, 0
      %v4502 = vsel %vm270, %v4391, 0
      %v4505 = vsel %vm270, %v4392, 0
      %v4508 = vsel %vm270, %v4393, 0
      %v4511 = vsel %vm270, %v4394, 0
      %v4514 = vsel %vm270, %v4395, 0
      %v4517 = vsel %vm270, %v4396, 0
      %v4520 = vsel %vm270, %v4397, 0
      %v4523 = vsel %vm270, %v4398, 0
      %v4526 = vsel %vm270, %v4399, 0
      %v4529 = vsel %vm270, %v4400, 0
      %v4532 = vsel %vm576, %v4434, 0
      %4534 = vmatprep.subr.mxu0 0.0
      %4535 = vmatpush1.msra.mxu0 %v4532
      %4536 = vmatprep.subr.mxu0 0.0
      %4537 = vmatpush1.msra.mxu0 0.0
      %4538 = vmatprep.subr.mxu0 0.0
      %4539 = vmatpush1.msra.mxu0 0.0
      %4540 = vmatprep.subr.mxu0 0.0
      %4541 = vmatpush1.msra.mxu0 0.0
      %4542 = vmatprep.subr.mxu0 0.0
      %4543 = vmatpush1.msra.mxu0 0.0
      %4544 = vmatprep.subr.mxu0 0.0
      %4545 = vmatpush1.msra.mxu0 0.0
      %4546 = vmatprep.subr.mxu0 0.0
      %4547 = vmatpush1.msra.mxu0 0.0
      %4548 = vmatprep.subr.mxu0 0.0
      %4549 = vmatpush1.msra.mxu0 0.0
      %4550 = vmatprep.subr.mxu0 0.0
      %4551 = vmatpush1.msra.mxu0 0.0
      %4552 = vmatprep.subr.mxu0 0.0
      %4553 = vmatpush1.msra.mxu0 0.0
      %4554 = vmatprep.subr.mxu0 0.0
      %4555 = vmatpush1.msra.mxu0 0.0
      %4556 = vmatprep.subr.mxu0 0.0
      %4557 = vmatpush1.msra.mxu0 0.0
      %4558 = vmatprep.subr.mxu0 0.0
      %4559 = vmatpush1.msra.mxu0 0.0
      %4560 = vmatprep.subr.mxu0 0.0
      %4561 = vmatpush1.msra.mxu0 0.0
      %4562 = vmatprep.subr.mxu0 0.0
      %4563 = vmatpush1.msra.mxu0 0.0
      %4564 = vmatprep.subr.mxu0 0.0
      %4565 = vmatpush1.msra.mxu0 0.0
      %4566 = vmatprep.subr.mxu0 0.0
      %4567 = vmatpush1.msra.mxu0 0.0
      %4568 = vmatprep.subr.mxu0 0.0
      %4569 = vmatpush1.msra.mxu0 0.0
      %4570 = vmatprep.subr.mxu0 0.0
      %4571 = vmatpush1.msra.mxu0 0.0
      %4572 = vmatprep.subr.mxu0 0.0
      %4573 = vmatpush1.msra.mxu0 0.0
      %4574 = vmatprep.subr.mxu0 0.0
      %4575 = vmatpush1.msra.mxu0 0.0
      %4576 = vmatprep.subr.mxu0 0.0
      %4577 = vmatpush1.msra.mxu0 0.0
      %4578 = vmatprep.subr.mxu0 0.0
      %4579 = vmatpush1.msra.mxu0 0.0
      %4580 = vmatprep.subr.mxu0 0.0
      %4581 = vmatpush1.msra.mxu0 0.0
      %4582 = vmatprep.subr.mxu0 0.0
      %4583 = vmatpush1.msra.mxu0 0.0
      %4584 = vmatprep.subr.mxu0 0.0
      %4585 = vmatpush1.msra.mxu0 0.0
      %4586 = vmatprep.subr.mxu0 0.0
      %4587 = vmatpush1.msra.mxu0 0.0
      %4588 = vmatprep.subr.mxu0 0.0
      %4589 = vmatpush1.msra.mxu0 0.0
      %4590 = vmatprep.subr.mxu0 0.0
      %4591 = vmatpush1.msra.mxu0 0.0
      %4592 = vmatprep.subr.mxu0 0.0
      %4593 = vmatpush1.msra.mxu0 0.0
      %4594 = vmatprep.subr.mxu0 0.0
      %4595 = vmatpush1.msra.mxu0 0.0
      %4596 = vmatprep.subr.mxu0 0.0
      %4597 = vmatpush1.msra.mxu0 0.0
      %4598 = vmatprep.mubr.f32.mxu0 0.0
      %4599 = vmatmul.mubr.f32.gmra.mrb[0].mxu0 %v4436
      %v4600 = vpop.f32.mrb[0].mxu0
      %v4601 = vadd.f32 0.0, %v4600
      %v4602 = vpop.f32.mrb[0].mxu0
      %4603 = vmatprep.mubr.f32.mxu0 0.0
      %4604 = vmatmul.mubr.f32.gmra.mrb[0].mxu0 %v4439
      %v4605 = vpop.f32.mrb[0].mxu0
      %v4606 = vadd.f32 0.0, %v4605
      %v4607 = vpop.f32.mrb[0].mxu0
      %4608 = vmatprep.mubr.f32.mxu0 0.0
      %4609 = vmatmul.mubr.f32.gmra.mrb[0].mxu0 %v4442
      %v4610 = vpop.f32.mrb[0].mxu0
      %v4611 = vadd.f32 0.0, %v4610
      %v4612 = vpop.f32.mrb[0].mxu0
      %4613 = vmatprep.mubr.f32.mxu0 0.0
      %4614 = vmatmul.mubr.f32.gmra.mrb[0].mxu0 %v4445
      %v4615 = vpop.f32.mrb[0].mxu0
      %v4616 = vadd.f32 0.0, %v4615
      %v4617 = vpop.f32.mrb[0].mxu0
      %4618 = vmatprep.mubr.f32.mxu0 0.0
      %4619 = vmatmul.mubr.f32.gmra.mrb[0].mxu0 %v4448
      %v4620 = vpop.f32.mrb[0].mxu0
      %v4621 = vadd.f32 0.0, %v4620
      %v4622 = vpop.f32.mrb[0].mxu0
      %4623 = vmatprep.mubr.f32.mxu0 0.0
      %4624 = vmatmul.mubr.f32.gmra.mrb[0].mxu0 %v4451
      %v4625 = vpop.f32.mrb[0].mxu0
      %v4626 = vadd.f32 0.0, %v4625
      %v4627 = vpop.f32.mrb[0].mxu0
      %4628 = vmatprep.mubr.f32.mxu0 0.0
      %4629 = vmatmul.mubr.f32.gmra.mrb[0].mxu0 %v4454
      %v4630 = vpop.f32.mrb[0].mxu0
      %v4631 = vadd.f32 0.0, %v4630
      %v4632 = vpop.f32.mrb[0].mxu0
      %4633 = vmatprep.mubr.f32.mxu0 0.0
      %4634 = vmatmul.mubr.f32.gmra.mrb[0].mxu0 %v4457
      %v4635 = vpop.f32.mrb[0].mxu0
      %v4636 = vadd.f32 0.0, %v4635
      %v4637 = vpop.f32.mrb[0].mxu0
      %4638 = vmatprep.mubr.f32.mxu0 0.0
      %4639 = vmatmul.mubr.f32.gmra.mrb[0].mxu0 %v4460
      %v4640 = vpop.f32.mrb[0].mxu0
      %v4641 = vadd.f32 0.0, %v4640
      %v4642 = vpop.f32.mrb[0].mxu0
      %4643 = vmatprep.mubr.f32.mxu0 0.0
      %4644 = vmatmul.mubr.f32.gmra.mrb[0].mxu0 %v4463
      %v4645 = vpop.f32.mrb[0].mxu0
      %v4646 = vadd.f32 0.0, %v4645
      %v4647 = vpop.f32.mrb[0].mxu0
      %4648 = vmatprep.mubr.f32.mxu0 0.0
      %4649 = vmatmul.mubr.f32.gmra.mrb[0].mxu0 %v4466
      %v4650 = vpop.f32.mrb[0].mxu0
      %v4651 = vadd.f32 0.0, %v4650
      %v4652 = vpop.f32.mrb[0].mxu0
      %4653 = vmatprep.mubr.f32.mxu0 0.0
      %4654 = vmatmul.mubr.f32.gmra.mrb[0].mxu0 %v4469
      %v4655 = vpop.f32.mrb[0].mxu0
      %v4656 = vadd.f32 0.0, %v4655
      %v4657 = vpop.f32.mrb[0].mxu0
      %4658 = vmatprep.mubr.f32.mxu0 0.0
      %4659 = vmatmul.mubr.f32.gmra.mrb[0].mxu0 %v4472
      %v4660 = vpop.f32.mrb[0].mxu0
      %v4661 = vadd.f32 0.0, %v4660
      %v4662 = vpop.f32.mrb[0].mxu0
      %4663 = vmatprep.mubr.f32.mxu0 0.0
      %4664 = vmatmul.mubr.f32.gmra.mrb[0].mxu0 %v4475
      %v4665 = vpop.f32.mrb[0].mxu0
      %v4666 = vadd.f32 0.0, %v4665
      %v4667 = vpop.f32.mrb[0].mxu0
      %4668 = vmatprep.mubr.f32.mxu0 0.0
      %4669 = vmatmul.mubr.f32.gmra.mrb[0].mxu0 %v4478
      %v4670 = vpop.f32.mrb[0].mxu0
      %v4671 = vadd.f32 0.0, %v4670
      %v4672 = vpop.f32.mrb[0].mxu0
      %4673 = vmatprep.mubr.f32.mxu0 0.0
      %4674 = vmatmul.mubr.f32.gmra.mrb[0].mxu0 %v4481
      %v4675 = vpop.f32.mrb[0].mxu0
      %v4676 = vadd.f32 0.0, %v4675
      %v4677 = vpop.f32.mrb[0].mxu0
      %4678 = vmatprep.mubr.f32.mxu0 0.0
      %4679 = vmatmul.mubr.f32.gmra.mrb[0].mxu0 %v4484
      %v4680 = vpop.f32.mrb[0].mxu0
      %v4681 = vadd.f32 0.0, %v4680
      %v4682 = vpop.f32.mrb[0].mxu0
      %4683 = vmatprep.mubr.f32.mxu0 0.0
      %4684 = vmatmul.mubr.f32.gmra.mrb[0].mxu0 %v4487
      %v4685 = vpop.f32.mrb[0].mxu0
      %v4686 = vadd.f32 0.0, %v4685
      %v4687 = vpop.f32.mrb[0].mxu0
      %4688 = vmatprep.mubr.f32.mxu0 0.0
      %4689 = vmatmul.mubr.f32.gmra.mrb[0].mxu0 %v4490
      %v4690 = vpop.f32.mrb[0].mxu0
      %v4691 = vadd.f32 0.0, %v4690
      %v4692 = vpop.f32.mrb[0].mxu0
      %4693 = vmatprep.mubr.f32.mxu0 0.0
      %4694 = vmatmul.mubr.f32.gmra.mrb[0].mxu0 %v4493
      %v4695 = vpop.f32.mrb[0].mxu0
      %v4696 = vadd.f32 0.0, %v4695
      %v4697 = vpop.f32.mrb[0].mxu0
      %4698 = vmatprep.mubr.f32.mxu0 0.0
      %4699 = vmatmul.mubr.f32.gmra.mrb[0].mxu0 %v4496
      %v4700 = vpop.f32.mrb[0].mxu0
      %v4701 = vadd.f32 0.0, %v4700
      %v4702 = vpop.f32.mrb[0].mxu0
      %4703 = vmatprep.mubr.f32.mxu0 0.0
      %4704 = vmatmul.mubr.f32.gmra.mrb[0].mxu0 %v4499
      %v4705 = vpop.f32.mrb[0].mxu0
      %v4706 = vadd.f32 0.0, %v4705
      %v4707 = vpop.f32.mrb[0].mxu0
      %4708 = vmatprep.mubr.f32.mxu0 0.0
      %4709 = vmatmul.mubr.f32.gmra.mrb[0].mxu0 %v4502
      %v4710 = vpop.f32.mrb[0].mxu0
      %v4711 = vadd.f32 0.0, %v4710
      %v4712 = vpop.f32.mrb[0].mxu0
      %4713 = vmatprep.mubr.f32.mxu0 0.0
      %4714 = vmatmul.mubr.f32.gmra.mrb[0].mxu0 %v4505
      %v4715 = vpop.f32.mrb[0].mxu0
      %v4716 = vadd.f32 0.0, %v4715
      %v4717 = vpop.f32.mrb[0].mxu0
      %4718 = vmatprep.mubr.f32.mxu0 0.0
      %4719 = vmatmul.mubr.f32.gmra.mrb[0].mxu0 %v4508
      %v4720 = vpop.f32.mrb[0].mxu0
      %v4721 = vadd.f32 0.0, %v4720
      %v4722 = vpop.f32.mrb[0].mxu0
      %4723 = vmatprep.mubr.f32.mxu0 0.0
      %4724 = vmatmul.mubr.f32.gmra.mrb[0].mxu0 %v4511
      %v4725 = vpop.f32.mrb[0].mxu0
      %v4726 = vadd.f32 0.0, %v4725
      %v4727 = vpop.f32.mrb[0].mxu0
      %4728 = vmatprep.mubr.f32.mxu0 0.0
      %4729 = vmatmul.mubr.f32.gmra.mrb[0].mxu0 %v4514
      %v4730 = vpop.f32.mrb[0].mxu0
      %v4731 = vadd.f32 0.0, %v4730
      %v4732 = vpop.f32.mrb[0].mxu0
      %4733 = vmatprep.mubr.f32.mxu0 0.0
      %4734 = vmatmul.mubr.f32.gmra.mrb[0].mxu0 %v4517
      %v4735 = vpop.f32.mrb[0].mxu0
      %v4736 = vadd.f32 0.0, %v4735
      %v4737 = vpop.f32.mrb[0].mxu0
      %4738 = vmatprep.mubr.f32.mxu0 0.0
      %4739 = vmatmul.mubr.f32.gmra.mrb[0].mxu0 %v4520
      %v4740 = vpop.f32.mrb[0].mxu0
      %v4741 = vadd.f32 0.0, %v4740
      %v4742 = vpop.f32.mrb[0].mxu0
      %4743 = vmatprep.mubr.f32.mxu0 0.0
      %4744 = vmatmul.mubr.f32.gmra.mrb[0].mxu0 %v4523
      %v4745 = vpop.f32.mrb[0].mxu0
      %v4746 = vadd.f32 0.0, %v4745
      %v4747 = vpop.f32.mrb[0].mxu0
      %4748 = vmatprep.mubr.f32.mxu0 0.0
      %4749 = vmatmul.mubr.f32.gmra.mrb[0].mxu0 %v4526
      %v4750 = vpop.f32.mrb[0].mxu0
      %v4751 = vadd.f32 0.0, %v4750
      %v4752 = vpop.f32.mrb[0].mxu0
      %4753 = vmatprep.mubr.f32.mxu0 0.0
      %4754 = vmatmul.mubr.f32.gmra.mrb[0].mxu0 %v4529
      %v4755 = vpop.f32.mrb[0].mxu0
      %v4756 = vadd.f32 0.0, %v4755
      %v4757 = vpop.f32.mrb[0].mxu0
      %4758 = vdwg.mxu0
      %v4759 = vadd.f32 %v4401, %v4601
      %v4760 = vadd.f32 %v4402, %v4606
      %v4761 = vadd.f32 %v4403, %v4611
      %v4762 = vadd.f32 %v4404, %v4616
      %v4763 = vadd.f32 %v4405, %v4621
      %v4764 = vadd.f32 %v4406, %v4626
      %v4765 = vadd.f32 %v4407, %v4631
      %v4766 = vadd.f32 %v4408, %v4636
      %v4767 = vadd.f32 %v4409, %v4641
      %v4768 = vadd.f32 %v4410, %v4646
      %v4769 = vadd.f32 %v4411, %v4651
      %v4770 = vadd.f32 %v4412, %v4656
      %v4771 = vadd.f32 %v4413, %v4661
      %v4772 = vadd.f32 %v4414, %v4666
      %v4773 = vadd.f32 %v4415, %v4671
      %v4774 = vadd.f32 %v4416, %v4676
      %v4775 = vadd.f32 %v4417, %v4681
      %v4776 = vadd.f32 %v4418, %v4686
      %v4777 = vadd.f32 %v4419, %v4691
      %v4778 = vadd.f32 %v4420, %v4696
      %v4779 = vadd.f32 %v4421, %v4701
      %v4780 = vadd.f32 %v4422, %v4706
      %v4781 = vadd.f32 %v4423, %v4711
      %v4782 = vadd.f32 %v4424, %v4716
      %v4783 = vadd.f32 %v4425, %v4721
      %v4784 = vadd.f32 %v4426, %v4726
      %v4785 = vadd.f32 %v4427, %v4731
      %v4786 = vadd.f32 %v4428, %v4736
      %v4787 = vadd.f32 %v4429, %v4741
      %v4788 = vadd.f32 %v4430, %v4746
      %v4789 = vadd.f32 %v4431, %v4751
      %v4790 = vadd.f32 %v4432, %v4756
      %4791 = vst.msk [vmem:[#allocation2] sm:$0xff] %vm270, %v4759
      %4792 = vst.msk [vmem:[#allocation2 + $0x8] sm:$0xff] %vm270, %v4760
      %4793 = vst.msk [vmem:[#allocation2 + $0x10] sm:$0xff] %vm270, %v4761
      %4794 = vst.msk [vmem:[#allocation2 + $0x18] sm:$0xff] %vm270, %v4762
      %4795 = vst.msk [vmem:[#allocation2 + $0x20] sm:$0xff] %vm270, %v4763
      %4796 = vst.msk [vmem:[#allocation2 + $0x28] sm:$0xff] %vm270, %v4764
      %4797 = vst.msk [vmem:[#allocation2 + $0x30] sm:$0xff] %vm270, %v4765
      %4798 = vst.msk [vmem:[#allocation2 + $0x38] sm:$0xff] %vm270, %v4766
      %4799 = vst.msk [vmem:[#allocation2 + $0x40] sm:$0xff] %vm270, %v4767
      %4800 = vst.msk [vmem:[#allocation2 + $0x48] sm:$0xff] %vm270, %v4768
      %4801 = vst.msk [vmem:[#allocation2 + $0x50] sm:$0xff] %vm270, %v4769
      %4802 = vst.msk [vmem:[#allocation2 + $0x58] sm:$0xff] %vm270, %v4770
      %4803 = vst.msk [vmem:[#allocation2 + $0x60] sm:$0xff] %vm270, %v4771
      %4804 = vst.msk [vmem:[#allocation2 + $0x68] sm:$0xff] %vm270, %v4772
      %4805 = vst.msk [vmem:[#allocation2 + $0x70] sm:$0xff] %vm270, %v4773
      %4806 = vst.msk [vmem:[#allocation2 + $0x78] sm:$0xff] %vm270, %v4774
      %4807 = vst.msk [vmem:[#allocation2 + $0x80] sm:$0xff] %vm270, %v4775
      %4808 = vst.msk [vmem:[#allocation2 + $0x88] sm:$0xff] %vm270, %v4776
      %4809 = vst.msk [vmem:[#allocation2 + $0x90] sm:$0xff] %vm270, %v4777
      %4810 = vst.msk [vmem:[#allocation2 + $0x98] sm:$0xff] %vm270, %v4778
      %4811 = vst.msk [vmem:[#allocation2 + $0xa0] sm:$0xff] %vm270, %v4779
      %4812 = vst.msk [vmem:[#allocation2 + $0xa8] sm:$0xff] %vm270, %v4780
      %4813 = vst.msk [vmem:[#allocation2 + $0xb0] sm:$0xff] %vm270, %v4781
      %4814 = vst.msk [vmem:[#allocation2 + $0xb8] sm:$0xff] %vm270, %v4782
      %4815 = vst.msk [vmem:[#allocation2 + $0xc0] sm:$0xff] %vm270, %v4783
      %4816 = vst.msk [vmem:[#allocation2 + $0xc8] sm:$0xff] %vm270, %v4784
      %4817 = vst.msk [vmem:[#allocation2 + $0xd0] sm:$0xff] %vm270, %v4785
      %4818 = vst.msk [vmem:[#allocation2 + $0xd8] sm:$0xff] %vm270, %v4786
      %4819 = vst.msk [vmem:[#allocation2 + $0xe0] sm:$0xff] %vm270, %v4787
      %4820 = vst.msk [vmem:[#allocation2 + $0xe8] sm:$0xff] %vm270, %v4788
      %4821 = vst.msk [vmem:[#allocation2 + $0xf0] sm:$0xff] %vm270, %v4789
      %4822 = vst.msk [vmem:[#allocation2 + $0xf8] sm:$0xff] %vm270, %v4790
      %v4823 = vld [vmem:[%s3694 + $0x2] sm:$0xff]
      %v4824 = vld [vmem:[%s3694 + $0xa] sm:$0xff]
      %v4825 = vld [vmem:[%s3694 + $0x1a] sm:$0xff]
      %v4826 = vld [vmem:[%s3694 + $0x22] sm:$0xff]
      %v4827 = vld [vmem:[%s3694 + $0x32] sm:$0xff]
      %v4828 = vld [vmem:[%s3694 + $0x3a] sm:$0xff]
      %v4829 = vld [vmem:[%s3694 + $0x4a] sm:$0xff]
      %v4830 = vld [vmem:[%s3694 + $0x52] sm:$0xff]
      %v4831 = vld [vmem:[%s3694 + $0x62] sm:$0xff]
      %v4832 = vld [vmem:[%s3694 + $0x6a] sm:$0xff]
      %v4833 = vld [vmem:[%s3694 + $0x7a] sm:$0xff]
      %v4834 = vld [vmem:[%s3694 + $0x82] sm:$0xff]
      %v4835 = vld [vmem:[%s3694 + $0x92] sm:$0xff]
      %v4836 = vld [vmem:[%s3694 + $0x9a] sm:$0xff]
      %v4837 = vld [vmem:[%s3694 + $0xaa] sm:$0xff]
      %v4838 = vld [vmem:[%s3694 + $0xb2] sm:$0xff]
      %v4839 = vld [vmem:[%s3694 + $0xc2] sm:$0xff]
      %v4840 = vld [vmem:[%s3694 + $0xca] sm:$0xff]
      %v4841 = vld [vmem:[%s3694 + $0xda] sm:$0xff]
      %v4842 = vld [vmem:[%s3694 + $0xe2] sm:$0xff]
      %v4843 = vld [vmem:[%s3694 + $0xf2] sm:$0xff]
      %v4844 = vld [vmem:[%s3694 + $0xfa] sm:$0xff]
      %v4845 = vld [vmem:[%s3694 + $0x10a] sm:$0xff]
      %v4846 = vld [vmem:[%s3694 + $0x112] sm:$0xff]
      %v4847 = vld [vmem:[%s3694 + $0x122] sm:$0xff]
      %v4848 = vld [vmem:[%s3694 + $0x12a] sm:$0xff]
      %v4849 = vld [vmem:[%s3694 + $0x13a] sm:$0xff]
      %v4850 = vld [vmem:[%s3694 + $0x142] sm:$0xff]
      %v4851 = vld [vmem:[%s3694 + $0x152] sm:$0xff]
      %v4852 = vld [vmem:[%s3694 + $0x15a] sm:$0xff]
      %v4853 = vld [vmem:[%s3694 + $0x16a] sm:$0xff]
      %v4854 = vld [vmem:[%s3694 + $0x172] sm:$0xff]
      %v4855 = vld [vmem:[%s2] sm:$0x1]
      %v4857 = vlaneseq
      %v4858 = vshrl.u32 %v4857, 7
      %v4859 = vsub.s32 0, %v4858
      %v4860 = vrot.slane %v4855, %v4859
      %v4862 = vmul.f32 %v4823, %v4860
      %v4863 = vmul.f32 %v4824, %v4860
      %v4864 = vmul.f32 %v4825, %v4860
      %v4865 = vmul.f32 %v4826, %v4860
      %v4866 = vmul.f32 %v4827, %v4860
      %v4867 = vmul.f32 %v4828, %v4860
      %v4868 = vmul.f32 %v4829, %v4860
      %v4869 = vmul.f32 %v4830, %v4860
      %v4870 = vmul.f32 %v4831, %v4860
      %v4871 = vmul.f32 %v4832, %v4860
      %v4872 = vmul.f32 %v4833, %v4860
      %v4873 = vmul.f32 %v4834, %v4860
      %v4874 = vmul.f32 %v4835, %v4860
      %v4875 = vmul.f32 %v4836, %v4860
      %v4876 = vmul.f32 %v4837, %v4860
      %v4877 = vmul.f32 %v4838, %v4860
      %v4878 = vmul.f32 %v4839, %v4860
      %v4879 = vmul.f32 %v4840, %v4860
      %v4880 = vmul.f32 %v4841, %v4860
      %v4881 = vmul.f32 %v4842, %v4860
      %v4882 = vmul.f32 %v4843, %v4860
      %v4883 = vmul.f32 %v4844, %v4860
      %v4884 = vmul.f32 %v4845, %v4860
      %v4885 = vmul.f32 %v4846, %v4860
      %v4886 = vmul.f32 %v4847, %v4860
      %v4887 = vmul.f32 %v4848, %v4860
      %v4888 = vmul.f32 %v4849, %v4860
      %v4889 = vmul.f32 %v4850, %v4860
      %v4890 = vmul.f32 %v4851, %v4860
      %v4891 = vmul.f32 %v4852, %v4860
      %v4892 = vmul.f32 %v4853, %v4860
      %v4893 = vmul.f32 %v4854, %v4860
      %v4894 = vld [vmem:[%s3] sm:$0x1]
      %v4896 = vlaneseq
      %v4897 = vshrl.u32 %v4896, 7
      %v4898 = vsub.s32 0, %v4897
      %v4899 = vrot.slane %v4894, %v4898
      %v4901 = vadd.f32 %v4862, %v4899
      %v4902 = vadd.f32 %v4863, %v4899
      %v4903 = vadd.f32 %v4864, %v4899
      %v4904 = vadd.f32 %v4865, %v4899
      %v4905 = vadd.f32 %v4866, %v4899
      %v4906 = vadd.f32 %v4867, %v4899
      %v4907 = vadd.f32 %v4868, %v4899
      %v4908 = vadd.f32 %v4869, %v4899
      %v4909 = vadd.f32 %v4870, %v4899
      %v4910 = vadd.f32 %v4871, %v4899
      %v4911 = vadd.f32 %v4872, %v4899
      %v4912 = vadd.f32 %v4873, %v4899
      %v4913 = vadd.f32 %v4874, %v4899
      %v4914 = vadd.f32 %v4875, %v4899
      %v4915 = vadd.f32 %v4876, %v4899
      %v4916 = vadd.f32 %v4877, %v4899
      %v4917 = vadd.f32 %v4878, %v4899
      %v4918 = vadd.f32 %v4879, %v4899
      %v4919 = vadd.f32 %v4880, %v4899
      %v4920 = vadd.f32 %v4881, %v4899
      %v4921 = vadd.f32 %v4882, %v4899
      %v4922 = vadd.f32 %v4883, %v4899
      %v4923 = vadd.f32 %v4884, %v4899
      %v4924 = vadd.f32 %v4885, %v4899
      %v4925 = vadd.f32 %v4886, %v4899
      %v4926 = vadd.f32 %v4887, %v4899
      %v4927 = vadd.f32 %v4888, %v4899
      %v4928 = vadd.f32 %v4889, %v4899
      %v4929 = vadd.f32 %v4890, %v4899
      %v4930 = vadd.f32 %v4891, %v4899
      %v4931 = vadd.f32 %v4892, %v4899
      %v4932 = vadd.f32 %v4893, %v4899
      %v4933 = vmax.f32 %v4901, 0.0
      %v4934 = vmax.f32 %v4902, 0.0
      %v4935 = vmax.f32 %v4903, 0.0
      %v4936 = vmax.f32 %v4904, 0.0
      %v4937 = vmax.f32 %v4905, 0.0
      %v4938 = vmax.f32 %v4906, 0.0
      %v4939 = vmax.f32 %v4907, 0.0
      %v4940 = vmax.f32 %v4908, 0.0
      %v4941 = vmax.f32 %v4909, 0.0
      %v4942 = vmax.f32 %v4910, 0.0
      %v4943 = vmax.f32 %v4911, 0.0
      %v4944 = vmax.f32 %v4912, 0.0
      %v4945 = vmax.f32 %v4913, 0.0
      %v4946 = vmax.f32 %v4914, 0.0
      %v4947 = vmax.f32 %v4915, 0.0
      %v4948 = vmax.f32 %v4916, 0.0
      %v4949 = vmax.f32 %v4917, 0.0
      %v4950 = vmax.f32 %v4918, 0.0
      %v4951 = vmax.f32 %v4919, 0.0
      %v4952 = vmax.f32 %v4920, 0.0
      %v4953 = vmax.f32 %v4921, 0.0
      %v4954 = vmax.f32 %v4922, 0.0
      %v4955 = vmax.f32 %v4923, 0.0
      %v4956 = vmax.f32 %v4924, 0.0
      %v4957 = vmax.f32 %v4925, 0.0
      %v4958 = vmax.f32 %v4926, 0.0
      %v4959 = vmax.f32 %v4927, 0.0
      %v4960 = vmax.f32 %v4928, 0.0
      %v4961 = vmax.f32 %v4929, 0.0
      %v4962 = vmax.f32 %v4930, 0.0
      %v4963 = vmax.f32 %v4931, 0.0
      %v4964 = vmax.f32 %v4932, 0.0
      %v4965 = vld [vmem:[#allocation2] sm:$0xff]
      %v4966 = vld [vmem:[#allocation2 + $0x8] sm:$0xff]
      %v4967 = vld [vmem:[#allocation2 + $0x10] sm:$0xff]
      %v4968 = vld [vmem:[#allocation2 + $0x18] sm:$0xff]
      %v4969 = vld [vmem:[#allocation2 + $0x20] sm:$0xff]
      %v4970 = vld [vmem:[#allocation2 + $0x28] sm:$0xff]
      %v4971 = vld [vmem:[#allocation2 + $0x30] sm:$0xff]
      %v4972 = vld [vmem:[#allocation2 + $0x38] sm:$0xff]
      %v4973 = vld [vmem:[#allocation2 + $0x40] sm:$0xff]
      %v4974 = vld [vmem:[#allocation2 + $0x48] sm:$0xff]
      %v4975 = vld [vmem:[#allocation2 + $0x50] sm:$0xff]
      %v4976 = vld [vmem:[#allocation2 + $0x58] sm:$0xff]
      %v4977 = vld [vmem:[#allocation2 + $0x60] sm:$0xff]
      %v4978 = vld [vmem:[#allocation2 + $0x68] sm:$0xff]
      %v4979 = vld [vmem:[#allocation2 + $0x70] sm:$0xff]
      %v4980 = vld [vmem:[#allocation2 + $0x78] sm:$0xff]
      %v4981 = vld [vmem:[#allocation2 + $0x80] sm:$0xff]
      %v4982 = vld [vmem:[#allocation2 + $0x88] sm:$0xff]
      %v4983 = vld [vmem:[#allocation2 + $0x90] sm:$0xff]
      %v4984 = vld [vmem:[#allocation2 + $0x98] sm:$0xff]
      %v4985 = vld [vmem:[#allocation2 + $0xa0] sm:$0xff]
      %v4986 = vld [vmem:[#allocation2 + $0xa8] sm:$0xff]
      %v4987 = vld [vmem:[#allocation2 + $0xb0] sm:$0xff]
      %v4988 = vld [vmem:[#allocation2 + $0xb8] sm:$0xff]
      %v4989 = vld [vmem:[#allocation2 + $0xc0] sm:$0xff]
      %v4990 = vld [vmem:[#allocation2 + $0xc8] sm:$0xff]
      %v4991 = vld [vmem:[#allocation2 + $0xd0] sm:$0xff]
      %v4992 = vld [vmem:[#allocation2 + $0xd8] sm:$0xff]
      %v4993 = vld [vmem:[#allocation2 + $0xe0] sm:$0xff]
      %v4994 = vld [vmem:[#allocation2 + $0xe8] sm:$0xff]
      %v4995 = vld [vmem:[#allocation2 + $0xf0] sm:$0xff]
      %v4996 = vld [vmem:[#allocation2 + $0xf8] sm:$0xff]
      %s4997 = scalar_lea.vmem %s1, 32
      %v4998 = vld [vmem:[%s4997] sm:$0xf]
      %v5000 = vsel %vm270, %v4933, 0
      %v5003 = vsel %vm270, %v4934, 0
      %v5006 = vsel %vm270, %v4935, 0
      %v5009 = vsel %vm270, %v4936, 0
      %v5012 = vsel %vm270, %v4937, 0
      %v5015 = vsel %vm270, %v4938, 0
      %v5018 = vsel %vm270, %v4939, 0
      %v5021 = vsel %vm270, %v4940, 0
      %v5024 = vsel %vm270, %v4941, 0
      %v5027 = vsel %vm270, %v4942, 0
      %v5030 = vsel %vm270, %v4943, 0
      %v5033 = vsel %vm270, %v4944, 0
      %v5036 = vsel %vm270, %v4945, 0
      %v5039 = vsel %vm270, %v4946, 0
      %v5042 = vsel %vm270, %v4947, 0
      %v5045 = vsel %vm270, %v4948, 0
      %v5048 = vsel %vm270, %v4949, 0
      %v5051 = vsel %vm270, %v4950, 0
      %v5054 = vsel %vm270, %v4951, 0
      %v5057 = vsel %vm270, %v4952, 0
      %v5060 = vsel %vm270, %v4953, 0
      %v5063 = vsel %vm270, %v4954, 0
      %v5066 = vsel %vm270, %v4955, 0
      %v5069 = vsel %vm270, %v4956, 0
      %v5072 = vsel %vm270, %v4957, 0
      %v5075 = vsel %vm270, %v4958, 0
      %v5078 = vsel %vm270, %v4959, 0
      %v5081 = vsel %vm270, %v4960, 0
      %v5084 = vsel %vm270, %v4961, 0
      %v5087 = vsel %vm270, %v4962, 0
      %v5090 = vsel %vm270, %v4963, 0
      %v5093 = vsel %vm270, %v4964, 0
      %v5096 = vsel %vm576, %v4998, 0
      %5098 = vmatprep.subr.mxu0 0.0
      %5099 = vmatpush1.msra.mxu0 %v5096
      %5100 = vmatprep.subr.mxu0 0.0
      %5101 = vmatpush1.msra.mxu0 0.0
      %5102 = vmatprep.subr.mxu0 0.0
      %5103 = vmatpush1.msra.mxu0 0.0
      %5104 = vmatprep.subr.mxu0 0.0
      %5105 = vmatpush1.msra.mxu0 0.0
      %5106 = vmatprep.subr.mxu0 0.0
      %5107 = vmatpush1.msra.mxu0 0.0
      %5108 = vmatprep.subr.mxu0 0.0
      %5109 = vmatpush1.msra.mxu0 0.0
      %5110 = vmatprep.subr.mxu0 0.0
      %5111 = vmatpush1.msra.mxu0 0.0
      %5112 = vmatprep.subr.mxu0 0.0
      %5113 = vmatpush1.msra.mxu0 0.0
      %5114 = vmatprep.subr.mxu0 0.0
      %5115 = vmatpush1.msra.mxu0 0.0
      %5116 = vmatprep.subr.mxu0 0.0
      %5117 = vmatpush1.msra.mxu0 0.0
      %5118 = vmatprep.subr.mxu0 0.0
      %5119 = vmatpush1.msra.mxu0 0.0
      %5120 = vmatprep.subr.mxu0 0.0
      %5121 = vmatpush1.msra.mxu0 0.0
      %5122 = vmatprep.subr.mxu0 0.0
      %5123 = vmatpush1.msra.mxu0 0.0
      %5124 = vmatprep.subr.mxu0 0.0
      %5125 = vmatpush1.msra.mxu0 0.0
      %5126 = vmatprep.subr.mxu0 0.0
      %5127 = vmatpush1.msra.mxu0 0.0
      %5128 = vmatprep.subr.mxu0 0.0
      %5129 = vmatpush1.msra.mxu0 0.0
      %5130 = vmatprep.subr.mxu0 0.0
      %5131 = vmatpush1.msra.mxu0 0.0
      %5132 = vmatprep.subr.mxu0 0.0
      %5133 = vmatpush1.msra.mxu0 0.0
      %5134 = vmatprep.subr.mxu0 0.0
      %5135 = vmatpush1.msra.mxu0 0.0
      %5136 = vmatprep.subr.mxu0 0.0
      %5137 = vmatpush1.msra.mxu0 0.0
      %5138 = vmatprep.subr.mxu0 0.0
      %5139 = vmatpush1.msra.mxu0 0.0
      %5140 = vmatprep.subr.mxu0 0.0
      %5141 = vmatpush1.msra.mxu0 0.0
      %5142 = vmatprep.subr.mxu0 0.0
      %5143 = vmatpush1.msra.mxu0 0.0
      %5144 = vmatprep.subr.mxu0 0.0
      %5145 = vmatpush1.msra.mxu0 0.0
      %5146 = vmatprep.subr.mxu0 0.0
      %5147 = vmatpush1.msra.mxu0 0.0
      %5148 = vmatprep.subr.mxu0 0.0
      %5149 = vmatpush1.msra.mxu0 0.0
      %5150 = vmatprep.subr.mxu0 0.0
      %5151 = vmatpush1.msra.mxu0 0.0
      %5152 = vmatprep.subr.mxu0 0.0
      %5153 = vmatpush1.msra.mxu0 0.0
      %5154 = vmatprep.subr.mxu0 0.0
      %5155 = vmatpush1.msra.mxu0 0.0
      %5156 = vmatprep.subr.mxu0 0.0
      %5157 = vmatpush1.msra.mxu0 0.0
      %5158 = vmatprep.subr.mxu0 0.0
      %5159 = vmatpush1.msra.mxu0 0.0
      %5160 = vmatprep.subr.mxu0 0.0
      %5161 = vmatpush1.msra.mxu0 0.0
      %5162 = vmatprep.mubr.f32.mxu0 0.0
      %5163 = vmatmul.mubr.f32.gmra.mrb[0].mxu0 %v5000
      %v5164 = vpop.f32.mrb[0].mxu0
      %v5165 = vadd.f32 0.0, %v5164
      %v5166 = vpop.f32.mrb[0].mxu0
      %5167 = vmatprep.mubr.f32.mxu0 0.0
      %5168 = vmatmul.mubr.f32.gmra.mrb[0].mxu0 %v5003
      %v5169 = vpop.f32.mrb[0].mxu0
      %v5170 = vadd.f32 0.0, %v5169
      %v5171 = vpop.f32.mrb[0].mxu0
      %5172 = vmatprep.mubr.f32.mxu0 0.0
      %5173 = vmatmul.mubr.f32.gmra.mrb[0].mxu0 %v5006
      %v5174 = vpop.f32.mrb[0].mxu0
      %v5175 = vadd.f32 0.0, %v5174
      %v5176 = vpop.f32.mrb[0].mxu0
      %5177 = vmatprep.mubr.f32.mxu0 0.0
      %5178 = vmatmul.mubr.f32.gmra.mrb[0].mxu0 %v5009
      %v5179 = vpop.f32.mrb[0].mxu0
      %v5180 = vadd.f32 0.0, %v5179
      %v5181 = vpop.f32.mrb[0].mxu0
      %5182 = vmatprep.mubr.f32.mxu0 0.0
      %5183 = vmatmul.mubr.f32.gmra.mrb[0].mxu0 %v5012
      %v5184 = vpop.f32.mrb[0].mxu0
      %v5185 = vadd.f32 0.0, %v5184
      %v5186 = vpop.f32.mrb[0].mxu0
      %5187 = vmatprep.mubr.f32.mxu0 0.0
      %5188 = vmatmul.mubr.f32.gmra.mrb[0].mxu0 %v5015
      %v5189 = vpop.f32.mrb[0].mxu0
      %v5190 = vadd.f32 0.0, %v5189
      %v5191 = vpop.f32.mrb[0].mxu0
      %5192 = vmatprep.mubr.f32.mxu0 0.0
      %5193 = vmatmul.mubr.f32.gmra.mrb[0].mxu0 %v5018
      %v5194 = vpop.f32.mrb[0].mxu0
      %v5195 = vadd.f32 0.0, %v5194
      %v5196 = vpop.f32.mrb[0].mxu0
      %5197 = vmatprep.mubr.f32.mxu0 0.0
      %5198 = vmatmul.mubr.f32.gmra.mrb[0].mxu0 %v5021
      %v5199 = vpop.f32.mrb[0].mxu0
      %v5200 = vadd.f32 0.0, %v5199
      %v5201 = vpop.f32.mrb[0].mxu0
      %5202 = vmatprep.mubr.f32.mxu0 0.0
      %5203 = vmatmul.mubr.f32.gmra.mrb[0].mxu0 %v5024
      %v5204 = vpop.f32.mrb[0].mxu0
      %v5205 = vadd.f32 0.0, %v5204
      %v5206 = vpop.f32.mrb[0].mxu0
      %5207 = vmatprep.mubr.f32.mxu0 0.0
      %5208 = vmatmul.mubr.f32.gmra.mrb[0].mxu0 %v5027
      %v5209 = vpop.f32.mrb[0].mxu0
      %v5210 = vadd.f32 0.0, %v5209
      %v5211 = vpop.f32.mrb[0].mxu0
      %5212 = vmatprep.mubr.f32.mxu0 0.0
      %5213 = vmatmul.mubr.f32.gmra.mrb[0].mxu0 %v5030
      %v5214 = vpop.f32.mrb[0].mxu0
      %v5215 = vadd.f32 0.0, %v5214
      %v5216 = vpop.f32.mrb[0].mxu0
      %5217 = vmatprep.mubr.f32.mxu0 0.0
      %5218 = vmatmul.mubr.f32.gmra.mrb[0].mxu0 %v5033
      %v5219 = vpop.f32.mrb[0].mxu0
      %v5220 = vadd.f32 0.0, %v5219
      %v5221 = vpop.f32.mrb[0].mxu0
      %5222 = vmatprep.mubr.f32.mxu0 0.0
      %5223 = vmatmul.mubr.f32.gmra.mrb[0].mxu0 %v5036
      %v5224 = vpop.f32.mrb[0].mxu0
      %v5225 = vadd.f32 0.0, %v5224
      %v5226 = vpop.f32.mrb[0].mxu0
      %5227 = vmatprep.mubr.f32.mxu0 0.0
      %5228 = vmatmul.mubr.f32.gmra.mrb[0].mxu0 %v5039
      %v5229 = vpop.f32.mrb[0].mxu0
      %v5230 = vadd.f32 0.0, %v5229
      %v5231 = vpop.f32.mrb[0].mxu0
      %5232 = vmatprep.mubr.f32.mxu0 0.0
      %5233 = vmatmul.mubr.f32.gmra.mrb[0].mxu0 %v5042
      %v5234 = vpop.f32.mrb[0].mxu0
      %v5235 = vadd.f32 0.0, %v5234
      %v5236 = vpop.f32.mrb[0].mxu0
      %5237 = vmatprep.mubr.f32.mxu0 0.0
      %5238 = vmatmul.mubr.f32.gmra.mrb[0].mxu0 %v5045
      %v5239 = vpop.f32.mrb[0].mxu0
      %v5240 = vadd.f32 0.0, %v5239
      %v5241 = vpop.f32.mrb[0].mxu0
      %5242 = vmatprep.mubr.f32.mxu0 0.0
      %5243 = vmatmul.mubr.f32.gmra.mrb[0].mxu0 %v5048
      %v5244 = vpop.f32.mrb[0].mxu0
      %v5245 = vadd.f32 0.0, %v5244
      %v5246 = vpop.f32.mrb[0].mxu0
      %5247 = vmatprep.mubr.f32.mxu0 0.0
      %5248 = vmatmul.mubr.f32.gmra.mrb[0].mxu0 %v5051
      %v5249 = vpop.f32.mrb[0].mxu0
      %v5250 = vadd.f32 0.0, %v5249
      %v5251 = vpop.f32.mrb[0].mxu0
      %5252 = vmatprep.mubr.f32.mxu0 0.0
      %5253 = vmatmul.mubr.f32.gmra.mrb[0].mxu0 %v5054
      %v5254 = vpop.f32.mrb[0].mxu0
      %v5255 = vadd.f32 0.0, %v5254
      %v5256 = vpop.f32.mrb[0].mxu0
      %5257 = vmatprep.mubr.f32.mxu0 0.0
      %5258 = vmatmul.mubr.f32.gmra.mrb[0].mxu0 %v5057
      %v5259 = vpop.f32.mrb[0].mxu0
      %v5260 = vadd.f32 0.0, %v5259
      %v5261 = vpop.f32.mrb[0].mxu0
      %5262 = vmatprep.mubr.f32.mxu0 0.0
      %5263 = vmatmul.mubr.f32.gmra.mrb[0].mxu0 %v5060
      %v5264 = vpop.f32.mrb[0].mxu0
      %v5265 = vadd.f32 0.0, %v5264
      %v5266 = vpop.f32.mrb[0].mxu0
      %5267 = vmatprep.mubr.f32.mxu0 0.0
      %5268 = vmatmul.mubr.f32.gmra.mrb[0].mxu0 %v5063
      %v5269 = vpop.f32.mrb[0].mxu0
      %v5270 = vadd.f32 0.0, %v5269
      %v5271 = vpop.f32.mrb[0].mxu0
      %5272 = vmatprep.mubr.f32.mxu0 0.0
      %5273 = vmatmul.mubr.f32.gmra.mrb[0].mxu0 %v5066
      %v5274 = vpop.f32.mrb[0].mxu0
      %v5275 = vadd.f32 0.0, %v5274
      %v5276 = vpop.f32.mrb[0].mxu0
      %5277 = vmatprep.mubr.f32.mxu0 0.0
      %5278 = vmatmul.mubr.f32.gmra.mrb[0].mxu0 %v5069
      %v5279 = vpop.f32.mrb[0].mxu0
      %v5280 = vadd.f32 0.0, %v5279
      %v5281 = vpop.f32.mrb[0].mxu0
      %5282 = vmatprep.mubr.f32.mxu0 0.0
      %5283 = vmatmul.mubr.f32.gmra.mrb[0].mxu0 %v5072
      %v5284 = vpop.f32.mrb[0].mxu0
      %v5285 = vadd.f32 0.0, %v5284
      %v5286 = vpop.f32.mrb[0].mxu0
      %5287 = vmatprep.mubr.f32.mxu0 0.0
      %5288 = vmatmul.mubr.f32.gmra.mrb[0].mxu0 %v5075
      %v5289 = vpop.f32.mrb[0].mxu0
      %v5290 = vadd.f32 0.0, %v5289
      %v5291 = vpop.f32.mrb[0].mxu0
      %5292 = vmatprep.mubr.f32.mxu0 0.0
      %5293 = vmatmul.mubr.f32.gmra.mrb[0].mxu0 %v5078
      %v5294 = vpop.f32.mrb[0].mxu0
      %v5295 = vadd.f32 0.0, %v5294
      %v5296 = vpop.f32.mrb[0].mxu0
      %5297 = vmatprep.mubr.f32.mxu0 0.0
      %5298 = vmatmul.mubr.f32.gmra.mrb[0].mxu0 %v5081
      %v5299 = vpop.f32.mrb[0].mxu0
      %v5300 = vadd.f32 0.0, %v5299
      %v5301 = vpop.f32.mrb[0].mxu0
      %5302 = vmatprep.mubr.f32.mxu0 0.0
      %5303 = vmatmul.mubr.f32.gmra.mrb[0].mxu0 %v5084
      %v5304 = vpop.f32.mrb[0].mxu0
      %v5305 = vadd.f32 0.0, %v5304
      %v5306 = vpop.f32.mrb[0].mxu0
      %5307 = vmatprep.mubr.f32.mxu0 0.0
      %5308 = vmatmul.mubr.f32.gmra.mrb[0].mxu0 %v5087
      %v5309 = vpop.f32.mrb[0].mxu0
      %v5310 = vadd.f32 0.0, %v5309
      %v5311 = vpop.f32.mrb[0].mxu0
      %5312 = vmatprep.mubr.f32.mxu0 0.0
      %5313 = vmatmul.mubr.f32.gmra.mrb[0].mxu0 %v5090
      %v5314 = vpop.f32.mrb[0].mxu0
      %v5315 = vadd.f32 0.0, %v5314
      %v5316 = vpop.f32.mrb[0].mxu0
      %5317 = vmatprep.mubr.f32.mxu0 0.0
      %5318 = vmatmul.mubr.f32.gmra.mrb[0].mxu0 %v5093
      %v5319 = vpop.f32.mrb[0].mxu0
      %v5320 = vadd.f32 0.0, %v5319
      %v5321 = vpop.f32.mrb[0].mxu0
      %5322 = vdwg.mxu0
      %v5323 = vadd.f32 %v4965, %v5165
      %v5324 = vadd.f32 %v4966, %v5170
      %v5325 = vadd.f32 %v4967, %v5175
      %v5326 = vadd.f32 %v4968, %v5180
      %v5327 = vadd.f32 %v4969, %v5185
      %v5328 = vadd.f32 %v4970, %v5190
      %v5329 = vadd.f32 %v4971, %v5195
      %v5330 = vadd.f32 %v4972, %v5200
      %v5331 = vadd.f32 %v4973, %v5205
      %v5332 = vadd.f32 %v4974, %v5210
      %v5333 = vadd.f32 %v4975, %v5215
      %v5334 = vadd.f32 %v4976, %v5220
      %v5335 = vadd.f32 %v4977, %v5225
      %v5336 = vadd.f32 %v4978, %v5230
      %v5337 = vadd.f32 %v4979, %v5235
      %v5338 = vadd.f32 %v4980, %v5240
      %v5339 = vadd.f32 %v4981, %v5245
      %v5340 = vadd.f32 %v4982, %v5250
      %v5341 = vadd.f32 %v4983, %v5255
      %v5342 = vadd.f32 %v4984, %v5260
      %v5343 = vadd.f32 %v4985, %v5265
      %v5344 = vadd.f32 %v4986, %v5270
      %v5345 = vadd.f32 %v4987, %v5275
      %v5346 = vadd.f32 %v4988, %v5280
      %v5347 = vadd.f32 %v4989, %v5285
      %v5348 = vadd.f32 %v4990, %v5290
      %v5349 = vadd.f32 %v4991, %v5295
      %v5350 = vadd.f32 %v4992, %v5300
      %v5351 = vadd.f32 %v4993, %v5305
      %v5352 = vadd.f32 %v4994, %v5310
      %v5353 = vadd.f32 %v4995, %v5315
      %v5354 = vadd.f32 %v4996, %v5320
      %5355 = vst.msk [vmem:[#allocation2] sm:$0xff] %vm270, %v5323
      %5356 = vst.msk [vmem:[#allocation2 + $0x8] sm:$0xff] %vm270, %v5324
      %5357 = vst.msk [vmem:[#allocation2 + $0x10] sm:$0xff] %vm270, %v5325
      %5358 = vst.msk [vmem:[#allocation2 + $0x18] sm:$0xff] %vm270, %v5326
      %5359 = vst.msk [vmem:[#allocation2 + $0x20] sm:$0xff] %vm270, %v5327
      %5360 = vst.msk [vmem:[#allocation2 + $0x28] sm:$0xff] %vm270, %v5328
      %5361 = vst.msk [vmem:[#allocation2 + $0x30] sm:$0xff] %vm270, %v5329
      %5362 = vst.msk [vmem:[#allocation2 + $0x38] sm:$0xff] %vm270, %v5330
      %5363 = vst.msk [vmem:[#allocation2 + $0x40] sm:$0xff] %vm270, %v5331
      %5364 = vst.msk [vmem:[#allocation2 + $0x48] sm:$0xff] %vm270, %v5332
      %5365 = vst.msk [vmem:[#allocation2 + $0x50] sm:$0xff] %vm270, %v5333
      %5366 = vst.msk [vmem:[#allocation2 + $0x58] sm:$0xff] %vm270, %v5334
      %5367 = vst.msk [vmem:[#allocation2 + $0x60] sm:$0xff] %vm270, %v5335
      %5368 = vst.msk [vmem:[#allocation2 + $0x68] sm:$0xff] %vm270, %v5336
      %5369 = vst.msk [vmem:[#allocation2 + $0x70] sm:$0xff] %vm270, %v5337
      %5370 = vst.msk [vmem:[#allocation2 + $0x78] sm:$0xff] %vm270, %v5338
      %5371 = vst.msk [vmem:[#allocation2 + $0x80] sm:$0xff] %vm270, %v5339
      %5372 = vst.msk [vmem:[#allocation2 + $0x88] sm:$0xff] %vm270, %v5340
      %5373 = vst.msk [vmem:[#allocation2 + $0x90] sm:$0xff] %vm270, %v5341
      %5374 = vst.msk [vmem:[#allocation2 + $0x98] sm:$0xff] %vm270, %v5342
      %5375 = vst.msk [vmem:[#allocation2 + $0xa0] sm:$0xff] %vm270, %v5343
      %5376 = vst.msk [vmem:[#allocation2 + $0xa8] sm:$0xff] %vm270, %v5344
      %5377 = vst.msk [vmem:[#allocation2 + $0xb0] sm:$0xff] %vm270, %v5345
      %5378 = vst.msk [vmem:[#allocation2 + $0xb8] sm:$0xff] %vm270, %v5346
      %5379 = vst.msk [vmem:[#allocation2 + $0xc0] sm:$0xff] %vm270, %v5347
      %5380 = vst.msk [vmem:[#allocation2 + $0xc8] sm:$0xff] %vm270, %v5348
      %5381 = vst.msk [vmem:[#allocation2 + $0xd0] sm:$0xff] %vm270, %v5349
      %5382 = vst.msk [vmem:[#allocation2 + $0xd8] sm:$0xff] %vm270, %v5350
      %5383 = vst.msk [vmem:[#allocation2 + $0xe0] sm:$0xff] %vm270, %v5351
      %5384 = vst.msk [vmem:[#allocation2 + $0xe8] sm:$0xff] %vm270, %v5352
      %5385 = vst.msk [vmem:[#allocation2 + $0xf0] sm:$0xff] %vm270, %v5353
      %5386 = vst.msk [vmem:[#allocation2 + $0xf8] sm:$0xff] %vm270, %v5354
      %v5387 = vld [vmem:[#allocation2] sm:$0xff]
      %v5388 = vld [vmem:[#allocation2 + $0x8] sm:$0xff]
      %v5389 = vld [vmem:[#allocation2 + $0x10] sm:$0xff]
      %v5390 = vld [vmem:[#allocation2 + $0x18] sm:$0xff]
      %v5391 = vld [vmem:[#allocation2 + $0x20] sm:$0xff]
      %v5392 = vld [vmem:[#allocation2 + $0x28] sm:$0xff]
      %v5393 = vld [vmem:[#allocation2 + $0x30] sm:$0xff]
      %v5394 = vld [vmem:[#allocation2 + $0x38] sm:$0xff]
      %v5395 = vld [vmem:[#allocation2 + $0x40] sm:$0xff]
      %v5396 = vld [vmem:[#allocation2 + $0x48] sm:$0xff]
      %v5397 = vld [vmem:[#allocation2 + $0x50] sm:$0xff]
      %v5398 = vld [vmem:[#allocation2 + $0x58] sm:$0xff]
      %v5399 = vld [vmem:[#allocation2 + $0x60] sm:$0xff]
      %v5400 = vld [vmem:[#allocation2 + $0x68] sm:$0xff]
      %v5401 = vld [vmem:[#allocation2 + $0x70] sm:$0xff]
      %v5402 = vld [vmem:[#allocation2 + $0x78] sm:$0xff]
      %v5403 = vld [vmem:[#allocation2 + $0x80] sm:$0xff]
      %v5404 = vld [vmem:[#allocation2 + $0x88] sm:$0xff]
      %v5405 = vld [vmem:[#allocation2 + $0x90] sm:$0xff]
      %v5406 = vld [vmem:[#allocation2 + $0x98] sm:$0xff]
      %v5407 = vld [vmem:[#allocation2 + $0xa0] sm:$0xff]
      %v5408 = vld [vmem:[#allocation2 + $0xa8] sm:$0xff]
      %v5409 = vld [vmem:[#allocation2 + $0xb0] sm:$0xff]
      %v5410 = vld [vmem:[#allocation2 + $0xb8] sm:$0xff]
      %v5411 = vld [vmem:[#allocation2 + $0xc0] sm:$0xff]
      %v5412 = vld [vmem:[#allocation2 + $0xc8] sm:$0xff]
      %v5413 = vld [vmem:[#allocation2 + $0xd0] sm:$0xff]
      %v5414 = vld [vmem:[#allocation2 + $0xd8] sm:$0xff]
      %v5415 = vld [vmem:[#allocation2 + $0xe0] sm:$0xff]
      %v5416 = vld [vmem:[#allocation2 + $0xe8] sm:$0xff]
      %v5417 = vld [vmem:[#allocation2 + $0xf0] sm:$0xff]
      %v5418 = vld [vmem:[#allocation2 + $0xf8] sm:$0xff]
      %5419 = vst.msk [vmem:[%s260] sm:$0xff] %vm270, %v5387
      %5420 = vst.msk [vmem:[%s260 + $0x8] sm:$0xff] %vm270, %v5388
      %5421 = vst.msk [vmem:[%s260 + $0x10] sm:$0xff] %vm270, %v5389
      %5422 = vst.msk [vmem:[%s260 + $0x18] sm:$0xff] %vm270, %v5390
      %5423 = vst.msk [vmem:[%s260 + $0x20] sm:$0xff] %vm270, %v5391
      %5424 = vst.msk [vmem:[%s260 + $0x28] sm:$0xff] %vm270, %v5392
      %5425 = vst.msk [vmem:[%s260 + $0x30] sm:$0xff] %vm270, %v5393
      %5426 = vst.msk [vmem:[%s260 + $0x38] sm:$0xff] %vm270, %v5394
      %5427 = vst.msk [vmem:[%s260 + $0x40] sm:$0xff] %vm270, %v5395
      %5428 = vst.msk [vmem:[%s260 + $0x48] sm:$0xff] %vm270, %v5396
      %5429 = vst.msk [vmem:[%s260 + $0x50] sm:$0xff] %vm270, %v5397
      %5430 = vst.msk [vmem:[%s260 + $0x58] sm:$0xff] %vm270, %v5398
      %5431 = vst.msk [vmem:[%s260 + $0x60] sm:$0xff] %vm270, %v5399
      %5432 = vst.msk [vmem:[%s260 + $0x68] sm:$0xff] %vm270, %v5400
      %5433 = vst.msk [vmem:[%s260 + $0x70] sm:$0xff] %vm270, %v5401
      %5434 = vst.msk [vmem:[%s260 + $0x78] sm:$0xff] %vm270, %v5402
      %5435 = vst.msk [vmem:[%s260 + $0x80] sm:$0xff] %vm270, %v5403
      %5436 = vst.msk [vmem:[%s260 + $0x88] sm:$0xff] %vm270, %v5404
      %5437 = vst.msk [vmem:[%s260 + $0x90] sm:$0xff] %vm270, %v5405
      %5438 = vst.msk [vmem:[%s260 + $0x98] sm:$0xff] %vm270, %v5406
      %5439 = vst.msk [vmem:[%s260 + $0xa0] sm:$0xff] %vm270, %v5407
      %5440 = vst.msk [vmem:[%s260 + $0xa8] sm:$0xff] %vm270, %v5408
      %5441 = vst.msk [vmem:[%s260 + $0xb0] sm:$0xff] %vm270, %v5409
      %5442 = vst.msk [vmem:[%s260 + $0xb8] sm:$0xff] %vm270, %v5410
      %5443 = vst.msk [vmem:[%s260 + $0xc0] sm:$0xff] %vm270, %v5411
      %5444 = vst.msk [vmem:[%s260 + $0xc8] sm:$0xff] %vm270, %v5412
      %5445 = vst.msk [vmem:[%s260 + $0xd0] sm:$0xff] %vm270, %v5413
      %5446 = vst.msk [vmem:[%s260 + $0xd8] sm:$0xff] %vm270, %v5414
      %5447 = vst.msk [vmem:[%s260 + $0xe0] sm:$0xff] %vm270, %v5415
      %5448 = vst.msk [vmem:[%s260 + $0xe8] sm:$0xff] %vm270, %v5416
      %5449 = vst.msk [vmem:[%s260 + $0xf0] sm:$0xff] %vm270, %v5417
      %5450 = vst.msk [vmem:[%s260 + $0xf8] sm:$0xff] %vm270, %v5418
      %v5451 = vsel %vm270, %v5387, 0.0
      %v5452 = vsel %vm270, %v5388, 0.0
      %v5453 = vadd.f32 %v5451, %v5452
      %v5454 = vsel %vm270, %v5389, 0.0
      %v5455 = vadd.f32 %v5453, %v5454
      %v5456 = vsel %vm270, %v5390, 0.0
      %v5457 = vadd.f32 %v5455, %v5456
      %v5458 = vsel %vm270, %v5391, 0.0
      %v5459 = vadd.f32 %v5457, %v5458
      %v5460 = vsel %vm270, %v5392, 0.0
      %v5461 = vadd.f32 %v5459, %v5460
      %v5462 = vsel %vm270, %v5393, 0.0
      %v5463 = vadd.f32 %v5461, %v5462
      %v5464 = vsel %vm270, %v5394, 0.0
      %v5465 = vadd.f32 %v5463, %v5464
      %v5466 = vsel %vm270, %v5395, 0.0
      %v5467 = vadd.f32 %v5465, %v5466
      %v5468 = vsel %vm270, %v5396, 0.0
      %v5469 = vadd.f32 %v5467, %v5468
      %v5470 = vsel %vm270, %v5397, 0.0
      %v5471 = vadd.f32 %v5469, %v5470
      %v5472 = vsel %vm270, %v5398, 0.0
      %v5473 = vadd.f32 %v5471, %v5472
      %v5474 = vsel %vm270, %v5399, 0.0
      %v5475 = vadd.f32 %v5473, %v5474
      %v5476 = vsel %vm270, %v5400, 0.0
      %v5477 = vadd.f32 %v5475, %v5476
      %v5478 = vsel %vm270, %v5401, 0.0
      %v5479 = vadd.f32 %v5477, %v5478
      %v5480 = vsel %vm270, %v5402, 0.0
      %v5481 = vadd.f32 %v5479, %v5480
      %v5482 = vsel %vm270, %v5403, 0.0
      %v5483 = vadd.f32 %v5481, %v5482
      %v5484 = vsel %vm270, %v5404, 0.0
      %v5485 = vadd.f32 %v5483, %v5484
      %v5486 = vsel %vm270, %v5405, 0.0
      %v5487 = vadd.f32 %v5485, %v5486
      %v5488 = vsel %vm270, %v5406, 0.0
      %v5489 = vadd.f32 %v5487, %v5488
      %v5490 = vsel %vm270, %v5407, 0.0
      %v5491 = vadd.f32 %v5489, %v5490
      %v5492 = vsel %vm270, %v5408, 0.0
      %v5493 = vadd.f32 %v5491, %v5492
      %v5494 = vsel %vm270, %v5409, 0.0
      %v5495 = vadd.f32 %v5493, %v5494
      %v5496 = vsel %vm270, %v5410, 0.0
      %v5497 = vadd.f32 %v5495, %v5496
      %v5498 = vsel %vm270, %v5411, 0.0
      %v5499 = vadd.f32 %v5497, %v5498
      %v5500 = vsel %vm270, %v5412, 0.0
      %v5501 = vadd.f32 %v5499, %v5500
      %v5502 = vsel %vm270, %v5413, 0.0
      %v5503 = vadd.f32 %v5501, %v5502
      %v5504 = vsel %vm270, %v5414, 0.0
      %v5505 = vadd.f32 %v5503, %v5504
      %v5506 = vsel %vm270, %v5415, 0.0
      %v5507 = vadd.f32 %v5505, %v5506
      %v5508 = vsel %vm270, %v5416, 0.0
      %v5509 = vadd.f32 %v5507, %v5508
      %v5510 = vsel %vm270, %v5417, 0.0
      %v5511 = vadd.f32 %v5509, %v5510
      %v5512 = vsel %vm270, %v5418, 0.0
      %v5513 = vadd.f32 %v5511, %v5512
      %v5514 = vrot.slane %v5513, 4
      %v5515 = vadd.f32 %v5513, %v5514
      %v5516 = vrot.slane %v5515, 2
      %v5517 = vadd.f32 %v5515, %v5516
      %v5518 = vrot.slane %v5517, 1
      %v5519 = vadd.f32 %v5517, %v5518
      %vm5520 = vcmask 24576
      %5521 = vst.msk [vmem:[%s268] sm:$0x1] %vm5520, %v5519
      %v5522 = vmul.f32 %v5387, %v5387
      %v5523 = vmul.f32 %v5388, %v5388
      %v5524 = vmul.f32 %v5389, %v5389
      %v5525 = vmul.f32 %v5390, %v5390
      %v5526 = vmul.f32 %v5391, %v5391
      %v5527 = vmul.f32 %v5392, %v5392
      %v5528 = vmul.f32 %v5393, %v5393
      %v5529 = vmul.f32 %v5394, %v5394
      %v5530 = vmul.f32 %v5395, %v5395
      %v5531 = vmul.f32 %v5396, %v5396
      %v5532 = vmul.f32 %v5397, %v5397
      %v5533 = vmul.f32 %v5398, %v5398
      %v5534 = vmul.f32 %v5399, %v5399
      %v5535 = vmul.f32 %v5400, %v5400
      %v5536 = vmul.f32 %v5401, %v5401
      %v5537 = vmul.f32 %v5402, %v5402
      %v5538 = vmul.f32 %v5403, %v5403
      %v5539 = vmul.f32 %v5404, %v5404
      %v5540 = vmul.f32 %v5405, %v5405
      %v5541 = vmul.f32 %v5406, %v5406
      %v5542 = vmul.f32 %v5407, %v5407
      %v5543 = vmul.f32 %v5408, %v5408
      %v5544 = vmul.f32 %v5409, %v5409
      %v5545 = vmul.f32 %v5410, %v5410
      %v5546 = vmul.f32 %v5411, %v5411
      %v5547 = vmul.f32 %v5412, %v5412
      %v5548 = vmul.f32 %v5413, %v5413
      %v5549 = vmul.f32 %v5414, %v5414
      %v5550 = vmul.f32 %v5415, %v5415
      %v5551 = vmul.f32 %v5416, %v5416
      %v5552 = vmul.f32 %v5417, %v5417
      %v5553 = vmul.f32 %v5418, %v5418
      %v5554 = vsel %vm270, %v5522, 0.0
      %v5555 = vsel %vm270, %v5523, 0.0
      %v5556 = vadd.f32 %v5554, %v5555
      %v5557 = vsel %vm270, %v5524, 0.0
      %v5558 = vadd.f32 %v5556, %v5557
      %v5559 = vsel %vm270, %v5525, 0.0
      %v5560 = vadd.f32 %v5558, %v5559
      %v5561 = vsel %vm270, %v5526, 0.0
      %v5562 = vadd.f32 %v5560, %v5561
      %v5563 = vsel %vm270, %v5527, 0.0
      %v5564 = vadd.f32 %v5562, %v5563
      %v5565 = vsel %vm270, %v5528, 0.0
      %v5566 = vadd.f32 %v5564, %v5565
      %v5567 = vsel %vm270, %v5529, 0.0
      %v5568 = vadd.f32 %v5566, %v5567
      %v5569 = vsel %vm270, %v5530, 0.0
      %v5570 = vadd.f32 %v5568, %v5569
      %v5571 = vsel %vm270, %v5531, 0.0
      %v5572 = vadd.f32 %v5570, %v5571
      %v5573 = vsel %vm270, %v5532, 0.0
      %v5574 = vadd.f32 %v5572, %v5573
      %v5575 = vsel %vm270, %v5533, 0.0
      %v5576 = vadd.f32 %v5574, %v5575
      %v5577 = vsel %vm270, %v5534, 0.0
      %v5578 = vadd.f32 %v5576, %v5577
      %v5579 = vsel %vm270, %v5535, 0.0
      %v5580 = vadd.f32 %v5578, %v5579
      %v5581 = vsel %vm270, %v5536, 0.0
      %v5582 = vadd.f32 %v5580, %v5581
      %v5583 = vsel %vm270, %v5537, 0.0
      %v5584 = vadd.f32 %v5582, %v5583
      %v5585 = vsel %vm270, %v5538, 0.0
      %v5586 = vadd.f32 %v5584, %v5585
      %v5587 = vsel %vm270, %v5539, 0.0
      %v5588 = vadd.f32 %v5586, %v5587
      %v5589 = vsel %vm270, %v5540, 0.0
      %v5590 = vadd.f32 %v5588, %v5589
      %v5591 = vsel %vm270, %v5541, 0.0
      %v5592 = vadd.f32 %v5590, %v5591
      %v5593 = vsel %vm270, %v5542, 0.0
      %v5594 = vadd.f32 %v5592, %v5593
      %v5595 = vsel %vm270, %v5543, 0.0
      %v5596 = vadd.f32 %v5594, %v5595
      %v5597 = vsel %vm270, %v5544, 0.0
      %v5598 = vadd.f32 %v5596, %v5597
      %v5599 = vsel %vm270, %v5545, 0.0
      %v5600 = vadd.f32 %v5598, %v5599
      %v5601 = vsel %vm270, %v5546, 0.0
      %v5602 = vadd.f32 %v5600, %v5601
      %v5603 = vsel %vm270, %v5547, 0.0
      %v5604 = vadd.f32 %v5602, %v5603
      %v5605 = vsel %vm270, %v5548, 0.0
      %v5606 = vadd.f32 %v5604, %v5605
      %v5607 = vsel %vm270, %v5549, 0.0
      %v5608 = vadd.f32 %v5606, %v5607
      %v5609 = vsel %vm270, %v5550, 0.0
      %v5610 = vadd.f32 %v5608, %v5609
      %v5611 = vsel %vm270, %v5551, 0.0
      %v5612 = vadd.f32 %v5610, %v5611
      %v5613 = vsel %vm270, %v5552, 0.0
      %v5614 = vadd.f32 %v5612, %v5613
      %v5615 = vsel %vm270, %v5553, 0.0
      %v5616 = vadd.f32 %v5614, %v5615
      %v5617 = vrot.slane %v5616, 4
      %v5618 = vadd.f32 %v5616, %v5617
      %v5619 = vrot.slane %v5618, 2
      %v5620 = vadd.f32 %v5618, %v5619
      %v5621 = vrot.slane %v5620, 1
      %v5622 = vadd.f32 %v5620, %v5621
      %5623 = vst.msk [vmem:[%s268 + $0x1] sm:$0x1] %vm5520, %v5622
      %s5624 = smul.u32 16, %s22
      %p5625 = scmp.lt.s32.totalorder %s21, 1
      %s5626 = scalar_select %p5625, %s21, 1
      %p5627 = scmp.lt.s32.totalorder %s5624, 15
      %s5628 = scalar_select %p5627, %s5624, 15
      %s5629 = smul.addr %s5628, 2
      %s5630 = smul.addr %s5626, 32
      %s5631 = sadd.s32 %s5629, %s5630
      %s5632 = smul.addr %s5631, 8
      %s5633 = scalar_lea.vmem %s4, %s5632
      %p5634 = scmp.lt.s32.totalorder %s21, 1
      %s5635 = scalar_select %p5634, %s21, 1
      %p5636 = scmp.lt.s32.totalorder %s22, 0
      %s5637 = scalar_select %p5636, %s22, 0
      %s5638 = sadd.s32 %s5637, %s5635
      %s5639 = smul.addr %s5638, 2
      %s5640 = scalar_lea.vmem %s5, %s5639
      // Predicated region
      $region37: #{bottleneck_forward.6} parent=35 // pred_check
        %p5641 = pneg %p138
      $region38: #{bottleneck_forward.6} parent=35 // pred_check_branch
        %5643 = sbr.rel (%p5641) target = $region40
      $region39: #{bottleneck_forward.6} parent=35 // pred_region
        %s5644 = smul.u32 16, %s22
      $region40: #{bottleneck_forward.6} parent=35 // pred_fallthru
        _
      // Predicated region
      $region41: #{bottleneck_forward.6} parent=35 // pred_check
        %p5645 = pneg %p166
      $region42: #{bottleneck_forward.6} parent=35 // pred_check_branch
        %5647 = sbr.rel (%p5645) target = $region44
      $region43: #{bottleneck_forward.6} parent=35 // pred_region
        _
      $region44: #{bottleneck_forward.6} parent=35 // pred_fallthru
        _
    $region36: #{bottleneck_forward.6} parent=5 // pred_fallthru
      _
    %p5648 = scmp.le.s32.totalorder 2, %s12
    // Predicated region
    $region45: #{bottleneck_forward.6} parent=5 // pred_check
      %p5649 = pneg %p5648
    $region46: #{bottleneck_forward.6} parent=5 // pred_check_branch
      %5651 = sbr.rel (%p5649) target = $region48
    $region47: #{bottleneck_forward.6} parent=5 // pred_region
      %s5652 = ssub.s32 %s12, 2
      // Predicated region
      $region49: #{bottleneck_forward.6} parent=47 // pred_check
        %p5653 = pneg %p144
      $region50: #{bottleneck_forward.6} parent=47 // pred_check_branch
        %5655 = sbr.rel (%p5653) target = $region52
      $region51: #{bottleneck_forward.6} parent=47 // pred_region
        %s5656 = smul.u32 16, %s24
        %p5657 = scmp.lt.s32.totalorder %s23, 1
        %s5658 = scalar_select %p5657, %s23, 1
        %p5659 = scmp.lt.s32.totalorder %s5656, 15
        %s5660 = scalar_select %p5659, %s5656, 15
        %s5661 = smul.addr %s5660, 2
        %s5662 = smul.addr %s5658, 32
        %s5663 = sadd.s32 %s5661, %s5662
        %s5664 = smul.addr %s5663, 8
        %s5665 = scalar_lea.vmem %s4, %s5664
      $region52: #{bottleneck_forward.6} parent=47 // pred_fallthru
        _
      // Predicated region
      $region53: #{bottleneck_forward.6} parent=47 // pred_check
        %p5666 = pneg %p172
      $region54: #{bottleneck_forward.6} parent=47 // pred_check_branch
        %5668 = sbr.rel (%p5666) target = $region56
      $region55: #{bottleneck_forward.6} parent=47 // pred_region
        %p5669 = scmp.lt.s32.totalorder %s23, 1
        %s5670 = scalar_select %p5669, %s23, 1
        %p5671 = scmp.lt.s32.totalorder %s24, 0
        %s5672 = scalar_select %p5671, %s24, 0
        %s5673 = sadd.s32 %s5672, %s5670
        %s5674 = smul.addr %s5673, 2
        %s5675 = scalar_lea.vmem %s5, %s5674
      $region56: #{bottleneck_forward.6} parent=47 // pred_fallthru
        _
    $region48: #{bottleneck_forward.6} parent=5 // pred_fallthru
      _
  $region6: #{bottleneck_forward.6} parent=0 // loop_footer
    %s16 = sadd.s32 1, %s12
  $region7: #{bottleneck_forward.6} parent=0 // loop_footer_branch
    %11 = sbr.rel target = $region3
  $region8: #{bottleneck_forward.6} parent=0 // loop_exit
    _

</llo_original>
